<compile_context>
chip_gen: v6e
topology: v6e:2x2x1
jax: 0.10.0
libtpu: 0.0.40
codegen_flags: <defaults>
</compile_context>

<pallas_src>
import functools

import jax
import jax.numpy as jnp
from jax.experimental import pallas as pl
from jax.experimental.pallas import tpu as pltpu


def ens_head_kernel(feat_ref, w_ref, b_ref, out_ref, acc_ref, *, w_resident):
    """feat_ref: (TB, TF) feature tile (f32 or bf16)
       w_ref:    resident: (NJ, TF) full expanded weight (feature dtype)
                 streamed: (1, TF) weight tile
       b_ref:    (1,) f32 bias in SMEM
       out_ref:  (TB, 1) f32 sigmoid probabilities
       acc_ref:  (TB, 1) f32 VMEM accumulator (persists across feature tiles)
    """
    j = pl.program_id(1)

    @pl.when(j == 0)
    def _init():
        acc_ref[...] = jnp.zeros_like(acc_ref)

    if w_resident:
        # Whole expanded weight lives in VMEM; pick row j for this feature tile.
        w_tile = w_ref[pl.ds(j, 1), :]          # (1, TF)
    else:
        w_tile = w_ref[...]                     # (1, TF) streamed tile

    # Fused pool + linear: weighted partial sum. VPU multiply + XLU cross-lane
    # reduce; the MXU is deliberately not used (N=1 output column).
    x = feat_ref[...].astype(jnp.float32)
    acc_ref[...] += jnp.sum(x * w_tile.astype(jnp.float32),
                            axis=-1, keepdims=True)

    @pl.when(j == pl.num_programs(1) - 1)
    def _finalize():
        out_ref[...] = jax.nn.sigmoid(acc_ref[...] + b_ref[0])


def _pick_batch_tile(B):
    """Largest of {32, 16, 8} dividing B, preferring >=2 batch blocks so both
    v7x TensorCores get work on the 'parallel' axis; else the whole batch."""
    candidates = [tb for tb in (32, 16, 8) if B % tb == 0]
    for tb in candidates:
        if B // tb >= 2:
            return tb
    if candidates:
        return candidates[0]
    return B


def _pick_feature_tile(F, C, TB, itemsize, max_block_bytes=2 * 1024 * 1024):
    """Largest multiple of C that divides F while keeping a (TB, TF) block
    within ~max_block_bytes. C (=1280) is a multiple of 128 and divides F, so a
    valid lane-dense tile always exists (no untiled fallback)."""
    assert C % 128 == 0 and F % C == 0, "head expects channel dim % 128 == 0"
    S = F // C
    limit_elems = max(max_block_bytes // (TB * itemsize), C)
    m_max = max(min(S, limit_elems // C), 1)
    for m in range(m_max, 0, -1):
        if S % m == 0:
            return m * C
    return C


def prepare_ens_head_weights(w, b, spatial, dtype=jnp.float32):
    """Fold the flat-NCHW layout and the 1/S global-average-pool into the
    Linear weights. Depends only on (w, b, H*W, dtype): compute ONCE at
    weight-load time and reuse across calls (hoisted out of the hot path)."""
    C = w.shape[0]
    S = int(spatial)
    w_exp = jnp.repeat(w.reshape(C).astype(jnp.float32), S) / jnp.float32(S)
    return w_exp.astype(dtype), jnp.asarray(b, jnp.float32).reshape(1)


def ens_model_head(feat_nchw, w_exp_flat, b_vec):
    """feat_nchw: (B, C, H, W) backbone output (f32 or bf16), NCHW, untouched.
       w_exp_flat: (C*H*W,) pre-expanded weights (from prepare_ens_head_weights).
       b_vec: (1,) f32 bias.
       Returns (B, 1) f32 sigmoid probabilities."""
    B, C, H, W = feat_nchw.shape
    S = H * W
    F = C * S
    assert w_exp_flat.shape == (F,)

    # Free view of the contiguous NCHW feature map — no transpose, no HBM pass.
    feat_flat = feat_nchw.reshape(B, F)

    TB = _pick_batch_tile(B)
    TF = _pick_feature_tile(F, C, TB, feat_flat.dtype.itemsize)
    NJ = F // TF
    grid = (B // TB, NJ)

    # Keep the expanded weight resident in VMEM (fetched from HBM once per
    # call) whenever it is small; otherwise stream (1, TF) tiles per step.
    w_resident = (F * w_exp_flat.dtype.itemsize) <= (1 << 20)
    if w_resident:
        w_arg = w_exp_flat.reshape(NJ, TF)
        w_spec = pl.BlockSpec((NJ, TF), lambda i, j: (0, 0))   # constant index
    else:
        w_arg = w_exp_flat.reshape(1, F)
        w_spec = pl.BlockSpec((1, TF), lambda i, j: (0, j))

    kernel = functools.partial(ens_head_kernel, w_resident=w_resident)

    return pl.pallas_call(
        kernel,
        out_shape=jax.ShapeDtypeStruct((B, 1), jnp.float32),
        grid_spec=pltpu.PrefetchScalarGridSpec(
            num_scalar_prefetch=0,
            grid=grid,
            in_specs=[
                pl.BlockSpec((TB, TF), lambda i, j: (i, j)),          # features
                w_spec,                                               # weights
                pl.BlockSpec(memory_space=pltpu.MemorySpace.SMEM),    # bias
            ],
            out_specs=pl.BlockSpec((TB, 1), lambda i, j: (i, 0)),
            scratch_shapes=[pltpu.VMEM((TB, 1), jnp.float32)],
        ),
        compiler_params=pltpu.CompilerParams(
            dimension_semantics=("parallel", "arbitrary"),
            # Explicit budget: ~2*2 MiB feature buffers + resident weight
            # stays far below this on every gen (v5e default is only 16 MiB).
            vmem_limit_bytes=32 * 1024 * 1024,
        ),
    )(feat_flat, w_arg, b_vec)


if __name__ == "__main__":
    key = jax.random.PRNGKey(0)
    k_feat, k_w, k_b = jax.random.split(key, 3)

    # EfficientNet-b0 feature maps have 1280 channels; small synthetic map.
    # (Feed bf16 features in production for ~2x on this HBM-bound head; the
    # kernel upcasts and accumulates in f32 either way.)
    B, C, H, W = 2, 1280, 8, 8
    feat = jax.random.normal(k_feat, (B, C, H, W), dtype=jnp.float32)

    # Deterministic nn.Linear(1280, 1)-style init: U(-1/sqrt(C), 1/sqrt(C)).
    bound = 1.0 / (C ** 0.5)
    w = jax.random.uniform(k_w, (C, 1), jnp.float32, -bound, bound)
    b = jax.random.uniform(k_b, (1,), jnp.float32, -bound, bound)

    # Hoisted weight prep (once, at weight-load time).
    w_exp, b_vec = prepare_ens_head_weights(w, b, H * W, dtype=feat.dtype)

    out = jax.block_until_ready(ens_model_head(feat, w_exp, b_vec))

    # Reference in plain JAX (same semantics as the PyTorch forward head).
    pooled_ref = feat.mean(axis=2).mean(axis=2)          # (B, C)
    ref = jax.nn.sigmoid(pooled_ref @ w + b)             # (B, 1)
    assert out.shape == (B, 1)
    assert jnp.allclose(out, ref, atol=1e-5, rtol=1e-5), (out, ref)

    print("KERNEL_OK")
</pallas_src>

<mosaic_0001>
module attributes {stable_mosaic.version = 11 : i64} {
  func.func @ens_head_kernel(%arg0: i32, %arg1: i32, %arg2: memref<2x81920xf32, #tpu.memory_space<vmem>>, %arg3: memref<1x81920xf32, #tpu.memory_space<vmem>>, %arg4: memref<1xf32, #tpu.memory_space<smem>>, %arg5: memref<2x1xf32, #tpu.memory_space<vmem>>, %arg6: memref<2x1xf32, #tpu.memory_space<vmem>>) attributes {dimension_semantics = [#tpu.dimension_semantics<parallel>, #tpu.dimension_semantics<arbitrary>], iteration_bounds = array<i64: 1, 1>, scalar_prefetch = 0 : i64, scratch_operands = 1 : i64, tpu.core_type = #tpu.core_type<tc>, window_params = [{transform_indices = @transform_0, window_bounds = array<i64: 2, 81920>}, {pipeline_mode = #tpu.pipeline_mode<synchronous>, transform_indices = @transform_1, window_bounds = array<i64: 1, 81920>}, {transform_indices = @transform_2, window_bounds = array<i64: 1>}, {transform_indices = @transform_3, window_bounds = array<i64: 2, 1>}]} {
    %c0_i32 = arith.constant 0 : i32
    %0 = arith.cmpi eq, %arg1, %c0_i32 : i32
    %1 = arith.extui %0 : i1 to i32
    %c0_i32_0 = arith.constant 0 : i32
    %2 = arith.cmpi ne, %1, %c0_i32_0 : i32
    scf.if %2 {
      %cst_9 = arith.constant 0.000000e+00 : f32
      %16 = vector.broadcast %cst_9 : f32 to vector<2x1xf32>
      %c0_10 = arith.constant 0 : index
      %c0_11 = arith.constant 0 : index
      %17 = vector.load %arg6[%c0_10, %c0_11] : memref<2x1xf32, #tpu.memory_space<vmem>>, vector<2x1xf32>
      tpu.vector_store %arg6[%c0_10, %c0_11], %16 {strides = array<i32>} : memref<2x1xf32, #tpu.memory_space<vmem>>, vector<2x1xf32>,
    } else {
    }
    %3 = arith.index_cast %arg1 : i32 to index
    %c0 = arith.constant 0 : index
    %4 = vector.load %arg3[%3, %c0] : memref<1x81920xf32, #tpu.memory_space<vmem>>, vector<1x81920xf32>
    %c0_1 = arith.constant 0 : index
    %c0_2 = arith.constant 0 : index
    %5 = vector.load %arg2[%c0_1, %c0_2] : memref<2x81920xf32, #tpu.memory_space<vmem>>, vector<2x81920xf32>
    %c0_3 = arith.constant 0 : index
    %c0_4 = arith.constant 0 : index
    %6 = vector.load %arg6[%c0_3, %c0_4] : memref<2x1xf32, #tpu.memory_space<vmem>>, vector<2x1xf32>
    %7 = vector.broadcast %4 : vector<1x81920xf32> to vector<2x81920xf32>
    %8 = arith.mulf %5, %7 : vector<2x81920xf32>
    %cst = arith.constant dense<0.000000e+00> : vector<2xf32>
    %9 = vector.multi_reduction <add>, %8, %cst [1] : vector<2x81920xf32> to vector<2xf32>
    %10 = vector.shape_cast %9 : vector<2xf32> to vector<2x1xf32>
    %11 = arith.addf %6, %10 : vector<2x1xf32>
    %c0_5 = arith.constant 0 : index
    %c0_6 = arith.constant 0 : index
    %12 = vector.load %arg6[%c0_5, %c0_6] : memref<2x1xf32, #tpu.memory_space<vmem>>, vector<2x1xf32>
    tpu.vector_store %arg6[%c0_5, %c0_6], %11 {strides = array<i32>} : memref<2x1xf32, #tpu.memory_space<vmem>>, vector<2x1xf32>,
    %c0_i32_7 = arith.constant 0 : i32
    %13 = arith.cmpi eq, %arg1, %c0_i32_7 : i32
    %14 = arith.extui %13 : i1 to i32
    %c0_i32_8 = arith.constant 0 : i32
    %15 = arith.cmpi ne, %14, %c0_i32_8 : i32
    scf.if %15 {
      %c0_9 = arith.constant 0 : index
      %c0_10 = arith.constant 0 : index
      %16 = vector.load %arg6[%c0_9, %c0_10] : memref<2x1xf32, #tpu.memory_space<vmem>>, vector<2x1xf32>
      %c0_11 = arith.constant 0 : index
      %17 = memref.load %arg4[%c0_11] : memref<1xf32, #tpu.memory_space<smem>>
      %18 = vector.broadcast %17 : f32 to vector<2x1xf32>
      %19 = arith.addf %16, %18 : vector<2x1xf32>
      %20 = arith.negf %19 : vector<2x1xf32>
      %21 = math.exp %20 : vector<2x1xf32>
      %cst_12 = arith.constant 1.000000e+00 : f32
      %22 = vector.broadcast %cst_12 : f32 to vector<2x1xf32>
      %23 = arith.addf %22, %21 : vector<2x1xf32>
      %24 = arith.divf %22, %23 : vector<2x1xf32>
      %c0_13 = arith.constant 0 : index
      %c0_14 = arith.constant 0 : index
      %25 = vector.load %arg5[%c0_13, %c0_14] : memref<2x1xf32, #tpu.memory_space<vmem>>, vector<2x1xf32>
      tpu.vector_store %arg5[%c0_13, %c0_14], %24 {strides = array<i32>} : memref<2x1xf32, #tpu.memory_space<vmem>>, vector<2x1xf32>,
    } else {
    }
    return
  }
  func.func @transform_0(%arg0: i32, %arg1: i32) -> (i32, i32) {
    %c0_i32 = arith.constant 0 : i32
    return %arg0, %arg1 : i32, i32
  }
  func.func @transform_1(%arg0: i32, %arg1: i32) -> (i32, i32) {
    %c0_i32 = arith.constant 0 : i32
    %c0_i32_0 = arith.constant 0 : i32
    %c0_i32_1 = arith.constant 0 : i32
    return %c0_i32, %c0_i32_0 : i32, i32
  }
  func.func @transform_2(%arg0: i32, %arg1: i32) -> i32 {
    %c0_i32 = arith.constant 0 : i32
    %c0_i32_0 = arith.constant 0 : i32
    return %c0_i32 : i32
  }
  func.func @transform_3(%arg0: i32, %arg1: i32) -> (i32, i32) {
    %c0_i32 = arith.constant 0 : i32
    %c0_i32_0 = arith.constant 0 : i32
    return %arg0, %c0_i32 : i32, i32
  }
}

</mosaic_0001>

<llo_original>
// kernel: tpu_custom_call.1
$region0: #{tpu_custom_call.1}
  #allocation0 [shape = 'u32[]', space=smem, size = 0x4, offset = 0x4, fixed_abs, tag = 'smem constant byte address 0x4 - core index']
  #allocation1 [shape = 'u32[144,128]{1,0:T(1,128)}', space=vmem, size = 0x12000, scoped, tag = 'internal scratch']
  #allocation2 [shape = 'f32[2,1]{1,0:T(2,128)}', space=vmem, size = 0x400, scoped, tag = 'scratch operand']
  #allocation3 [shape = 'f32[1]{0:T(128)S(6)}', space=smem, size = 0x200, scoped, tag = 'scoped memory for tpu_custom_call.1']
  %s0 = inlined_call_operand.hbm [shape: f32[2,81920], index: 0, kind: input, shape index: {}]
  %s1 = inlined_call_operand.hbm [shape: f32[1,81920], index: 1, kind: input, shape index: {}]
  %s2 = inlined_call_operand.<no memory space> [shape: f32[1], index: 2, kind: input, shape index: {}]
  %s3 = inlined_call_operand.vmem [shape: f32[2,1], index: 3, kind: output, shape index: {}]
  %s4 = sld [smem:[#allocation0]]
  $region38: #{tpu_custom_call.1} parent=0
    _
  %s6 = ssub.s32 1, %s4
  %s7 = scalar_select 0, %s6, %s4
  %8 = sst [smem:[#allocation3]] %s2
  $region1: #{tpu_custom_call.1} parent=0
    #allocation4 [shape = 'u8[655360]{0}', space=vmem, size = 0xa0000, scoped, tag = 'input window, operand 0, single buffered']
    #allocation5 [shape = 's32[1]{0}', space=sflag, size = 0x4, scoped, tag = 'scoped memory for tpu_custom_call.1']
    #allocation6 [shape = 'u8[327680]{0}', space=vmem, size = 0x50000, scoped, tag = 'input window, operand 1, single buffered']
    #allocation7 [shape = 's32[1]{0}', space=sflag, size = 0x4, scoped, tag = 'scoped memory for tpu_custom_call.1']
    %9 = vsyncpa [#allocation5], 0
    %10 = vsyncpa [#allocation7], 0
    // Predicated region
    $region2: #{tpu_custom_call.1} parent=1 // pred_check
      _
    $region3: #{tpu_custom_call.1} parent=1 // pred_check_branch
      %12 = sbr.rel (0) target = $region5
    $region4: #{tpu_custom_call.1} parent=1 // pred_region
      %s14 = ssub.s32 20480, 20480
      %15 = vsyncadd [#allocation5], %s14
      %s17 = sshll.u32 [#allocation4], 4
      %s18 = int_to_ptr.vmem [resolvable:$true] %s17
      %20 = dma.hbm_to_vmem [thread:$0]  %s0, 20480, %s18, [#allocation5]
    $region5: #{tpu_custom_call.1} parent=1 // pred_fallthru
      _
    // Predicated region
    $region6: #{tpu_custom_call.1} parent=1 // pred_check
      _
    $region7: #{tpu_custom_call.1} parent=1 // pred_check_branch
      %22 = sbr.rel (0) target = $region9
    $region8: #{tpu_custom_call.1} parent=1 // pred_region
      %s24 = ssub.s32 10240, 10240
      %25 = vsyncadd [#allocation7], %s24
      %s27 = sshll.u32 [#allocation6], 4
      %s28 = int_to_ptr.vmem [resolvable:$true] %s27
      %30 = dma.hbm_to_vmem [thread:$0]  %s1, 10240, %s28, [#allocation7]
    $region9: #{tpu_custom_call.1} parent=1 // pred_fallthru
      _
    // Predicated region
    $region10: #{tpu_custom_call.1} parent=1 // pred_check
      _
    $region11: #{tpu_custom_call.1} parent=1 // pred_check_branch
      %32 = sbr.rel (0) target = $region13
    $region12: #{tpu_custom_call.1} parent=1 // pred_region
      _
    $region13: #{tpu_custom_call.1} parent=1 // pred_fallthru
      _
    // Predicated region
    $region14: #{tpu_custom_call.1} parent=1 // pred_check
      _
    $region15: #{tpu_custom_call.1} parent=1 // pred_check_branch
      %34 = sbr.rel (0) target = $region17
    $region16: #{tpu_custom_call.1} parent=1 // pred_region
      %35 = dma.done [#allocation5], 20480
    $region17: #{tpu_custom_call.1} parent=1 // pred_fallthru
      _
    // Predicated region
    $region18: #{tpu_custom_call.1} parent=1 // pred_check
      _
    $region19: #{tpu_custom_call.1} parent=1 // pred_check_branch
      %37 = sbr.rel (0) target = $region21
    $region20: #{tpu_custom_call.1} parent=1 // pred_region
      %38 = dma.done [#allocation7], 10240
    $region21: #{tpu_custom_call.1} parent=1 // pred_fallthru
      _
    %p39 = scmp.eq.s32.totalorder 0, 0
    // Predicated region
    $region22: #{tpu_custom_call.1} parent=1 // pred_check
      %p40 = pneg %p39
    $region23: #{tpu_custom_call.1} parent=1 // pred_check_branch
      %42 = sbr.rel (%p40) target = $region25
    $region24: #{tpu_custom_call.1} parent=1 // pred_region
      %vm43 = vcmask 1024
      %44 = vst.msk [vmem:[#allocation2] sm:$0x3] %vm43, 0.0
    $region25: #{tpu_custom_call.1} parent=1 // pred_fallthru
      _
    %s45 = smul.u32 0, 640
    %s46 = scalar_lea.vmem [#allocation6], %s45
    %v47 = vld [vmem:[%s46] sm:$0xff]
    %v48 = vld [vmem:[%s46 + $0x8] sm:$0xff]
    %v49 = vld [vmem:[%s46 + $0x10] sm:$0xff]
    %v50 = vld [vmem:[%s46 + $0x18] sm:$0xff]
    %v51 = vld [vmem:[%s46 + $0x20] sm:$0xff]
    %v52 = vld [vmem:[%s46 + $0x28] sm:$0xff]
    %v53 = vld [vmem:[%s46 + $0x30] sm:$0xff]
    %v54 = vld [vmem:[%s46 + $0x38] sm:$0xff]
    %v55 = vld [vmem:[%s46 + $0x40] sm:$0xff]
    %v56 = vld [vmem:[%s46 + $0x48] sm:$0xff]
    %v57 = vld [vmem:[%s46 + $0x50] sm:$0xff]
    %v58 = vld [vmem:[%s46 + $0x58] sm:$0xff]
    %v59 = vld [vmem:[%s46 + $0x60] sm:$0xff]
    %v60 = vld [vmem:[%s46 + $0x68] sm:$0xff]
    %v61 = vld [vmem:[%s46 + $0x70] sm:$0xff]
    %v62 = vld [vmem:[%s46 + $0x78] sm:$0xff]
    %v63 = vld [vmem:[%s46 + $0x80] sm:$0xff]
    %v64 = vld [vmem:[%s46 + $0x88] sm:$0xff]
    %v65 = vld [vmem:[%s46 + $0x90] sm:$0xff]
    %v66 = vld [vmem:[%s46 + $0x98] sm:$0xff]
    %v67 = vld [vmem:[%s46 + $0xa0] sm:$0xff]
    %v68 = vld [vmem:[%s46 + $0xa8] sm:$0xff]
    %v69 = vld [vmem:[%s46 + $0xb0] sm:$0xff]
    %v70 = vld [vmem:[%s46 + $0xb8] sm:$0xff]
    %v71 = vld [vmem:[%s46 + $0xc0] sm:$0xff]
    %v72 = vld [vmem:[%s46 + $0xc8] sm:$0xff]
    %v73 = vld [vmem:[%s46 + $0xd0] sm:$0xff]
    %v74 = vld [vmem:[%s46 + $0xd8] sm:$0xff]
    %v75 = vld [vmem:[%s46 + $0xe0] sm:$0xff]
    %v76 = vld [vmem:[%s46 + $0xe8] sm:$0xff]
    %v77 = vld [vmem:[%s46 + $0xf0] sm:$0xff]
    %v78 = vld [vmem:[%s46 + $0xf8] sm:$0xff]
    %v79 = vld [vmem:[%s46 + $0x100] sm:$0xff]
    %v80 = vld [vmem:[%s46 + $0x108] sm:$0xff]
    %v81 = vld [vmem:[%s46 + $0x110] sm:$0xff]
    %v82 = vld [vmem:[%s46 + $0x118] sm:$0xff]
    %v83 = vld [vmem:[%s46 + $0x120] sm:$0xff]
    %v84 = vld [vmem:[%s46 + $0x128] sm:$0xff]
    %v85 = vld [vmem:[%s46 + $0x130] sm:$0xff]
    %v86 = vld [vmem:[%s46 + $0x138] sm:$0xff]
    %v87 = vld [vmem:[%s46 + $0x140] sm:$0xff]
    %v88 = vld [vmem:[%s46 + $0x148] sm:$0xff]
    %v89 = vld [vmem:[%s46 + $0x150] sm:$0xff]
    %v90 = vld [vmem:[%s46 + $0x158] sm:$0xff]
    %v91 = vld [vmem:[%s46 + $0x160] sm:$0xff]
    %v92 = vld [vmem:[%s46 + $0x168] sm:$0xff]
    %v93 = vld [vmem:[%s46 + $0x170] sm:$0xff]
    %v94 = vld [vmem:[%s46 + $0x178] sm:$0xff]
    %v95 = vld [vmem:[%s46 + $0x180] sm:$0xff]
    %v96 = vld [vmem:[%s46 + $0x188] sm:$0xff]
    %v97 = vld [vmem:[%s46 + $0x190] sm:$0xff]
    %v98 = vld [vmem:[%s46 + $0x198] sm:$0xff]
    %v99 = vld [vmem:[%s46 + $0x1a0] sm:$0xff]
    %v100 = vld [vmem:[%s46 + $0x1a8] sm:$0xff]
    %v101 = vld [vmem:[%s46 + $0x1b0] sm:$0xff]
    %v102 = vld [vmem:[%s46 + $0x1b8] sm:$0xff]
    %v103 = vld [vmem:[%s46 + $0x1c0] sm:$0xff]
    %v104 = vld [vmem:[%s46 + $0x1c8] sm:$0xff]
    %v105 = vld [vmem:[%s46 + $0x1d0] sm:$0xff]
    %v106 = vld [vmem:[%s46 + $0x1d8] sm:$0xff]
    %v107 = vld [vmem:[%s46 + $0x1e0] sm:$0xff]
    %v108 = vld [vmem:[%s46 + $0x1e8] sm:$0xff]
    %v109 = vld [vmem:[%s46 + $0x1f0] sm:$0xff]
    %v110 = vld [vmem:[%s46 + $0x1f8] sm:$0xff]
    %v111 = vld [vmem:[%s46 + $0x200] sm:$0xff]
    %v112 = vld [vmem:[%s46 + $0x208] sm:$0xff]
    %v113 = vld [vmem:[%s46 + $0x210] sm:$0xff]
    %v114 = vld [vmem:[%s46 + $0x218] sm:$0xff]
    %v115 = vld [vmem:[%s46 + $0x220] sm:$0xff]
    %v116 = vld [vmem:[%s46 + $0x228] sm:$0xff]
    %v117 = vld [vmem:[%s46 + $0x230] sm:$0xff]
    %v118 = vld [vmem:[%s46 + $0x238] sm:$0xff]
    %v119 = vld [vmem:[%s46 + $0x240] sm:$0xff]
    %v120 = vld [vmem:[%s46 + $0x248] sm:$0xff]
    %v121 = vld [vmem:[%s46 + $0x250] sm:$0xff]
    %v122 = vld [vmem:[%s46 + $0x258] sm:$0xff]
    %v123 = vld [vmem:[%s46 + $0x260] sm:$0xff]
    %v124 = vld [vmem:[%s46 + $0x268] sm:$0xff]
    %v125 = vld [vmem:[%s46 + $0x270] sm:$0xff]
    %v126 = vld [vmem:[%s46 + $0x278] sm:$0xff]
    %v127 = vld [vmem:[#allocation4] sm:$0xff]
    %v128 = vld [vmem:[#allocation4 + $0x8] sm:$0xff]
    %v129 = vld [vmem:[#allocation4 + $0x10] sm:$0xff]
    %v130 = vld [vmem:[#allocation4 + $0x18] sm:$0xff]
    %v131 = vld [vmem:[#allocation4 + $0x20] sm:$0xff]
    %v132 = vld [vmem:[#allocation4 + $0x28] sm:$0xff]
    %v133 = vld [vmem:[#allocation4 + $0x30] sm:$0xff]
    %v134 = vld [vmem:[#allocation4 + $0x38] sm:$0xff]
    %v135 = vld [vmem:[#allocation4 + $0x40] sm:$0xff]
    %v136 = vld [vmem:[#allocation4 + $0x48] sm:$0xff]
    %v137 = vld [vmem:[#allocation4 + $0x50] sm:$0xff]
    %v138 = vld [vmem:[#allocation4 + $0x58] sm:$0xff]
    %v139 = vld [vmem:[#allocation4 + $0x60] sm:$0xff]
    %v140 = vld [vmem:[#allocation4 + $0x68] sm:$0xff]
    %v141 = vld [vmem:[#allocation4 + $0x70] sm:$0xff]
    %v142 = vld [vmem:[#allocation4 + $0x78] sm:$0xff]
    %v143 = vld [vmem:[#allocation4 + $0x80] sm:$0xff]
    %v144 = vld [vmem:[#allocation4 + $0x88] sm:$0xff]
    %v145 = vld [vmem:[#allocation4 + $0x90] sm:$0xff]
    %v146 = vld [vmem:[#allocation4 + $0x98] sm:$0xff]
    %v147 = vld [vmem:[#allocation4 + $0xa0] sm:$0xff]
    %v148 = vld [vmem:[#allocation4 + $0xa8] sm:$0xff]
    %v149 = vld [vmem:[#allocation4 + $0xb0] sm:$0xff]
    %v150 = vld [vmem:[#allocation4 + $0xb8] sm:$0xff]
    %v151 = vld [vmem:[#allocation4 + $0xc0] sm:$0xff]
    %v152 = vld [vmem:[#allocation4 + $0xc8] sm:$0xff]
    %v153 = vld [vmem:[#allocation4 + $0xd0] sm:$0xff]
    %v154 = vld [vmem:[#allocation4 + $0xd8] sm:$0xff]
    %v155 = vld [vmem:[#allocation4 + $0xe0] sm:$0xff]
    %v156 = vld [vmem:[#allocation4 + $0xe8] sm:$0xff]
    %v157 = vld [vmem:[#allocation4 + $0xf0] sm:$0xff]
    %v158 = vld [vmem:[#allocation4 + $0xf8] sm:$0xff]
    %v159 = vld [vmem:[#allocation4 + $0x100] sm:$0xff]
    %v160 = vld [vmem:[#allocation4 + $0x108] sm:$0xff]
    %v161 = vld [vmem:[#allocation4 + $0x110] sm:$0xff]
    %v162 = vld [vmem:[#allocation4 + $0x118] sm:$0xff]
    %v163 = vld [vmem:[#allocation4 + $0x120] sm:$0xff]
    %v164 = vld [vmem:[#allocation4 + $0x128] sm:$0xff]
    %v165 = vld [vmem:[#allocation4 + $0x130] sm:$0xff]
    %v166 = vld [vmem:[#allocation4 + $0x138] sm:$0xff]
    %v167 = vld [vmem:[#allocation4 + $0x140] sm:$0xff]
    %v168 = vld [vmem:[#allocation4 + $0x148] sm:$0xff]
    %v169 = vld [vmem:[#allocation4 + $0x150] sm:$0xff]
    %v170 = vld [vmem:[#allocation4 + $0x158] sm:$0xff]
    %v171 = vld [vmem:[#allocation4 + $0x160] sm:$0xff]
    %v172 = vld [vmem:[#allocation4 + $0x168] sm:$0xff]
    %v173 = vld [vmem:[#allocation4 + $0x170] sm:$0xff]
    %v174 = vld [vmem:[#allocation4 + $0x178] sm:$0xff]
    %v175 = vld [vmem:[#allocation4 + $0x180] sm:$0xff]
    %v176 = vld [vmem:[#allocation4 + $0x188] sm:$0xff]
    %v177 = vld [vmem:[#allocation4 + $0x190] sm:$0xff]
    %v178 = vld [vmem:[#allocation4 + $0x198] sm:$0xff]
    %v179 = vld [vmem:[#allocation4 + $0x1a0] sm:$0xff]
    %v180 = vld [vmem:[#allocation4 + $0x1a8] sm:$0xff]
    %v181 = vld [vmem:[#allocation4 + $0x1b0] sm:$0xff]
    %v182 = vld [vmem:[#allocation4 + $0x1b8] sm:$0xff]
    %v183 = vld [vmem:[#allocation4 + $0x1c0] sm:$0xff]
    %v184 = vld [vmem:[#allocation4 + $0x1c8] sm:$0xff]
    %v185 = vld [vmem:[#allocation4 + $0x1d0] sm:$0xff]
    %v186 = vld [vmem:[#allocation4 + $0x1d8] sm:$0xff]
    %v187 = vld [vmem:[#allocation4 + $0x1e0] sm:$0xff]
    %v188 = vld [vmem:[#allocation4 + $0x1e8] sm:$0xff]
    %v189 = vld [vmem:[#allocation4 + $0x1f0] sm:$0xff]
    %v190 = vld [vmem:[#allocation4 + $0x1f8] sm:$0xff]
    %v191 = vld [vmem:[#allocation4 + $0x200] sm:$0xff]
    %v192 = vld [vmem:[#allocation4 + $0x208] sm:$0xff]
    %v193 = vld [vmem:[#allocation4 + $0x210] sm:$0xff]
    %v194 = vld [vmem:[#allocation4 + $0x218] sm:$0xff]
    %v195 = vld [vmem:[#allocation4 + $0x220] sm:$0xff]
    %v196 = vld [vmem:[#allocation4 + $0x228] sm:$0xff]
    %v197 = vld [vmem:[#allocation4 + $0x230] sm:$0xff]
    %v198 = vld [vmem:[#allocation4 + $0x238] sm:$0xff]
    %v199 = vld [vmem:[#allocation4 + $0x240] sm:$0xff]
    %v200 = vld [vmem:[#allocation4 + $0x248] sm:$0xff]
    %v201 = vld [vmem:[#allocation4 + $0x250] sm:$0xff]
    %v202 = vld [vmem:[#allocation4 + $0x258] sm:$0xff]
    %v203 = vld [vmem:[#allocation4 + $0x260] sm:$0xff]
    %v204 = vld [vmem:[#allocation4 + $0x268] sm:$0xff]
    %v205 = vld [vmem:[#allocation4 + $0x270] sm:$0xff]
    %v206 = vld [vmem:[#allocation4 + $0x278] sm:$0xff]
    %v207 = vld [vmem:[#allocation4 + $0x280] sm:$0xff]
    %v208 = vld [vmem:[#allocation4 + $0x288] sm:$0xff]
    %v209 = vld [vmem:[#allocation4 + $0x290] sm:$0xff]
    %v210 = vld [vmem:[#allocation4 + $0x298] sm:$0xff]
    %v211 = vld [vmem:[#allocation4 + $0x2a0] sm:$0xff]
    %v212 = vld [vmem:[#allocation4 + $0x2a8] sm:$0xff]
    %v213 = vld [vmem:[#allocation4 + $0x2b0] sm:$0xff]
    %v214 = vld [vmem:[#allocation4 + $0x2b8] sm:$0xff]
    %v215 = vld [vmem:[#allocation4 + $0x2c0] sm:$0xff]
    %v216 = vld [vmem:[#allocation4 + $0x2c8] sm:$0xff]
    %v217 = vld [vmem:[#allocation4 + $0x2d0] sm:$0xff]
    %v218 = vld [vmem:[#allocation4 + $0x2d8] sm:$0xff]
    %v219 = vld [vmem:[#allocation4 + $0x2e0] sm:$0xff]
    %v220 = vld [vmem:[#allocation4 + $0x2e8] sm:$0xff]
    %v221 = vld [vmem:[#allocation4 + $0x2f0] sm:$0xff]
    %v222 = vld [vmem:[#allocation4 + $0x2f8] sm:$0xff]
    %v223 = vld [vmem:[#allocation4 + $0x300] sm:$0xff]
    %v224 = vld [vmem:[#allocation4 + $0x308] sm:$0xff]
    %v225 = vld [vmem:[#allocation4 + $0x310] sm:$0xff]
    %v226 = vld [vmem:[#allocation4 + $0x318] sm:$0xff]
    %v227 = vld [vmem:[#allocation4 + $0x320] sm:$0xff]
    %v228 = vld [vmem:[#allocation4 + $0x328] sm:$0xff]
    %v229 = vld [vmem:[#allocation4 + $0x330] sm:$0xff]
    %v230 = vld [vmem:[#allocation4 + $0x338] sm:$0xff]
    %v231 = vld [vmem:[#allocation4 + $0x340] sm:$0xff]
    %v232 = vld [vmem:[#allocation4 + $0x348] sm:$0xff]
    %v233 = vld [vmem:[#allocation4 + $0x350] sm:$0xff]
    %v234 = vld [vmem:[#allocation4 + $0x358] sm:$0xff]
    %v235 = vld [vmem:[#allocation4 + $0x360] sm:$0xff]
    %v236 = vld [vmem:[#allocation4 + $0x368] sm:$0xff]
    %v237 = vld [vmem:[#allocation4 + $0x370] sm:$0xff]
    %v238 = vld [vmem:[#allocation4 + $0x378] sm:$0xff]
    %v239 = vld [vmem:[#allocation4 + $0x380] sm:$0xff]
    %v240 = vld [vmem:[#allocation4 + $0x388] sm:$0xff]
    %v241 = vld [vmem:[#allocation4 + $0x390] sm:$0xff]
    %v242 = vld [vmem:[#allocation4 + $0x398] sm:$0xff]
    %v243 = vld [vmem:[#allocation4 + $0x3a0] sm:$0xff]
    %v244 = vld [vmem:[#allocation4 + $0x3a8] sm:$0xff]
    %v245 = vld [vmem:[#allocation4 + $0x3b0] sm:$0xff]
    %v246 = vld [vmem:[#allocation4 + $0x3b8] sm:$0xff]
    %v247 = vld [vmem:[#allocation4 + $0x3c0] sm:$0xff]
    %v248 = vld [vmem:[#allocation4 + $0x3c8] sm:$0xff]
    %v249 = vld [vmem:[#allocation4 + $0x3d0] sm:$0xff]
    %v250 = vld [vmem:[#allocation4 + $0x3d8] sm:$0xff]
    %v251 = vld [vmem:[#allocation4 + $0x3e0] sm:$0xff]
    %v252 = vld [vmem:[#allocation4 + $0x3e8] sm:$0xff]
    %v253 = vld [vmem:[#allocation4 + $0x3f0] sm:$0xff]
    %v254 = vld [vmem:[#allocation4 + $0x3f8] sm:$0xff]
    %v255 = vld [vmem:[#allocation4 + $0x400] sm:$0xff]
    %v256 = vld [vmem:[#allocation4 + $0x408] sm:$0xff]
    %v257 = vld [vmem:[#allocation4 + $0x410] sm:$0xff]
    %v258 = vld [vmem:[#allocation4 + $0x418] sm:$0xff]
    %v259 = vld [vmem:[#allocation4 + $0x420] sm:$0xff]
    %v260 = vld [vmem:[#allocation4 + $0x428] sm:$0xff]
    %v261 = vld [vmem:[#allocation4 + $0x430] sm:$0xff]
    %v262 = vld [vmem:[#allocation4 + $0x438] sm:$0xff]
    %v263 = vld [vmem:[#allocation4 + $0x440] sm:$0xff]
    %v264 = vld [vmem:[#allocation4 + $0x448] sm:$0xff]
    %v265 = vld [vmem:[#allocation4 + $0x450] sm:$0xff]
    %v266 = vld [vmem:[#allocation4 + $0x458] sm:$0xff]
    %v267 = vld [vmem:[#allocation4 + $0x460] sm:$0xff]
    %v268 = vld [vmem:[#allocation4 + $0x468] sm:$0xff]
    %v269 = vld [vmem:[#allocation4 + $0x470] sm:$0xff]
    %v270 = vld [vmem:[#allocation4 + $0x478] sm:$0xff]
    %v271 = vld [vmem:[#allocation4 + $0x480] sm:$0xff]
    %v272 = vld [vmem:[#allocation4 + $0x488] sm:$0xff]
    %v273 = vld [vmem:[#allocation4 + $0x490] sm:$0xff]
    %v274 = vld [vmem:[#allocation4 + $0x498] sm:$0xff]
    %v275 = vld [vmem:[#allocation4 + $0x4a0] sm:$0xff]
    %v276 = vld [vmem:[#allocation4 + $0x4a8] sm:$0xff]
    %v277 = vld [vmem:[#allocation4 + $0x4b0] sm:$0xff]
    %v278 = vld [vmem:[#allocation4 + $0x4b8] sm:$0xff]
    %v279 = vld [vmem:[#allocation4 + $0x4c0] sm:$0xff]
    %v280 = vld [vmem:[#allocation4 + $0x4c8] sm:$0xff]
    %v281 = vld [vmem:[#allocation4 + $0x4d0] sm:$0xff]
    %v282 = vld [vmem:[#allocation4 + $0x4d8] sm:$0xff]
    %v283 = vld [vmem:[#allocation4 + $0x4e0] sm:$0xff]
    %v284 = vld [vmem:[#allocation4 + $0x4e8] sm:$0xff]
    %v285 = vld [vmem:[#allocation4 + $0x4f0] sm:$0xff]
    %v286 = vld [vmem:[#allocation4 + $0x4f8] sm:$0xff]
    %v287 = vld [vmem:[#allocation2] sm:$0x3]
    %v368 = vlaneseq
    %v369 = vshrl.u32 %v368, 7
    %v370 = vsub.s32 0, %v369
    %v371 = vrot.slane %v47, %v370
    %v372 = vlaneseq
    %v373 = vshrl.u32 %v372, 7
    %v374 = vsub.s32 1, %v373
    %v375 = vrot.slane %v47, %v374
    %v376 = vlaneseq
    %v377 = vshrl.u32 %v376, 7
    %v378 = vsub.s32 2, %v377
    %v379 = vrot.slane %v47, %v378
    %v380 = vlaneseq
    %v381 = vshrl.u32 %v380, 7
    %v382 = vsub.s32 3, %v381
    %v383 = vrot.slane %v47, %v382
    %v384 = vlaneseq
    %v385 = vshrl.u32 %v384, 7
    %v386 = vsub.s32 4, %v385
    %v387 = vrot.slane %v47, %v386
    %v388 = vlaneseq
    %v389 = vshrl.u32 %v388, 7
    %v390 = vsub.s32 5, %v389
    %v391 = vrot.slane %v47, %v390
    %v392 = vlaneseq
    %v393 = vshrl.u32 %v392, 7
    %v394 = vsub.s32 6, %v393
    %v395 = vrot.slane %v47, %v394
    %v396 = vlaneseq
    %v397 = vshrl.u32 %v396, 7
    %v398 = vsub.s32 7, %v397
    %v399 = vrot.slane %v47, %v398
    %v400 = vlaneseq
    %v401 = vshrl.u32 %v400, 7
    %v402 = vsub.s32 0, %v401
    %v403 = vrot.slane %v48, %v402
    %v404 = vlaneseq
    %v405 = vshrl.u32 %v404, 7
    %v406 = vsub.s32 1, %v405
    %v407 = vrot.slane %v48, %v406
    %v408 = vlaneseq
    %v409 = vshrl.u32 %v408, 7
    %v410 = vsub.s32 2, %v409
    %v411 = vrot.slane %v48, %v410
    %v412 = vlaneseq
    %v413 = vshrl.u32 %v412, 7
    %v414 = vsub.s32 3, %v413
    %v415 = vrot.slane %v48, %v414
    %v416 = vlaneseq
    %v417 = vshrl.u32 %v416, 7
    %v418 = vsub.s32 4, %v417
    %v419 = vrot.slane %v48, %v418
    %v420 = vlaneseq
    %v421 = vshrl.u32 %v420, 7
    %v422 = vsub.s32 5, %v421
    %v423 = vrot.slane %v48, %v422
    %v424 = vlaneseq
    %v425 = vshrl.u32 %v424, 7
    %v426 = vsub.s32 6, %v425
    %v427 = vrot.slane %v48, %v426
    %v428 = vlaneseq
    %v429 = vshrl.u32 %v428, 7
    %v430 = vsub.s32 7, %v429
    %v431 = vrot.slane %v48, %v430
    %v432 = vlaneseq
    %v433 = vshrl.u32 %v432, 7
    %v434 = vsub.s32 0, %v433
    %v435 = vrot.slane %v49, %v434
    %v436 = vlaneseq
    %v437 = vshrl.u32 %v436, 7
    %v438 = vsub.s32 1, %v437
    %v439 = vrot.slane %v49, %v438
    %v440 = vlaneseq
    %v441 = vshrl.u32 %v440, 7
    %v442 = vsub.s32 2, %v441
    %v443 = vrot.slane %v49, %v442
    %v444 = vlaneseq
    %v445 = vshrl.u32 %v444, 7
    %v446 = vsub.s32 3, %v445
    %v447 = vrot.slane %v49, %v446
    %v448 = vlaneseq
    %v449 = vshrl.u32 %v448, 7
    %v450 = vsub.s32 4, %v449
    %v451 = vrot.slane %v49, %v450
    %v452 = vlaneseq
    %v453 = vshrl.u32 %v452, 7
    %v454 = vsub.s32 5, %v453
    %v455 = vrot.slane %v49, %v454
    %v456 = vlaneseq
    %v457 = vshrl.u32 %v456, 7
    %v458 = vsub.s32 6, %v457
    %v459 = vrot.slane %v49, %v458
    %v460 = vlaneseq
    %v461 = vshrl.u32 %v460, 7
    %v462 = vsub.s32 7, %v461
    %v463 = vrot.slane %v49, %v462
    %v464 = vlaneseq
    %v465 = vshrl.u32 %v464, 7
    %v466 = vsub.s32 0, %v465
    %v467 = vrot.slane %v50, %v466
    %v468 = vlaneseq
    %v469 = vshrl.u32 %v468, 7
    %v470 = vsub.s32 1, %v469
    %v471 = vrot.slane %v50, %v470
    %v472 = vlaneseq
    %v473 = vshrl.u32 %v472, 7
    %v474 = vsub.s32 2, %v473
    %v475 = vrot.slane %v50, %v474
    %v476 = vlaneseq
    %v477 = vshrl.u32 %v476, 7
    %v478 = vsub.s32 3, %v477
    %v479 = vrot.slane %v50, %v478
    %v480 = vlaneseq
    %v481 = vshrl.u32 %v480, 7
    %v482 = vsub.s32 4, %v481
    %v483 = vrot.slane %v50, %v482
    %v484 = vlaneseq
    %v485 = vshrl.u32 %v484, 7
    %v486 = vsub.s32 5, %v485
    %v487 = vrot.slane %v50, %v486
    %v488 = vlaneseq
    %v489 = vshrl.u32 %v488, 7
    %v490 = vsub.s32 6, %v489
    %v491 = vrot.slane %v50, %v490
    %v492 = vlaneseq
    %v493 = vshrl.u32 %v492, 7
    %v494 = vsub.s32 7, %v493
    %v495 = vrot.slane %v50, %v494
    %v496 = vlaneseq
    %v497 = vshrl.u32 %v496, 7
    %v498 = vsub.s32 0, %v497
    %v499 = vrot.slane %v51, %v498
    %v500 = vlaneseq
    %v501 = vshrl.u32 %v500, 7
    %v502 = vsub.s32 1, %v501
    %v503 = vrot.slane %v51, %v502
    %v504 = vlaneseq
    %v505 = vshrl.u32 %v504, 7
    %v506 = vsub.s32 2, %v505
    %v507 = vrot.slane %v51, %v506
    %v508 = vlaneseq
    %v509 = vshrl.u32 %v508, 7
    %v510 = vsub.s32 3, %v509
    %v511 = vrot.slane %v51, %v510
    %v512 = vlaneseq
    %v513 = vshrl.u32 %v512, 7
    %v514 = vsub.s32 4, %v513
    %v515 = vrot.slane %v51, %v514
    %v516 = vlaneseq
    %v517 = vshrl.u32 %v516, 7
    %v518 = vsub.s32 5, %v517
    %v519 = vrot.slane %v51, %v518
    %v520 = vlaneseq
    %v521 = vshrl.u32 %v520, 7
    %v522 = vsub.s32 6, %v521
    %v523 = vrot.slane %v51, %v522
    %v524 = vlaneseq
    %v525 = vshrl.u32 %v524, 7
    %v526 = vsub.s32 7, %v525
    %v527 = vrot.slane %v51, %v526
    %v528 = vlaneseq
    %v529 = vshrl.u32 %v528, 7
    %v530 = vsub.s32 0, %v529
    %v531 = vrot.slane %v52, %v530
    %v532 = vlaneseq
    %v533 = vshrl.u32 %v532, 7
    %v534 = vsub.s32 1, %v533
    %v535 = vrot.slane %v52, %v534
    %v536 = vlaneseq
    %v537 = vshrl.u32 %v536, 7
    %v538 = vsub.s32 2, %v537
    %v539 = vrot.slane %v52, %v538
    %v540 = vlaneseq
    %v541 = vshrl.u32 %v540, 7
    %v542 = vsub.s32 3, %v541
    %v543 = vrot.slane %v52, %v542
    %v544 = vlaneseq
    %v545 = vshrl.u32 %v544, 7
    %v546 = vsub.s32 4, %v545
    %v547 = vrot.slane %v52, %v546
    %v548 = vlaneseq
    %v549 = vshrl.u32 %v548, 7
    %v550 = vsub.s32 5, %v549
    %v551 = vrot.slane %v52, %v550
    %v552 = vlaneseq
    %v553 = vshrl.u32 %v552, 7
    %v554 = vsub.s32 6, %v553
    %v555 = vrot.slane %v52, %v554
    %v556 = vlaneseq
    %v557 = vshrl.u32 %v556, 7
    %v558 = vsub.s32 7, %v557
    %v559 = vrot.slane %v52, %v558
    %v560 = vlaneseq
    %v561 = vshrl.u32 %v560, 7
    %v562 = vsub.s32 0, %v561
    %v563 = vrot.slane %v53, %v562
    %v564 = vlaneseq
    %v565 = vshrl.u32 %v564, 7
    %v566 = vsub.s32 1, %v565
    %v567 = vrot.slane %v53, %v566
    %v568 = vlaneseq
    %v569 = vshrl.u32 %v568, 7
    %v570 = vsub.s32 2, %v569
    %v571 = vrot.slane %v53, %v570
    %v572 = vlaneseq
    %v573 = vshrl.u32 %v572, 7
    %v574 = vsub.s32 3, %v573
    %v575 = vrot.slane %v53, %v574
    %v576 = vlaneseq
    %v577 = vshrl.u32 %v576, 7
    %v578 = vsub.s32 4, %v577
    %v579 = vrot.slane %v53, %v578
    %v580 = vlaneseq
    %v581 = vshrl.u32 %v580, 7
    %v582 = vsub.s32 5, %v581
    %v583 = vrot.slane %v53, %v582
    %v584 = vlaneseq
    %v585 = vshrl.u32 %v584, 7
    %v586 = vsub.s32 6, %v585
    %v587 = vrot.slane %v53, %v586
    %v588 = vlaneseq
    %v589 = vshrl.u32 %v588, 7
    %v590 = vsub.s32 7, %v589
    %v591 = vrot.slane %v53, %v590
    %v592 = vlaneseq
    %v593 = vshrl.u32 %v592, 7
    %v594 = vsub.s32 0, %v593
    %v595 = vrot.slane %v54, %v594
    %v596 = vlaneseq
    %v597 = vshrl.u32 %v596, 7
    %v598 = vsub.s32 1, %v597
    %v599 = vrot.slane %v54, %v598
    %v600 = vlaneseq
    %v601 = vshrl.u32 %v600, 7
    %v602 = vsub.s32 2, %v601
    %v603 = vrot.slane %v54, %v602
    %v604 = vlaneseq
    %v605 = vshrl.u32 %v604, 7
    %v606 = vsub.s32 3, %v605
    %v607 = vrot.slane %v54, %v606
    %v608 = vlaneseq
    %v609 = vshrl.u32 %v608, 7
    %v610 = vsub.s32 4, %v609
    %v611 = vrot.slane %v54, %v610
    %v612 = vlaneseq
    %v613 = vshrl.u32 %v612, 7
    %v614 = vsub.s32 5, %v613
    %v615 = vrot.slane %v54, %v614
    %v616 = vlaneseq
    %v617 = vshrl.u32 %v616, 7
    %v618 = vsub.s32 6, %v617
    %v619 = vrot.slane %v54, %v618
    %v620 = vlaneseq
    %v621 = vshrl.u32 %v620, 7
    %v622 = vsub.s32 7, %v621
    %v623 = vrot.slane %v54, %v622
    %v624 = vlaneseq
    %v625 = vshrl.u32 %v624, 7
    %v626 = vsub.s32 0, %v625
    %v627 = vrot.slane %v55, %v626
    %v628 = vlaneseq
    %v629 = vshrl.u32 %v628, 7
    %v630 = vsub.s32 1, %v629
    %v631 = vrot.slane %v55, %v630
    %v632 = vlaneseq
    %v633 = vshrl.u32 %v632, 7
    %v634 = vsub.s32 2, %v633
    %v635 = vrot.slane %v55, %v634
    %v636 = vlaneseq
    %v637 = vshrl.u32 %v636, 7
    %v638 = vsub.s32 3, %v637
    %v639 = vrot.slane %v55, %v638
    %v640 = vlaneseq
    %v641 = vshrl.u32 %v640, 7
    %v642 = vsub.s32 4, %v641
    %v643 = vrot.slane %v55, %v642
    %v644 = vlaneseq
    %v645 = vshrl.u32 %v644, 7
    %v646 = vsub.s32 5, %v645
    %v647 = vrot.slane %v55, %v646
    %v648 = vlaneseq
    %v649 = vshrl.u32 %v648, 7
    %v650 = vsub.s32 6, %v649
    %v651 = vrot.slane %v55, %v650
    %v652 = vlaneseq
    %v653 = vshrl.u32 %v652, 7
    %v654 = vsub.s32 7, %v653
    %v655 = vrot.slane %v55, %v654
    %v656 = vlaneseq
    %v657 = vshrl.u32 %v656, 7
    %v658 = vsub.s32 0, %v657
    %v659 = vrot.slane %v56, %v658
    %v660 = vlaneseq
    %v661 = vshrl.u32 %v660, 7
    %v662 = vsub.s32 1, %v661
    %v663 = vrot.slane %v56, %v662
    %v664 = vlaneseq
    %v665 = vshrl.u32 %v664, 7
    %v666 = vsub.s32 2, %v665
    %v667 = vrot.slane %v56, %v666
    %v668 = vlaneseq
    %v669 = vshrl.u32 %v668, 7
    %v670 = vsub.s32 3, %v669
    %v671 = vrot.slane %v56, %v670
    %v672 = vlaneseq
    %v673 = vshrl.u32 %v672, 7
    %v674 = vsub.s32 4, %v673
    %v675 = vrot.slane %v56, %v674
    %v676 = vlaneseq
    %v677 = vshrl.u32 %v676, 7
    %v678 = vsub.s32 5, %v677
    %v679 = vrot.slane %v56, %v678
    %v680 = vlaneseq
    %v681 = vshrl.u32 %v680, 7
    %v682 = vsub.s32 6, %v681
    %v683 = vrot.slane %v56, %v682
    %v684 = vlaneseq
    %v685 = vshrl.u32 %v684, 7
    %v686 = vsub.s32 7, %v685
    %v687 = vrot.slane %v56, %v686
    %v688 = vlaneseq
    %v689 = vshrl.u32 %v688, 7
    %v690 = vsub.s32 0, %v689
    %v691 = vrot.slane %v57, %v690
    %v692 = vlaneseq
    %v693 = vshrl.u32 %v692, 7
    %v694 = vsub.s32 1, %v693
    %v695 = vrot.slane %v57, %v694
    %v696 = vlaneseq
    %v697 = vshrl.u32 %v696, 7
    %v698 = vsub.s32 2, %v697
    %v699 = vrot.slane %v57, %v698
    %v700 = vlaneseq
    %v701 = vshrl.u32 %v700, 7
    %v702 = vsub.s32 3, %v701
    %v703 = vrot.slane %v57, %v702
    %v704 = vlaneseq
    %v705 = vshrl.u32 %v704, 7
    %v706 = vsub.s32 4, %v705
    %v707 = vrot.slane %v57, %v706
    %v708 = vlaneseq
    %v709 = vshrl.u32 %v708, 7
    %v710 = vsub.s32 5, %v709
    %v711 = vrot.slane %v57, %v710
    %v712 = vlaneseq
    %v713 = vshrl.u32 %v712, 7
    %v714 = vsub.s32 6, %v713
    %v715 = vrot.slane %v57, %v714
    %v716 = vlaneseq
    %v717 = vshrl.u32 %v716, 7
    %v718 = vsub.s32 7, %v717
    %v719 = vrot.slane %v57, %v718
    %v720 = vlaneseq
    %v721 = vshrl.u32 %v720, 7
    %v722 = vsub.s32 0, %v721
    %v723 = vrot.slane %v58, %v722
    %v724 = vlaneseq
    %v725 = vshrl.u32 %v724, 7
    %v726 = vsub.s32 1, %v725
    %v727 = vrot.slane %v58, %v726
    %v728 = vlaneseq
    %v729 = vshrl.u32 %v728, 7
    %v730 = vsub.s32 2, %v729
    %v731 = vrot.slane %v58, %v730
    %v732 = vlaneseq
    %v733 = vshrl.u32 %v732, 7
    %v734 = vsub.s32 3, %v733
    %v735 = vrot.slane %v58, %v734
    %v736 = vlaneseq
    %v737 = vshrl.u32 %v736, 7
    %v738 = vsub.s32 4, %v737
    %v739 = vrot.slane %v58, %v738
    %v740 = vlaneseq
    %v741 = vshrl.u32 %v740, 7
    %v742 = vsub.s32 5, %v741
    %v743 = vrot.slane %v58, %v742
    %v744 = vlaneseq
    %v745 = vshrl.u32 %v744, 7
    %v746 = vsub.s32 6, %v745
    %v747 = vrot.slane %v58, %v746
    %v748 = vlaneseq
    %v749 = vshrl.u32 %v748, 7
    %v750 = vsub.s32 7, %v749
    %v751 = vrot.slane %v58, %v750
    %v752 = vlaneseq
    %v753 = vshrl.u32 %v752, 7
    %v754 = vsub.s32 0, %v753
    %v755 = vrot.slane %v59, %v754
    %v756 = vlaneseq
    %v757 = vshrl.u32 %v756, 7
    %v758 = vsub.s32 1, %v757
    %v759 = vrot.slane %v59, %v758
    %v760 = vlaneseq
    %v761 = vshrl.u32 %v760, 7
    %v762 = vsub.s32 2, %v761
    %v763 = vrot.slane %v59, %v762
    %v764 = vlaneseq
    %v765 = vshrl.u32 %v764, 7
    %v766 = vsub.s32 3, %v765
    %v767 = vrot.slane %v59, %v766
    %v768 = vlaneseq
    %v769 = vshrl.u32 %v768, 7
    %v770 = vsub.s32 4, %v769
    %v771 = vrot.slane %v59, %v770
    %v772 = vlaneseq
    %v773 = vshrl.u32 %v772, 7
    %v774 = vsub.s32 5, %v773
    %v775 = vrot.slane %v59, %v774
    %v776 = vlaneseq
    %v777 = vshrl.u32 %v776, 7
    %v778 = vsub.s32 6, %v777
    %v779 = vrot.slane %v59, %v778
    %v780 = vlaneseq
    %v781 = vshrl.u32 %v780, 7
    %v782 = vsub.s32 7, %v781
    %v783 = vrot.slane %v59, %v782
    %v784 = vlaneseq
    %v785 = vshrl.u32 %v784, 7
    %v786 = vsub.s32 0, %v785
    %v787 = vrot.slane %v60, %v786
    %v788 = vlaneseq
    %v789 = vshrl.u32 %v788, 7
    %v790 = vsub.s32 1, %v789
    %v791 = vrot.slane %v60, %v790
    %v792 = vlaneseq
    %v793 = vshrl.u32 %v792, 7
    %v794 = vsub.s32 2, %v793
    %v795 = vrot.slane %v60, %v794
    %v796 = vlaneseq
    %v797 = vshrl.u32 %v796, 7
    %v798 = vsub.s32 3, %v797
    %v799 = vrot.slane %v60, %v798
    %v800 = vlaneseq
    %v801 = vshrl.u32 %v800, 7
    %v802 = vsub.s32 4, %v801
    %v803 = vrot.slane %v60, %v802
    %v804 = vlaneseq
    %v805 = vshrl.u32 %v804, 7
    %v806 = vsub.s32 5, %v805
    %v807 = vrot.slane %v60, %v806
    %v808 = vlaneseq
    %v809 = vshrl.u32 %v808, 7
    %v810 = vsub.s32 6, %v809
    %v811 = vrot.slane %v60, %v810
    %v812 = vlaneseq
    %v813 = vshrl.u32 %v812, 7
    %v814 = vsub.s32 7, %v813
    %v815 = vrot.slane %v60, %v814
    %v816 = vlaneseq
    %v817 = vshrl.u32 %v816, 7
    %v818 = vsub.s32 0, %v817
    %v819 = vrot.slane %v61, %v818
    %v820 = vlaneseq
    %v821 = vshrl.u32 %v820, 7
    %v822 = vsub.s32 1, %v821
    %v823 = vrot.slane %v61, %v822
    %v824 = vlaneseq
    %v825 = vshrl.u32 %v824, 7
    %v826 = vsub.s32 2, %v825
    %v827 = vrot.slane %v61, %v826
    %v828 = vlaneseq
    %v829 = vshrl.u32 %v828, 7
    %v830 = vsub.s32 3, %v829
    %v831 = vrot.slane %v61, %v830
    %v832 = vlaneseq
    %v833 = vshrl.u32 %v832, 7
    %v834 = vsub.s32 4, %v833
    %v835 = vrot.slane %v61, %v834
    %v836 = vlaneseq
    %v837 = vshrl.u32 %v836, 7
    %v838 = vsub.s32 5, %v837
    %v839 = vrot.slane %v61, %v838
    %v840 = vlaneseq
    %v841 = vshrl.u32 %v840, 7
    %v842 = vsub.s32 6, %v841
    %v843 = vrot.slane %v61, %v842
    %v844 = vlaneseq
    %v845 = vshrl.u32 %v844, 7
    %v846 = vsub.s32 7, %v845
    %v847 = vrot.slane %v61, %v846
    %v848 = vlaneseq
    %v849 = vshrl.u32 %v848, 7
    %v850 = vsub.s32 0, %v849
    %v851 = vrot.slane %v62, %v850
    %v852 = vlaneseq
    %v853 = vshrl.u32 %v852, 7
    %v854 = vsub.s32 1, %v853
    %v855 = vrot.slane %v62, %v854
    %v856 = vlaneseq
    %v857 = vshrl.u32 %v856, 7
    %v858 = vsub.s32 2, %v857
    %v859 = vrot.slane %v62, %v858
    %v860 = vlaneseq
    %v861 = vshrl.u32 %v860, 7
    %v862 = vsub.s32 3, %v861
    %v863 = vrot.slane %v62, %v862
    %v864 = vlaneseq
    %v865 = vshrl.u32 %v864, 7
    %v866 = vsub.s32 4, %v865
    %v867 = vrot.slane %v62, %v866
    %v868 = vlaneseq
    %v869 = vshrl.u32 %v868, 7
    %v870 = vsub.s32 5, %v869
    %v871 = vrot.slane %v62, %v870
    %v872 = vlaneseq
    %v873 = vshrl.u32 %v872, 7
    %v874 = vsub.s32 6, %v873
    %v875 = vrot.slane %v62, %v874
    %v876 = vlaneseq
    %v877 = vshrl.u32 %v876, 7
    %v878 = vsub.s32 7, %v877
    %v879 = vrot.slane %v62, %v878
    %v880 = vlaneseq
    %v881 = vshrl.u32 %v880, 7
    %v882 = vsub.s32 0, %v881
    %v883 = vrot.slane %v63, %v882
    %v884 = vlaneseq
    %v885 = vshrl.u32 %v884, 7
    %v886 = vsub.s32 1, %v885
    %v887 = vrot.slane %v63, %v886
    %v888 = vlaneseq
    %v889 = vshrl.u32 %v888, 7
    %v890 = vsub.s32 2, %v889
    %v891 = vrot.slane %v63, %v890
    %v892 = vlaneseq
    %v893 = vshrl.u32 %v892, 7
    %v894 = vsub.s32 3, %v893
    %v895 = vrot.slane %v63, %v894
    %v896 = vlaneseq
    %v897 = vshrl.u32 %v896, 7
    %v898 = vsub.s32 4, %v897
    %v899 = vrot.slane %v63, %v898
    %v900 = vlaneseq
    %v901 = vshrl.u32 %v900, 7
    %v902 = vsub.s32 5, %v901
    %v903 = vrot.slane %v63, %v902
    %v904 = vlaneseq
    %v905 = vshrl.u32 %v904, 7
    %v906 = vsub.s32 6, %v905
    %v907 = vrot.slane %v63, %v906
    %v908 = vlaneseq
    %v909 = vshrl.u32 %v908, 7
    %v910 = vsub.s32 7, %v909
    %v911 = vrot.slane %v63, %v910
    %v912 = vlaneseq
    %v913 = vshrl.u32 %v912, 7
    %v914 = vsub.s32 0, %v913
    %v915 = vrot.slane %v64, %v914
    %v916 = vlaneseq
    %v917 = vshrl.u32 %v916, 7
    %v918 = vsub.s32 1, %v917
    %v919 = vrot.slane %v64, %v918
    %v920 = vlaneseq
    %v921 = vshrl.u32 %v920, 7
    %v922 = vsub.s32 2, %v921
    %v923 = vrot.slane %v64, %v922
    %v924 = vlaneseq
    %v925 = vshrl.u32 %v924, 7
    %v926 = vsub.s32 3, %v925
    %v927 = vrot.slane %v64, %v926
    %v928 = vlaneseq
    %v929 = vshrl.u32 %v928, 7
    %v930 = vsub.s32 4, %v929
    %v931 = vrot.slane %v64, %v930
    %v932 = vlaneseq
    %v933 = vshrl.u32 %v932, 7
    %v934 = vsub.s32 5, %v933
    %v935 = vrot.slane %v64, %v934
    %v936 = vlaneseq
    %v937 = vshrl.u32 %v936, 7
    %v938 = vsub.s32 6, %v937
    %v939 = vrot.slane %v64, %v938
    %v940 = vlaneseq
    %v941 = vshrl.u32 %v940, 7
    %v942 = vsub.s32 7, %v941
    %v943 = vrot.slane %v64, %v942
    %v944 = vlaneseq
    %v945 = vshrl.u32 %v944, 7
    %v946 = vsub.s32 0, %v945
    %v947 = vrot.slane %v65, %v946
    %v948 = vlaneseq
    %v949 = vshrl.u32 %v948, 7
    %v950 = vsub.s32 1, %v949
    %v951 = vrot.slane %v65, %v950
    %v952 = vlaneseq
    %v953 = vshrl.u32 %v952, 7
    %v954 = vsub.s32 2, %v953
    %v955 = vrot.slane %v65, %v954
    %v956 = vlaneseq
    %v957 = vshrl.u32 %v956, 7
    %v958 = vsub.s32 3, %v957
    %v959 = vrot.slane %v65, %v958
    %v960 = vlaneseq
    %v961 = vshrl.u32 %v960, 7
    %v962 = vsub.s32 4, %v961
    %v963 = vrot.slane %v65, %v962
    %v964 = vlaneseq
    %v965 = vshrl.u32 %v964, 7
    %v966 = vsub.s32 5, %v965
    %v967 = vrot.slane %v65, %v966
    %v968 = vlaneseq
    %v969 = vshrl.u32 %v968, 7
    %v970 = vsub.s32 6, %v969
    %v971 = vrot.slane %v65, %v970
    %v972 = vlaneseq
    %v973 = vshrl.u32 %v972, 7
    %v974 = vsub.s32 7, %v973
    %v975 = vrot.slane %v65, %v974
    %v976 = vlaneseq
    %v977 = vshrl.u32 %v976, 7
    %v978 = vsub.s32 0, %v977
    %v979 = vrot.slane %v66, %v978
    %v980 = vlaneseq
    %v981 = vshrl.u32 %v980, 7
    %v982 = vsub.s32 1, %v981
    %v983 = vrot.slane %v66, %v982
    %v984 = vlaneseq
    %v985 = vshrl.u32 %v984, 7
    %v986 = vsub.s32 2, %v985
    %v987 = vrot.slane %v66, %v986
    %v988 = vlaneseq
    %v989 = vshrl.u32 %v988, 7
    %v990 = vsub.s32 3, %v989
    %v991 = vrot.slane %v66, %v990
    %v992 = vlaneseq
    %v993 = vshrl.u32 %v992, 7
    %v994 = vsub.s32 4, %v993
    %v995 = vrot.slane %v66, %v994
    %v996 = vlaneseq
    %v997 = vshrl.u32 %v996, 7
    %v998 = vsub.s32 5, %v997
    %v999 = vrot.slane %v66, %v998
    %v1000 = vlaneseq
    %v1001 = vshrl.u32 %v1000, 7
    %v1002 = vsub.s32 6, %v1001
    %v1003 = vrot.slane %v66, %v1002
    %v1004 = vlaneseq
    %v1005 = vshrl.u32 %v1004, 7
    %v1006 = vsub.s32 7, %v1005
    %v1007 = vrot.slane %v66, %v1006
    %v1008 = vlaneseq
    %v1009 = vshrl.u32 %v1008, 7
    %v1010 = vsub.s32 0, %v1009
    %v1011 = vrot.slane %v67, %v1010
    %v1012 = vlaneseq
    %v1013 = vshrl.u32 %v1012, 7
    %v1014 = vsub.s32 1, %v1013
    %v1015 = vrot.slane %v67, %v1014
    %v1016 = vlaneseq
    %v1017 = vshrl.u32 %v1016, 7
    %v1018 = vsub.s32 2, %v1017
    %v1019 = vrot.slane %v67, %v1018
    %v1020 = vlaneseq
    %v1021 = vshrl.u32 %v1020, 7
    %v1022 = vsub.s32 3, %v1021
    %v1023 = vrot.slane %v67, %v1022
    %v1024 = vlaneseq
    %v1025 = vshrl.u32 %v1024, 7
    %v1026 = vsub.s32 4, %v1025
    %v1027 = vrot.slane %v67, %v1026
    %v1028 = vlaneseq
    %v1029 = vshrl.u32 %v1028, 7
    %v1030 = vsub.s32 5, %v1029
    %v1031 = vrot.slane %v67, %v1030
    %v1032 = vlaneseq
    %v1033 = vshrl.u32 %v1032, 7
    %v1034 = vsub.s32 6, %v1033
    %v1035 = vrot.slane %v67, %v1034
    %v1036 = vlaneseq
    %v1037 = vshrl.u32 %v1036, 7
    %v1038 = vsub.s32 7, %v1037
    %v1039 = vrot.slane %v67, %v1038
    %v1040 = vlaneseq
    %v1041 = vshrl.u32 %v1040, 7
    %v1042 = vsub.s32 0, %v1041
    %v1043 = vrot.slane %v68, %v1042
    %v1044 = vlaneseq
    %v1045 = vshrl.u32 %v1044, 7
    %v1046 = vsub.s32 1, %v1045
    %v1047 = vrot.slane %v68, %v1046
    %v1048 = vlaneseq
    %v1049 = vshrl.u32 %v1048, 7
    %v1050 = vsub.s32 2, %v1049
    %v1051 = vrot.slane %v68, %v1050
    %v1052 = vlaneseq
    %v1053 = vshrl.u32 %v1052, 7
    %v1054 = vsub.s32 3, %v1053
    %v1055 = vrot.slane %v68, %v1054
    %v1056 = vlaneseq
    %v1057 = vshrl.u32 %v1056, 7
    %v1058 = vsub.s32 4, %v1057
    %v1059 = vrot.slane %v68, %v1058
    %v1060 = vlaneseq
    %v1061 = vshrl.u32 %v1060, 7
    %v1062 = vsub.s32 5, %v1061
    %v1063 = vrot.slane %v68, %v1062
    %v1064 = vlaneseq
    %v1065 = vshrl.u32 %v1064, 7
    %v1066 = vsub.s32 6, %v1065
    %v1067 = vrot.slane %v68, %v1066
    %v1068 = vlaneseq
    %v1069 = vshrl.u32 %v1068, 7
    %v1070 = vsub.s32 7, %v1069
    %v1071 = vrot.slane %v68, %v1070
    %v1072 = vlaneseq
    %v1073 = vshrl.u32 %v1072, 7
    %v1074 = vsub.s32 0, %v1073
    %v1075 = vrot.slane %v69, %v1074
    %v1076 = vlaneseq
    %v1077 = vshrl.u32 %v1076, 7
    %v1078 = vsub.s32 1, %v1077
    %v1079 = vrot.slane %v69, %v1078
    %v1080 = vlaneseq
    %v1081 = vshrl.u32 %v1080, 7
    %v1082 = vsub.s32 2, %v1081
    %v1083 = vrot.slane %v69, %v1082
    %v1084 = vlaneseq
    %v1085 = vshrl.u32 %v1084, 7
    %v1086 = vsub.s32 3, %v1085
    %v1087 = vrot.slane %v69, %v1086
    %v1088 = vlaneseq
    %v1089 = vshrl.u32 %v1088, 7
    %v1090 = vsub.s32 4, %v1089
    %v1091 = vrot.slane %v69, %v1090
    %v1092 = vlaneseq
    %v1093 = vshrl.u32 %v1092, 7
    %v1094 = vsub.s32 5, %v1093
    %v1095 = vrot.slane %v69, %v1094
    %v1096 = vlaneseq
    %v1097 = vshrl.u32 %v1096, 7
    %v1098 = vsub.s32 6, %v1097
    %v1099 = vrot.slane %v69, %v1098
    %v1100 = vlaneseq
    %v1101 = vshrl.u32 %v1100, 7
    %v1102 = vsub.s32 7, %v1101
    %v1103 = vrot.slane %v69, %v1102
    %v1104 = vlaneseq
    %v1105 = vshrl.u32 %v1104, 7
    %v1106 = vsub.s32 0, %v1105
    %v1107 = vrot.slane %v70, %v1106
    %v1108 = vlaneseq
    %v1109 = vshrl.u32 %v1108, 7
    %v1110 = vsub.s32 1, %v1109
    %v1111 = vrot.slane %v70, %v1110
    %v1112 = vlaneseq
    %v1113 = vshrl.u32 %v1112, 7
    %v1114 = vsub.s32 2, %v1113
    %v1115 = vrot.slane %v70, %v1114
    %v1116 = vlaneseq
    %v1117 = vshrl.u32 %v1116, 7
    %v1118 = vsub.s32 3, %v1117
    %v1119 = vrot.slane %v70, %v1118
    %v1120 = vlaneseq
    %v1121 = vshrl.u32 %v1120, 7
    %v1122 = vsub.s32 4, %v1121
    %v1123 = vrot.slane %v70, %v1122
    %v1124 = vlaneseq
    %v1125 = vshrl.u32 %v1124, 7
    %v1126 = vsub.s32 5, %v1125
    %v1127 = vrot.slane %v70, %v1126
    %v1128 = vlaneseq
    %v1129 = vshrl.u32 %v1128, 7
    %v1130 = vsub.s32 6, %v1129
    %v1131 = vrot.slane %v70, %v1130
    %v1132 = vlaneseq
    %v1133 = vshrl.u32 %v1132, 7
    %v1134 = vsub.s32 7, %v1133
    %v1135 = vrot.slane %v70, %v1134
    %v1136 = vlaneseq
    %v1137 = vshrl.u32 %v1136, 7
    %v1138 = vsub.s32 0, %v1137
    %v1139 = vrot.slane %v71, %v1138
    %v1140 = vlaneseq
    %v1141 = vshrl.u32 %v1140, 7
    %v1142 = vsub.s32 1, %v1141
    %v1143 = vrot.slane %v71, %v1142
    %v1144 = vlaneseq
    %v1145 = vshrl.u32 %v1144, 7
    %v1146 = vsub.s32 2, %v1145
    %v1147 = vrot.slane %v71, %v1146
    %v1148 = vlaneseq
    %v1149 = vshrl.u32 %v1148, 7
    %v1150 = vsub.s32 3, %v1149
    %v1151 = vrot.slane %v71, %v1150
    %v1152 = vlaneseq
    %v1153 = vshrl.u32 %v1152, 7
    %v1154 = vsub.s32 4, %v1153
    %v1155 = vrot.slane %v71, %v1154
    %v1156 = vlaneseq
    %v1157 = vshrl.u32 %v1156, 7
    %v1158 = vsub.s32 5, %v1157
    %v1159 = vrot.slane %v71, %v1158
    %v1160 = vlaneseq
    %v1161 = vshrl.u32 %v1160, 7
    %v1162 = vsub.s32 6, %v1161
    %v1163 = vrot.slane %v71, %v1162
    %v1164 = vlaneseq
    %v1165 = vshrl.u32 %v1164, 7
    %v1166 = vsub.s32 7, %v1165
    %v1167 = vrot.slane %v71, %v1166
    %v1168 = vlaneseq
    %v1169 = vshrl.u32 %v1168, 7
    %v1170 = vsub.s32 0, %v1169
    %v1171 = vrot.slane %v72, %v1170
    %v1172 = vlaneseq
    %v1173 = vshrl.u32 %v1172, 7
    %v1174 = vsub.s32 1, %v1173
    %v1175 = vrot.slane %v72, %v1174
    %v1176 = vlaneseq
    %v1177 = vshrl.u32 %v1176, 7
    %v1178 = vsub.s32 2, %v1177
    %v1179 = vrot.slane %v72, %v1178
    %v1180 = vlaneseq
    %v1181 = vshrl.u32 %v1180, 7
    %v1182 = vsub.s32 3, %v1181
    %v1183 = vrot.slane %v72, %v1182
    %v1184 = vlaneseq
    %v1185 = vshrl.u32 %v1184, 7
    %v1186 = vsub.s32 4, %v1185
    %v1187 = vrot.slane %v72, %v1186
    %v1188 = vlaneseq
    %v1189 = vshrl.u32 %v1188, 7
    %v1190 = vsub.s32 5, %v1189
    %v1191 = vrot.slane %v72, %v1190
    %v1192 = vlaneseq
    %v1193 = vshrl.u32 %v1192, 7
    %v1194 = vsub.s32 6, %v1193
    %v1195 = vrot.slane %v72, %v1194
    %v1196 = vlaneseq
    %v1197 = vshrl.u32 %v1196, 7
    %v1198 = vsub.s32 7, %v1197
    %v1199 = vrot.slane %v72, %v1198
    %v1200 = vlaneseq
    %v1201 = vshrl.u32 %v1200, 7
    %v1202 = vsub.s32 0, %v1201
    %v1203 = vrot.slane %v73, %v1202
    %v1204 = vlaneseq
    %v1205 = vshrl.u32 %v1204, 7
    %v1206 = vsub.s32 1, %v1205
    %v1207 = vrot.slane %v73, %v1206
    %v1208 = vlaneseq
    %v1209 = vshrl.u32 %v1208, 7
    %v1210 = vsub.s32 2, %v1209
    %v1211 = vrot.slane %v73, %v1210
    %v1212 = vlaneseq
    %v1213 = vshrl.u32 %v1212, 7
    %v1214 = vsub.s32 3, %v1213
    %v1215 = vrot.slane %v73, %v1214
    %v1216 = vlaneseq
    %v1217 = vshrl.u32 %v1216, 7
    %v1218 = vsub.s32 4, %v1217
    %v1219 = vrot.slane %v73, %v1218
    %v1220 = vlaneseq
    %v1221 = vshrl.u32 %v1220, 7
    %v1222 = vsub.s32 5, %v1221
    %v1223 = vrot.slane %v73, %v1222
    %v1224 = vlaneseq
    %v1225 = vshrl.u32 %v1224, 7
    %v1226 = vsub.s32 6, %v1225
    %v1227 = vrot.slane %v73, %v1226
    %v1228 = vlaneseq
    %v1229 = vshrl.u32 %v1228, 7
    %v1230 = vsub.s32 7, %v1229
    %v1231 = vrot.slane %v73, %v1230
    %v1232 = vlaneseq
    %v1233 = vshrl.u32 %v1232, 7
    %v1234 = vsub.s32 0, %v1233
    %v1235 = vrot.slane %v74, %v1234
    %v1236 = vlaneseq
    %v1237 = vshrl.u32 %v1236, 7
    %v1238 = vsub.s32 1, %v1237
    %v1239 = vrot.slane %v74, %v1238
    %v1240 = vlaneseq
    %v1241 = vshrl.u32 %v1240, 7
    %v1242 = vsub.s32 2, %v1241
    %v1243 = vrot.slane %v74, %v1242
    %v1244 = vlaneseq
    %v1245 = vshrl.u32 %v1244, 7
    %v1246 = vsub.s32 3, %v1245
    %v1247 = vrot.slane %v74, %v1246
    %v1248 = vlaneseq
    %v1249 = vshrl.u32 %v1248, 7
    %v1250 = vsub.s32 4, %v1249
    %v1251 = vrot.slane %v74, %v1250
    %v1252 = vlaneseq
    %v1253 = vshrl.u32 %v1252, 7
    %v1254 = vsub.s32 5, %v1253
    %v1255 = vrot.slane %v74, %v1254
    %v1256 = vlaneseq
    %v1257 = vshrl.u32 %v1256, 7
    %v1258 = vsub.s32 6, %v1257
    %v1259 = vrot.slane %v74, %v1258
    %v1260 = vlaneseq
    %v1261 = vshrl.u32 %v1260, 7
    %v1262 = vsub.s32 7, %v1261
    %v1263 = vrot.slane %v74, %v1262
    %v1264 = vlaneseq
    %v1265 = vshrl.u32 %v1264, 7
    %v1266 = vsub.s32 0, %v1265
    %v1267 = vrot.slane %v75, %v1266
    %v1268 = vlaneseq
    %v1269 = vshrl.u32 %v1268, 7
    %v1270 = vsub.s32 1, %v1269
    %v1271 = vrot.slane %v75, %v1270
    %v1272 = vlaneseq
    %v1273 = vshrl.u32 %v1272, 7
    %v1274 = vsub.s32 2, %v1273
    %v1275 = vrot.slane %v75, %v1274
    %v1276 = vlaneseq
    %v1277 = vshrl.u32 %v1276, 7
    %v1278 = vsub.s32 3, %v1277
    %v1279 = vrot.slane %v75, %v1278
    %v1280 = vlaneseq
    %v1281 = vshrl.u32 %v1280, 7
    %v1282 = vsub.s32 4, %v1281
    %v1283 = vrot.slane %v75, %v1282
    %v1284 = vlaneseq
    %v1285 = vshrl.u32 %v1284, 7
    %v1286 = vsub.s32 5, %v1285
    %v1287 = vrot.slane %v75, %v1286
    %v1288 = vlaneseq
    %v1289 = vshrl.u32 %v1288, 7
    %v1290 = vsub.s32 6, %v1289
    %v1291 = vrot.slane %v75, %v1290
    %v1292 = vlaneseq
    %v1293 = vshrl.u32 %v1292, 7
    %v1294 = vsub.s32 7, %v1293
    %v1295 = vrot.slane %v75, %v1294
    %v1296 = vlaneseq
    %v1297 = vshrl.u32 %v1296, 7
    %v1298 = vsub.s32 0, %v1297
    %v1299 = vrot.slane %v76, %v1298
    %v1300 = vlaneseq
    %v1301 = vshrl.u32 %v1300, 7
    %v1302 = vsub.s32 1, %v1301
    %v1303 = vrot.slane %v76, %v1302
    %v1304 = vlaneseq
    %v1305 = vshrl.u32 %v1304, 7
    %v1306 = vsub.s32 2, %v1305
    %v1307 = vrot.slane %v76, %v1306
    %v1308 = vlaneseq
    %v1309 = vshrl.u32 %v1308, 7
    %v1310 = vsub.s32 3, %v1309
    %v1311 = vrot.slane %v76, %v1310
    %v1312 = vlaneseq
    %v1313 = vshrl.u32 %v1312, 7
    %v1314 = vsub.s32 4, %v1313
    %v1315 = vrot.slane %v76, %v1314
    %v1316 = vlaneseq
    %v1317 = vshrl.u32 %v1316, 7
    %v1318 = vsub.s32 5, %v1317
    %v1319 = vrot.slane %v76, %v1318
    %v1320 = vlaneseq
    %v1321 = vshrl.u32 %v1320, 7
    %v1322 = vsub.s32 6, %v1321
    %v1323 = vrot.slane %v76, %v1322
    %v1324 = vlaneseq
    %v1325 = vshrl.u32 %v1324, 7
    %v1326 = vsub.s32 7, %v1325
    %v1327 = vrot.slane %v76, %v1326
    %v1328 = vlaneseq
    %v1329 = vshrl.u32 %v1328, 7
    %v1330 = vsub.s32 0, %v1329
    %v1331 = vrot.slane %v77, %v1330
    %v1332 = vlaneseq
    %v1333 = vshrl.u32 %v1332, 7
    %v1334 = vsub.s32 1, %v1333
    %v1335 = vrot.slane %v77, %v1334
    %v1336 = vlaneseq
    %v1337 = vshrl.u32 %v1336, 7
    %v1338 = vsub.s32 2, %v1337
    %v1339 = vrot.slane %v77, %v1338
    %v1340 = vlaneseq
    %v1341 = vshrl.u32 %v1340, 7
    %v1342 = vsub.s32 3, %v1341
    %v1343 = vrot.slane %v77, %v1342
    %v1344 = vlaneseq
    %v1345 = vshrl.u32 %v1344, 7
    %v1346 = vsub.s32 4, %v1345
    %v1347 = vrot.slane %v77, %v1346
    %v1348 = vlaneseq
    %v1349 = vshrl.u32 %v1348, 7
    %v1350 = vsub.s32 5, %v1349
    %v1351 = vrot.slane %v77, %v1350
    %v1352 = vlaneseq
    %v1353 = vshrl.u32 %v1352, 7
    %v1354 = vsub.s32 6, %v1353
    %v1355 = vrot.slane %v77, %v1354
    %v1356 = vlaneseq
    %v1357 = vshrl.u32 %v1356, 7
    %v1358 = vsub.s32 7, %v1357
    %v1359 = vrot.slane %v77, %v1358
    %v1360 = vlaneseq
    %v1361 = vshrl.u32 %v1360, 7
    %v1362 = vsub.s32 0, %v1361
    %v1363 = vrot.slane %v78, %v1362
    %v1364 = vlaneseq
    %v1365 = vshrl.u32 %v1364, 7
    %v1366 = vsub.s32 1, %v1365
    %v1367 = vrot.slane %v78, %v1366
    %v1368 = vlaneseq
    %v1369 = vshrl.u32 %v1368, 7
    %v1370 = vsub.s32 2, %v1369
    %v1371 = vrot.slane %v78, %v1370
    %v1372 = vlaneseq
    %v1373 = vshrl.u32 %v1372, 7
    %v1374 = vsub.s32 3, %v1373
    %v1375 = vrot.slane %v78, %v1374
    %v1376 = vlaneseq
    %v1377 = vshrl.u32 %v1376, 7
    %v1378 = vsub.s32 4, %v1377
    %v1379 = vrot.slane %v78, %v1378
    %v1380 = vlaneseq
    %v1381 = vshrl.u32 %v1380, 7
    %v1382 = vsub.s32 5, %v1381
    %v1383 = vrot.slane %v78, %v1382
    %v1384 = vlaneseq
    %v1385 = vshrl.u32 %v1384, 7
    %v1386 = vsub.s32 6, %v1385
    %v1387 = vrot.slane %v78, %v1386
    %v1388 = vlaneseq
    %v1389 = vshrl.u32 %v1388, 7
    %v1390 = vsub.s32 7, %v1389
    %v1391 = vrot.slane %v78, %v1390
    %v1392 = vlaneseq
    %v1393 = vshrl.u32 %v1392, 7
    %v1394 = vsub.s32 0, %v1393
    %v1395 = vrot.slane %v79, %v1394
    %v1396 = vlaneseq
    %v1397 = vshrl.u32 %v1396, 7
    %v1398 = vsub.s32 1, %v1397
    %v1399 = vrot.slane %v79, %v1398
    %v1400 = vlaneseq
    %v1401 = vshrl.u32 %v1400, 7
    %v1402 = vsub.s32 2, %v1401
    %v1403 = vrot.slane %v79, %v1402
    %v1404 = vlaneseq
    %v1405 = vshrl.u32 %v1404, 7
    %v1406 = vsub.s32 3, %v1405
    %v1407 = vrot.slane %v79, %v1406
    %v1408 = vlaneseq
    %v1409 = vshrl.u32 %v1408, 7
    %v1410 = vsub.s32 4, %v1409
    %v1411 = vrot.slane %v79, %v1410
    %v1412 = vlaneseq
    %v1413 = vshrl.u32 %v1412, 7
    %v1414 = vsub.s32 5, %v1413
    %v1415 = vrot.slane %v79, %v1414
    %v1416 = vlaneseq
    %v1417 = vshrl.u32 %v1416, 7
    %v1418 = vsub.s32 6, %v1417
    %v1419 = vrot.slane %v79, %v1418
    %v1420 = vlaneseq
    %v1421 = vshrl.u32 %v1420, 7
    %v1422 = vsub.s32 7, %v1421
    %v1423 = vrot.slane %v79, %v1422
    %v1424 = vlaneseq
    %v1425 = vshrl.u32 %v1424, 7
    %v1426 = vsub.s32 0, %v1425
    %v1427 = vrot.slane %v80, %v1426
    %v1428 = vlaneseq
    %v1429 = vshrl.u32 %v1428, 7
    %v1430 = vsub.s32 1, %v1429
    %v1431 = vrot.slane %v80, %v1430
    %v1432 = vlaneseq
    %v1433 = vshrl.u32 %v1432, 7
    %v1434 = vsub.s32 2, %v1433
    %v1435 = vrot.slane %v80, %v1434
    %v1436 = vlaneseq
    %v1437 = vshrl.u32 %v1436, 7
    %v1438 = vsub.s32 3, %v1437
    %v1439 = vrot.slane %v80, %v1438
    %v1440 = vlaneseq
    %v1441 = vshrl.u32 %v1440, 7
    %v1442 = vsub.s32 4, %v1441
    %v1443 = vrot.slane %v80, %v1442
    %v1444 = vlaneseq
    %v1445 = vshrl.u32 %v1444, 7
    %v1446 = vsub.s32 5, %v1445
    %v1447 = vrot.slane %v80, %v1446
    %v1448 = vlaneseq
    %v1449 = vshrl.u32 %v1448, 7
    %v1450 = vsub.s32 6, %v1449
    %v1451 = vrot.slane %v80, %v1450
    %v1452 = vlaneseq
    %v1453 = vshrl.u32 %v1452, 7
    %v1454 = vsub.s32 7, %v1453
    %v1455 = vrot.slane %v80, %v1454
    %v1456 = vlaneseq
    %v1457 = vshrl.u32 %v1456, 7
    %v1458 = vsub.s32 0, %v1457
    %v1459 = vrot.slane %v81, %v1458
    %v1460 = vlaneseq
    %v1461 = vshrl.u32 %v1460, 7
    %v1462 = vsub.s32 1, %v1461
    %v1463 = vrot.slane %v81, %v1462
    %v1464 = vlaneseq
    %v1465 = vshrl.u32 %v1464, 7
    %v1466 = vsub.s32 2, %v1465
    %v1467 = vrot.slane %v81, %v1466
    %v1468 = vlaneseq
    %v1469 = vshrl.u32 %v1468, 7
    %v1470 = vsub.s32 3, %v1469
    %v1471 = vrot.slane %v81, %v1470
    %v1472 = vlaneseq
    %v1473 = vshrl.u32 %v1472, 7
    %v1474 = vsub.s32 4, %v1473
    %v1475 = vrot.slane %v81, %v1474
    %v1476 = vlaneseq
    %v1477 = vshrl.u32 %v1476, 7
    %v1478 = vsub.s32 5, %v1477
    %v1479 = vrot.slane %v81, %v1478
    %v1480 = vlaneseq
    %v1481 = vshrl.u32 %v1480, 7
    %v1482 = vsub.s32 6, %v1481
    %v1483 = vrot.slane %v81, %v1482
    %v1484 = vlaneseq
    %v1485 = vshrl.u32 %v1484, 7
    %v1486 = vsub.s32 7, %v1485
    %v1487 = vrot.slane %v81, %v1486
    %v1488 = vlaneseq
    %v1489 = vshrl.u32 %v1488, 7
    %v1490 = vsub.s32 0, %v1489
    %v1491 = vrot.slane %v82, %v1490
    %v1492 = vlaneseq
    %v1493 = vshrl.u32 %v1492, 7
    %v1494 = vsub.s32 1, %v1493
    %v1495 = vrot.slane %v82, %v1494
    %v1496 = vlaneseq
    %v1497 = vshrl.u32 %v1496, 7
    %v1498 = vsub.s32 2, %v1497
    %v1499 = vrot.slane %v82, %v1498
    %v1500 = vlaneseq
    %v1501 = vshrl.u32 %v1500, 7
    %v1502 = vsub.s32 3, %v1501
    %v1503 = vrot.slane %v82, %v1502
    %v1504 = vlaneseq
    %v1505 = vshrl.u32 %v1504, 7
    %v1506 = vsub.s32 4, %v1505
    %v1507 = vrot.slane %v82, %v1506
    %v1508 = vlaneseq
    %v1509 = vshrl.u32 %v1508, 7
    %v1510 = vsub.s32 5, %v1509
    %v1511 = vrot.slane %v82, %v1510
    %v1512 = vlaneseq
    %v1513 = vshrl.u32 %v1512, 7
    %v1514 = vsub.s32 6, %v1513
    %v1515 = vrot.slane %v82, %v1514
    %v1516 = vlaneseq
    %v1517 = vshrl.u32 %v1516, 7
    %v1518 = vsub.s32 7, %v1517
    %v1519 = vrot.slane %v82, %v1518
    %v1520 = vlaneseq
    %v1521 = vshrl.u32 %v1520, 7
    %v1522 = vsub.s32 0, %v1521
    %v1523 = vrot.slane %v83, %v1522
    %v1524 = vlaneseq
    %v1525 = vshrl.u32 %v1524, 7
    %v1526 = vsub.s32 1, %v1525
    %v1527 = vrot.slane %v83, %v1526
    %v1528 = vlaneseq
    %v1529 = vshrl.u32 %v1528, 7
    %v1530 = vsub.s32 2, %v1529
    %v1531 = vrot.slane %v83, %v1530
    %v1532 = vlaneseq
    %v1533 = vshrl.u32 %v1532, 7
    %v1534 = vsub.s32 3, %v1533
    %v1535 = vrot.slane %v83, %v1534
    %v1536 = vlaneseq
    %v1537 = vshrl.u32 %v1536, 7
    %v1538 = vsub.s32 4, %v1537
    %v1539 = vrot.slane %v83, %v1538
    %v1540 = vlaneseq
    %v1541 = vshrl.u32 %v1540, 7
    %v1542 = vsub.s32 5, %v1541
    %v1543 = vrot.slane %v83, %v1542
    %v1544 = vlaneseq
    %v1545 = vshrl.u32 %v1544, 7
    %v1546 = vsub.s32 6, %v1545
    %v1547 = vrot.slane %v83, %v1546
    %v1548 = vlaneseq
    %v1549 = vshrl.u32 %v1548, 7
    %v1550 = vsub.s32 7, %v1549
    %v1551 = vrot.slane %v83, %v1550
    %v1552 = vlaneseq
    %v1553 = vshrl.u32 %v1552, 7
    %v1554 = vsub.s32 0, %v1553
    %v1555 = vrot.slane %v84, %v1554
    %v1556 = vlaneseq
    %v1557 = vshrl.u32 %v1556, 7
    %v1558 = vsub.s32 1, %v1557
    %v1559 = vrot.slane %v84, %v1558
    %v1560 = vlaneseq
    %v1561 = vshrl.u32 %v1560, 7
    %v1562 = vsub.s32 2, %v1561
    %v1563 = vrot.slane %v84, %v1562
    %v1564 = vlaneseq
    %v1565 = vshrl.u32 %v1564, 7
    %v1566 = vsub.s32 3, %v1565
    %v1567 = vrot.slane %v84, %v1566
    %v1568 = vlaneseq
    %v1569 = vshrl.u32 %v1568, 7
    %v1570 = vsub.s32 4, %v1569
    %v1571 = vrot.slane %v84, %v1570
    %v1572 = vlaneseq
    %v1573 = vshrl.u32 %v1572, 7
    %v1574 = vsub.s32 5, %v1573
    %v1575 = vrot.slane %v84, %v1574
    %v1576 = vlaneseq
    %v1577 = vshrl.u32 %v1576, 7
    %v1578 = vsub.s32 6, %v1577
    %v1579 = vrot.slane %v84, %v1578
    %v1580 = vlaneseq
    %v1581 = vshrl.u32 %v1580, 7
    %v1582 = vsub.s32 7, %v1581
    %v1583 = vrot.slane %v84, %v1582
    %v1584 = vlaneseq
    %v1585 = vshrl.u32 %v1584, 7
    %v1586 = vsub.s32 0, %v1585
    %v1587 = vrot.slane %v85, %v1586
    %v1588 = vlaneseq
    %v1589 = vshrl.u32 %v1588, 7
    %v1590 = vsub.s32 1, %v1589
    %v1591 = vrot.slane %v85, %v1590
    %v1592 = vlaneseq
    %v1593 = vshrl.u32 %v1592, 7
    %v1594 = vsub.s32 2, %v1593
    %v1595 = vrot.slane %v85, %v1594
    %v1596 = vlaneseq
    %v1597 = vshrl.u32 %v1596, 7
    %v1598 = vsub.s32 3, %v1597
    %v1599 = vrot.slane %v85, %v1598
    %v1600 = vlaneseq
    %v1601 = vshrl.u32 %v1600, 7
    %v1602 = vsub.s32 4, %v1601
    %v1603 = vrot.slane %v85, %v1602
    %v1604 = vlaneseq
    %v1605 = vshrl.u32 %v1604, 7
    %v1606 = vsub.s32 5, %v1605
    %v1607 = vrot.slane %v85, %v1606
    %v1608 = vlaneseq
    %v1609 = vshrl.u32 %v1608, 7
    %v1610 = vsub.s32 6, %v1609
    %v1611 = vrot.slane %v85, %v1610
    %v1612 = vlaneseq
    %v1613 = vshrl.u32 %v1612, 7
    %v1614 = vsub.s32 7, %v1613
    %v1615 = vrot.slane %v85, %v1614
    %v1616 = vlaneseq
    %v1617 = vshrl.u32 %v1616, 7
    %v1618 = vsub.s32 0, %v1617
    %v1619 = vrot.slane %v86, %v1618
    %v1620 = vlaneseq
    %v1621 = vshrl.u32 %v1620, 7
    %v1622 = vsub.s32 1, %v1621
    %v1623 = vrot.slane %v86, %v1622
    %v1624 = vlaneseq
    %v1625 = vshrl.u32 %v1624, 7
    %v1626 = vsub.s32 2, %v1625
    %v1627 = vrot.slane %v86, %v1626
    %v1628 = vlaneseq
    %v1629 = vshrl.u32 %v1628, 7
    %v1630 = vsub.s32 3, %v1629
    %v1631 = vrot.slane %v86, %v1630
    %v1632 = vlaneseq
    %v1633 = vshrl.u32 %v1632, 7
    %v1634 = vsub.s32 4, %v1633
    %v1635 = vrot.slane %v86, %v1634
    %v1636 = vlaneseq
    %v1637 = vshrl.u32 %v1636, 7
    %v1638 = vsub.s32 5, %v1637
    %v1639 = vrot.slane %v86, %v1638
    %v1640 = vlaneseq
    %v1641 = vshrl.u32 %v1640, 7
    %v1642 = vsub.s32 6, %v1641
    %v1643 = vrot.slane %v86, %v1642
    %v1644 = vlaneseq
    %v1645 = vshrl.u32 %v1644, 7
    %v1646 = vsub.s32 7, %v1645
    %v1647 = vrot.slane %v86, %v1646
    %v1648 = vlaneseq
    %v1649 = vshrl.u32 %v1648, 7
    %v1650 = vsub.s32 0, %v1649
    %v1651 = vrot.slane %v87, %v1650
    %v1652 = vlaneseq
    %v1653 = vshrl.u32 %v1652, 7
    %v1654 = vsub.s32 1, %v1653
    %v1655 = vrot.slane %v87, %v1654
    %v1656 = vlaneseq
    %v1657 = vshrl.u32 %v1656, 7
    %v1658 = vsub.s32 2, %v1657
    %v1659 = vrot.slane %v87, %v1658
    %v1660 = vlaneseq
    %v1661 = vshrl.u32 %v1660, 7
    %v1662 = vsub.s32 3, %v1661
    %v1663 = vrot.slane %v87, %v1662
    %v1664 = vlaneseq
    %v1665 = vshrl.u32 %v1664, 7
    %v1666 = vsub.s32 4, %v1665
    %v1667 = vrot.slane %v87, %v1666
    %v1668 = vlaneseq
    %v1669 = vshrl.u32 %v1668, 7
    %v1670 = vsub.s32 5, %v1669
    %v1671 = vrot.slane %v87, %v1670
    %v1672 = vlaneseq
    %v1673 = vshrl.u32 %v1672, 7
    %v1674 = vsub.s32 6, %v1673
    %v1675 = vrot.slane %v87, %v1674
    %v1676 = vlaneseq
    %v1677 = vshrl.u32 %v1676, 7
    %v1678 = vsub.s32 7, %v1677
    %v1679 = vrot.slane %v87, %v1678
    %v1680 = vlaneseq
    %v1681 = vshrl.u32 %v1680, 7
    %v1682 = vsub.s32 0, %v1681
    %v1683 = vrot.slane %v88, %v1682
    %v1684 = vlaneseq
    %v1685 = vshrl.u32 %v1684, 7
    %v1686 = vsub.s32 1, %v1685
    %v1687 = vrot.slane %v88, %v1686
    %v1688 = vlaneseq
    %v1689 = vshrl.u32 %v1688, 7
    %v1690 = vsub.s32 2, %v1689
    %v1691 = vrot.slane %v88, %v1690
    %v1692 = vlaneseq
    %v1693 = vshrl.u32 %v1692, 7
    %v1694 = vsub.s32 3, %v1693
    %v1695 = vrot.slane %v88, %v1694
    %v1696 = vlaneseq
    %v1697 = vshrl.u32 %v1696, 7
    %v1698 = vsub.s32 4, %v1697
    %v1699 = vrot.slane %v88, %v1698
    %v1700 = vlaneseq
    %v1701 = vshrl.u32 %v1700, 7
    %v1702 = vsub.s32 5, %v1701
    %v1703 = vrot.slane %v88, %v1702
    %v1704 = vlaneseq
    %v1705 = vshrl.u32 %v1704, 7
    %v1706 = vsub.s32 6, %v1705
    %v1707 = vrot.slane %v88, %v1706
    %v1708 = vlaneseq
    %v1709 = vshrl.u32 %v1708, 7
    %v1710 = vsub.s32 7, %v1709
    %v1711 = vrot.slane %v88, %v1710
    %v1712 = vlaneseq
    %v1713 = vshrl.u32 %v1712, 7
    %v1714 = vsub.s32 0, %v1713
    %v1715 = vrot.slane %v89, %v1714
    %v1716 = vlaneseq
    %v1717 = vshrl.u32 %v1716, 7
    %v1718 = vsub.s32 1, %v1717
    %v1719 = vrot.slane %v89, %v1718
    %v1720 = vlaneseq
    %v1721 = vshrl.u32 %v1720, 7
    %v1722 = vsub.s32 2, %v1721
    %v1723 = vrot.slane %v89, %v1722
    %v1724 = vlaneseq
    %v1725 = vshrl.u32 %v1724, 7
    %v1726 = vsub.s32 3, %v1725
    %v1727 = vrot.slane %v89, %v1726
    %v1728 = vlaneseq
    %v1729 = vshrl.u32 %v1728, 7
    %v1730 = vsub.s32 4, %v1729
    %v1731 = vrot.slane %v89, %v1730
    %v1732 = vlaneseq
    %v1733 = vshrl.u32 %v1732, 7
    %v1734 = vsub.s32 5, %v1733
    %v1735 = vrot.slane %v89, %v1734
    %v1736 = vlaneseq
    %v1737 = vshrl.u32 %v1736, 7
    %v1738 = vsub.s32 6, %v1737
    %v1739 = vrot.slane %v89, %v1738
    %v1740 = vlaneseq
    %v1741 = vshrl.u32 %v1740, 7
    %v1742 = vsub.s32 7, %v1741
    %v1743 = vrot.slane %v89, %v1742
    %v1744 = vlaneseq
    %v1745 = vshrl.u32 %v1744, 7
    %v1746 = vsub.s32 0, %v1745
    %v1747 = vrot.slane %v90, %v1746
    %v1748 = vlaneseq
    %v1749 = vshrl.u32 %v1748, 7
    %v1750 = vsub.s32 1, %v1749
    %v1751 = vrot.slane %v90, %v1750
    %v1752 = vlaneseq
    %v1753 = vshrl.u32 %v1752, 7
    %v1754 = vsub.s32 2, %v1753
    %v1755 = vrot.slane %v90, %v1754
    %v1756 = vlaneseq
    %v1757 = vshrl.u32 %v1756, 7
    %v1758 = vsub.s32 3, %v1757
    %v1759 = vrot.slane %v90, %v1758
    %v1760 = vlaneseq
    %v1761 = vshrl.u32 %v1760, 7
    %v1762 = vsub.s32 4, %v1761
    %v1763 = vrot.slane %v90, %v1762
    %v1764 = vlaneseq
    %v1765 = vshrl.u32 %v1764, 7
    %v1766 = vsub.s32 5, %v1765
    %v1767 = vrot.slane %v90, %v1766
    %v1768 = vlaneseq
    %v1769 = vshrl.u32 %v1768, 7
    %v1770 = vsub.s32 6, %v1769
    %v1771 = vrot.slane %v90, %v1770
    %v1772 = vlaneseq
    %v1773 = vshrl.u32 %v1772, 7
    %v1774 = vsub.s32 7, %v1773
    %v1775 = vrot.slane %v90, %v1774
    %v1776 = vlaneseq
    %v1777 = vshrl.u32 %v1776, 7
    %v1778 = vsub.s32 0, %v1777
    %v1779 = vrot.slane %v91, %v1778
    %v1780 = vlaneseq
    %v1781 = vshrl.u32 %v1780, 7
    %v1782 = vsub.s32 1, %v1781
    %v1783 = vrot.slane %v91, %v1782
    %v1784 = vlaneseq
    %v1785 = vshrl.u32 %v1784, 7
    %v1786 = vsub.s32 2, %v1785
    %v1787 = vrot.slane %v91, %v1786
    %v1788 = vlaneseq
    %v1789 = vshrl.u32 %v1788, 7
    %v1790 = vsub.s32 3, %v1789
    %v1791 = vrot.slane %v91, %v1790
    %v1792 = vlaneseq
    %v1793 = vshrl.u32 %v1792, 7
    %v1794 = vsub.s32 4, %v1793
    %v1795 = vrot.slane %v91, %v1794
    %v1796 = vlaneseq
    %v1797 = vshrl.u32 %v1796, 7
    %v1798 = vsub.s32 5, %v1797
    %v1799 = vrot.slane %v91, %v1798
    %v1800 = vlaneseq
    %v1801 = vshrl.u32 %v1800, 7
    %v1802 = vsub.s32 6, %v1801
    %v1803 = vrot.slane %v91, %v1802
    %v1804 = vlaneseq
    %v1805 = vshrl.u32 %v1804, 7
    %v1806 = vsub.s32 7, %v1805
    %v1807 = vrot.slane %v91, %v1806
    %v1808 = vlaneseq
    %v1809 = vshrl.u32 %v1808, 7
    %v1810 = vsub.s32 0, %v1809
    %v1811 = vrot.slane %v92, %v1810
    %v1812 = vlaneseq
    %v1813 = vshrl.u32 %v1812, 7
    %v1814 = vsub.s32 1, %v1813
    %v1815 = vrot.slane %v92, %v1814
    %v1816 = vlaneseq
    %v1817 = vshrl.u32 %v1816, 7
    %v1818 = vsub.s32 2, %v1817
    %v1819 = vrot.slane %v92, %v1818
    %v1820 = vlaneseq
    %v1821 = vshrl.u32 %v1820, 7
    %v1822 = vsub.s32 3, %v1821
    %v1823 = vrot.slane %v92, %v1822
    %v1824 = vlaneseq
    %v1825 = vshrl.u32 %v1824, 7
    %v1826 = vsub.s32 4, %v1825
    %v1827 = vrot.slane %v92, %v1826
    %v1828 = vlaneseq
    %v1829 = vshrl.u32 %v1828, 7
    %v1830 = vsub.s32 5, %v1829
    %v1831 = vrot.slane %v92, %v1830
    %v1832 = vlaneseq
    %v1833 = vshrl.u32 %v1832, 7
    %v1834 = vsub.s32 6, %v1833
    %v1835 = vrot.slane %v92, %v1834
    %v1836 = vlaneseq
    %v1837 = vshrl.u32 %v1836, 7
    %v1838 = vsub.s32 7, %v1837
    %v1839 = vrot.slane %v92, %v1838
    %v1840 = vlaneseq
    %v1841 = vshrl.u32 %v1840, 7
    %v1842 = vsub.s32 0, %v1841
    %v1843 = vrot.slane %v93, %v1842
    %v1844 = vlaneseq
    %v1845 = vshrl.u32 %v1844, 7
    %v1846 = vsub.s32 1, %v1845
    %v1847 = vrot.slane %v93, %v1846
    %v1848 = vlaneseq
    %v1849 = vshrl.u32 %v1848, 7
    %v1850 = vsub.s32 2, %v1849
    %v1851 = vrot.slane %v93, %v1850
    %v1852 = vlaneseq
    %v1853 = vshrl.u32 %v1852, 7
    %v1854 = vsub.s32 3, %v1853
    %v1855 = vrot.slane %v93, %v1854
    %v1856 = vlaneseq
    %v1857 = vshrl.u32 %v1856, 7
    %v1858 = vsub.s32 4, %v1857
    %v1859 = vrot.slane %v93, %v1858
    %v1860 = vlaneseq
    %v1861 = vshrl.u32 %v1860, 7
    %v1862 = vsub.s32 5, %v1861
    %v1863 = vrot.slane %v93, %v1862
    %v1864 = vlaneseq
    %v1865 = vshrl.u32 %v1864, 7
    %v1866 = vsub.s32 6, %v1865
    %v1867 = vrot.slane %v93, %v1866
    %v1868 = vlaneseq
    %v1869 = vshrl.u32 %v1868, 7
    %v1870 = vsub.s32 7, %v1869
    %v1871 = vrot.slane %v93, %v1870
    %v1872 = vlaneseq
    %v1873 = vshrl.u32 %v1872, 7
    %v1874 = vsub.s32 0, %v1873
    %v1875 = vrot.slane %v94, %v1874
    %v1876 = vlaneseq
    %v1877 = vshrl.u32 %v1876, 7
    %v1878 = vsub.s32 1, %v1877
    %v1879 = vrot.slane %v94, %v1878
    %v1880 = vlaneseq
    %v1881 = vshrl.u32 %v1880, 7
    %v1882 = vsub.s32 2, %v1881
    %v1883 = vrot.slane %v94, %v1882
    %v1884 = vlaneseq
    %v1885 = vshrl.u32 %v1884, 7
    %v1886 = vsub.s32 3, %v1885
    %v1887 = vrot.slane %v94, %v1886
    %v1888 = vlaneseq
    %v1889 = vshrl.u32 %v1888, 7
    %v1890 = vsub.s32 4, %v1889
    %v1891 = vrot.slane %v94, %v1890
    %v1892 = vlaneseq
    %v1893 = vshrl.u32 %v1892, 7
    %v1894 = vsub.s32 5, %v1893
    %v1895 = vrot.slane %v94, %v1894
    %v1896 = vlaneseq
    %v1897 = vshrl.u32 %v1896, 7
    %v1898 = vsub.s32 6, %v1897
    %v1899 = vrot.slane %v94, %v1898
    %v1900 = vlaneseq
    %v1901 = vshrl.u32 %v1900, 7
    %v1902 = vsub.s32 7, %v1901
    %v1903 = vrot.slane %v94, %v1902
    %v1904 = vlaneseq
    %v1905 = vshrl.u32 %v1904, 7
    %v1906 = vsub.s32 0, %v1905
    %v1907 = vrot.slane %v95, %v1906
    %v1908 = vlaneseq
    %v1909 = vshrl.u32 %v1908, 7
    %v1910 = vsub.s32 1, %v1909
    %v1911 = vrot.slane %v95, %v1910
    %v1912 = vlaneseq
    %v1913 = vshrl.u32 %v1912, 7
    %v1914 = vsub.s32 2, %v1913
    %v1915 = vrot.slane %v95, %v1914
    %v1916 = vlaneseq
    %v1917 = vshrl.u32 %v1916, 7
    %v1918 = vsub.s32 3, %v1917
    %v1919 = vrot.slane %v95, %v1918
    %v1920 = vlaneseq
    %v1921 = vshrl.u32 %v1920, 7
    %v1922 = vsub.s32 4, %v1921
    %v1923 = vrot.slane %v95, %v1922
    %v1924 = vlaneseq
    %v1925 = vshrl.u32 %v1924, 7
    %v1926 = vsub.s32 5, %v1925
    %v1927 = vrot.slane %v95, %v1926
    %v1928 = vlaneseq
    %v1929 = vshrl.u32 %v1928, 7
    %v1930 = vsub.s32 6, %v1929
    %v1931 = vrot.slane %v95, %v1930
    %v1932 = vlaneseq
    %v1933 = vshrl.u32 %v1932, 7
    %v1934 = vsub.s32 7, %v1933
    %v1935 = vrot.slane %v95, %v1934
    %v1936 = vlaneseq
    %v1937 = vshrl.u32 %v1936, 7
    %v1938 = vsub.s32 0, %v1937
    %v1939 = vrot.slane %v96, %v1938
    %v1940 = vlaneseq
    %v1941 = vshrl.u32 %v1940, 7
    %v1942 = vsub.s32 1, %v1941
    %v1943 = vrot.slane %v96, %v1942
    %v1944 = vlaneseq
    %v1945 = vshrl.u32 %v1944, 7
    %v1946 = vsub.s32 2, %v1945
    %v1947 = vrot.slane %v96, %v1946
    %v1948 = vlaneseq
    %v1949 = vshrl.u32 %v1948, 7
    %v1950 = vsub.s32 3, %v1949
    %v1951 = vrot.slane %v96, %v1950
    %v1952 = vlaneseq
    %v1953 = vshrl.u32 %v1952, 7
    %v1954 = vsub.s32 4, %v1953
    %v1955 = vrot.slane %v96, %v1954
    %v1956 = vlaneseq
    %v1957 = vshrl.u32 %v1956, 7
    %v1958 = vsub.s32 5, %v1957
    %v1959 = vrot.slane %v96, %v1958
    %v1960 = vlaneseq
    %v1961 = vshrl.u32 %v1960, 7
    %v1962 = vsub.s32 6, %v1961
    %v1963 = vrot.slane %v96, %v1962
    %v1964 = vlaneseq
    %v1965 = vshrl.u32 %v1964, 7
    %v1966 = vsub.s32 7, %v1965
    %v1967 = vrot.slane %v96, %v1966
    %v1968 = vlaneseq
    %v1969 = vshrl.u32 %v1968, 7
    %v1970 = vsub.s32 0, %v1969
    %v1971 = vrot.slane %v97, %v1970
    %v1972 = vlaneseq
    %v1973 = vshrl.u32 %v1972, 7
    %v1974 = vsub.s32 1, %v1973
    %v1975 = vrot.slane %v97, %v1974
    %v1976 = vlaneseq
    %v1977 = vshrl.u32 %v1976, 7
    %v1978 = vsub.s32 2, %v1977
    %v1979 = vrot.slane %v97, %v1978
    %v1980 = vlaneseq
    %v1981 = vshrl.u32 %v1980, 7
    %v1982 = vsub.s32 3, %v1981
    %v1983 = vrot.slane %v97, %v1982
    %v1984 = vlaneseq
    %v1985 = vshrl.u32 %v1984, 7
    %v1986 = vsub.s32 4, %v1985
    %v1987 = vrot.slane %v97, %v1986
    %v1988 = vlaneseq
    %v1989 = vshrl.u32 %v1988, 7
    %v1990 = vsub.s32 5, %v1989
    %v1991 = vrot.slane %v97, %v1990
    %v1992 = vlaneseq
    %v1993 = vshrl.u32 %v1992, 7
    %v1994 = vsub.s32 6, %v1993
    %v1995 = vrot.slane %v97, %v1994
    %v1996 = vlaneseq
    %v1997 = vshrl.u32 %v1996, 7
    %v1998 = vsub.s32 7, %v1997
    %v1999 = vrot.slane %v97, %v1998
    %v2000 = vlaneseq
    %v2001 = vshrl.u32 %v2000, 7
    %v2002 = vsub.s32 0, %v2001
    %v2003 = vrot.slane %v98, %v2002
    %v2004 = vlaneseq
    %v2005 = vshrl.u32 %v2004, 7
    %v2006 = vsub.s32 1, %v2005
    %v2007 = vrot.slane %v98, %v2006
    %v2008 = vlaneseq
    %v2009 = vshrl.u32 %v2008, 7
    %v2010 = vsub.s32 2, %v2009
    %v2011 = vrot.slane %v98, %v2010
    %v2012 = vlaneseq
    %v2013 = vshrl.u32 %v2012, 7
    %v2014 = vsub.s32 3, %v2013
    %v2015 = vrot.slane %v98, %v2014
    %v2016 = vlaneseq
    %v2017 = vshrl.u32 %v2016, 7
    %v2018 = vsub.s32 4, %v2017
    %v2019 = vrot.slane %v98, %v2018
    %v2020 = vlaneseq
    %v2021 = vshrl.u32 %v2020, 7
    %v2022 = vsub.s32 5, %v2021
    %v2023 = vrot.slane %v98, %v2022
    %v2024 = vlaneseq
    %v2025 = vshrl.u32 %v2024, 7
    %v2026 = vsub.s32 6, %v2025
    %v2027 = vrot.slane %v98, %v2026
    %v2028 = vlaneseq
    %v2029 = vshrl.u32 %v2028, 7
    %v2030 = vsub.s32 7, %v2029
    %v2031 = vrot.slane %v98, %v2030
    %v2032 = vlaneseq
    %v2033 = vshrl.u32 %v2032, 7
    %v2034 = vsub.s32 0, %v2033
    %v2035 = vrot.slane %v99, %v2034
    %v2036 = vlaneseq
    %v2037 = vshrl.u32 %v2036, 7
    %v2038 = vsub.s32 1, %v2037
    %v2039 = vrot.slane %v99, %v2038
    %v2040 = vlaneseq
    %v2041 = vshrl.u32 %v2040, 7
    %v2042 = vsub.s32 2, %v2041
    %v2043 = vrot.slane %v99, %v2042
    %v2044 = vlaneseq
    %v2045 = vshrl.u32 %v2044, 7
    %v2046 = vsub.s32 3, %v2045
    %v2047 = vrot.slane %v99, %v2046
    %v2048 = vlaneseq
    %v2049 = vshrl.u32 %v2048, 7
    %v2050 = vsub.s32 4, %v2049
    %v2051 = vrot.slane %v99, %v2050
    %v2052 = vlaneseq
    %v2053 = vshrl.u32 %v2052, 7
    %v2054 = vsub.s32 5, %v2053
    %v2055 = vrot.slane %v99, %v2054
    %v2056 = vlaneseq
    %v2057 = vshrl.u32 %v2056, 7
    %v2058 = vsub.s32 6, %v2057
    %v2059 = vrot.slane %v99, %v2058
    %v2060 = vlaneseq
    %v2061 = vshrl.u32 %v2060, 7
    %v2062 = vsub.s32 7, %v2061
    %v2063 = vrot.slane %v99, %v2062
    %v2064 = vlaneseq
    %v2065 = vshrl.u32 %v2064, 7
    %v2066 = vsub.s32 0, %v2065
    %v2067 = vrot.slane %v100, %v2066
    %v2068 = vlaneseq
    %v2069 = vshrl.u32 %v2068, 7
    %v2070 = vsub.s32 1, %v2069
    %v2071 = vrot.slane %v100, %v2070
    %v2072 = vlaneseq
    %v2073 = vshrl.u32 %v2072, 7
    %v2074 = vsub.s32 2, %v2073
    %v2075 = vrot.slane %v100, %v2074
    %v2076 = vlaneseq
    %v2077 = vshrl.u32 %v2076, 7
    %v2078 = vsub.s32 3, %v2077
    %v2079 = vrot.slane %v100, %v2078
    %v2080 = vlaneseq
    %v2081 = vshrl.u32 %v2080, 7
    %v2082 = vsub.s32 4, %v2081
    %v2083 = vrot.slane %v100, %v2082
    %v2084 = vlaneseq
    %v2085 = vshrl.u32 %v2084, 7
    %v2086 = vsub.s32 5, %v2085
    %v2087 = vrot.slane %v100, %v2086
    %v2088 = vlaneseq
    %v2089 = vshrl.u32 %v2088, 7
    %v2090 = vsub.s32 6, %v2089
    %v2091 = vrot.slane %v100, %v2090
    %v2092 = vlaneseq
    %v2093 = vshrl.u32 %v2092, 7
    %v2094 = vsub.s32 7, %v2093
    %v2095 = vrot.slane %v100, %v2094
    %v2096 = vlaneseq
    %v2097 = vshrl.u32 %v2096, 7
    %v2098 = vsub.s32 0, %v2097
    %v2099 = vrot.slane %v101, %v2098
    %v2100 = vlaneseq
    %v2101 = vshrl.u32 %v2100, 7
    %v2102 = vsub.s32 1, %v2101
    %v2103 = vrot.slane %v101, %v2102
    %v2104 = vlaneseq
    %v2105 = vshrl.u32 %v2104, 7
    %v2106 = vsub.s32 2, %v2105
    %v2107 = vrot.slane %v101, %v2106
    %v2108 = vlaneseq
    %v2109 = vshrl.u32 %v2108, 7
    %v2110 = vsub.s32 3, %v2109
    %v2111 = vrot.slane %v101, %v2110
    %v2112 = vlaneseq
    %v2113 = vshrl.u32 %v2112, 7
    %v2114 = vsub.s32 4, %v2113
    %v2115 = vrot.slane %v101, %v2114
    %v2116 = vlaneseq
    %v2117 = vshrl.u32 %v2116, 7
    %v2118 = vsub.s32 5, %v2117
    %v2119 = vrot.slane %v101, %v2118
    %v2120 = vlaneseq
    %v2121 = vshrl.u32 %v2120, 7
    %v2122 = vsub.s32 6, %v2121
    %v2123 = vrot.slane %v101, %v2122
    %v2124 = vlaneseq
    %v2125 = vshrl.u32 %v2124, 7
    %v2126 = vsub.s32 7, %v2125
    %v2127 = vrot.slane %v101, %v2126
    %v2128 = vlaneseq
    %v2129 = vshrl.u32 %v2128, 7
    %v2130 = vsub.s32 0, %v2129
    %v2131 = vrot.slane %v102, %v2130
    %v2132 = vlaneseq
    %v2133 = vshrl.u32 %v2132, 7
    %v2134 = vsub.s32 1, %v2133
    %v2135 = vrot.slane %v102, %v2134
    %v2136 = vlaneseq
    %v2137 = vshrl.u32 %v2136, 7
    %v2138 = vsub.s32 2, %v2137
    %v2139 = vrot.slane %v102, %v2138
    %v2140 = vlaneseq
    %v2141 = vshrl.u32 %v2140, 7
    %v2142 = vsub.s32 3, %v2141
    %v2143 = vrot.slane %v102, %v2142
    %v2144 = vlaneseq
    %v2145 = vshrl.u32 %v2144, 7
    %v2146 = vsub.s32 4, %v2145
    %v2147 = vrot.slane %v102, %v2146
    %v2148 = vlaneseq
    %v2149 = vshrl.u32 %v2148, 7
    %v2150 = vsub.s32 5, %v2149
    %v2151 = vrot.slane %v102, %v2150
    %v2152 = vlaneseq
    %v2153 = vshrl.u32 %v2152, 7
    %v2154 = vsub.s32 6, %v2153
    %v2155 = vrot.slane %v102, %v2154
    %v2156 = vlaneseq
    %v2157 = vshrl.u32 %v2156, 7
    %v2158 = vsub.s32 7, %v2157
    %v2159 = vrot.slane %v102, %v2158
    %v2160 = vlaneseq
    %v2161 = vshrl.u32 %v2160, 7
    %v2162 = vsub.s32 0, %v2161
    %v2163 = vrot.slane %v103, %v2162
    %v2164 = vlaneseq
    %v2165 = vshrl.u32 %v2164, 7
    %v2166 = vsub.s32 1, %v2165
    %v2167 = vrot.slane %v103, %v2166
    %v2168 = vlaneseq
    %v2169 = vshrl.u32 %v2168, 7
    %v2170 = vsub.s32 2, %v2169
    %v2171 = vrot.slane %v103, %v2170
    %v2172 = vlaneseq
    %v2173 = vshrl.u32 %v2172, 7
    %v2174 = vsub.s32 3, %v2173
    %v2175 = vrot.slane %v103, %v2174
    %v2176 = vlaneseq
    %v2177 = vshrl.u32 %v2176, 7
    %v2178 = vsub.s32 4, %v2177
    %v2179 = vrot.slane %v103, %v2178
    %v2180 = vlaneseq
    %v2181 = vshrl.u32 %v2180, 7
    %v2182 = vsub.s32 5, %v2181
    %v2183 = vrot.slane %v103, %v2182
    %v2184 = vlaneseq
    %v2185 = vshrl.u32 %v2184, 7
    %v2186 = vsub.s32 6, %v2185
    %v2187 = vrot.slane %v103, %v2186
    %v2188 = vlaneseq
    %v2189 = vshrl.u32 %v2188, 7
    %v2190 = vsub.s32 7, %v2189
    %v2191 = vrot.slane %v103, %v2190
    %v2192 = vlaneseq
    %v2193 = vshrl.u32 %v2192, 7
    %v2194 = vsub.s32 0, %v2193
    %v2195 = vrot.slane %v104, %v2194
    %v2196 = vlaneseq
    %v2197 = vshrl.u32 %v2196, 7
    %v2198 = vsub.s32 1, %v2197
    %v2199 = vrot.slane %v104, %v2198
    %v2200 = vlaneseq
    %v2201 = vshrl.u32 %v2200, 7
    %v2202 = vsub.s32 2, %v2201
    %v2203 = vrot.slane %v104, %v2202
    %v2204 = vlaneseq
    %v2205 = vshrl.u32 %v2204, 7
    %v2206 = vsub.s32 3, %v2205
    %v2207 = vrot.slane %v104, %v2206
    %v2208 = vlaneseq
    %v2209 = vshrl.u32 %v2208, 7
    %v2210 = vsub.s32 4, %v2209
    %v2211 = vrot.slane %v104, %v2210
    %v2212 = vlaneseq
    %v2213 = vshrl.u32 %v2212, 7
    %v2214 = vsub.s32 5, %v2213
    %v2215 = vrot.slane %v104, %v2214
    %v2216 = vlaneseq
    %v2217 = vshrl.u32 %v2216, 7
    %v2218 = vsub.s32 6, %v2217
    %v2219 = vrot.slane %v104, %v2218
    %v2220 = vlaneseq
    %v2221 = vshrl.u32 %v2220, 7
    %v2222 = vsub.s32 7, %v2221
    %v2223 = vrot.slane %v104, %v2222
    %v2224 = vlaneseq
    %v2225 = vshrl.u32 %v2224, 7
    %v2226 = vsub.s32 0, %v2225
    %v2227 = vrot.slane %v105, %v2226
    %v2228 = vlaneseq
    %v2229 = vshrl.u32 %v2228, 7
    %v2230 = vsub.s32 1, %v2229
    %v2231 = vrot.slane %v105, %v2230
    %v2232 = vlaneseq
    %v2233 = vshrl.u32 %v2232, 7
    %v2234 = vsub.s32 2, %v2233
    %v2235 = vrot.slane %v105, %v2234
    %v2236 = vlaneseq
    %v2237 = vshrl.u32 %v2236, 7
    %v2238 = vsub.s32 3, %v2237
    %v2239 = vrot.slane %v105, %v2238
    %v2240 = vlaneseq
    %v2241 = vshrl.u32 %v2240, 7
    %v2242 = vsub.s32 4, %v2241
    %v2243 = vrot.slane %v105, %v2242
    %v2244 = vlaneseq
    %v2245 = vshrl.u32 %v2244, 7
    %v2246 = vsub.s32 5, %v2245
    %v2247 = vrot.slane %v105, %v2246
    %v2248 = vlaneseq
    %v2249 = vshrl.u32 %v2248, 7
    %v2250 = vsub.s32 6, %v2249
    %v2251 = vrot.slane %v105, %v2250
    %v2252 = vlaneseq
    %v2253 = vshrl.u32 %v2252, 7
    %v2254 = vsub.s32 7, %v2253
    %v2255 = vrot.slane %v105, %v2254
    %v2256 = vlaneseq
    %v2257 = vshrl.u32 %v2256, 7
    %v2258 = vsub.s32 0, %v2257
    %v2259 = vrot.slane %v106, %v2258
    %v2260 = vlaneseq
    %v2261 = vshrl.u32 %v2260, 7
    %v2262 = vsub.s32 1, %v2261
    %v2263 = vrot.slane %v106, %v2262
    %v2264 = vlaneseq
    %v2265 = vshrl.u32 %v2264, 7
    %v2266 = vsub.s32 2, %v2265
    %v2267 = vrot.slane %v106, %v2266
    %v2268 = vlaneseq
    %v2269 = vshrl.u32 %v2268, 7
    %v2270 = vsub.s32 3, %v2269
    %v2271 = vrot.slane %v106, %v2270
    %v2272 = vlaneseq
    %v2273 = vshrl.u32 %v2272, 7
    %v2274 = vsub.s32 4, %v2273
    %v2275 = vrot.slane %v106, %v2274
    %v2276 = vlaneseq
    %v2277 = vshrl.u32 %v2276, 7
    %v2278 = vsub.s32 5, %v2277
    %v2279 = vrot.slane %v106, %v2278
    %v2280 = vlaneseq
    %v2281 = vshrl.u32 %v2280, 7
    %v2282 = vsub.s32 6, %v2281
    %v2283 = vrot.slane %v106, %v2282
    %v2284 = vlaneseq
    %v2285 = vshrl.u32 %v2284, 7
    %v2286 = vsub.s32 7, %v2285
    %v2287 = vrot.slane %v106, %v2286
    %v2288 = vlaneseq
    %v2289 = vshrl.u32 %v2288, 7
    %v2290 = vsub.s32 0, %v2289
    %v2291 = vrot.slane %v107, %v2290
    %v2292 = vlaneseq
    %v2293 = vshrl.u32 %v2292, 7
    %v2294 = vsub.s32 1, %v2293
    %v2295 = vrot.slane %v107, %v2294
    %v2296 = vlaneseq
    %v2297 = vshrl.u32 %v2296, 7
    %v2298 = vsub.s32 2, %v2297
    %v2299 = vrot.slane %v107, %v2298
    %v2300 = vlaneseq
    %v2301 = vshrl.u32 %v2300, 7
    %v2302 = vsub.s32 3, %v2301
    %v2303 = vrot.slane %v107, %v2302
    %v2304 = vlaneseq
    %v2305 = vshrl.u32 %v2304, 7
    %v2306 = vsub.s32 4, %v2305
    %v2307 = vrot.slane %v107, %v2306
    %v2308 = vlaneseq
    %v2309 = vshrl.u32 %v2308, 7
    %v2310 = vsub.s32 5, %v2309
    %v2311 = vrot.slane %v107, %v2310
    %v2312 = vlaneseq
    %v2313 = vshrl.u32 %v2312, 7
    %v2314 = vsub.s32 6, %v2313
    %v2315 = vrot.slane %v107, %v2314
    %v2316 = vlaneseq
    %v2317 = vshrl.u32 %v2316, 7
    %v2318 = vsub.s32 7, %v2317
    %v2319 = vrot.slane %v107, %v2318
    %v2320 = vlaneseq
    %v2321 = vshrl.u32 %v2320, 7
    %v2322 = vsub.s32 0, %v2321
    %v2323 = vrot.slane %v108, %v2322
    %v2324 = vlaneseq
    %v2325 = vshrl.u32 %v2324, 7
    %v2326 = vsub.s32 1, %v2325
    %v2327 = vrot.slane %v108, %v2326
    %v2328 = vlaneseq
    %v2329 = vshrl.u32 %v2328, 7
    %v2330 = vsub.s32 2, %v2329
    %v2331 = vrot.slane %v108, %v2330
    %v2332 = vlaneseq
    %v2333 = vshrl.u32 %v2332, 7
    %v2334 = vsub.s32 3, %v2333
    %v2335 = vrot.slane %v108, %v2334
    %v2336 = vlaneseq
    %v2337 = vshrl.u32 %v2336, 7
    %v2338 = vsub.s32 4, %v2337
    %v2339 = vrot.slane %v108, %v2338
    %v2340 = vlaneseq
    %v2341 = vshrl.u32 %v2340, 7
    %v2342 = vsub.s32 5, %v2341
    %v2343 = vrot.slane %v108, %v2342
    %v2344 = vlaneseq
    %v2345 = vshrl.u32 %v2344, 7
    %v2346 = vsub.s32 6, %v2345
    %v2347 = vrot.slane %v108, %v2346
    %v2348 = vlaneseq
    %v2349 = vshrl.u32 %v2348, 7
    %v2350 = vsub.s32 7, %v2349
    %v2351 = vrot.slane %v108, %v2350
    %v2352 = vlaneseq
    %v2353 = vshrl.u32 %v2352, 7
    %v2354 = vsub.s32 0, %v2353
    %v2355 = vrot.slane %v109, %v2354
    %v2356 = vlaneseq
    %v2357 = vshrl.u32 %v2356, 7
    %v2358 = vsub.s32 1, %v2357
    %v2359 = vrot.slane %v109, %v2358
    %v2360 = vlaneseq
    %v2361 = vshrl.u32 %v2360, 7
    %v2362 = vsub.s32 2, %v2361
    %v2363 = vrot.slane %v109, %v2362
    %v2364 = vlaneseq
    %v2365 = vshrl.u32 %v2364, 7
    %v2366 = vsub.s32 3, %v2365
    %v2367 = vrot.slane %v109, %v2366
    %v2368 = vlaneseq
    %v2369 = vshrl.u32 %v2368, 7
    %v2370 = vsub.s32 4, %v2369
    %v2371 = vrot.slane %v109, %v2370
    %v2372 = vlaneseq
    %v2373 = vshrl.u32 %v2372, 7
    %v2374 = vsub.s32 5, %v2373
    %v2375 = vrot.slane %v109, %v2374
    %v2376 = vlaneseq
    %v2377 = vshrl.u32 %v2376, 7
    %v2378 = vsub.s32 6, %v2377
    %v2379 = vrot.slane %v109, %v2378
    %v2380 = vlaneseq
    %v2381 = vshrl.u32 %v2380, 7
    %v2382 = vsub.s32 7, %v2381
    %v2383 = vrot.slane %v109, %v2382
    %v2384 = vlaneseq
    %v2385 = vshrl.u32 %v2384, 7
    %v2386 = vsub.s32 0, %v2385
    %v2387 = vrot.slane %v110, %v2386
    %v2388 = vlaneseq
    %v2389 = vshrl.u32 %v2388, 7
    %v2390 = vsub.s32 1, %v2389
    %v2391 = vrot.slane %v110, %v2390
    %v2392 = vlaneseq
    %v2393 = vshrl.u32 %v2392, 7
    %v2394 = vsub.s32 2, %v2393
    %v2395 = vrot.slane %v110, %v2394
    %v2396 = vlaneseq
    %v2397 = vshrl.u32 %v2396, 7
    %v2398 = vsub.s32 3, %v2397
    %v2399 = vrot.slane %v110, %v2398
    %v2400 = vlaneseq
    %v2401 = vshrl.u32 %v2400, 7
    %v2402 = vsub.s32 4, %v2401
    %v2403 = vrot.slane %v110, %v2402
    %v2404 = vlaneseq
    %v2405 = vshrl.u32 %v2404, 7
    %v2406 = vsub.s32 5, %v2405
    %v2407 = vrot.slane %v110, %v2406
    %v2408 = vlaneseq
    %v2409 = vshrl.u32 %v2408, 7
    %v2410 = vsub.s32 6, %v2409
    %v2411 = vrot.slane %v110, %v2410
    %v2412 = vlaneseq
    %v2413 = vshrl.u32 %v2412, 7
    %v2414 = vsub.s32 7, %v2413
    %v2415 = vrot.slane %v110, %v2414
    %v2416 = vlaneseq
    %v2417 = vshrl.u32 %v2416, 7
    %v2418 = vsub.s32 0, %v2417
    %v2419 = vrot.slane %v111, %v2418
    %v2420 = vlaneseq
    %v2421 = vshrl.u32 %v2420, 7
    %v2422 = vsub.s32 1, %v2421
    %v2423 = vrot.slane %v111, %v2422
    %v2424 = vlaneseq
    %v2425 = vshrl.u32 %v2424, 7
    %v2426 = vsub.s32 2, %v2425
    %v2427 = vrot.slane %v111, %v2426
    %v2428 = vlaneseq
    %v2429 = vshrl.u32 %v2428, 7
    %v2430 = vsub.s32 3, %v2429
    %v2431 = vrot.slane %v111, %v2430
    %v2432 = vlaneseq
    %v2433 = vshrl.u32 %v2432, 7
    %v2434 = vsub.s32 4, %v2433
    %v2435 = vrot.slane %v111, %v2434
    %v2436 = vlaneseq
    %v2437 = vshrl.u32 %v2436, 7
    %v2438 = vsub.s32 5, %v2437
    %v2439 = vrot.slane %v111, %v2438
    %v2440 = vlaneseq
    %v2441 = vshrl.u32 %v2440, 7
    %v2442 = vsub.s32 6, %v2441
    %v2443 = vrot.slane %v111, %v2442
    %v2444 = vlaneseq
    %v2445 = vshrl.u32 %v2444, 7
    %v2446 = vsub.s32 7, %v2445
    %v2447 = vrot.slane %v111, %v2446
    %v2448 = vlaneseq
    %v2449 = vshrl.u32 %v2448, 7
    %v2450 = vsub.s32 0, %v2449
    %v2451 = vrot.slane %v112, %v2450
    %v2452 = vlaneseq
    %v2453 = vshrl.u32 %v2452, 7
    %v2454 = vsub.s32 1, %v2453
    %v2455 = vrot.slane %v112, %v2454
    %v2456 = vlaneseq
    %v2457 = vshrl.u32 %v2456, 7
    %v2458 = vsub.s32 2, %v2457
    %v2459 = vrot.slane %v112, %v2458
    %v2460 = vlaneseq
    %v2461 = vshrl.u32 %v2460, 7
    %v2462 = vsub.s32 3, %v2461
    %v2463 = vrot.slane %v112, %v2462
    %v2464 = vlaneseq
    %v2465 = vshrl.u32 %v2464, 7
    %v2466 = vsub.s32 4, %v2465
    %v2467 = vrot.slane %v112, %v2466
    %v2468 = vlaneseq
    %v2469 = vshrl.u32 %v2468, 7
    %v2470 = vsub.s32 5, %v2469
    %v2471 = vrot.slane %v112, %v2470
    %v2472 = vlaneseq
    %v2473 = vshrl.u32 %v2472, 7
    %v2474 = vsub.s32 6, %v2473
    %v2475 = vrot.slane %v112, %v2474
    %v2476 = vlaneseq
    %v2477 = vshrl.u32 %v2476, 7
    %v2478 = vsub.s32 7, %v2477
    %v2479 = vrot.slane %v112, %v2478
    %v2480 = vlaneseq
    %v2481 = vshrl.u32 %v2480, 7
    %v2482 = vsub.s32 0, %v2481
    %v2483 = vrot.slane %v113, %v2482
    %v2484 = vlaneseq
    %v2485 = vshrl.u32 %v2484, 7
    %v2486 = vsub.s32 1, %v2485
    %v2487 = vrot.slane %v113, %v2486
    %v2488 = vlaneseq
    %v2489 = vshrl.u32 %v2488, 7
    %v2490 = vsub.s32 2, %v2489
    %v2491 = vrot.slane %v113, %v2490
    %v2492 = vlaneseq
    %v2493 = vshrl.u32 %v2492, 7
    %v2494 = vsub.s32 3, %v2493
    %v2495 = vrot.slane %v113, %v2494
    %v2496 = vlaneseq
    %v2497 = vshrl.u32 %v2496, 7
    %v2498 = vsub.s32 4, %v2497
    %v2499 = vrot.slane %v113, %v2498
    %v2500 = vlaneseq
    %v2501 = vshrl.u32 %v2500, 7
    %v2502 = vsub.s32 5, %v2501
    %v2503 = vrot.slane %v113, %v2502
    %v2504 = vlaneseq
    %v2505 = vshrl.u32 %v2504, 7
    %v2506 = vsub.s32 6, %v2505
    %v2507 = vrot.slane %v113, %v2506
    %v2508 = vlaneseq
    %v2509 = vshrl.u32 %v2508, 7
    %v2510 = vsub.s32 7, %v2509
    %v2511 = vrot.slane %v113, %v2510
    %v2512 = vlaneseq
    %v2513 = vshrl.u32 %v2512, 7
    %v2514 = vsub.s32 0, %v2513
    %v2515 = vrot.slane %v114, %v2514
    %v2516 = vlaneseq
    %v2517 = vshrl.u32 %v2516, 7
    %v2518 = vsub.s32 1, %v2517
    %v2519 = vrot.slane %v114, %v2518
    %v2520 = vlaneseq
    %v2521 = vshrl.u32 %v2520, 7
    %v2522 = vsub.s32 2, %v2521
    %v2523 = vrot.slane %v114, %v2522
    %v2524 = vlaneseq
    %v2525 = vshrl.u32 %v2524, 7
    %v2526 = vsub.s32 3, %v2525
    %v2527 = vrot.slane %v114, %v2526
    %v2528 = vlaneseq
    %v2529 = vshrl.u32 %v2528, 7
    %v2530 = vsub.s32 4, %v2529
    %v2531 = vrot.slane %v114, %v2530
    %v2532 = vlaneseq
    %v2533 = vshrl.u32 %v2532, 7
    %v2534 = vsub.s32 5, %v2533
    %v2535 = vrot.slane %v114, %v2534
    %v2536 = vlaneseq
    %v2537 = vshrl.u32 %v2536, 7
    %v2538 = vsub.s32 6, %v2537
    %v2539 = vrot.slane %v114, %v2538
    %v2540 = vlaneseq
    %v2541 = vshrl.u32 %v2540, 7
    %v2542 = vsub.s32 7, %v2541
    %v2543 = vrot.slane %v114, %v2542
    %v2544 = vlaneseq
    %v2545 = vshrl.u32 %v2544, 7
    %v2546 = vsub.s32 0, %v2545
    %v2547 = vrot.slane %v115, %v2546
    %v2548 = vlaneseq
    %v2549 = vshrl.u32 %v2548, 7
    %v2550 = vsub.s32 1, %v2549
    %v2551 = vrot.slane %v115, %v2550
    %v2552 = vlaneseq
    %v2553 = vshrl.u32 %v2552, 7
    %v2554 = vsub.s32 2, %v2553
    %v2555 = vrot.slane %v115, %v2554
    %v2556 = vlaneseq
    %v2557 = vshrl.u32 %v2556, 7
    %v2558 = vsub.s32 3, %v2557
    %v2559 = vrot.slane %v115, %v2558
    %v2560 = vlaneseq
    %v2561 = vshrl.u32 %v2560, 7
    %v2562 = vsub.s32 4, %v2561
    %v2563 = vrot.slane %v115, %v2562
    %v2564 = vlaneseq
    %v2565 = vshrl.u32 %v2564, 7
    %v2566 = vsub.s32 5, %v2565
    %v2567 = vrot.slane %v115, %v2566
    %v2568 = vlaneseq
    %v2569 = vshrl.u32 %v2568, 7
    %v2570 = vsub.s32 6, %v2569
    %v2571 = vrot.slane %v115, %v2570
    %v2572 = vlaneseq
    %v2573 = vshrl.u32 %v2572, 7
    %v2574 = vsub.s32 7, %v2573
    %v2575 = vrot.slane %v115, %v2574
    %v2576 = vlaneseq
    %v2577 = vshrl.u32 %v2576, 7
    %v2578 = vsub.s32 0, %v2577
    %v2579 = vrot.slane %v116, %v2578
    %v2580 = vlaneseq
    %v2581 = vshrl.u32 %v2580, 7
    %v2582 = vsub.s32 1, %v2581
    %v2583 = vrot.slane %v116, %v2582
    %v2584 = vlaneseq
    %v2585 = vshrl.u32 %v2584, 7
    %v2586 = vsub.s32 2, %v2585
    %v2587 = vrot.slane %v116, %v2586
    %v2588 = vlaneseq
    %v2589 = vshrl.u32 %v2588, 7
    %v2590 = vsub.s32 3, %v2589
    %v2591 = vrot.slane %v116, %v2590
    %v2592 = vlaneseq
    %v2593 = vshrl.u32 %v2592, 7
    %v2594 = vsub.s32 4, %v2593
    %v2595 = vrot.slane %v116, %v2594
    %v2596 = vlaneseq
    %v2597 = vshrl.u32 %v2596, 7
    %v2598 = vsub.s32 5, %v2597
    %v2599 = vrot.slane %v116, %v2598
    %v2600 = vlaneseq
    %v2601 = vshrl.u32 %v2600, 7
    %v2602 = vsub.s32 6, %v2601
    %v2603 = vrot.slane %v116, %v2602
    %v2604 = vlaneseq
    %v2605 = vshrl.u32 %v2604, 7
    %v2606 = vsub.s32 7, %v2605
    %v2607 = vrot.slane %v116, %v2606
    %v2608 = vlaneseq
    %v2609 = vshrl.u32 %v2608, 7
    %v2610 = vsub.s32 0, %v2609
    %v2611 = vrot.slane %v117, %v2610
    %v2612 = vlaneseq
    %v2613 = vshrl.u32 %v2612, 7
    %v2614 = vsub.s32 1, %v2613
    %v2615 = vrot.slane %v117, %v2614
    %v2616 = vlaneseq
    %v2617 = vshrl.u32 %v2616, 7
    %v2618 = vsub.s32 2, %v2617
    %v2619 = vrot.slane %v117, %v2618
    %v2620 = vlaneseq
    %v2621 = vshrl.u32 %v2620, 7
    %v2622 = vsub.s32 3, %v2621
    %v2623 = vrot.slane %v117, %v2622
    %v2624 = vlaneseq
    %v2625 = vshrl.u32 %v2624, 7
    %v2626 = vsub.s32 4, %v2625
    %v2627 = vrot.slane %v117, %v2626
    %v2628 = vlaneseq
    %v2629 = vshrl.u32 %v2628, 7
    %v2630 = vsub.s32 5, %v2629
    %v2631 = vrot.slane %v117, %v2630
    %v2632 = vlaneseq
    %v2633 = vshrl.u32 %v2632, 7
    %v2634 = vsub.s32 6, %v2633
    %v2635 = vrot.slane %v117, %v2634
    %v2636 = vlaneseq
    %v2637 = vshrl.u32 %v2636, 7
    %v2638 = vsub.s32 7, %v2637
    %v2639 = vrot.slane %v117, %v2638
    %v2640 = vlaneseq
    %v2641 = vshrl.u32 %v2640, 7
    %v2642 = vsub.s32 0, %v2641
    %v2643 = vrot.slane %v118, %v2642
    %v2644 = vlaneseq
    %v2645 = vshrl.u32 %v2644, 7
    %v2646 = vsub.s32 1, %v2645
    %v2647 = vrot.slane %v118, %v2646
    %v2648 = vlaneseq
    %v2649 = vshrl.u32 %v2648, 7
    %v2650 = vsub.s32 2, %v2649
    %v2651 = vrot.slane %v118, %v2650
    %v2652 = vlaneseq
    %v2653 = vshrl.u32 %v2652, 7
    %v2654 = vsub.s32 3, %v2653
    %v2655 = vrot.slane %v118, %v2654
    %v2656 = vlaneseq
    %v2657 = vshrl.u32 %v2656, 7
    %v2658 = vsub.s32 4, %v2657
    %v2659 = vrot.slane %v118, %v2658
    %v2660 = vlaneseq
    %v2661 = vshrl.u32 %v2660, 7
    %v2662 = vsub.s32 5, %v2661
    %v2663 = vrot.slane %v118, %v2662
    %v2664 = vlaneseq
    %v2665 = vshrl.u32 %v2664, 7
    %v2666 = vsub.s32 6, %v2665
    %v2667 = vrot.slane %v118, %v2666
    %v2668 = vlaneseq
    %v2669 = vshrl.u32 %v2668, 7
    %v2670 = vsub.s32 7, %v2669
    %v2671 = vrot.slane %v118, %v2670
    %v2672 = vlaneseq
    %v2673 = vshrl.u32 %v2672, 7
    %v2674 = vsub.s32 0, %v2673
    %v2675 = vrot.slane %v119, %v2674
    %v2676 = vlaneseq
    %v2677 = vshrl.u32 %v2676, 7
    %v2678 = vsub.s32 1, %v2677
    %v2679 = vrot.slane %v119, %v2678
    %v2680 = vlaneseq
    %v2681 = vshrl.u32 %v2680, 7
    %v2682 = vsub.s32 2, %v2681
    %v2683 = vrot.slane %v119, %v2682
    %v2684 = vlaneseq
    %v2685 = vshrl.u32 %v2684, 7
    %v2686 = vsub.s32 3, %v2685
    %v2687 = vrot.slane %v119, %v2686
    %v2688 = vlaneseq
    %v2689 = vshrl.u32 %v2688, 7
    %v2690 = vsub.s32 4, %v2689
    %v2691 = vrot.slane %v119, %v2690
    %v2692 = vlaneseq
    %v2693 = vshrl.u32 %v2692, 7
    %v2694 = vsub.s32 5, %v2693
    %v2695 = vrot.slane %v119, %v2694
    %v2696 = vlaneseq
    %v2697 = vshrl.u32 %v2696, 7
    %v2698 = vsub.s32 6, %v2697
    %v2699 = vrot.slane %v119, %v2698
    %v2700 = vlaneseq
    %v2701 = vshrl.u32 %v2700, 7
    %v2702 = vsub.s32 7, %v2701
    %v2703 = vrot.slane %v119, %v2702
    %v2704 = vlaneseq
    %v2705 = vshrl.u32 %v2704, 7
    %v2706 = vsub.s32 0, %v2705
    %v2707 = vrot.slane %v120, %v2706
    %v2708 = vlaneseq
    %v2709 = vshrl.u32 %v2708, 7
    %v2710 = vsub.s32 1, %v2709
    %v2711 = vrot.slane %v120, %v2710
    %v2712 = vlaneseq
    %v2713 = vshrl.u32 %v2712, 7
    %v2714 = vsub.s32 2, %v2713
    %v2715 = vrot.slane %v120, %v2714
    %v2716 = vlaneseq
    %v2717 = vshrl.u32 %v2716, 7
    %v2718 = vsub.s32 3, %v2717
    %v2719 = vrot.slane %v120, %v2718
    %v2720 = vlaneseq
    %v2721 = vshrl.u32 %v2720, 7
    %v2722 = vsub.s32 4, %v2721
    %v2723 = vrot.slane %v120, %v2722
    %v2724 = vlaneseq
    %v2725 = vshrl.u32 %v2724, 7
    %v2726 = vsub.s32 5, %v2725
    %v2727 = vrot.slane %v120, %v2726
    %v2728 = vlaneseq
    %v2729 = vshrl.u32 %v2728, 7
    %v2730 = vsub.s32 6, %v2729
    %v2731 = vrot.slane %v120, %v2730
    %v2732 = vlaneseq
    %v2733 = vshrl.u32 %v2732, 7
    %v2734 = vsub.s32 7, %v2733
    %v2735 = vrot.slane %v120, %v2734
    %v2736 = vlaneseq
    %v2737 = vshrl.u32 %v2736, 7
    %v2738 = vsub.s32 0, %v2737
    %v2739 = vrot.slane %v121, %v2738
    %v2740 = vlaneseq
    %v2741 = vshrl.u32 %v2740, 7
    %v2742 = vsub.s32 1, %v2741
    %v2743 = vrot.slane %v121, %v2742
    %v2744 = vlaneseq
    %v2745 = vshrl.u32 %v2744, 7
    %v2746 = vsub.s32 2, %v2745
    %v2747 = vrot.slane %v121, %v2746
    %v2748 = vlaneseq
    %v2749 = vshrl.u32 %v2748, 7
    %v2750 = vsub.s32 3, %v2749
    %v2751 = vrot.slane %v121, %v2750
    %v2752 = vlaneseq
    %v2753 = vshrl.u32 %v2752, 7
    %v2754 = vsub.s32 4, %v2753
    %v2755 = vrot.slane %v121, %v2754
    %v2756 = vlaneseq
    %v2757 = vshrl.u32 %v2756, 7
    %v2758 = vsub.s32 5, %v2757
    %v2759 = vrot.slane %v121, %v2758
    %v2760 = vlaneseq
    %v2761 = vshrl.u32 %v2760, 7
    %v2762 = vsub.s32 6, %v2761
    %v2763 = vrot.slane %v121, %v2762
    %v2764 = vlaneseq
    %v2765 = vshrl.u32 %v2764, 7
    %v2766 = vsub.s32 7, %v2765
    %v2767 = vrot.slane %v121, %v2766
    %v2768 = vlaneseq
    %v2769 = vshrl.u32 %v2768, 7
    %v2770 = vsub.s32 0, %v2769
    %v2771 = vrot.slane %v122, %v2770
    %v2772 = vlaneseq
    %v2773 = vshrl.u32 %v2772, 7
    %v2774 = vsub.s32 1, %v2773
    %v2775 = vrot.slane %v122, %v2774
    %v2776 = vlaneseq
    %v2777 = vshrl.u32 %v2776, 7
    %v2778 = vsub.s32 2, %v2777
    %v2779 = vrot.slane %v122, %v2778
    %v2780 = vlaneseq
    %v2781 = vshrl.u32 %v2780, 7
    %v2782 = vsub.s32 3, %v2781
    %v2783 = vrot.slane %v122, %v2782
    %v2784 = vlaneseq
    %v2785 = vshrl.u32 %v2784, 7
    %v2786 = vsub.s32 4, %v2785
    %v2787 = vrot.slane %v122, %v2786
    %v2788 = vlaneseq
    %v2789 = vshrl.u32 %v2788, 7
    %v2790 = vsub.s32 5, %v2789
    %v2791 = vrot.slane %v122, %v2790
    %v2792 = vlaneseq
    %v2793 = vshrl.u32 %v2792, 7
    %v2794 = vsub.s32 6, %v2793
    %v2795 = vrot.slane %v122, %v2794
    %v2796 = vlaneseq
    %v2797 = vshrl.u32 %v2796, 7
    %v2798 = vsub.s32 7, %v2797
    %v2799 = vrot.slane %v122, %v2798
    %v2800 = vlaneseq
    %v2801 = vshrl.u32 %v2800, 7
    %v2802 = vsub.s32 0, %v2801
    %v2803 = vrot.slane %v123, %v2802
    %v2804 = vlaneseq
    %v2805 = vshrl.u32 %v2804, 7
    %v2806 = vsub.s32 1, %v2805
    %v2807 = vrot.slane %v123, %v2806
    %v2808 = vlaneseq
    %v2809 = vshrl.u32 %v2808, 7
    %v2810 = vsub.s32 2, %v2809
    %v2811 = vrot.slane %v123, %v2810
    %v2812 = vlaneseq
    %v2813 = vshrl.u32 %v2812, 7
    %v2814 = vsub.s32 3, %v2813
    %v2815 = vrot.slane %v123, %v2814
    %v2816 = vlaneseq
    %v2817 = vshrl.u32 %v2816, 7
    %v2818 = vsub.s32 4, %v2817
    %v2819 = vrot.slane %v123, %v2818
    %v2820 = vlaneseq
    %v2821 = vshrl.u32 %v2820, 7
    %v2822 = vsub.s32 5, %v2821
    %v2823 = vrot.slane %v123, %v2822
    %v2824 = vlaneseq
    %v2825 = vshrl.u32 %v2824, 7
    %v2826 = vsub.s32 6, %v2825
    %v2827 = vrot.slane %v123, %v2826
    %v2828 = vlaneseq
    %v2829 = vshrl.u32 %v2828, 7
    %v2830 = vsub.s32 7, %v2829
    %v2831 = vrot.slane %v123, %v2830
    %v2832 = vlaneseq
    %v2833 = vshrl.u32 %v2832, 7
    %v2834 = vsub.s32 0, %v2833
    %v2835 = vrot.slane %v124, %v2834
    %v2836 = vlaneseq
    %v2837 = vshrl.u32 %v2836, 7
    %v2838 = vsub.s32 1, %v2837
    %v2839 = vrot.slane %v124, %v2838
    %v2840 = vlaneseq
    %v2841 = vshrl.u32 %v2840, 7
    %v2842 = vsub.s32 2, %v2841
    %v2843 = vrot.slane %v124, %v2842
    %v2844 = vlaneseq
    %v2845 = vshrl.u32 %v2844, 7
    %v2846 = vsub.s32 3, %v2845
    %v2847 = vrot.slane %v124, %v2846
    %v2848 = vlaneseq
    %v2849 = vshrl.u32 %v2848, 7
    %v2850 = vsub.s32 4, %v2849
    %v2851 = vrot.slane %v124, %v2850
    %v2852 = vlaneseq
    %v2853 = vshrl.u32 %v2852, 7
    %v2854 = vsub.s32 5, %v2853
    %v2855 = vrot.slane %v124, %v2854
    %v2856 = vlaneseq
    %v2857 = vshrl.u32 %v2856, 7
    %v2858 = vsub.s32 6, %v2857
    %v2859 = vrot.slane %v124, %v2858
    %v2860 = vlaneseq
    %v2861 = vshrl.u32 %v2860, 7
    %v2862 = vsub.s32 7, %v2861
    %v2863 = vrot.slane %v124, %v2862
    %v2864 = vlaneseq
    %v2865 = vshrl.u32 %v2864, 7
    %v2866 = vsub.s32 0, %v2865
    %v2867 = vrot.slane %v125, %v2866
    %v2868 = vlaneseq
    %v2869 = vshrl.u32 %v2868, 7
    %v2870 = vsub.s32 1, %v2869
    %v2871 = vrot.slane %v125, %v2870
    %v2872 = vlaneseq
    %v2873 = vshrl.u32 %v2872, 7
    %v2874 = vsub.s32 2, %v2873
    %v2875 = vrot.slane %v125, %v2874
    %v2876 = vlaneseq
    %v2877 = vshrl.u32 %v2876, 7
    %v2878 = vsub.s32 3, %v2877
    %v2879 = vrot.slane %v125, %v2878
    %v2880 = vlaneseq
    %v2881 = vshrl.u32 %v2880, 7
    %v2882 = vsub.s32 4, %v2881
    %v2883 = vrot.slane %v125, %v2882
    %v2884 = vlaneseq
    %v2885 = vshrl.u32 %v2884, 7
    %v2886 = vsub.s32 5, %v2885
    %v2887 = vrot.slane %v125, %v2886
    %v2888 = vlaneseq
    %v2889 = vshrl.u32 %v2888, 7
    %v2890 = vsub.s32 6, %v2889
    %v2891 = vrot.slane %v125, %v2890
    %v2892 = vlaneseq
    %v2893 = vshrl.u32 %v2892, 7
    %v2894 = vsub.s32 7, %v2893
    %v2895 = vrot.slane %v125, %v2894
    %v2896 = vlaneseq
    %v2897 = vshrl.u32 %v2896, 7
    %v2898 = vsub.s32 0, %v2897
    %v2899 = vrot.slane %v126, %v2898
    %v2900 = vlaneseq
    %v2901 = vshrl.u32 %v2900, 7
    %v2902 = vsub.s32 1, %v2901
    %v2903 = vrot.slane %v126, %v2902
    %v2904 = vlaneseq
    %v2905 = vshrl.u32 %v2904, 7
    %v2906 = vsub.s32 2, %v2905
    %v2907 = vrot.slane %v126, %v2906
    %v2908 = vlaneseq
    %v2909 = vshrl.u32 %v2908, 7
    %v2910 = vsub.s32 3, %v2909
    %v2911 = vrot.slane %v126, %v2910
    %v2912 = vlaneseq
    %v2913 = vshrl.u32 %v2912, 7
    %v2914 = vsub.s32 4, %v2913
    %v2915 = vrot.slane %v126, %v2914
    %v2916 = vlaneseq
    %v2917 = vshrl.u32 %v2916, 7
    %v2918 = vsub.s32 5, %v2917
    %v2919 = vrot.slane %v126, %v2918
    %v2920 = vlaneseq
    %v2921 = vshrl.u32 %v2920, 7
    %v2922 = vsub.s32 6, %v2921
    %v2923 = vrot.slane %v126, %v2922
    %v2924 = vlaneseq
    %v2925 = vshrl.u32 %v2924, 7
    %v2926 = vsub.s32 7, %v2925
    %v2927 = vrot.slane %v126, %v2926
    %v2928 = vcombine.low %v371, %v375
    %v2929 = vcombine.low %v379, %v383
    %v2931 = vunpack.c.l.s4 1983009808
    %v2932 = vunpack.c.0.s8 %v2931
    %v2933 = vlaneseq
    %v2934 = vshrl.u32 %v2933, 7
    %v2935 = vsub.s32 %v2932, %v2934
    %v2936 = vrot.slane %v2928, %v2935
    %v2938 = vunpack.c.l.s4 1983009808
    %v2939 = vunpack.c.0.s8 %v2938
    %v2940 = vlaneseq
    %v2941 = vshrl.u32 %v2940, 7
    %v2942 = vsub.s32 %v2939, %v2941
    %v2943 = vrot.slane %v2929, %v2942
    %v2944 = vcombine.low %v2936, %v2943
    %v2945 = vcombine.low %v387, %v391
    %v2946 = vcombine.low %v395, %v399
    %v2948 = vunpack.c.l.s4 1983009808
    %v2949 = vunpack.c.0.s8 %v2948
    %v2950 = vlaneseq
    %v2951 = vshrl.u32 %v2950, 7
    %v2952 = vsub.s32 %v2949, %v2951
    %v2953 = vrot.slane %v2945, %v2952
    %v2955 = vunpack.c.l.s4 1983009808
    %v2956 = vunpack.c.0.s8 %v2955
    %v2957 = vlaneseq
    %v2958 = vshrl.u32 %v2957, 7
    %v2959 = vsub.s32 %v2956, %v2958
    %v2960 = vrot.slane %v2946, %v2959
    %v2961 = vcombine.low %v2953, %v2960
    %v2962 = vcombine.low %v403, %v407
    %v2963 = vcombine.low %v411, %v415
    %v2965 = vunpack.c.l.s4 1983009808
    %v2966 = vunpack.c.0.s8 %v2965
    %v2967 = vlaneseq
    %v2968 = vshrl.u32 %v2967, 7
    %v2969 = vsub.s32 %v2966, %v2968
    %v2970 = vrot.slane %v2962, %v2969
    %v2972 = vunpack.c.l.s4 1983009808
    %v2973 = vunpack.c.0.s8 %v2972
    %v2974 = vlaneseq
    %v2975 = vshrl.u32 %v2974, 7
    %v2976 = vsub.s32 %v2973, %v2975
    %v2977 = vrot.slane %v2963, %v2976
    %v2978 = vcombine.low %v2970, %v2977
    %v2979 = vcombine.low %v419, %v423
    %v2980 = vcombine.low %v427, %v431
    %v2982 = vunpack.c.l.s4 1983009808
    %v2983 = vunpack.c.0.s8 %v2982
    %v2984 = vlaneseq
    %v2985 = vshrl.u32 %v2984, 7
    %v2986 = vsub.s32 %v2983, %v2985
    %v2987 = vrot.slane %v2979, %v2986
    %v2989 = vunpack.c.l.s4 1983009808
    %v2990 = vunpack.c.0.s8 %v2989
    %v2991 = vlaneseq
    %v2992 = vshrl.u32 %v2991, 7
    %v2993 = vsub.s32 %v2990, %v2992
    %v2994 = vrot.slane %v2980, %v2993
    %v2995 = vcombine.low %v2987, %v2994
    %v2996 = vcombine.low %v435, %v439
    %v2997 = vcombine.low %v443, %v447
    %v2999 = vunpack.c.l.s4 1983009808
    %v3000 = vunpack.c.0.s8 %v2999
    %v3001 = vlaneseq
    %v3002 = vshrl.u32 %v3001, 7
    %v3003 = vsub.s32 %v3000, %v3002
    %v3004 = vrot.slane %v2996, %v3003
    %v3006 = vunpack.c.l.s4 1983009808
    %v3007 = vunpack.c.0.s8 %v3006
    %v3008 = vlaneseq
    %v3009 = vshrl.u32 %v3008, 7
    %v3010 = vsub.s32 %v3007, %v3009
    %v3011 = vrot.slane %v2997, %v3010
    %v3012 = vcombine.low %v3004, %v3011
    %v3013 = vcombine.low %v451, %v455
    %v3014 = vcombine.low %v459, %v463
    %v3016 = vunpack.c.l.s4 1983009808
    %v3017 = vunpack.c.0.s8 %v3016
    %v3018 = vlaneseq
    %v3019 = vshrl.u32 %v3018, 7
    %v3020 = vsub.s32 %v3017, %v3019
    %v3021 = vrot.slane %v3013, %v3020
    %v3023 = vunpack.c.l.s4 1983009808
    %v3024 = vunpack.c.0.s8 %v3023
    %v3025 = vlaneseq
    %v3026 = vshrl.u32 %v3025, 7
    %v3027 = vsub.s32 %v3024, %v3026
    %v3028 = vrot.slane %v3014, %v3027
    %v3029 = vcombine.low %v3021, %v3028
    %v3030 = vcombine.low %v467, %v471
    %v3031 = vcombine.low %v475, %v479
    %v3033 = vunpack.c.l.s4 1983009808
    %v3034 = vunpack.c.0.s8 %v3033
    %v3035 = vlaneseq
    %v3036 = vshrl.u32 %v3035, 7
    %v3037 = vsub.s32 %v3034, %v3036
    %v3038 = vrot.slane %v3030, %v3037
    %v3040 = vunpack.c.l.s4 1983009808
    %v3041 = vunpack.c.0.s8 %v3040
    %v3042 = vlaneseq
    %v3043 = vshrl.u32 %v3042, 7
    %v3044 = vsub.s32 %v3041, %v3043
    %v3045 = vrot.slane %v3031, %v3044
    %v3046 = vcombine.low %v3038, %v3045
    %v3047 = vcombine.low %v483, %v487
    %v3048 = vcombine.low %v491, %v495
    %v3050 = vunpack.c.l.s4 1983009808
    %v3051 = vunpack.c.0.s8 %v3050
    %v3052 = vlaneseq
    %v3053 = vshrl.u32 %v3052, 7
    %v3054 = vsub.s32 %v3051, %v3053
    %v3055 = vrot.slane %v3047, %v3054
    %v3057 = vunpack.c.l.s4 1983009808
    %v3058 = vunpack.c.0.s8 %v3057
    %v3059 = vlaneseq
    %v3060 = vshrl.u32 %v3059, 7
    %v3061 = vsub.s32 %v3058, %v3060
    %v3062 = vrot.slane %v3048, %v3061
    %v3063 = vcombine.low %v3055, %v3062
    %v3064 = vcombine.low %v499, %v503
    %v3065 = vcombine.low %v507, %v511
    %v3067 = vunpack.c.l.s4 1983009808
    %v3068 = vunpack.c.0.s8 %v3067
    %v3069 = vlaneseq
    %v3070 = vshrl.u32 %v3069, 7
    %v3071 = vsub.s32 %v3068, %v3070
    %v3072 = vrot.slane %v3064, %v3071
    %v3074 = vunpack.c.l.s4 1983009808
    %v3075 = vunpack.c.0.s8 %v3074
    %v3076 = vlaneseq
    %v3077 = vshrl.u32 %v3076, 7
    %v3078 = vsub.s32 %v3075, %v3077
    %v3079 = vrot.slane %v3065, %v3078
    %v3080 = vcombine.low %v3072, %v3079
    %v3081 = vcombine.low %v515, %v519
    %v3082 = vcombine.low %v523, %v527
    %v3084 = vunpack.c.l.s4 1983009808
    %v3085 = vunpack.c.0.s8 %v3084
    %v3086 = vlaneseq
    %v3087 = vshrl.u32 %v3086, 7
    %v3088 = vsub.s32 %v3085, %v3087
    %v3089 = vrot.slane %v3081, %v3088
    %v3091 = vunpack.c.l.s4 1983009808
    %v3092 = vunpack.c.0.s8 %v3091
    %v3093 = vlaneseq
    %v3094 = vshrl.u32 %v3093, 7
    %v3095 = vsub.s32 %v3092, %v3094
    %v3096 = vrot.slane %v3082, %v3095
    %v3097 = vcombine.low %v3089, %v3096
    %v3098 = vcombine.low %v531, %v535
    %v3099 = vcombine.low %v539, %v543
    %v3101 = vunpack.c.l.s4 1983009808
    %v3102 = vunpack.c.0.s8 %v3101
    %v3103 = vlaneseq
    %v3104 = vshrl.u32 %v3103, 7
    %v3105 = vsub.s32 %v3102, %v3104
    %v3106 = vrot.slane %v3098, %v3105
    %v3108 = vunpack.c.l.s4 1983009808
    %v3109 = vunpack.c.0.s8 %v3108
    %v3110 = vlaneseq
    %v3111 = vshrl.u32 %v3110, 7
    %v3112 = vsub.s32 %v3109, %v3111
    %v3113 = vrot.slane %v3099, %v3112
    %v3114 = vcombine.low %v3106, %v3113
    %v3115 = vcombine.low %v547, %v551
    %v3116 = vcombine.low %v555, %v559
    %v3118 = vunpack.c.l.s4 1983009808
    %v3119 = vunpack.c.0.s8 %v3118
    %v3120 = vlaneseq
    %v3121 = vshrl.u32 %v3120, 7
    %v3122 = vsub.s32 %v3119, %v3121
    %v3123 = vrot.slane %v3115, %v3122
    %v3125 = vunpack.c.l.s4 1983009808
    %v3126 = vunpack.c.0.s8 %v3125
    %v3127 = vlaneseq
    %v3128 = vshrl.u32 %v3127, 7
    %v3129 = vsub.s32 %v3126, %v3128
    %v3130 = vrot.slane %v3116, %v3129
    %v3131 = vcombine.low %v3123, %v3130
    %v3132 = vcombine.low %v563, %v567
    %v3133 = vcombine.low %v571, %v575
    %v3135 = vunpack.c.l.s4 1983009808
    %v3136 = vunpack.c.0.s8 %v3135
    %v3137 = vlaneseq
    %v3138 = vshrl.u32 %v3137, 7
    %v3139 = vsub.s32 %v3136, %v3138
    %v3140 = vrot.slane %v3132, %v3139
    %v3142 = vunpack.c.l.s4 1983009808
    %v3143 = vunpack.c.0.s8 %v3142
    %v3144 = vlaneseq
    %v3145 = vshrl.u32 %v3144, 7
    %v3146 = vsub.s32 %v3143, %v3145
    %v3147 = vrot.slane %v3133, %v3146
    %v3148 = vcombine.low %v3140, %v3147
    %v3149 = vcombine.low %v579, %v583
    %v3150 = vcombine.low %v587, %v591
    %v3152 = vunpack.c.l.s4 1983009808
    %v3153 = vunpack.c.0.s8 %v3152
    %v3154 = vlaneseq
    %v3155 = vshrl.u32 %v3154, 7
    %v3156 = vsub.s32 %v3153, %v3155
    %v3157 = vrot.slane %v3149, %v3156
    %v3159 = vunpack.c.l.s4 1983009808
    %v3160 = vunpack.c.0.s8 %v3159
    %v3161 = vlaneseq
    %v3162 = vshrl.u32 %v3161, 7
    %v3163 = vsub.s32 %v3160, %v3162
    %v3164 = vrot.slane %v3150, %v3163
    %v3165 = vcombine.low %v3157, %v3164
    %v3166 = vcombine.low %v595, %v599
    %v3167 = vcombine.low %v603, %v607
    %v3169 = vunpack.c.l.s4 1983009808
    %v3170 = vunpack.c.0.s8 %v3169
    %v3171 = vlaneseq
    %v3172 = vshrl.u32 %v3171, 7
    %v3173 = vsub.s32 %v3170, %v3172
    %v3174 = vrot.slane %v3166, %v3173
    %v3176 = vunpack.c.l.s4 1983009808
    %v3177 = vunpack.c.0.s8 %v3176
    %v3178 = vlaneseq
    %v3179 = vshrl.u32 %v3178, 7
    %v3180 = vsub.s32 %v3177, %v3179
    %v3181 = vrot.slane %v3167, %v3180
    %v3182 = vcombine.low %v3174, %v3181
    %v3183 = vcombine.low %v611, %v615
    %v3184 = vcombine.low %v619, %v623
    %v3186 = vunpack.c.l.s4 1983009808
    %v3187 = vunpack.c.0.s8 %v3186
    %v3188 = vlaneseq
    %v3189 = vshrl.u32 %v3188, 7
    %v3190 = vsub.s32 %v3187, %v3189
    %v3191 = vrot.slane %v3183, %v3190
    %v3193 = vunpack.c.l.s4 1983009808
    %v3194 = vunpack.c.0.s8 %v3193
    %v3195 = vlaneseq
    %v3196 = vshrl.u32 %v3195, 7
    %v3197 = vsub.s32 %v3194, %v3196
    %v3198 = vrot.slane %v3184, %v3197
    %v3199 = vcombine.low %v3191, %v3198
    %v3200 = vcombine.low %v627, %v631
    %v3201 = vcombine.low %v635, %v639
    %v3203 = vunpack.c.l.s4 1983009808
    %v3204 = vunpack.c.0.s8 %v3203
    %v3205 = vlaneseq
    %v3206 = vshrl.u32 %v3205, 7
    %v3207 = vsub.s32 %v3204, %v3206
    %v3208 = vrot.slane %v3200, %v3207
    %v3210 = vunpack.c.l.s4 1983009808
    %v3211 = vunpack.c.0.s8 %v3210
    %v3212 = vlaneseq
    %v3213 = vshrl.u32 %v3212, 7
    %v3214 = vsub.s32 %v3211, %v3213
    %v3215 = vrot.slane %v3201, %v3214
    %v3216 = vcombine.low %v3208, %v3215
    %v3217 = vcombine.low %v643, %v647
    %v3218 = vcombine.low %v651, %v655
    %v3220 = vunpack.c.l.s4 1983009808
    %v3221 = vunpack.c.0.s8 %v3220
    %v3222 = vlaneseq
    %v3223 = vshrl.u32 %v3222, 7
    %v3224 = vsub.s32 %v3221, %v3223
    %v3225 = vrot.slane %v3217, %v3224
    %v3227 = vunpack.c.l.s4 1983009808
    %v3228 = vunpack.c.0.s8 %v3227
    %v3229 = vlaneseq
    %v3230 = vshrl.u32 %v3229, 7
    %v3231 = vsub.s32 %v3228, %v3230
    %v3232 = vrot.slane %v3218, %v3231
    %v3233 = vcombine.low %v3225, %v3232
    %v3234 = vcombine.low %v659, %v663
    %v3235 = vcombine.low %v667, %v671
    %v3237 = vunpack.c.l.s4 1983009808
    %v3238 = vunpack.c.0.s8 %v3237
    %v3239 = vlaneseq
    %v3240 = vshrl.u32 %v3239, 7
    %v3241 = vsub.s32 %v3238, %v3240
    %v3242 = vrot.slane %v3234, %v3241
    %v3244 = vunpack.c.l.s4 1983009808
    %v3245 = vunpack.c.0.s8 %v3244
    %v3246 = vlaneseq
    %v3247 = vshrl.u32 %v3246, 7
    %v3248 = vsub.s32 %v3245, %v3247
    %v3249 = vrot.slane %v3235, %v3248
    %v3250 = vcombine.low %v3242, %v3249
    %v3251 = vcombine.low %v675, %v679
    %v3252 = vcombine.low %v683, %v687
    %v3254 = vunpack.c.l.s4 1983009808
    %v3255 = vunpack.c.0.s8 %v3254
    %v3256 = vlaneseq
    %v3257 = vshrl.u32 %v3256, 7
    %v3258 = vsub.s32 %v3255, %v3257
    %v3259 = vrot.slane %v3251, %v3258
    %v3261 = vunpack.c.l.s4 1983009808
    %v3262 = vunpack.c.0.s8 %v3261
    %v3263 = vlaneseq
    %v3264 = vshrl.u32 %v3263, 7
    %v3265 = vsub.s32 %v3262, %v3264
    %v3266 = vrot.slane %v3252, %v3265
    %v3267 = vcombine.low %v3259, %v3266
    %v3268 = vcombine.low %v691, %v695
    %v3269 = vcombine.low %v699, %v703
    %v3271 = vunpack.c.l.s4 1983009808
    %v3272 = vunpack.c.0.s8 %v3271
    %v3273 = vlaneseq
    %v3274 = vshrl.u32 %v3273, 7
    %v3275 = vsub.s32 %v3272, %v3274
    %v3276 = vrot.slane %v3268, %v3275
    %v3278 = vunpack.c.l.s4 1983009808
    %v3279 = vunpack.c.0.s8 %v3278
    %v3280 = vlaneseq
    %v3281 = vshrl.u32 %v3280, 7
    %v3282 = vsub.s32 %v3279, %v3281
    %v3283 = vrot.slane %v3269, %v3282
    %v3284 = vcombine.low %v3276, %v3283
    %v3285 = vcombine.low %v707, %v711
    %v3286 = vcombine.low %v715, %v719
    %v3288 = vunpack.c.l.s4 1983009808
    %v3289 = vunpack.c.0.s8 %v3288
    %v3290 = vlaneseq
    %v3291 = vshrl.u32 %v3290, 7
    %v3292 = vsub.s32 %v3289, %v3291
    %v3293 = vrot.slane %v3285, %v3292
    %v3295 = vunpack.c.l.s4 1983009808
    %v3296 = vunpack.c.0.s8 %v3295
    %v3297 = vlaneseq
    %v3298 = vshrl.u32 %v3297, 7
    %v3299 = vsub.s32 %v3296, %v3298
    %v3300 = vrot.slane %v3286, %v3299
    %v3301 = vcombine.low %v3293, %v3300
    %v3302 = vcombine.low %v723, %v727
    %v3303 = vcombine.low %v731, %v735
    %v3305 = vunpack.c.l.s4 1983009808
    %v3306 = vunpack.c.0.s8 %v3305
    %v3307 = vlaneseq
    %v3308 = vshrl.u32 %v3307, 7
    %v3309 = vsub.s32 %v3306, %v3308
    %v3310 = vrot.slane %v3302, %v3309
    %v3312 = vunpack.c.l.s4 1983009808
    %v3313 = vunpack.c.0.s8 %v3312
    %v3314 = vlaneseq
    %v3315 = vshrl.u32 %v3314, 7
    %v3316 = vsub.s32 %v3313, %v3315
    %v3317 = vrot.slane %v3303, %v3316
    %v3318 = vcombine.low %v3310, %v3317
    %v3319 = vcombine.low %v739, %v743
    %v3320 = vcombine.low %v747, %v751
    %v3322 = vunpack.c.l.s4 1983009808
    %v3323 = vunpack.c.0.s8 %v3322
    %v3324 = vlaneseq
    %v3325 = vshrl.u32 %v3324, 7
    %v3326 = vsub.s32 %v3323, %v3325
    %v3327 = vrot.slane %v3319, %v3326
    %v3329 = vunpack.c.l.s4 1983009808
    %v3330 = vunpack.c.0.s8 %v3329
    %v3331 = vlaneseq
    %v3332 = vshrl.u32 %v3331, 7
    %v3333 = vsub.s32 %v3330, %v3332
    %v3334 = vrot.slane %v3320, %v3333
    %v3335 = vcombine.low %v3327, %v3334
    %v3336 = vcombine.low %v755, %v759
    %v3337 = vcombine.low %v763, %v767
    %v3339 = vunpack.c.l.s4 1983009808
    %v3340 = vunpack.c.0.s8 %v3339
    %v3341 = vlaneseq
    %v3342 = vshrl.u32 %v3341, 7
    %v3343 = vsub.s32 %v3340, %v3342
    %v3344 = vrot.slane %v3336, %v3343
    %v3346 = vunpack.c.l.s4 1983009808
    %v3347 = vunpack.c.0.s8 %v3346
    %v3348 = vlaneseq
    %v3349 = vshrl.u32 %v3348, 7
    %v3350 = vsub.s32 %v3347, %v3349
    %v3351 = vrot.slane %v3337, %v3350
    %v3352 = vcombine.low %v3344, %v3351
    %v3353 = vcombine.low %v771, %v775
    %v3354 = vcombine.low %v779, %v783
    %v3356 = vunpack.c.l.s4 1983009808
    %v3357 = vunpack.c.0.s8 %v3356
    %v3358 = vlaneseq
    %v3359 = vshrl.u32 %v3358, 7
    %v3360 = vsub.s32 %v3357, %v3359
    %v3361 = vrot.slane %v3353, %v3360
    %v3363 = vunpack.c.l.s4 1983009808
    %v3364 = vunpack.c.0.s8 %v3363
    %v3365 = vlaneseq
    %v3366 = vshrl.u32 %v3365, 7
    %v3367 = vsub.s32 %v3364, %v3366
    %v3368 = vrot.slane %v3354, %v3367
    %v3369 = vcombine.low %v3361, %v3368
    %v3370 = vcombine.low %v787, %v791
    %v3371 = vcombine.low %v795, %v799
    %v3373 = vunpack.c.l.s4 1983009808
    %v3374 = vunpack.c.0.s8 %v3373
    %v3375 = vlaneseq
    %v3376 = vshrl.u32 %v3375, 7
    %v3377 = vsub.s32 %v3374, %v3376
    %v3378 = vrot.slane %v3370, %v3377
    %v3380 = vunpack.c.l.s4 1983009808
    %v3381 = vunpack.c.0.s8 %v3380
    %v3382 = vlaneseq
    %v3383 = vshrl.u32 %v3382, 7
    %v3384 = vsub.s32 %v3381, %v3383
    %v3385 = vrot.slane %v3371, %v3384
    %v3386 = vcombine.low %v3378, %v3385
    %v3387 = vcombine.low %v803, %v807
    %v3388 = vcombine.low %v811, %v815
    %v3390 = vunpack.c.l.s4 1983009808
    %v3391 = vunpack.c.0.s8 %v3390
    %v3392 = vlaneseq
    %v3393 = vshrl.u32 %v3392, 7
    %v3394 = vsub.s32 %v3391, %v3393
    %v3395 = vrot.slane %v3387, %v3394
    %v3397 = vunpack.c.l.s4 1983009808
    %v3398 = vunpack.c.0.s8 %v3397
    %v3399 = vlaneseq
    %v3400 = vshrl.u32 %v3399, 7
    %v3401 = vsub.s32 %v3398, %v3400
    %v3402 = vrot.slane %v3388, %v3401
    %v3403 = vcombine.low %v3395, %v3402
    %v3404 = vcombine.low %v819, %v823
    %v3405 = vcombine.low %v827, %v831
    %v3407 = vunpack.c.l.s4 1983009808
    %v3408 = vunpack.c.0.s8 %v3407
    %v3409 = vlaneseq
    %v3410 = vshrl.u32 %v3409, 7
    %v3411 = vsub.s32 %v3408, %v3410
    %v3412 = vrot.slane %v3404, %v3411
    %v3414 = vunpack.c.l.s4 1983009808
    %v3415 = vunpack.c.0.s8 %v3414
    %v3416 = vlaneseq
    %v3417 = vshrl.u32 %v3416, 7
    %v3418 = vsub.s32 %v3415, %v3417
    %v3419 = vrot.slane %v3405, %v3418
    %v3420 = vcombine.low %v3412, %v3419
    %v3421 = vcombine.low %v835, %v839
    %v3422 = vcombine.low %v843, %v847
    %v3424 = vunpack.c.l.s4 1983009808
    %v3425 = vunpack.c.0.s8 %v3424
    %v3426 = vlaneseq
    %v3427 = vshrl.u32 %v3426, 7
    %v3428 = vsub.s32 %v3425, %v3427
    %v3429 = vrot.slane %v3421, %v3428
    %v3431 = vunpack.c.l.s4 1983009808
    %v3432 = vunpack.c.0.s8 %v3431
    %v3433 = vlaneseq
    %v3434 = vshrl.u32 %v3433, 7
    %v3435 = vsub.s32 %v3432, %v3434
    %v3436 = vrot.slane %v3422, %v3435
    %v3437 = vcombine.low %v3429, %v3436
    %v3438 = vcombine.low %v851, %v855
    %v3439 = vcombine.low %v859, %v863
    %v3441 = vunpack.c.l.s4 1983009808
    %v3442 = vunpack.c.0.s8 %v3441
    %v3443 = vlaneseq
    %v3444 = vshrl.u32 %v3443, 7
    %v3445 = vsub.s32 %v3442, %v3444
    %v3446 = vrot.slane %v3438, %v3445
    %v3448 = vunpack.c.l.s4 1983009808
    %v3449 = vunpack.c.0.s8 %v3448
    %v3450 = vlaneseq
    %v3451 = vshrl.u32 %v3450, 7
    %v3452 = vsub.s32 %v3449, %v3451
    %v3453 = vrot.slane %v3439, %v3452
    %v3454 = vcombine.low %v3446, %v3453
    %v3455 = vcombine.low %v867, %v871
    %v3456 = vcombine.low %v875, %v879
    %v3458 = vunpack.c.l.s4 1983009808
    %v3459 = vunpack.c.0.s8 %v3458
    %v3460 = vlaneseq
    %v3461 = vshrl.u32 %v3460, 7
    %v3462 = vsub.s32 %v3459, %v3461
    %v3463 = vrot.slane %v3455, %v3462
    %v3465 = vunpack.c.l.s4 1983009808
    %v3466 = vunpack.c.0.s8 %v3465
    %v3467 = vlaneseq
    %v3468 = vshrl.u32 %v3467, 7
    %v3469 = vsub.s32 %v3466, %v3468
    %v3470 = vrot.slane %v3456, %v3469
    %v3471 = vcombine.low %v3463, %v3470
    %v3472 = vcombine.low %v883, %v887
    %v3473 = vcombine.low %v891, %v895
    %v3475 = vunpack.c.l.s4 1983009808
    %v3476 = vunpack.c.0.s8 %v3475
    %v3477 = vlaneseq
    %v3478 = vshrl.u32 %v3477, 7
    %v3479 = vsub.s32 %v3476, %v3478
    %v3480 = vrot.slane %v3472, %v3479
    %v3482 = vunpack.c.l.s4 1983009808
    %v3483 = vunpack.c.0.s8 %v3482
    %v3484 = vlaneseq
    %v3485 = vshrl.u32 %v3484, 7
    %v3486 = vsub.s32 %v3483, %v3485
    %v3487 = vrot.slane %v3473, %v3486
    %v3488 = vcombine.low %v3480, %v3487
    %v3489 = vcombine.low %v899, %v903
    %v3490 = vcombine.low %v907, %v911
    %v3492 = vunpack.c.l.s4 1983009808
    %v3493 = vunpack.c.0.s8 %v3492
    %v3494 = vlaneseq
    %v3495 = vshrl.u32 %v3494, 7
    %v3496 = vsub.s32 %v3493, %v3495
    %v3497 = vrot.slane %v3489, %v3496
    %v3499 = vunpack.c.l.s4 1983009808
    %v3500 = vunpack.c.0.s8 %v3499
    %v3501 = vlaneseq
    %v3502 = vshrl.u32 %v3501, 7
    %v3503 = vsub.s32 %v3500, %v3502
    %v3504 = vrot.slane %v3490, %v3503
    %v3505 = vcombine.low %v3497, %v3504
    %v3506 = vcombine.low %v915, %v919
    %v3507 = vcombine.low %v923, %v927
    %v3509 = vunpack.c.l.s4 1983009808
    %v3510 = vunpack.c.0.s8 %v3509
    %v3511 = vlaneseq
    %v3512 = vshrl.u32 %v3511, 7
    %v3513 = vsub.s32 %v3510, %v3512
    %v3514 = vrot.slane %v3506, %v3513
    %v3516 = vunpack.c.l.s4 1983009808
    %v3517 = vunpack.c.0.s8 %v3516
    %v3518 = vlaneseq
    %v3519 = vshrl.u32 %v3518, 7
    %v3520 = vsub.s32 %v3517, %v3519
    %v3521 = vrot.slane %v3507, %v3520
    %v3522 = vcombine.low %v3514, %v3521
    %v3523 = vcombine.low %v931, %v935
    %v3524 = vcombine.low %v939, %v943
    %v3526 = vunpack.c.l.s4 1983009808
    %v3527 = vunpack.c.0.s8 %v3526
    %v3528 = vlaneseq
    %v3529 = vshrl.u32 %v3528, 7
    %v3530 = vsub.s32 %v3527, %v3529
    %v3531 = vrot.slane %v3523, %v3530
    %v3533 = vunpack.c.l.s4 1983009808
    %v3534 = vunpack.c.0.s8 %v3533
    %v3535 = vlaneseq
    %v3536 = vshrl.u32 %v3535, 7
    %v3537 = vsub.s32 %v3534, %v3536
    %v3538 = vrot.slane %v3524, %v3537
    %v3539 = vcombine.low %v3531, %v3538
    %v3540 = vcombine.low %v947, %v951
    %v3541 = vcombine.low %v955, %v959
    %v3543 = vunpack.c.l.s4 1983009808
    %v3544 = vunpack.c.0.s8 %v3543
    %v3545 = vlaneseq
    %v3546 = vshrl.u32 %v3545, 7
    %v3547 = vsub.s32 %v3544, %v3546
    %v3548 = vrot.slane %v3540, %v3547
    %v3550 = vunpack.c.l.s4 1983009808
    %v3551 = vunpack.c.0.s8 %v3550
    %v3552 = vlaneseq
    %v3553 = vshrl.u32 %v3552, 7
    %v3554 = vsub.s32 %v3551, %v3553
    %v3555 = vrot.slane %v3541, %v3554
    %v3556 = vcombine.low %v3548, %v3555
    %v3557 = vcombine.low %v963, %v967
    %v3558 = vcombine.low %v971, %v975
    %v3560 = vunpack.c.l.s4 1983009808
    %v3561 = vunpack.c.0.s8 %v3560
    %v3562 = vlaneseq
    %v3563 = vshrl.u32 %v3562, 7
    %v3564 = vsub.s32 %v3561, %v3563
    %v3565 = vrot.slane %v3557, %v3564
    %v3567 = vunpack.c.l.s4 1983009808
    %v3568 = vunpack.c.0.s8 %v3567
    %v3569 = vlaneseq
    %v3570 = vshrl.u32 %v3569, 7
    %v3571 = vsub.s32 %v3568, %v3570
    %v3572 = vrot.slane %v3558, %v3571
    %v3573 = vcombine.low %v3565, %v3572
    %v3574 = vcombine.low %v979, %v983
    %v3575 = vcombine.low %v987, %v991
    %v3577 = vunpack.c.l.s4 1983009808
    %v3578 = vunpack.c.0.s8 %v3577
    %v3579 = vlaneseq
    %v3580 = vshrl.u32 %v3579, 7
    %v3581 = vsub.s32 %v3578, %v3580
    %v3582 = vrot.slane %v3574, %v3581
    %v3584 = vunpack.c.l.s4 1983009808
    %v3585 = vunpack.c.0.s8 %v3584
    %v3586 = vlaneseq
    %v3587 = vshrl.u32 %v3586, 7
    %v3588 = vsub.s32 %v3585, %v3587
    %v3589 = vrot.slane %v3575, %v3588
    %v3590 = vcombine.low %v3582, %v3589
    %v3591 = vcombine.low %v995, %v999
    %v3592 = vcombine.low %v1003, %v1007
    %v3594 = vunpack.c.l.s4 1983009808
    %v3595 = vunpack.c.0.s8 %v3594
    %v3596 = vlaneseq
    %v3597 = vshrl.u32 %v3596, 7
    %v3598 = vsub.s32 %v3595, %v3597
    %v3599 = vrot.slane %v3591, %v3598
    %v3601 = vunpack.c.l.s4 1983009808
    %v3602 = vunpack.c.0.s8 %v3601
    %v3603 = vlaneseq
    %v3604 = vshrl.u32 %v3603, 7
    %v3605 = vsub.s32 %v3602, %v3604
    %v3606 = vrot.slane %v3592, %v3605
    %v3607 = vcombine.low %v3599, %v3606
    %v3608 = vcombine.low %v1011, %v1015
    %v3609 = vcombine.low %v1019, %v1023
    %v3611 = vunpack.c.l.s4 1983009808
    %v3612 = vunpack.c.0.s8 %v3611
    %v3613 = vlaneseq
    %v3614 = vshrl.u32 %v3613, 7
    %v3615 = vsub.s32 %v3612, %v3614
    %v3616 = vrot.slane %v3608, %v3615
    %v3618 = vunpack.c.l.s4 1983009808
    %v3619 = vunpack.c.0.s8 %v3618
    %v3620 = vlaneseq
    %v3621 = vshrl.u32 %v3620, 7
    %v3622 = vsub.s32 %v3619, %v3621
    %v3623 = vrot.slane %v3609, %v3622
    %v3624 = vcombine.low %v3616, %v3623
    %v3625 = vcombine.low %v1027, %v1031
    %v3626 = vcombine.low %v1035, %v1039
    %v3628 = vunpack.c.l.s4 1983009808
    %v3629 = vunpack.c.0.s8 %v3628
    %v3630 = vlaneseq
    %v3631 = vshrl.u32 %v3630, 7
    %v3632 = vsub.s32 %v3629, %v3631
    %v3633 = vrot.slane %v3625, %v3632
    %v3635 = vunpack.c.l.s4 1983009808
    %v3636 = vunpack.c.0.s8 %v3635
    %v3637 = vlaneseq
    %v3638 = vshrl.u32 %v3637, 7
    %v3639 = vsub.s32 %v3636, %v3638
    %v3640 = vrot.slane %v3626, %v3639
    %v3641 = vcombine.low %v3633, %v3640
    %v3642 = vcombine.low %v1043, %v1047
    %v3643 = vcombine.low %v1051, %v1055
    %v3645 = vunpack.c.l.s4 1983009808
    %v3646 = vunpack.c.0.s8 %v3645
    %v3647 = vlaneseq
    %v3648 = vshrl.u32 %v3647, 7
    %v3649 = vsub.s32 %v3646, %v3648
    %v3650 = vrot.slane %v3642, %v3649
    %v3652 = vunpack.c.l.s4 1983009808
    %v3653 = vunpack.c.0.s8 %v3652
    %v3654 = vlaneseq
    %v3655 = vshrl.u32 %v3654, 7
    %v3656 = vsub.s32 %v3653, %v3655
    %v3657 = vrot.slane %v3643, %v3656
    %v3658 = vcombine.low %v3650, %v3657
    %v3659 = vcombine.low %v1059, %v1063
    %v3660 = vcombine.low %v1067, %v1071
    %v3662 = vunpack.c.l.s4 1983009808
    %v3663 = vunpack.c.0.s8 %v3662
    %v3664 = vlaneseq
    %v3665 = vshrl.u32 %v3664, 7
    %v3666 = vsub.s32 %v3663, %v3665
    %v3667 = vrot.slane %v3659, %v3666
    %v3669 = vunpack.c.l.s4 1983009808
    %v3670 = vunpack.c.0.s8 %v3669
    %v3671 = vlaneseq
    %v3672 = vshrl.u32 %v3671, 7
    %v3673 = vsub.s32 %v3670, %v3672
    %v3674 = vrot.slane %v3660, %v3673
    %v3675 = vcombine.low %v3667, %v3674
    %v3676 = vcombine.low %v1075, %v1079
    %v3677 = vcombine.low %v1083, %v1087
    %v3679 = vunpack.c.l.s4 1983009808
    %v3680 = vunpack.c.0.s8 %v3679
    %v3681 = vlaneseq
    %v3682 = vshrl.u32 %v3681, 7
    %v3683 = vsub.s32 %v3680, %v3682
    %v3684 = vrot.slane %v3676, %v3683
    %v3686 = vunpack.c.l.s4 1983009808
    %v3687 = vunpack.c.0.s8 %v3686
    %v3688 = vlaneseq
    %v3689 = vshrl.u32 %v3688, 7
    %v3690 = vsub.s32 %v3687, %v3689
    %v3691 = vrot.slane %v3677, %v3690
    %v3692 = vcombine.low %v3684, %v3691
    %v3693 = vcombine.low %v1091, %v1095
    %v3694 = vcombine.low %v1099, %v1103
    %v3696 = vunpack.c.l.s4 1983009808
    %v3697 = vunpack.c.0.s8 %v3696
    %v3698 = vlaneseq
    %v3699 = vshrl.u32 %v3698, 7
    %v3700 = vsub.s32 %v3697, %v3699
    %v3701 = vrot.slane %v3693, %v3700
    %v3703 = vunpack.c.l.s4 1983009808
    %v3704 = vunpack.c.0.s8 %v3703
    %v3705 = vlaneseq
    %v3706 = vshrl.u32 %v3705, 7
    %v3707 = vsub.s32 %v3704, %v3706
    %v3708 = vrot.slane %v3694, %v3707
    %v3709 = vcombine.low %v3701, %v3708
    %v3710 = vcombine.low %v1107, %v1111
    %v3711 = vcombine.low %v1115, %v1119
    %v3713 = vunpack.c.l.s4 1983009808
    %v3714 = vunpack.c.0.s8 %v3713
    %v3715 = vlaneseq
    %v3716 = vshrl.u32 %v3715, 7
    %v3717 = vsub.s32 %v3714, %v3716
    %v3718 = vrot.slane %v3710, %v3717
    %v3720 = vunpack.c.l.s4 1983009808
    %v3721 = vunpack.c.0.s8 %v3720
    %v3722 = vlaneseq
    %v3723 = vshrl.u32 %v3722, 7
    %v3724 = vsub.s32 %v3721, %v3723
    %v3725 = vrot.slane %v3711, %v3724
    %v3726 = vcombine.low %v3718, %v3725
    %v3727 = vcombine.low %v1123, %v1127
    %v3728 = vcombine.low %v1131, %v1135
    %v3730 = vunpack.c.l.s4 1983009808
    %v3731 = vunpack.c.0.s8 %v3730
    %v3732 = vlaneseq
    %v3733 = vshrl.u32 %v3732, 7
    %v3734 = vsub.s32 %v3731, %v3733
    %v3735 = vrot.slane %v3727, %v3734
    %v3737 = vunpack.c.l.s4 1983009808
    %v3738 = vunpack.c.0.s8 %v3737
    %v3739 = vlaneseq
    %v3740 = vshrl.u32 %v3739, 7
    %v3741 = vsub.s32 %v3738, %v3740
    %v3742 = vrot.slane %v3728, %v3741
    %v3743 = vcombine.low %v3735, %v3742
    %v3744 = vcombine.low %v1139, %v1143
    %v3745 = vcombine.low %v1147, %v1151
    %v3747 = vunpack.c.l.s4 1983009808
    %v3748 = vunpack.c.0.s8 %v3747
    %v3749 = vlaneseq
    %v3750 = vshrl.u32 %v3749, 7
    %v3751 = vsub.s32 %v3748, %v3750
    %v3752 = vrot.slane %v3744, %v3751
    %v3754 = vunpack.c.l.s4 1983009808
    %v3755 = vunpack.c.0.s8 %v3754
    %v3756 = vlaneseq
    %v3757 = vshrl.u32 %v3756, 7
    %v3758 = vsub.s32 %v3755, %v3757
    %v3759 = vrot.slane %v3745, %v3758
    %v3760 = vcombine.low %v3752, %v3759
    %v3761 = vcombine.low %v1155, %v1159
    %v3762 = vcombine.low %v1163, %v1167
    %v3764 = vunpack.c.l.s4 1983009808
    %v3765 = vunpack.c.0.s8 %v3764
    %v3766 = vlaneseq
    %v3767 = vshrl.u32 %v3766, 7
    %v3768 = vsub.s32 %v3765, %v3767
    %v3769 = vrot.slane %v3761, %v3768
    %v3771 = vunpack.c.l.s4 1983009808
    %v3772 = vunpack.c.0.s8 %v3771
    %v3773 = vlaneseq
    %v3774 = vshrl.u32 %v3773, 7
    %v3775 = vsub.s32 %v3772, %v3774
    %v3776 = vrot.slane %v3762, %v3775
    %v3777 = vcombine.low %v3769, %v3776
    %v3778 = vcombine.low %v1171, %v1175
    %v3779 = vcombine.low %v1179, %v1183
    %v3781 = vunpack.c.l.s4 1983009808
    %v3782 = vunpack.c.0.s8 %v3781
    %v3783 = vlaneseq
    %v3784 = vshrl.u32 %v3783, 7
    %v3785 = vsub.s32 %v3782, %v3784
    %v3786 = vrot.slane %v3778, %v3785
    %v3788 = vunpack.c.l.s4 1983009808
    %v3789 = vunpack.c.0.s8 %v3788
    %v3790 = vlaneseq
    %v3791 = vshrl.u32 %v3790, 7
    %v3792 = vsub.s32 %v3789, %v3791
    %v3793 = vrot.slane %v3779, %v3792
    %v3794 = vcombine.low %v3786, %v3793
    %v3795 = vcombine.low %v1187, %v1191
    %v3796 = vcombine.low %v1195, %v1199
    %v3798 = vunpack.c.l.s4 1983009808
    %v3799 = vunpack.c.0.s8 %v3798
    %v3800 = vlaneseq
    %v3801 = vshrl.u32 %v3800, 7
    %v3802 = vsub.s32 %v3799, %v3801
    %v3803 = vrot.slane %v3795, %v3802
    %v3805 = vunpack.c.l.s4 1983009808
    %v3806 = vunpack.c.0.s8 %v3805
    %v3807 = vlaneseq
    %v3808 = vshrl.u32 %v3807, 7
    %v3809 = vsub.s32 %v3806, %v3808
    %v3810 = vrot.slane %v3796, %v3809
    %v3811 = vcombine.low %v3803, %v3810
    %v3812 = vcombine.low %v1203, %v1207
    %v3813 = vcombine.low %v1211, %v1215
    %v3815 = vunpack.c.l.s4 1983009808
    %v3816 = vunpack.c.0.s8 %v3815
    %v3817 = vlaneseq
    %v3818 = vshrl.u32 %v3817, 7
    %v3819 = vsub.s32 %v3816, %v3818
    %v3820 = vrot.slane %v3812, %v3819
    %v3822 = vunpack.c.l.s4 1983009808
    %v3823 = vunpack.c.0.s8 %v3822
    %v3824 = vlaneseq
    %v3825 = vshrl.u32 %v3824, 7
    %v3826 = vsub.s32 %v3823, %v3825
    %v3827 = vrot.slane %v3813, %v3826
    %v3828 = vcombine.low %v3820, %v3827
    %v3829 = vcombine.low %v1219, %v1223
    %v3830 = vcombine.low %v1227, %v1231
    %v3832 = vunpack.c.l.s4 1983009808
    %v3833 = vunpack.c.0.s8 %v3832
    %v3834 = vlaneseq
    %v3835 = vshrl.u32 %v3834, 7
    %v3836 = vsub.s32 %v3833, %v3835
    %v3837 = vrot.slane %v3829, %v3836
    %v3839 = vunpack.c.l.s4 1983009808
    %v3840 = vunpack.c.0.s8 %v3839
    %v3841 = vlaneseq
    %v3842 = vshrl.u32 %v3841, 7
    %v3843 = vsub.s32 %v3840, %v3842
    %v3844 = vrot.slane %v3830, %v3843
    %v3845 = vcombine.low %v3837, %v3844
    %v3846 = vcombine.low %v1235, %v1239
    %v3847 = vcombine.low %v1243, %v1247
    %v3849 = vunpack.c.l.s4 1983009808
    %v3850 = vunpack.c.0.s8 %v3849
    %v3851 = vlaneseq
    %v3852 = vshrl.u32 %v3851, 7
    %v3853 = vsub.s32 %v3850, %v3852
    %v3854 = vrot.slane %v3846, %v3853
    %v3856 = vunpack.c.l.s4 1983009808
    %v3857 = vunpack.c.0.s8 %v3856
    %v3858 = vlaneseq
    %v3859 = vshrl.u32 %v3858, 7
    %v3860 = vsub.s32 %v3857, %v3859
    %v3861 = vrot.slane %v3847, %v3860
    %v3862 = vcombine.low %v3854, %v3861
    %v3863 = vcombine.low %v1251, %v1255
    %v3864 = vcombine.low %v1259, %v1263
    %v3866 = vunpack.c.l.s4 1983009808
    %v3867 = vunpack.c.0.s8 %v3866
    %v3868 = vlaneseq
    %v3869 = vshrl.u32 %v3868, 7
    %v3870 = vsub.s32 %v3867, %v3869
    %v3871 = vrot.slane %v3863, %v3870
    %v3873 = vunpack.c.l.s4 1983009808
    %v3874 = vunpack.c.0.s8 %v3873
    %v3875 = vlaneseq
    %v3876 = vshrl.u32 %v3875, 7
    %v3877 = vsub.s32 %v3874, %v3876
    %v3878 = vrot.slane %v3864, %v3877
    %v3879 = vcombine.low %v3871, %v3878
    %v3880 = vcombine.low %v1267, %v1271
    %v3881 = vcombine.low %v1275, %v1279
    %v3883 = vunpack.c.l.s4 1983009808
    %v3884 = vunpack.c.0.s8 %v3883
    %v3885 = vlaneseq
    %v3886 = vshrl.u32 %v3885, 7
    %v3887 = vsub.s32 %v3884, %v3886
    %v3888 = vrot.slane %v3880, %v3887
    %v3890 = vunpack.c.l.s4 1983009808
    %v3891 = vunpack.c.0.s8 %v3890
    %v3892 = vlaneseq
    %v3893 = vshrl.u32 %v3892, 7
    %v3894 = vsub.s32 %v3891, %v3893
    %v3895 = vrot.slane %v3881, %v3894
    %v3896 = vcombine.low %v3888, %v3895
    %v3897 = vcombine.low %v1283, %v1287
    %v3898 = vcombine.low %v1291, %v1295
    %v3900 = vunpack.c.l.s4 1983009808
    %v3901 = vunpack.c.0.s8 %v3900
    %v3902 = vlaneseq
    %v3903 = vshrl.u32 %v3902, 7
    %v3904 = vsub.s32 %v3901, %v3903
    %v3905 = vrot.slane %v3897, %v3904
    %v3907 = vunpack.c.l.s4 1983009808
    %v3908 = vunpack.c.0.s8 %v3907
    %v3909 = vlaneseq
    %v3910 = vshrl.u32 %v3909, 7
    %v3911 = vsub.s32 %v3908, %v3910
    %v3912 = vrot.slane %v3898, %v3911
    %v3913 = vcombine.low %v3905, %v3912
    %v3914 = vcombine.low %v1299, %v1303
    %v3915 = vcombine.low %v1307, %v1311
    %v3917 = vunpack.c.l.s4 1983009808
    %v3918 = vunpack.c.0.s8 %v3917
    %v3919 = vlaneseq
    %v3920 = vshrl.u32 %v3919, 7
    %v3921 = vsub.s32 %v3918, %v3920
    %v3922 = vrot.slane %v3914, %v3921
    %v3924 = vunpack.c.l.s4 1983009808
    %v3925 = vunpack.c.0.s8 %v3924
    %v3926 = vlaneseq
    %v3927 = vshrl.u32 %v3926, 7
    %v3928 = vsub.s32 %v3925, %v3927
    %v3929 = vrot.slane %v3915, %v3928
    %v3930 = vcombine.low %v3922, %v3929
    %v3931 = vcombine.low %v1315, %v1319
    %v3932 = vcombine.low %v1323, %v1327
    %v3934 = vunpack.c.l.s4 1983009808
    %v3935 = vunpack.c.0.s8 %v3934
    %v3936 = vlaneseq
    %v3937 = vshrl.u32 %v3936, 7
    %v3938 = vsub.s32 %v3935, %v3937
    %v3939 = vrot.slane %v3931, %v3938
    %v3941 = vunpack.c.l.s4 1983009808
    %v3942 = vunpack.c.0.s8 %v3941
    %v3943 = vlaneseq
    %v3944 = vshrl.u32 %v3943, 7
    %v3945 = vsub.s32 %v3942, %v3944
    %v3946 = vrot.slane %v3932, %v3945
    %v3947 = vcombine.low %v3939, %v3946
    %v3948 = vcombine.low %v1331, %v1335
    %v3949 = vcombine.low %v1339, %v1343
    %v3951 = vunpack.c.l.s4 1983009808
    %v3952 = vunpack.c.0.s8 %v3951
    %v3953 = vlaneseq
    %v3954 = vshrl.u32 %v3953, 7
    %v3955 = vsub.s32 %v3952, %v3954
    %v3956 = vrot.slane %v3948, %v3955
    %v3958 = vunpack.c.l.s4 1983009808
    %v3959 = vunpack.c.0.s8 %v3958
    %v3960 = vlaneseq
    %v3961 = vshrl.u32 %v3960, 7
    %v3962 = vsub.s32 %v3959, %v3961
    %v3963 = vrot.slane %v3949, %v3962
    %v3964 = vcombine.low %v3956, %v3963
    %v3965 = vcombine.low %v1347, %v1351
    %v3966 = vcombine.low %v1355, %v1359
    %v3968 = vunpack.c.l.s4 1983009808
    %v3969 = vunpack.c.0.s8 %v3968
    %v3970 = vlaneseq
    %v3971 = vshrl.u32 %v3970, 7
    %v3972 = vsub.s32 %v3969, %v3971
    %v3973 = vrot.slane %v3965, %v3972
    %v3975 = vunpack.c.l.s4 1983009808
    %v3976 = vunpack.c.0.s8 %v3975
    %v3977 = vlaneseq
    %v3978 = vshrl.u32 %v3977, 7
    %v3979 = vsub.s32 %v3976, %v3978
    %v3980 = vrot.slane %v3966, %v3979
    %v3981 = vcombine.low %v3973, %v3980
    %v3982 = vcombine.low %v1363, %v1367
    %v3983 = vcombine.low %v1371, %v1375
    %v3985 = vunpack.c.l.s4 1983009808
    %v3986 = vunpack.c.0.s8 %v3985
    %v3987 = vlaneseq
    %v3988 = vshrl.u32 %v3987, 7
    %v3989 = vsub.s32 %v3986, %v3988
    %v3990 = vrot.slane %v3982, %v3989
    %v3992 = vunpack.c.l.s4 1983009808
    %v3993 = vunpack.c.0.s8 %v3992
    %v3994 = vlaneseq
    %v3995 = vshrl.u32 %v3994, 7
    %v3996 = vsub.s32 %v3993, %v3995
    %v3997 = vrot.slane %v3983, %v3996
    %v3998 = vcombine.low %v3990, %v3997
    %v3999 = vcombine.low %v1379, %v1383
    %v4000 = vcombine.low %v1387, %v1391
    %v4002 = vunpack.c.l.s4 1983009808
    %v4003 = vunpack.c.0.s8 %v4002
    %v4004 = vlaneseq
    %v4005 = vshrl.u32 %v4004, 7
    %v4006 = vsub.s32 %v4003, %v4005
    %v4007 = vrot.slane %v3999, %v4006
    %v4009 = vunpack.c.l.s4 1983009808
    %v4010 = vunpack.c.0.s8 %v4009
    %v4011 = vlaneseq
    %v4012 = vshrl.u32 %v4011, 7
    %v4013 = vsub.s32 %v4010, %v4012
    %v4014 = vrot.slane %v4000, %v4013
    %v4015 = vcombine.low %v4007, %v4014
    %v4016 = vcombine.low %v1395, %v1399
    %v4017 = vcombine.low %v1403, %v1407
    %v4019 = vunpack.c.l.s4 1983009808
    %v4020 = vunpack.c.0.s8 %v4019
    %v4021 = vlaneseq
    %v4022 = vshrl.u32 %v4021, 7
    %v4023 = vsub.s32 %v4020, %v4022
    %v4024 = vrot.slane %v4016, %v4023
    %v4026 = vunpack.c.l.s4 1983009808
    %v4027 = vunpack.c.0.s8 %v4026
    %v4028 = vlaneseq
    %v4029 = vshrl.u32 %v4028, 7
    %v4030 = vsub.s32 %v4027, %v4029
    %v4031 = vrot.slane %v4017, %v4030
    %v4032 = vcombine.low %v4024, %v4031
    %v4033 = vcombine.low %v1411, %v1415
    %v4034 = vcombine.low %v1419, %v1423
    %v4036 = vunpack.c.l.s4 1983009808
    %v4037 = vunpack.c.0.s8 %v4036
    %v4038 = vlaneseq
    %v4039 = vshrl.u32 %v4038, 7
    %v4040 = vsub.s32 %v4037, %v4039
    %v4041 = vrot.slane %v4033, %v4040
    %v4043 = vunpack.c.l.s4 1983009808
    %v4044 = vunpack.c.0.s8 %v4043
    %v4045 = vlaneseq
    %v4046 = vshrl.u32 %v4045, 7
    %v4047 = vsub.s32 %v4044, %v4046
    %v4048 = vrot.slane %v4034, %v4047
    %v4049 = vcombine.low %v4041, %v4048
    %v4050 = vcombine.low %v1427, %v1431
    %v4051 = vcombine.low %v1435, %v1439
    %v4053 = vunpack.c.l.s4 1983009808
    %v4054 = vunpack.c.0.s8 %v4053
    %v4055 = vlaneseq
    %v4056 = vshrl.u32 %v4055, 7
    %v4057 = vsub.s32 %v4054, %v4056
    %v4058 = vrot.slane %v4050, %v4057
    %v4060 = vunpack.c.l.s4 1983009808
    %v4061 = vunpack.c.0.s8 %v4060
    %v4062 = vlaneseq
    %v4063 = vshrl.u32 %v4062, 7
    %v4064 = vsub.s32 %v4061, %v4063
    %v4065 = vrot.slane %v4051, %v4064
    %v4066 = vcombine.low %v4058, %v4065
    %v4067 = vcombine.low %v1443, %v1447
    %v4068 = vcombine.low %v1451, %v1455
    %v4070 = vunpack.c.l.s4 1983009808
    %v4071 = vunpack.c.0.s8 %v4070
    %v4072 = vlaneseq
    %v4073 = vshrl.u32 %v4072, 7
    %v4074 = vsub.s32 %v4071, %v4073
    %v4075 = vrot.slane %v4067, %v4074
    %v4077 = vunpack.c.l.s4 1983009808
    %v4078 = vunpack.c.0.s8 %v4077
    %v4079 = vlaneseq
    %v4080 = vshrl.u32 %v4079, 7
    %v4081 = vsub.s32 %v4078, %v4080
    %v4082 = vrot.slane %v4068, %v4081
    %v4083 = vcombine.low %v4075, %v4082
    %v4084 = vcombine.low %v1459, %v1463
    %v4085 = vcombine.low %v1467, %v1471
    %v4087 = vunpack.c.l.s4 1983009808
    %v4088 = vunpack.c.0.s8 %v4087
    %v4089 = vlaneseq
    %v4090 = vshrl.u32 %v4089, 7
    %v4091 = vsub.s32 %v4088, %v4090
    %v4092 = vrot.slane %v4084, %v4091
    %v4094 = vunpack.c.l.s4 1983009808
    %v4095 = vunpack.c.0.s8 %v4094
    %v4096 = vlaneseq
    %v4097 = vshrl.u32 %v4096, 7
    %v4098 = vsub.s32 %v4095, %v4097
    %v4099 = vrot.slane %v4085, %v4098
    %v4100 = vcombine.low %v4092, %v4099
    %v4101 = vcombine.low %v1475, %v1479
    %v4102 = vcombine.low %v1483, %v1487
    %v4104 = vunpack.c.l.s4 1983009808
    %v4105 = vunpack.c.0.s8 %v4104
    %v4106 = vlaneseq
    %v4107 = vshrl.u32 %v4106, 7
    %v4108 = vsub.s32 %v4105, %v4107
    %v4109 = vrot.slane %v4101, %v4108
    %v4111 = vunpack.c.l.s4 1983009808
    %v4112 = vunpack.c.0.s8 %v4111
    %v4113 = vlaneseq
    %v4114 = vshrl.u32 %v4113, 7
    %v4115 = vsub.s32 %v4112, %v4114
    %v4116 = vrot.slane %v4102, %v4115
    %v4117 = vcombine.low %v4109, %v4116
    %v4118 = vcombine.low %v1491, %v1495
    %v4119 = vcombine.low %v1499, %v1503
    %v4121 = vunpack.c.l.s4 1983009808
    %v4122 = vunpack.c.0.s8 %v4121
    %v4123 = vlaneseq
    %v4124 = vshrl.u32 %v4123, 7
    %v4125 = vsub.s32 %v4122, %v4124
    %v4126 = vrot.slane %v4118, %v4125
    %v4128 = vunpack.c.l.s4 1983009808
    %v4129 = vunpack.c.0.s8 %v4128
    %v4130 = vlaneseq
    %v4131 = vshrl.u32 %v4130, 7
    %v4132 = vsub.s32 %v4129, %v4131
    %v4133 = vrot.slane %v4119, %v4132
    %v4134 = vcombine.low %v4126, %v4133
    %v4135 = vcombine.low %v1507, %v1511
    %v4136 = vcombine.low %v1515, %v1519
    %v4138 = vunpack.c.l.s4 1983009808
    %v4139 = vunpack.c.0.s8 %v4138
    %v4140 = vlaneseq
    %v4141 = vshrl.u32 %v4140, 7
    %v4142 = vsub.s32 %v4139, %v4141
    %v4143 = vrot.slane %v4135, %v4142
    %v4145 = vunpack.c.l.s4 1983009808
    %v4146 = vunpack.c.0.s8 %v4145
    %v4147 = vlaneseq
    %v4148 = vshrl.u32 %v4147, 7
    %v4149 = vsub.s32 %v4146, %v4148
    %v4150 = vrot.slane %v4136, %v4149
    %v4151 = vcombine.low %v4143, %v4150
    %v4152 = vcombine.low %v1523, %v1527
    %v4153 = vcombine.low %v1531, %v1535
    %v4155 = vunpack.c.l.s4 1983009808
    %v4156 = vunpack.c.0.s8 %v4155
    %v4157 = vlaneseq
    %v4158 = vshrl.u32 %v4157, 7
    %v4159 = vsub.s32 %v4156, %v4158
    %v4160 = vrot.slane %v4152, %v4159
    %v4162 = vunpack.c.l.s4 1983009808
    %v4163 = vunpack.c.0.s8 %v4162
    %v4164 = vlaneseq
    %v4165 = vshrl.u32 %v4164, 7
    %v4166 = vsub.s32 %v4163, %v4165
    %v4167 = vrot.slane %v4153, %v4166
    %v4168 = vcombine.low %v4160, %v4167
    %v4169 = vcombine.low %v1539, %v1543
    %v4170 = vcombine.low %v1547, %v1551
    %v4172 = vunpack.c.l.s4 1983009808
    %v4173 = vunpack.c.0.s8 %v4172
    %v4174 = vlaneseq
    %v4175 = vshrl.u32 %v4174, 7
    %v4176 = vsub.s32 %v4173, %v4175
    %v4177 = vrot.slane %v4169, %v4176
    %v4179 = vunpack.c.l.s4 1983009808
    %v4180 = vunpack.c.0.s8 %v4179
    %v4181 = vlaneseq
    %v4182 = vshrl.u32 %v4181, 7
    %v4183 = vsub.s32 %v4180, %v4182
    %v4184 = vrot.slane %v4170, %v4183
    %v4185 = vcombine.low %v4177, %v4184
    %v4186 = vcombine.low %v1555, %v1559
    %v4187 = vcombine.low %v1563, %v1567
    %v4189 = vunpack.c.l.s4 1983009808
    %v4190 = vunpack.c.0.s8 %v4189
    %v4191 = vlaneseq
    %v4192 = vshrl.u32 %v4191, 7
    %v4193 = vsub.s32 %v4190, %v4192
    %v4194 = vrot.slane %v4186, %v4193
    %v4196 = vunpack.c.l.s4 1983009808
    %v4197 = vunpack.c.0.s8 %v4196
    %v4198 = vlaneseq
    %v4199 = vshrl.u32 %v4198, 7
    %v4200 = vsub.s32 %v4197, %v4199
    %v4201 = vrot.slane %v4187, %v4200
    %v4202 = vcombine.low %v4194, %v4201
    %v4203 = vcombine.low %v1571, %v1575
    %v4204 = vcombine.low %v1579, %v1583
    %v4206 = vunpack.c.l.s4 1983009808
    %v4207 = vunpack.c.0.s8 %v4206
    %v4208 = vlaneseq
    %v4209 = vshrl.u32 %v4208, 7
    %v4210 = vsub.s32 %v4207, %v4209
    %v4211 = vrot.slane %v4203, %v4210
    %v4213 = vunpack.c.l.s4 1983009808
    %v4214 = vunpack.c.0.s8 %v4213
    %v4215 = vlaneseq
    %v4216 = vshrl.u32 %v4215, 7
    %v4217 = vsub.s32 %v4214, %v4216
    %v4218 = vrot.slane %v4204, %v4217
    %v4219 = vcombine.low %v4211, %v4218
    %v4220 = vcombine.low %v1587, %v1591
    %v4221 = vcombine.low %v1595, %v1599
    %v4223 = vunpack.c.l.s4 1983009808
    %v4224 = vunpack.c.0.s8 %v4223
    %v4225 = vlaneseq
    %v4226 = vshrl.u32 %v4225, 7
    %v4227 = vsub.s32 %v4224, %v4226
    %v4228 = vrot.slane %v4220, %v4227
    %v4230 = vunpack.c.l.s4 1983009808
    %v4231 = vunpack.c.0.s8 %v4230
    %v4232 = vlaneseq
    %v4233 = vshrl.u32 %v4232, 7
    %v4234 = vsub.s32 %v4231, %v4233
    %v4235 = vrot.slane %v4221, %v4234
    %v4236 = vcombine.low %v4228, %v4235
    %v4237 = vcombine.low %v1603, %v1607
    %v4238 = vcombine.low %v1611, %v1615
    %v4240 = vunpack.c.l.s4 1983009808
    %v4241 = vunpack.c.0.s8 %v4240
    %v4242 = vlaneseq
    %v4243 = vshrl.u32 %v4242, 7
    %v4244 = vsub.s32 %v4241, %v4243
    %v4245 = vrot.slane %v4237, %v4244
    %v4247 = vunpack.c.l.s4 1983009808
    %v4248 = vunpack.c.0.s8 %v4247
    %v4249 = vlaneseq
    %v4250 = vshrl.u32 %v4249, 7
    %v4251 = vsub.s32 %v4248, %v4250
    %v4252 = vrot.slane %v4238, %v4251
    %v4253 = vcombine.low %v4245, %v4252
    %v4254 = vcombine.low %v1619, %v1623
    %v4255 = vcombine.low %v1627, %v1631
    %v4257 = vunpack.c.l.s4 1983009808
    %v4258 = vunpack.c.0.s8 %v4257
    %v4259 = vlaneseq
    %v4260 = vshrl.u32 %v4259, 7
    %v4261 = vsub.s32 %v4258, %v4260
    %v4262 = vrot.slane %v4254, %v4261
    %v4264 = vunpack.c.l.s4 1983009808
    %v4265 = vunpack.c.0.s8 %v4264
    %v4266 = vlaneseq
    %v4267 = vshrl.u32 %v4266, 7
    %v4268 = vsub.s32 %v4265, %v4267
    %v4269 = vrot.slane %v4255, %v4268
    %v4270 = vcombine.low %v4262, %v4269
    %v4271 = vcombine.low %v1635, %v1639
    %v4272 = vcombine.low %v1643, %v1647
    %v4274 = vunpack.c.l.s4 1983009808
    %v4275 = vunpack.c.0.s8 %v4274
    %v4276 = vlaneseq
    %v4277 = vshrl.u32 %v4276, 7
    %v4278 = vsub.s32 %v4275, %v4277
    %v4279 = vrot.slane %v4271, %v4278
    %v4281 = vunpack.c.l.s4 1983009808
    %v4282 = vunpack.c.0.s8 %v4281
    %v4283 = vlaneseq
    %v4284 = vshrl.u32 %v4283, 7
    %v4285 = vsub.s32 %v4282, %v4284
    %v4286 = vrot.slane %v4272, %v4285
    %v4287 = vcombine.low %v4279, %v4286
    %v4288 = vcombine.low %v1651, %v1655
    %v4289 = vcombine.low %v1659, %v1663
    %v4291 = vunpack.c.l.s4 1983009808
    %v4292 = vunpack.c.0.s8 %v4291
    %v4293 = vlaneseq
    %v4294 = vshrl.u32 %v4293, 7
    %v4295 = vsub.s32 %v4292, %v4294
    %v4296 = vrot.slane %v4288, %v4295
    %v4298 = vunpack.c.l.s4 1983009808
    %v4299 = vunpack.c.0.s8 %v4298
    %v4300 = vlaneseq
    %v4301 = vshrl.u32 %v4300, 7
    %v4302 = vsub.s32 %v4299, %v4301
    %v4303 = vrot.slane %v4289, %v4302
    %v4304 = vcombine.low %v4296, %v4303
    %v4305 = vcombine.low %v1667, %v1671
    %v4306 = vcombine.low %v1675, %v1679
    %v4308 = vunpack.c.l.s4 1983009808
    %v4309 = vunpack.c.0.s8 %v4308
    %v4310 = vlaneseq
    %v4311 = vshrl.u32 %v4310, 7
    %v4312 = vsub.s32 %v4309, %v4311
    %v4313 = vrot.slane %v4305, %v4312
    %v4315 = vunpack.c.l.s4 1983009808
    %v4316 = vunpack.c.0.s8 %v4315
    %v4317 = vlaneseq
    %v4318 = vshrl.u32 %v4317, 7
    %v4319 = vsub.s32 %v4316, %v4318
    %v4320 = vrot.slane %v4306, %v4319
    %v4321 = vcombine.low %v4313, %v4320
    %v4322 = vcombine.low %v1683, %v1687
    %v4323 = vcombine.low %v1691, %v1695
    %v4325 = vunpack.c.l.s4 1983009808
    %v4326 = vunpack.c.0.s8 %v4325
    %v4327 = vlaneseq
    %v4328 = vshrl.u32 %v4327, 7
    %v4329 = vsub.s32 %v4326, %v4328
    %v4330 = vrot.slane %v4322, %v4329
    %v4332 = vunpack.c.l.s4 1983009808
    %v4333 = vunpack.c.0.s8 %v4332
    %v4334 = vlaneseq
    %v4335 = vshrl.u32 %v4334, 7
    %v4336 = vsub.s32 %v4333, %v4335
    %v4337 = vrot.slane %v4323, %v4336
    %v4338 = vcombine.low %v4330, %v4337
    %v4339 = vcombine.low %v1699, %v1703
    %v4340 = vcombine.low %v1707, %v1711
    %v4342 = vunpack.c.l.s4 1983009808
    %v4343 = vunpack.c.0.s8 %v4342
    %v4344 = vlaneseq
    %v4345 = vshrl.u32 %v4344, 7
    %v4346 = vsub.s32 %v4343, %v4345
    %v4347 = vrot.slane %v4339, %v4346
    %v4349 = vunpack.c.l.s4 1983009808
    %v4350 = vunpack.c.0.s8 %v4349
    %v4351 = vlaneseq
    %v4352 = vshrl.u32 %v4351, 7
    %v4353 = vsub.s32 %v4350, %v4352
    %v4354 = vrot.slane %v4340, %v4353
    %v4355 = vcombine.low %v4347, %v4354
    %v4356 = vcombine.low %v1715, %v1719
    %v4357 = vcombine.low %v1723, %v1727
    %v4359 = vunpack.c.l.s4 1983009808
    %v4360 = vunpack.c.0.s8 %v4359
    %v4361 = vlaneseq
    %v4362 = vshrl.u32 %v4361, 7
    %v4363 = vsub.s32 %v4360, %v4362
    %v4364 = vrot.slane %v4356, %v4363
    %v4366 = vunpack.c.l.s4 1983009808
    %v4367 = vunpack.c.0.s8 %v4366
    %v4368 = vlaneseq
    %v4369 = vshrl.u32 %v4368, 7
    %v4370 = vsub.s32 %v4367, %v4369
    %v4371 = vrot.slane %v4357, %v4370
    %v4372 = vcombine.low %v4364, %v4371
    %v4373 = vcombine.low %v1731, %v1735
    %v4374 = vcombine.low %v1739, %v1743
    %v4376 = vunpack.c.l.s4 1983009808
    %v4377 = vunpack.c.0.s8 %v4376
    %v4378 = vlaneseq
    %v4379 = vshrl.u32 %v4378, 7
    %v4380 = vsub.s32 %v4377, %v4379
    %v4381 = vrot.slane %v4373, %v4380
    %v4383 = vunpack.c.l.s4 1983009808
    %v4384 = vunpack.c.0.s8 %v4383
    %v4385 = vlaneseq
    %v4386 = vshrl.u32 %v4385, 7
    %v4387 = vsub.s32 %v4384, %v4386
    %v4388 = vrot.slane %v4374, %v4387
    %v4389 = vcombine.low %v4381, %v4388
    %v4390 = vcombine.low %v1747, %v1751
    %v4391 = vcombine.low %v1755, %v1759
    %v4393 = vunpack.c.l.s4 1983009808
    %v4394 = vunpack.c.0.s8 %v4393
    %v4395 = vlaneseq
    %v4396 = vshrl.u32 %v4395, 7
    %v4397 = vsub.s32 %v4394, %v4396
    %v4398 = vrot.slane %v4390, %v4397
    %v4400 = vunpack.c.l.s4 1983009808
    %v4401 = vunpack.c.0.s8 %v4400
    %v4402 = vlaneseq
    %v4403 = vshrl.u32 %v4402, 7
    %v4404 = vsub.s32 %v4401, %v4403
    %v4405 = vrot.slane %v4391, %v4404
    %v4406 = vcombine.low %v4398, %v4405
    %v4407 = vcombine.low %v1763, %v1767
    %v4408 = vcombine.low %v1771, %v1775
    %v4410 = vunpack.c.l.s4 1983009808
    %v4411 = vunpack.c.0.s8 %v4410
    %v4412 = vlaneseq
    %v4413 = vshrl.u32 %v4412, 7
    %v4414 = vsub.s32 %v4411, %v4413
    %v4415 = vrot.slane %v4407, %v4414
    %v4417 = vunpack.c.l.s4 1983009808
    %v4418 = vunpack.c.0.s8 %v4417
    %v4419 = vlaneseq
    %v4420 = vshrl.u32 %v4419, 7
    %v4421 = vsub.s32 %v4418, %v4420
    %v4422 = vrot.slane %v4408, %v4421
    %v4423 = vcombine.low %v4415, %v4422
    %v4424 = vcombine.low %v1779, %v1783
    %v4425 = vcombine.low %v1787, %v1791
    %v4427 = vunpack.c.l.s4 1983009808
    %v4428 = vunpack.c.0.s8 %v4427
    %v4429 = vlaneseq
    %v4430 = vshrl.u32 %v4429, 7
    %v4431 = vsub.s32 %v4428, %v4430
    %v4432 = vrot.slane %v4424, %v4431
    %v4434 = vunpack.c.l.s4 1983009808
    %v4435 = vunpack.c.0.s8 %v4434
    %v4436 = vlaneseq
    %v4437 = vshrl.u32 %v4436, 7
    %v4438 = vsub.s32 %v4435, %v4437
    %v4439 = vrot.slane %v4425, %v4438
    %v4440 = vcombine.low %v4432, %v4439
    %v4441 = vcombine.low %v1795, %v1799
    %v4442 = vcombine.low %v1803, %v1807
    %v4444 = vunpack.c.l.s4 1983009808
    %v4445 = vunpack.c.0.s8 %v4444
    %v4446 = vlaneseq
    %v4447 = vshrl.u32 %v4446, 7
    %v4448 = vsub.s32 %v4445, %v4447
    %v4449 = vrot.slane %v4441, %v4448
    %v4451 = vunpack.c.l.s4 1983009808
    %v4452 = vunpack.c.0.s8 %v4451
    %v4453 = vlaneseq
    %v4454 = vshrl.u32 %v4453, 7
    %v4455 = vsub.s32 %v4452, %v4454
    %v4456 = vrot.slane %v4442, %v4455
    %v4457 = vcombine.low %v4449, %v4456
    %v4458 = vcombine.low %v1811, %v1815
    %v4459 = vcombine.low %v1819, %v1823
    %v4461 = vunpack.c.l.s4 1983009808
    %v4462 = vunpack.c.0.s8 %v4461
    %v4463 = vlaneseq
    %v4464 = vshrl.u32 %v4463, 7
    %v4465 = vsub.s32 %v4462, %v4464
    %v4466 = vrot.slane %v4458, %v4465
    %v4468 = vunpack.c.l.s4 1983009808
    %v4469 = vunpack.c.0.s8 %v4468
    %v4470 = vlaneseq
    %v4471 = vshrl.u32 %v4470, 7
    %v4472 = vsub.s32 %v4469, %v4471
    %v4473 = vrot.slane %v4459, %v4472
    %v4474 = vcombine.low %v4466, %v4473
    %v4475 = vcombine.low %v1827, %v1831
    %v4476 = vcombine.low %v1835, %v1839
    %v4478 = vunpack.c.l.s4 1983009808
    %v4479 = vunpack.c.0.s8 %v4478
    %v4480 = vlaneseq
    %v4481 = vshrl.u32 %v4480, 7
    %v4482 = vsub.s32 %v4479, %v4481
    %v4483 = vrot.slane %v4475, %v4482
    %v4485 = vunpack.c.l.s4 1983009808
    %v4486 = vunpack.c.0.s8 %v4485
    %v4487 = vlaneseq
    %v4488 = vshrl.u32 %v4487, 7
    %v4489 = vsub.s32 %v4486, %v4488
    %v4490 = vrot.slane %v4476, %v4489
    %v4491 = vcombine.low %v4483, %v4490
    %v4492 = vcombine.low %v1843, %v1847
    %v4493 = vcombine.low %v1851, %v1855
    %v4495 = vunpack.c.l.s4 1983009808
    %v4496 = vunpack.c.0.s8 %v4495
    %v4497 = vlaneseq
    %v4498 = vshrl.u32 %v4497, 7
    %v4499 = vsub.s32 %v4496, %v4498
    %v4500 = vrot.slane %v4492, %v4499
    %v4502 = vunpack.c.l.s4 1983009808
    %v4503 = vunpack.c.0.s8 %v4502
    %v4504 = vlaneseq
    %v4505 = vshrl.u32 %v4504, 7
    %v4506 = vsub.s32 %v4503, %v4505
    %v4507 = vrot.slane %v4493, %v4506
    %v4508 = vcombine.low %v4500, %v4507
    %v4509 = vcombine.low %v1859, %v1863
    %v4510 = vcombine.low %v1867, %v1871
    %v4512 = vunpack.c.l.s4 1983009808
    %v4513 = vunpack.c.0.s8 %v4512
    %v4514 = vlaneseq
    %v4515 = vshrl.u32 %v4514, 7
    %v4516 = vsub.s32 %v4513, %v4515
    %v4517 = vrot.slane %v4509, %v4516
    %v4519 = vunpack.c.l.s4 1983009808
    %v4520 = vunpack.c.0.s8 %v4519
    %v4521 = vlaneseq
    %v4522 = vshrl.u32 %v4521, 7
    %v4523 = vsub.s32 %v4520, %v4522
    %v4524 = vrot.slane %v4510, %v4523
    %v4525 = vcombine.low %v4517, %v4524
    %v4526 = vcombine.low %v1875, %v1879
    %v4527 = vcombine.low %v1883, %v1887
    %v4529 = vunpack.c.l.s4 1983009808
    %v4530 = vunpack.c.0.s8 %v4529
    %v4531 = vlaneseq
    %v4532 = vshrl.u32 %v4531, 7
    %v4533 = vsub.s32 %v4530, %v4532
    %v4534 = vrot.slane %v4526, %v4533
    %v4536 = vunpack.c.l.s4 1983009808
    %v4537 = vunpack.c.0.s8 %v4536
    %v4538 = vlaneseq
    %v4539 = vshrl.u32 %v4538, 7
    %v4540 = vsub.s32 %v4537, %v4539
    %v4541 = vrot.slane %v4527, %v4540
    %v4542 = vcombine.low %v4534, %v4541
    %v4543 = vcombine.low %v1891, %v1895
    %v4544 = vcombine.low %v1899, %v1903
    %v4546 = vunpack.c.l.s4 1983009808
    %v4547 = vunpack.c.0.s8 %v4546
    %v4548 = vlaneseq
    %v4549 = vshrl.u32 %v4548, 7
    %v4550 = vsub.s32 %v4547, %v4549
    %v4551 = vrot.slane %v4543, %v4550
    %v4553 = vunpack.c.l.s4 1983009808
    %v4554 = vunpack.c.0.s8 %v4553
    %v4555 = vlaneseq
    %v4556 = vshrl.u32 %v4555, 7
    %v4557 = vsub.s32 %v4554, %v4556
    %v4558 = vrot.slane %v4544, %v4557
    %v4559 = vcombine.low %v4551, %v4558
    %v4560 = vcombine.low %v1907, %v1911
    %v4561 = vcombine.low %v1915, %v1919
    %v4563 = vunpack.c.l.s4 1983009808
    %v4564 = vunpack.c.0.s8 %v4563
    %v4565 = vlaneseq
    %v4566 = vshrl.u32 %v4565, 7
    %v4567 = vsub.s32 %v4564, %v4566
    %v4568 = vrot.slane %v4560, %v4567
    %v4570 = vunpack.c.l.s4 1983009808
    %v4571 = vunpack.c.0.s8 %v4570
    %v4572 = vlaneseq
    %v4573 = vshrl.u32 %v4572, 7
    %v4574 = vsub.s32 %v4571, %v4573
    %v4575 = vrot.slane %v4561, %v4574
    %v4576 = vcombine.low %v4568, %v4575
    %v4577 = vcombine.low %v1923, %v1927
    %v4578 = vcombine.low %v1931, %v1935
    %v4580 = vunpack.c.l.s4 1983009808
    %v4581 = vunpack.c.0.s8 %v4580
    %v4582 = vlaneseq
    %v4583 = vshrl.u32 %v4582, 7
    %v4584 = vsub.s32 %v4581, %v4583
    %v4585 = vrot.slane %v4577, %v4584
    %v4587 = vunpack.c.l.s4 1983009808
    %v4588 = vunpack.c.0.s8 %v4587
    %v4589 = vlaneseq
    %v4590 = vshrl.u32 %v4589, 7
    %v4591 = vsub.s32 %v4588, %v4590
    %v4592 = vrot.slane %v4578, %v4591
    %v4593 = vcombine.low %v4585, %v4592
    %v4594 = vcombine.low %v1939, %v1943
    %v4595 = vcombine.low %v1947, %v1951
    %v4597 = vunpack.c.l.s4 1983009808
    %v4598 = vunpack.c.0.s8 %v4597
    %v4599 = vlaneseq
    %v4600 = vshrl.u32 %v4599, 7
    %v4601 = vsub.s32 %v4598, %v4600
    %v4602 = vrot.slane %v4594, %v4601
    %v4604 = vunpack.c.l.s4 1983009808
    %v4605 = vunpack.c.0.s8 %v4604
    %v4606 = vlaneseq
    %v4607 = vshrl.u32 %v4606, 7
    %v4608 = vsub.s32 %v4605, %v4607
    %v4609 = vrot.slane %v4595, %v4608
    %v4610 = vcombine.low %v4602, %v4609
    %v4611 = vcombine.low %v1955, %v1959
    %v4612 = vcombine.low %v1963, %v1967
    %v4614 = vunpack.c.l.s4 1983009808
    %v4615 = vunpack.c.0.s8 %v4614
    %v4616 = vlaneseq
    %v4617 = vshrl.u32 %v4616, 7
    %v4618 = vsub.s32 %v4615, %v4617
    %v4619 = vrot.slane %v4611, %v4618
    %v4621 = vunpack.c.l.s4 1983009808
    %v4622 = vunpack.c.0.s8 %v4621
    %v4623 = vlaneseq
    %v4624 = vshrl.u32 %v4623, 7
    %v4625 = vsub.s32 %v4622, %v4624
    %v4626 = vrot.slane %v4612, %v4625
    %v4627 = vcombine.low %v4619, %v4626
    %v4628 = vcombine.low %v1971, %v1975
    %v4629 = vcombine.low %v1979, %v1983
    %v4631 = vunpack.c.l.s4 1983009808
    %v4632 = vunpack.c.0.s8 %v4631
    %v4633 = vlaneseq
    %v4634 = vshrl.u32 %v4633, 7
    %v4635 = vsub.s32 %v4632, %v4634
    %v4636 = vrot.slane %v4628, %v4635
    %v4638 = vunpack.c.l.s4 1983009808
    %v4639 = vunpack.c.0.s8 %v4638
    %v4640 = vlaneseq
    %v4641 = vshrl.u32 %v4640, 7
    %v4642 = vsub.s32 %v4639, %v4641
    %v4643 = vrot.slane %v4629, %v4642
    %v4644 = vcombine.low %v4636, %v4643
    %v4645 = vcombine.low %v1987, %v1991
    %v4646 = vcombine.low %v1995, %v1999
    %v4648 = vunpack.c.l.s4 1983009808
    %v4649 = vunpack.c.0.s8 %v4648
    %v4650 = vlaneseq
    %v4651 = vshrl.u32 %v4650, 7
    %v4652 = vsub.s32 %v4649, %v4651
    %v4653 = vrot.slane %v4645, %v4652
    %v4655 = vunpack.c.l.s4 1983009808
    %v4656 = vunpack.c.0.s8 %v4655
    %v4657 = vlaneseq
    %v4658 = vshrl.u32 %v4657, 7
    %v4659 = vsub.s32 %v4656, %v4658
    %v4660 = vrot.slane %v4646, %v4659
    %v4661 = vcombine.low %v4653, %v4660
    %v4662 = vcombine.low %v2003, %v2007
    %v4663 = vcombine.low %v2011, %v2015
    %v4665 = vunpack.c.l.s4 1983009808
    %v4666 = vunpack.c.0.s8 %v4665
    %v4667 = vlaneseq
    %v4668 = vshrl.u32 %v4667, 7
    %v4669 = vsub.s32 %v4666, %v4668
    %v4670 = vrot.slane %v4662, %v4669
    %v4672 = vunpack.c.l.s4 1983009808
    %v4673 = vunpack.c.0.s8 %v4672
    %v4674 = vlaneseq
    %v4675 = vshrl.u32 %v4674, 7
    %v4676 = vsub.s32 %v4673, %v4675
    %v4677 = vrot.slane %v4663, %v4676
    %v4678 = vcombine.low %v4670, %v4677
    %v4679 = vcombine.low %v2019, %v2023
    %v4680 = vcombine.low %v2027, %v2031
    %v4682 = vunpack.c.l.s4 1983009808
    %v4683 = vunpack.c.0.s8 %v4682
    %v4684 = vlaneseq
    %v4685 = vshrl.u32 %v4684, 7
    %v4686 = vsub.s32 %v4683, %v4685
    %v4687 = vrot.slane %v4679, %v4686
    %v4689 = vunpack.c.l.s4 1983009808
    %v4690 = vunpack.c.0.s8 %v4689
    %v4691 = vlaneseq
    %v4692 = vshrl.u32 %v4691, 7
    %v4693 = vsub.s32 %v4690, %v4692
    %v4694 = vrot.slane %v4680, %v4693
    %v4695 = vcombine.low %v4687, %v4694
    %v4696 = vcombine.low %v2035, %v2039
    %v4697 = vcombine.low %v2043, %v2047
    %v4699 = vunpack.c.l.s4 1983009808
    %v4700 = vunpack.c.0.s8 %v4699
    %v4701 = vlaneseq
    %v4702 = vshrl.u32 %v4701, 7
    %v4703 = vsub.s32 %v4700, %v4702
    %v4704 = vrot.slane %v4696, %v4703
    %v4706 = vunpack.c.l.s4 1983009808
    %v4707 = vunpack.c.0.s8 %v4706
    %v4708 = vlaneseq
    %v4709 = vshrl.u32 %v4708, 7
    %v4710 = vsub.s32 %v4707, %v4709
    %v4711 = vrot.slane %v4697, %v4710
    %v4712 = vcombine.low %v4704, %v4711
    %v4713 = vcombine.low %v2051, %v2055
    %v4714 = vcombine.low %v2059, %v2063
    %v4716 = vunpack.c.l.s4 1983009808
    %v4717 = vunpack.c.0.s8 %v4716
    %v4718 = vlaneseq
    %v4719 = vshrl.u32 %v4718, 7
    %v4720 = vsub.s32 %v4717, %v4719
    %v4721 = vrot.slane %v4713, %v4720
    %v4723 = vunpack.c.l.s4 1983009808
    %v4724 = vunpack.c.0.s8 %v4723
    %v4725 = vlaneseq
    %v4726 = vshrl.u32 %v4725, 7
    %v4727 = vsub.s32 %v4724, %v4726
    %v4728 = vrot.slane %v4714, %v4727
    %v4729 = vcombine.low %v4721, %v4728
    %v4730 = vcombine.low %v2067, %v2071
    %v4731 = vcombine.low %v2075, %v2079
    %v4733 = vunpack.c.l.s4 1983009808
    %v4734 = vunpack.c.0.s8 %v4733
    %v4735 = vlaneseq
    %v4736 = vshrl.u32 %v4735, 7
    %v4737 = vsub.s32 %v4734, %v4736
    %v4738 = vrot.slane %v4730, %v4737
    %v4740 = vunpack.c.l.s4 1983009808
    %v4741 = vunpack.c.0.s8 %v4740
    %v4742 = vlaneseq
    %v4743 = vshrl.u32 %v4742, 7
    %v4744 = vsub.s32 %v4741, %v4743
    %v4745 = vrot.slane %v4731, %v4744
    %v4746 = vcombine.low %v4738, %v4745
    %v4747 = vcombine.low %v2083, %v2087
    %v4748 = vcombine.low %v2091, %v2095
    %v4750 = vunpack.c.l.s4 1983009808
    %v4751 = vunpack.c.0.s8 %v4750
    %v4752 = vlaneseq
    %v4753 = vshrl.u32 %v4752, 7
    %v4754 = vsub.s32 %v4751, %v4753
    %v4755 = vrot.slane %v4747, %v4754
    %v4757 = vunpack.c.l.s4 1983009808
    %v4758 = vunpack.c.0.s8 %v4757
    %v4759 = vlaneseq
    %v4760 = vshrl.u32 %v4759, 7
    %v4761 = vsub.s32 %v4758, %v4760
    %v4762 = vrot.slane %v4748, %v4761
    %v4763 = vcombine.low %v4755, %v4762
    %v4764 = vcombine.low %v2099, %v2103
    %v4765 = vcombine.low %v2107, %v2111
    %v4767 = vunpack.c.l.s4 1983009808
    %v4768 = vunpack.c.0.s8 %v4767
    %v4769 = vlaneseq
    %v4770 = vshrl.u32 %v4769, 7
    %v4771 = vsub.s32 %v4768, %v4770
    %v4772 = vrot.slane %v4764, %v4771
    %v4774 = vunpack.c.l.s4 1983009808
    %v4775 = vunpack.c.0.s8 %v4774
    %v4776 = vlaneseq
    %v4777 = vshrl.u32 %v4776, 7
    %v4778 = vsub.s32 %v4775, %v4777
    %v4779 = vrot.slane %v4765, %v4778
    %v4780 = vcombine.low %v4772, %v4779
    %v4781 = vcombine.low %v2115, %v2119
    %v4782 = vcombine.low %v2123, %v2127
    %v4784 = vunpack.c.l.s4 1983009808
    %v4785 = vunpack.c.0.s8 %v4784
    %v4786 = vlaneseq
    %v4787 = vshrl.u32 %v4786, 7
    %v4788 = vsub.s32 %v4785, %v4787
    %v4789 = vrot.slane %v4781, %v4788
    %v4791 = vunpack.c.l.s4 1983009808
    %v4792 = vunpack.c.0.s8 %v4791
    %v4793 = vlaneseq
    %v4794 = vshrl.u32 %v4793, 7
    %v4795 = vsub.s32 %v4792, %v4794
    %v4796 = vrot.slane %v4782, %v4795
    %v4797 = vcombine.low %v4789, %v4796
    %v4798 = vcombine.low %v2131, %v2135
    %v4799 = vcombine.low %v2139, %v2143
    %v4801 = vunpack.c.l.s4 1983009808
    %v4802 = vunpack.c.0.s8 %v4801
    %v4803 = vlaneseq
    %v4804 = vshrl.u32 %v4803, 7
    %v4805 = vsub.s32 %v4802, %v4804
    %v4806 = vrot.slane %v4798, %v4805
    %v4808 = vunpack.c.l.s4 1983009808
    %v4809 = vunpack.c.0.s8 %v4808
    %v4810 = vlaneseq
    %v4811 = vshrl.u32 %v4810, 7
    %v4812 = vsub.s32 %v4809, %v4811
    %v4813 = vrot.slane %v4799, %v4812
    %v4814 = vcombine.low %v4806, %v4813
    %v4815 = vcombine.low %v2147, %v2151
    %v4816 = vcombine.low %v2155, %v2159
    %v4818 = vunpack.c.l.s4 1983009808
    %v4819 = vunpack.c.0.s8 %v4818
    %v4820 = vlaneseq
    %v4821 = vshrl.u32 %v4820, 7
    %v4822 = vsub.s32 %v4819, %v4821
    %v4823 = vrot.slane %v4815, %v4822
    %v4825 = vunpack.c.l.s4 1983009808
    %v4826 = vunpack.c.0.s8 %v4825
    %v4827 = vlaneseq
    %v4828 = vshrl.u32 %v4827, 7
    %v4829 = vsub.s32 %v4826, %v4828
    %v4830 = vrot.slane %v4816, %v4829
    %v4831 = vcombine.low %v4823, %v4830
    %v4832 = vcombine.low %v2163, %v2167
    %v4833 = vcombine.low %v2171, %v2175
    %v4835 = vunpack.c.l.s4 1983009808
    %v4836 = vunpack.c.0.s8 %v4835
    %v4837 = vlaneseq
    %v4838 = vshrl.u32 %v4837, 7
    %v4839 = vsub.s32 %v4836, %v4838
    %v4840 = vrot.slane %v4832, %v4839
    %v4842 = vunpack.c.l.s4 1983009808
    %v4843 = vunpack.c.0.s8 %v4842
    %v4844 = vlaneseq
    %v4845 = vshrl.u32 %v4844, 7
    %v4846 = vsub.s32 %v4843, %v4845
    %v4847 = vrot.slane %v4833, %v4846
    %v4848 = vcombine.low %v4840, %v4847
    %v4849 = vcombine.low %v2179, %v2183
    %v4850 = vcombine.low %v2187, %v2191
    %v4852 = vunpack.c.l.s4 1983009808
    %v4853 = vunpack.c.0.s8 %v4852
    %v4854 = vlaneseq
    %v4855 = vshrl.u32 %v4854, 7
    %v4856 = vsub.s32 %v4853, %v4855
    %v4857 = vrot.slane %v4849, %v4856
    %v4859 = vunpack.c.l.s4 1983009808
    %v4860 = vunpack.c.0.s8 %v4859
    %v4861 = vlaneseq
    %v4862 = vshrl.u32 %v4861, 7
    %v4863 = vsub.s32 %v4860, %v4862
    %v4864 = vrot.slane %v4850, %v4863
    %v4865 = vcombine.low %v4857, %v4864
    %v4866 = vcombine.low %v2195, %v2199
    %v4867 = vcombine.low %v2203, %v2207
    %v4869 = vunpack.c.l.s4 1983009808
    %v4870 = vunpack.c.0.s8 %v4869
    %v4871 = vlaneseq
    %v4872 = vshrl.u32 %v4871, 7
    %v4873 = vsub.s32 %v4870, %v4872
    %v4874 = vrot.slane %v4866, %v4873
    %v4876 = vunpack.c.l.s4 1983009808
    %v4877 = vunpack.c.0.s8 %v4876
    %v4878 = vlaneseq
    %v4879 = vshrl.u32 %v4878, 7
    %v4880 = vsub.s32 %v4877, %v4879
    %v4881 = vrot.slane %v4867, %v4880
    %v4882 = vcombine.low %v4874, %v4881
    %v4883 = vcombine.low %v2211, %v2215
    %v4884 = vcombine.low %v2219, %v2223
    %v4886 = vunpack.c.l.s4 1983009808
    %v4887 = vunpack.c.0.s8 %v4886
    %v4888 = vlaneseq
    %v4889 = vshrl.u32 %v4888, 7
    %v4890 = vsub.s32 %v4887, %v4889
    %v4891 = vrot.slane %v4883, %v4890
    %v4893 = vunpack.c.l.s4 1983009808
    %v4894 = vunpack.c.0.s8 %v4893
    %v4895 = vlaneseq
    %v4896 = vshrl.u32 %v4895, 7
    %v4897 = vsub.s32 %v4894, %v4896
    %v4898 = vrot.slane %v4884, %v4897
    %v4899 = vcombine.low %v4891, %v4898
    %v4900 = vcombine.low %v2227, %v2231
    %v4901 = vcombine.low %v2235, %v2239
    %v4903 = vunpack.c.l.s4 1983009808
    %v4904 = vunpack.c.0.s8 %v4903
    %v4905 = vlaneseq
    %v4906 = vshrl.u32 %v4905, 7
    %v4907 = vsub.s32 %v4904, %v4906
    %v4908 = vrot.slane %v4900, %v4907
    %v4910 = vunpack.c.l.s4 1983009808
    %v4911 = vunpack.c.0.s8 %v4910
    %v4912 = vlaneseq
    %v4913 = vshrl.u32 %v4912, 7
    %v4914 = vsub.s32 %v4911, %v4913
    %v4915 = vrot.slane %v4901, %v4914
    %v4916 = vcombine.low %v4908, %v4915
    %v4917 = vcombine.low %v2243, %v2247
    %v4918 = vcombine.low %v2251, %v2255
    %v4920 = vunpack.c.l.s4 1983009808
    %v4921 = vunpack.c.0.s8 %v4920
    %v4922 = vlaneseq
    %v4923 = vshrl.u32 %v4922, 7
    %v4924 = vsub.s32 %v4921, %v4923
    %v4925 = vrot.slane %v4917, %v4924
    %v4927 = vunpack.c.l.s4 1983009808
    %v4928 = vunpack.c.0.s8 %v4927
    %v4929 = vlaneseq
    %v4930 = vshrl.u32 %v4929, 7
    %v4931 = vsub.s32 %v4928, %v4930
    %v4932 = vrot.slane %v4918, %v4931
    %v4933 = vcombine.low %v4925, %v4932
    %v4934 = vcombine.low %v2259, %v2263
    %v4935 = vcombine.low %v2267, %v2271
    %v4937 = vunpack.c.l.s4 1983009808
    %v4938 = vunpack.c.0.s8 %v4937
    %v4939 = vlaneseq
    %v4940 = vshrl.u32 %v4939, 7
    %v4941 = vsub.s32 %v4938, %v4940
    %v4942 = vrot.slane %v4934, %v4941
    %v4944 = vunpack.c.l.s4 1983009808
    %v4945 = vunpack.c.0.s8 %v4944
    %v4946 = vlaneseq
    %v4947 = vshrl.u32 %v4946, 7
    %v4948 = vsub.s32 %v4945, %v4947
    %v4949 = vrot.slane %v4935, %v4948
    %v4950 = vcombine.low %v4942, %v4949
    %v4951 = vcombine.low %v2275, %v2279
    %v4952 = vcombine.low %v2283, %v2287
    %v4954 = vunpack.c.l.s4 1983009808
    %v4955 = vunpack.c.0.s8 %v4954
    %v4956 = vlaneseq
    %v4957 = vshrl.u32 %v4956, 7
    %v4958 = vsub.s32 %v4955, %v4957
    %v4959 = vrot.slane %v4951, %v4958
    %v4961 = vunpack.c.l.s4 1983009808
    %v4962 = vunpack.c.0.s8 %v4961
    %v4963 = vlaneseq
    %v4964 = vshrl.u32 %v4963, 7
    %v4965 = vsub.s32 %v4962, %v4964
    %v4966 = vrot.slane %v4952, %v4965
    %v4967 = vcombine.low %v4959, %v4966
    %v4968 = vcombine.low %v2291, %v2295
    %v4969 = vcombine.low %v2299, %v2303
    %v4971 = vunpack.c.l.s4 1983009808
    %v4972 = vunpack.c.0.s8 %v4971
    %v4973 = vlaneseq
    %v4974 = vshrl.u32 %v4973, 7
    %v4975 = vsub.s32 %v4972, %v4974
    %v4976 = vrot.slane %v4968, %v4975
    %v4978 = vunpack.c.l.s4 1983009808
    %v4979 = vunpack.c.0.s8 %v4978
    %v4980 = vlaneseq
    %v4981 = vshrl.u32 %v4980, 7
    %v4982 = vsub.s32 %v4979, %v4981
    %v4983 = vrot.slane %v4969, %v4982
    %v4984 = vcombine.low %v4976, %v4983
    %v4985 = vcombine.low %v2307, %v2311
    %v4986 = vcombine.low %v2315, %v2319
    %v4988 = vunpack.c.l.s4 1983009808
    %v4989 = vunpack.c.0.s8 %v4988
    %v4990 = vlaneseq
    %v4991 = vshrl.u32 %v4990, 7
    %v4992 = vsub.s32 %v4989, %v4991
    %v4993 = vrot.slane %v4985, %v4992
    %v4995 = vunpack.c.l.s4 1983009808
    %v4996 = vunpack.c.0.s8 %v4995
    %v4997 = vlaneseq
    %v4998 = vshrl.u32 %v4997, 7
    %v4999 = vsub.s32 %v4996, %v4998
    %v5000 = vrot.slane %v4986, %v4999
    %v5001 = vcombine.low %v4993, %v5000
    %v5002 = vcombine.low %v2323, %v2327
    %v5003 = vcombine.low %v2331, %v2335
    %v5005 = vunpack.c.l.s4 1983009808
    %v5006 = vunpack.c.0.s8 %v5005
    %v5007 = vlaneseq
    %v5008 = vshrl.u32 %v5007, 7
    %v5009 = vsub.s32 %v5006, %v5008
    %v5010 = vrot.slane %v5002, %v5009
    %v5012 = vunpack.c.l.s4 1983009808
    %v5013 = vunpack.c.0.s8 %v5012
    %v5014 = vlaneseq
    %v5015 = vshrl.u32 %v5014, 7
    %v5016 = vsub.s32 %v5013, %v5015
    %v5017 = vrot.slane %v5003, %v5016
    %v5018 = vcombine.low %v5010, %v5017
    %v5019 = vcombine.low %v2339, %v2343
    %v5020 = vcombine.low %v2347, %v2351
    %v5022 = vunpack.c.l.s4 1983009808
    %v5023 = vunpack.c.0.s8 %v5022
    %v5024 = vlaneseq
    %v5025 = vshrl.u32 %v5024, 7
    %v5026 = vsub.s32 %v5023, %v5025
    %v5027 = vrot.slane %v5019, %v5026
    %v5029 = vunpack.c.l.s4 1983009808
    %v5030 = vunpack.c.0.s8 %v5029
    %v5031 = vlaneseq
    %v5032 = vshrl.u32 %v5031, 7
    %v5033 = vsub.s32 %v5030, %v5032
    %v5034 = vrot.slane %v5020, %v5033
    %v5035 = vcombine.low %v5027, %v5034
    %v5036 = vcombine.low %v2355, %v2359
    %v5037 = vcombine.low %v2363, %v2367
    %v5039 = vunpack.c.l.s4 1983009808
    %v5040 = vunpack.c.0.s8 %v5039
    %v5041 = vlaneseq
    %v5042 = vshrl.u32 %v5041, 7
    %v5043 = vsub.s32 %v5040, %v5042
    %v5044 = vrot.slane %v5036, %v5043
    %v5046 = vunpack.c.l.s4 1983009808
    %v5047 = vunpack.c.0.s8 %v5046
    %v5048 = vlaneseq
    %v5049 = vshrl.u32 %v5048, 7
    %v5050 = vsub.s32 %v5047, %v5049
    %v5051 = vrot.slane %v5037, %v5050
    %v5052 = vcombine.low %v5044, %v5051
    %v5053 = vcombine.low %v2371, %v2375
    %v5054 = vcombine.low %v2379, %v2383
    %v5056 = vunpack.c.l.s4 1983009808
    %v5057 = vunpack.c.0.s8 %v5056
    %v5058 = vlaneseq
    %v5059 = vshrl.u32 %v5058, 7
    %v5060 = vsub.s32 %v5057, %v5059
    %v5061 = vrot.slane %v5053, %v5060
    %v5063 = vunpack.c.l.s4 1983009808
    %v5064 = vunpack.c.0.s8 %v5063
    %v5065 = vlaneseq
    %v5066 = vshrl.u32 %v5065, 7
    %v5067 = vsub.s32 %v5064, %v5066
    %v5068 = vrot.slane %v5054, %v5067
    %v5069 = vcombine.low %v5061, %v5068
    %v5070 = vcombine.low %v2387, %v2391
    %v5071 = vcombine.low %v2395, %v2399
    %v5073 = vunpack.c.l.s4 1983009808
    %v5074 = vunpack.c.0.s8 %v5073
    %v5075 = vlaneseq
    %v5076 = vshrl.u32 %v5075, 7
    %v5077 = vsub.s32 %v5074, %v5076
    %v5078 = vrot.slane %v5070, %v5077
    %v5080 = vunpack.c.l.s4 1983009808
    %v5081 = vunpack.c.0.s8 %v5080
    %v5082 = vlaneseq
    %v5083 = vshrl.u32 %v5082, 7
    %v5084 = vsub.s32 %v5081, %v5083
    %v5085 = vrot.slane %v5071, %v5084
    %v5086 = vcombine.low %v5078, %v5085
    %v5087 = vcombine.low %v2403, %v2407
    %v5088 = vcombine.low %v2411, %v2415
    %v5090 = vunpack.c.l.s4 1983009808
    %v5091 = vunpack.c.0.s8 %v5090
    %v5092 = vlaneseq
    %v5093 = vshrl.u32 %v5092, 7
    %v5094 = vsub.s32 %v5091, %v5093
    %v5095 = vrot.slane %v5087, %v5094
    %v5097 = vunpack.c.l.s4 1983009808
    %v5098 = vunpack.c.0.s8 %v5097
    %v5099 = vlaneseq
    %v5100 = vshrl.u32 %v5099, 7
    %v5101 = vsub.s32 %v5098, %v5100
    %v5102 = vrot.slane %v5088, %v5101
    %v5103 = vcombine.low %v5095, %v5102
    %v5104 = vcombine.low %v2419, %v2423
    %v5105 = vcombine.low %v2427, %v2431
    %v5107 = vunpack.c.l.s4 1983009808
    %v5108 = vunpack.c.0.s8 %v5107
    %v5109 = vlaneseq
    %v5110 = vshrl.u32 %v5109, 7
    %v5111 = vsub.s32 %v5108, %v5110
    %v5112 = vrot.slane %v5104, %v5111
    %v5114 = vunpack.c.l.s4 1983009808
    %v5115 = vunpack.c.0.s8 %v5114
    %v5116 = vlaneseq
    %v5117 = vshrl.u32 %v5116, 7
    %v5118 = vsub.s32 %v5115, %v5117
    %v5119 = vrot.slane %v5105, %v5118
    %v5120 = vcombine.low %v5112, %v5119
    %v5121 = vcombine.low %v2435, %v2439
    %v5122 = vcombine.low %v2443, %v2447
    %v5124 = vunpack.c.l.s4 1983009808
    %v5125 = vunpack.c.0.s8 %v5124
    %v5126 = vlaneseq
    %v5127 = vshrl.u32 %v5126, 7
    %v5128 = vsub.s32 %v5125, %v5127
    %v5129 = vrot.slane %v5121, %v5128
    %v5131 = vunpack.c.l.s4 1983009808
    %v5132 = vunpack.c.0.s8 %v5131
    %v5133 = vlaneseq
    %v5134 = vshrl.u32 %v5133, 7
    %v5135 = vsub.s32 %v5132, %v5134
    %v5136 = vrot.slane %v5122, %v5135
    %v5137 = vcombine.low %v5129, %v5136
    %v5138 = vcombine.low %v2451, %v2455
    %v5139 = vcombine.low %v2459, %v2463
    %v5141 = vunpack.c.l.s4 1983009808
    %v5142 = vunpack.c.0.s8 %v5141
    %v5143 = vlaneseq
    %v5144 = vshrl.u32 %v5143, 7
    %v5145 = vsub.s32 %v5142, %v5144
    %v5146 = vrot.slane %v5138, %v5145
    %v5148 = vunpack.c.l.s4 1983009808
    %v5149 = vunpack.c.0.s8 %v5148
    %v5150 = vlaneseq
    %v5151 = vshrl.u32 %v5150, 7
    %v5152 = vsub.s32 %v5149, %v5151
    %v5153 = vrot.slane %v5139, %v5152
    %v5154 = vcombine.low %v5146, %v5153
    %v5155 = vcombine.low %v2467, %v2471
    %v5156 = vcombine.low %v2475, %v2479
    %v5158 = vunpack.c.l.s4 1983009808
    %v5159 = vunpack.c.0.s8 %v5158
    %v5160 = vlaneseq
    %v5161 = vshrl.u32 %v5160, 7
    %v5162 = vsub.s32 %v5159, %v5161
    %v5163 = vrot.slane %v5155, %v5162
    %v5165 = vunpack.c.l.s4 1983009808
    %v5166 = vunpack.c.0.s8 %v5165
    %v5167 = vlaneseq
    %v5168 = vshrl.u32 %v5167, 7
    %v5169 = vsub.s32 %v5166, %v5168
    %v5170 = vrot.slane %v5156, %v5169
    %v5171 = vcombine.low %v5163, %v5170
    %v5172 = vcombine.low %v2483, %v2487
    %v5173 = vcombine.low %v2491, %v2495
    %v5175 = vunpack.c.l.s4 1983009808
    %v5176 = vunpack.c.0.s8 %v5175
    %v5177 = vlaneseq
    %v5178 = vshrl.u32 %v5177, 7
    %v5179 = vsub.s32 %v5176, %v5178
    %v5180 = vrot.slane %v5172, %v5179
    %v5182 = vunpack.c.l.s4 1983009808
    %v5183 = vunpack.c.0.s8 %v5182
    %v5184 = vlaneseq
    %v5185 = vshrl.u32 %v5184, 7
    %v5186 = vsub.s32 %v5183, %v5185
    %v5187 = vrot.slane %v5173, %v5186
    %v5188 = vcombine.low %v5180, %v5187
    %v5189 = vcombine.low %v2499, %v2503
    %v5190 = vcombine.low %v2507, %v2511
    %v5192 = vunpack.c.l.s4 1983009808
    %v5193 = vunpack.c.0.s8 %v5192
    %v5194 = vlaneseq
    %v5195 = vshrl.u32 %v5194, 7
    %v5196 = vsub.s32 %v5193, %v5195
    %v5197 = vrot.slane %v5189, %v5196
    %v5199 = vunpack.c.l.s4 1983009808
    %v5200 = vunpack.c.0.s8 %v5199
    %v5201 = vlaneseq
    %v5202 = vshrl.u32 %v5201, 7
    %v5203 = vsub.s32 %v5200, %v5202
    %v5204 = vrot.slane %v5190, %v5203
    %v5205 = vcombine.low %v5197, %v5204
    %v5206 = vcombine.low %v2515, %v2519
    %v5207 = vcombine.low %v2523, %v2527
    %v5209 = vunpack.c.l.s4 1983009808
    %v5210 = vunpack.c.0.s8 %v5209
    %v5211 = vlaneseq
    %v5212 = vshrl.u32 %v5211, 7
    %v5213 = vsub.s32 %v5210, %v5212
    %v5214 = vrot.slane %v5206, %v5213
    %v5216 = vunpack.c.l.s4 1983009808
    %v5217 = vunpack.c.0.s8 %v5216
    %v5218 = vlaneseq
    %v5219 = vshrl.u32 %v5218, 7
    %v5220 = vsub.s32 %v5217, %v5219
    %v5221 = vrot.slane %v5207, %v5220
    %v5222 = vcombine.low %v5214, %v5221
    %v5223 = vcombine.low %v2531, %v2535
    %v5224 = vcombine.low %v2539, %v2543
    %v5226 = vunpack.c.l.s4 1983009808
    %v5227 = vunpack.c.0.s8 %v5226
    %v5228 = vlaneseq
    %v5229 = vshrl.u32 %v5228, 7
    %v5230 = vsub.s32 %v5227, %v5229
    %v5231 = vrot.slane %v5223, %v5230
    %v5233 = vunpack.c.l.s4 1983009808
    %v5234 = vunpack.c.0.s8 %v5233
    %v5235 = vlaneseq
    %v5236 = vshrl.u32 %v5235, 7
    %v5237 = vsub.s32 %v5234, %v5236
    %v5238 = vrot.slane %v5224, %v5237
    %v5239 = vcombine.low %v5231, %v5238
    %v5240 = vcombine.low %v2547, %v2551
    %v5241 = vcombine.low %v2555, %v2559
    %v5243 = vunpack.c.l.s4 1983009808
    %v5244 = vunpack.c.0.s8 %v5243
    %v5245 = vlaneseq
    %v5246 = vshrl.u32 %v5245, 7
    %v5247 = vsub.s32 %v5244, %v5246
    %v5248 = vrot.slane %v5240, %v5247
    %v5250 = vunpack.c.l.s4 1983009808
    %v5251 = vunpack.c.0.s8 %v5250
    %v5252 = vlaneseq
    %v5253 = vshrl.u32 %v5252, 7
    %v5254 = vsub.s32 %v5251, %v5253
    %v5255 = vrot.slane %v5241, %v5254
    %v5256 = vcombine.low %v5248, %v5255
    %v5257 = vcombine.low %v2563, %v2567
    %v5258 = vcombine.low %v2571, %v2575
    %v5260 = vunpack.c.l.s4 1983009808
    %v5261 = vunpack.c.0.s8 %v5260
    %v5262 = vlaneseq
    %v5263 = vshrl.u32 %v5262, 7
    %v5264 = vsub.s32 %v5261, %v5263
    %v5265 = vrot.slane %v5257, %v5264
    %v5267 = vunpack.c.l.s4 1983009808
    %v5268 = vunpack.c.0.s8 %v5267
    %v5269 = vlaneseq
    %v5270 = vshrl.u32 %v5269, 7
    %v5271 = vsub.s32 %v5268, %v5270
    %v5272 = vrot.slane %v5258, %v5271
    %v5273 = vcombine.low %v5265, %v5272
    %v5274 = vcombine.low %v2579, %v2583
    %v5275 = vcombine.low %v2587, %v2591
    %v5277 = vunpack.c.l.s4 1983009808
    %v5278 = vunpack.c.0.s8 %v5277
    %v5279 = vlaneseq
    %v5280 = vshrl.u32 %v5279, 7
    %v5281 = vsub.s32 %v5278, %v5280
    %v5282 = vrot.slane %v5274, %v5281
    %v5284 = vunpack.c.l.s4 1983009808
    %v5285 = vunpack.c.0.s8 %v5284
    %v5286 = vlaneseq
    %v5287 = vshrl.u32 %v5286, 7
    %v5288 = vsub.s32 %v5285, %v5287
    %v5289 = vrot.slane %v5275, %v5288
    %v5290 = vcombine.low %v5282, %v5289
    %v5291 = vcombine.low %v2595, %v2599
    %v5292 = vcombine.low %v2603, %v2607
    %v5294 = vunpack.c.l.s4 1983009808
    %v5295 = vunpack.c.0.s8 %v5294
    %v5296 = vlaneseq
    %v5297 = vshrl.u32 %v5296, 7
    %v5298 = vsub.s32 %v5295, %v5297
    %v5299 = vrot.slane %v5291, %v5298
    %v5301 = vunpack.c.l.s4 1983009808
    %v5302 = vunpack.c.0.s8 %v5301
    %v5303 = vlaneseq
    %v5304 = vshrl.u32 %v5303, 7
    %v5305 = vsub.s32 %v5302, %v5304
    %v5306 = vrot.slane %v5292, %v5305
    %v5307 = vcombine.low %v5299, %v5306
    %v5308 = vcombine.low %v2611, %v2615
    %v5309 = vcombine.low %v2619, %v2623
    %v5311 = vunpack.c.l.s4 1983009808
    %v5312 = vunpack.c.0.s8 %v5311
    %v5313 = vlaneseq
    %v5314 = vshrl.u32 %v5313, 7
    %v5315 = vsub.s32 %v5312, %v5314
    %v5316 = vrot.slane %v5308, %v5315
    %v5318 = vunpack.c.l.s4 1983009808
    %v5319 = vunpack.c.0.s8 %v5318
    %v5320 = vlaneseq
    %v5321 = vshrl.u32 %v5320, 7
    %v5322 = vsub.s32 %v5319, %v5321
    %v5323 = vrot.slane %v5309, %v5322
    %v5324 = vcombine.low %v5316, %v5323
    %v5325 = vcombine.low %v2627, %v2631
    %v5326 = vcombine.low %v2635, %v2639
    %v5328 = vunpack.c.l.s4 1983009808
    %v5329 = vunpack.c.0.s8 %v5328
    %v5330 = vlaneseq
    %v5331 = vshrl.u32 %v5330, 7
    %v5332 = vsub.s32 %v5329, %v5331
    %v5333 = vrot.slane %v5325, %v5332
    %v5335 = vunpack.c.l.s4 1983009808
    %v5336 = vunpack.c.0.s8 %v5335
    %v5337 = vlaneseq
    %v5338 = vshrl.u32 %v5337, 7
    %v5339 = vsub.s32 %v5336, %v5338
    %v5340 = vrot.slane %v5326, %v5339
    %v5341 = vcombine.low %v5333, %v5340
    %v5342 = vcombine.low %v2643, %v2647
    %v5343 = vcombine.low %v2651, %v2655
    %v5345 = vunpack.c.l.s4 1983009808
    %v5346 = vunpack.c.0.s8 %v5345
    %v5347 = vlaneseq
    %v5348 = vshrl.u32 %v5347, 7
    %v5349 = vsub.s32 %v5346, %v5348
    %v5350 = vrot.slane %v5342, %v5349
    %v5352 = vunpack.c.l.s4 1983009808
    %v5353 = vunpack.c.0.s8 %v5352
    %v5354 = vlaneseq
    %v5355 = vshrl.u32 %v5354, 7
    %v5356 = vsub.s32 %v5353, %v5355
    %v5357 = vrot.slane %v5343, %v5356
    %v5358 = vcombine.low %v5350, %v5357
    %v5359 = vcombine.low %v2659, %v2663
    %v5360 = vcombine.low %v2667, %v2671
    %v5362 = vunpack.c.l.s4 1983009808
    %v5363 = vunpack.c.0.s8 %v5362
    %v5364 = vlaneseq
    %v5365 = vshrl.u32 %v5364, 7
    %v5366 = vsub.s32 %v5363, %v5365
    %v5367 = vrot.slane %v5359, %v5366
    %v5369 = vunpack.c.l.s4 1983009808
    %v5370 = vunpack.c.0.s8 %v5369
    %v5371 = vlaneseq
    %v5372 = vshrl.u32 %v5371, 7
    %v5373 = vsub.s32 %v5370, %v5372
    %v5374 = vrot.slane %v5360, %v5373
    %v5375 = vcombine.low %v5367, %v5374
    %v5376 = vcombine.low %v2675, %v2679
    %v5377 = vcombine.low %v2683, %v2687
    %v5379 = vunpack.c.l.s4 1983009808
    %v5380 = vunpack.c.0.s8 %v5379
    %v5381 = vlaneseq
    %v5382 = vshrl.u32 %v5381, 7
    %v5383 = vsub.s32 %v5380, %v5382
    %v5384 = vrot.slane %v5376, %v5383
    %v5386 = vunpack.c.l.s4 1983009808
    %v5387 = vunpack.c.0.s8 %v5386
    %v5388 = vlaneseq
    %v5389 = vshrl.u32 %v5388, 7
    %v5390 = vsub.s32 %v5387, %v5389
    %v5391 = vrot.slane %v5377, %v5390
    %v5392 = vcombine.low %v5384, %v5391
    %v5393 = vcombine.low %v2691, %v2695
    %v5394 = vcombine.low %v2699, %v2703
    %v5396 = vunpack.c.l.s4 1983009808
    %v5397 = vunpack.c.0.s8 %v5396
    %v5398 = vlaneseq
    %v5399 = vshrl.u32 %v5398, 7
    %v5400 = vsub.s32 %v5397, %v5399
    %v5401 = vrot.slane %v5393, %v5400
    %v5403 = vunpack.c.l.s4 1983009808
    %v5404 = vunpack.c.0.s8 %v5403
    %v5405 = vlaneseq
    %v5406 = vshrl.u32 %v5405, 7
    %v5407 = vsub.s32 %v5404, %v5406
    %v5408 = vrot.slane %v5394, %v5407
    %v5409 = vcombine.low %v5401, %v5408
    %v5410 = vcombine.low %v2707, %v2711
    %v5411 = vcombine.low %v2715, %v2719
    %v5413 = vunpack.c.l.s4 1983009808
    %v5414 = vunpack.c.0.s8 %v5413
    %v5415 = vlaneseq
    %v5416 = vshrl.u32 %v5415, 7
    %v5417 = vsub.s32 %v5414, %v5416
    %v5418 = vrot.slane %v5410, %v5417
    %v5420 = vunpack.c.l.s4 1983009808
    %v5421 = vunpack.c.0.s8 %v5420
    %v5422 = vlaneseq
    %v5423 = vshrl.u32 %v5422, 7
    %v5424 = vsub.s32 %v5421, %v5423
    %v5425 = vrot.slane %v5411, %v5424
    %v5426 = vcombine.low %v5418, %v5425
    %v5427 = vcombine.low %v2723, %v2727
    %v5428 = vcombine.low %v2731, %v2735
    %v5430 = vunpack.c.l.s4 1983009808
    %v5431 = vunpack.c.0.s8 %v5430
    %v5432 = vlaneseq
    %v5433 = vshrl.u32 %v5432, 7
    %v5434 = vsub.s32 %v5431, %v5433
    %v5435 = vrot.slane %v5427, %v5434
    %v5437 = vunpack.c.l.s4 1983009808
    %v5438 = vunpack.c.0.s8 %v5437
    %v5439 = vlaneseq
    %v5440 = vshrl.u32 %v5439, 7
    %v5441 = vsub.s32 %v5438, %v5440
    %v5442 = vrot.slane %v5428, %v5441
    %v5443 = vcombine.low %v5435, %v5442
    %v5444 = vcombine.low %v2739, %v2743
    %v5445 = vcombine.low %v2747, %v2751
    %v5447 = vunpack.c.l.s4 1983009808
    %v5448 = vunpack.c.0.s8 %v5447
    %v5449 = vlaneseq
    %v5450 = vshrl.u32 %v5449, 7
    %v5451 = vsub.s32 %v5448, %v5450
    %v5452 = vrot.slane %v5444, %v5451
    %v5454 = vunpack.c.l.s4 1983009808
    %v5455 = vunpack.c.0.s8 %v5454
    %v5456 = vlaneseq
    %v5457 = vshrl.u32 %v5456, 7
    %v5458 = vsub.s32 %v5455, %v5457
    %v5459 = vrot.slane %v5445, %v5458
    %v5460 = vcombine.low %v5452, %v5459
    %v5461 = vcombine.low %v2755, %v2759
    %v5462 = vcombine.low %v2763, %v2767
    %v5464 = vunpack.c.l.s4 1983009808
    %v5465 = vunpack.c.0.s8 %v5464
    %v5466 = vlaneseq
    %v5467 = vshrl.u32 %v5466, 7
    %v5468 = vsub.s32 %v5465, %v5467
    %v5469 = vrot.slane %v5461, %v5468
    %v5471 = vunpack.c.l.s4 1983009808
    %v5472 = vunpack.c.0.s8 %v5471
    %v5473 = vlaneseq
    %v5474 = vshrl.u32 %v5473, 7
    %v5475 = vsub.s32 %v5472, %v5474
    %v5476 = vrot.slane %v5462, %v5475
    %v5477 = vcombine.low %v5469, %v5476
    %v5478 = vcombine.low %v2771, %v2775
    %v5479 = vcombine.low %v2779, %v2783
    %v5481 = vunpack.c.l.s4 1983009808
    %v5482 = vunpack.c.0.s8 %v5481
    %v5483 = vlaneseq
    %v5484 = vshrl.u32 %v5483, 7
    %v5485 = vsub.s32 %v5482, %v5484
    %v5486 = vrot.slane %v5478, %v5485
    %v5488 = vunpack.c.l.s4 1983009808
    %v5489 = vunpack.c.0.s8 %v5488
    %v5490 = vlaneseq
    %v5491 = vshrl.u32 %v5490, 7
    %v5492 = vsub.s32 %v5489, %v5491
    %v5493 = vrot.slane %v5479, %v5492
    %v5494 = vcombine.low %v5486, %v5493
    %v5495 = vcombine.low %v2787, %v2791
    %v5496 = vcombine.low %v2795, %v2799
    %v5498 = vunpack.c.l.s4 1983009808
    %v5499 = vunpack.c.0.s8 %v5498
    %v5500 = vlaneseq
    %v5501 = vshrl.u32 %v5500, 7
    %v5502 = vsub.s32 %v5499, %v5501
    %v5503 = vrot.slane %v5495, %v5502
    %v5505 = vunpack.c.l.s4 1983009808
    %v5506 = vunpack.c.0.s8 %v5505
    %v5507 = vlaneseq
    %v5508 = vshrl.u32 %v5507, 7
    %v5509 = vsub.s32 %v5506, %v5508
    %v5510 = vrot.slane %v5496, %v5509
    %v5511 = vcombine.low %v5503, %v5510
    %v5512 = vcombine.low %v2803, %v2807
    %v5513 = vcombine.low %v2811, %v2815
    %v5515 = vunpack.c.l.s4 1983009808
    %v5516 = vunpack.c.0.s8 %v5515
    %v5517 = vlaneseq
    %v5518 = vshrl.u32 %v5517, 7
    %v5519 = vsub.s32 %v5516, %v5518
    %v5520 = vrot.slane %v5512, %v5519
    %v5522 = vunpack.c.l.s4 1983009808
    %v5523 = vunpack.c.0.s8 %v5522
    %v5524 = vlaneseq
    %v5525 = vshrl.u32 %v5524, 7
    %v5526 = vsub.s32 %v5523, %v5525
    %v5527 = vrot.slane %v5513, %v5526
    %v5528 = vcombine.low %v5520, %v5527
    %v5529 = vcombine.low %v2819, %v2823
    %v5530 = vcombine.low %v2827, %v2831
    %v5532 = vunpack.c.l.s4 1983009808
    %v5533 = vunpack.c.0.s8 %v5532
    %v5534 = vlaneseq
    %v5535 = vshrl.u32 %v5534, 7
    %v5536 = vsub.s32 %v5533, %v5535
    %v5537 = vrot.slane %v5529, %v5536
    %v5539 = vunpack.c.l.s4 1983009808
    %v5540 = vunpack.c.0.s8 %v5539
    %v5541 = vlaneseq
    %v5542 = vshrl.u32 %v5541, 7
    %v5543 = vsub.s32 %v5540, %v5542
    %v5544 = vrot.slane %v5530, %v5543
    %v5545 = vcombine.low %v5537, %v5544
    %v5546 = vcombine.low %v2835, %v2839
    %v5547 = vcombine.low %v2843, %v2847
    %v5549 = vunpack.c.l.s4 1983009808
    %v5550 = vunpack.c.0.s8 %v5549
    %v5551 = vlaneseq
    %v5552 = vshrl.u32 %v5551, 7
    %v5553 = vsub.s32 %v5550, %v5552
    %v5554 = vrot.slane %v5546, %v5553
    %v5556 = vunpack.c.l.s4 1983009808
    %v5557 = vunpack.c.0.s8 %v5556
    %v5558 = vlaneseq
    %v5559 = vshrl.u32 %v5558, 7
    %v5560 = vsub.s32 %v5557, %v5559
    %v5561 = vrot.slane %v5547, %v5560
    %v5562 = vcombine.low %v5554, %v5561
    %v5563 = vcombine.low %v2851, %v2855
    %v5564 = vcombine.low %v2859, %v2863
    %v5566 = vunpack.c.l.s4 1983009808
    %v5567 = vunpack.c.0.s8 %v5566
    %v5568 = vlaneseq
    %v5569 = vshrl.u32 %v5568, 7
    %v5570 = vsub.s32 %v5567, %v5569
    %v5571 = vrot.slane %v5563, %v5570
    %v5573 = vunpack.c.l.s4 1983009808
    %v5574 = vunpack.c.0.s8 %v5573
    %v5575 = vlaneseq
    %v5576 = vshrl.u32 %v5575, 7
    %v5577 = vsub.s32 %v5574, %v5576
    %v5578 = vrot.slane %v5564, %v5577
    %v5579 = vcombine.low %v5571, %v5578
    %v5580 = vcombine.low %v2867, %v2871
    %v5581 = vcombine.low %v2875, %v2879
    %v5583 = vunpack.c.l.s4 1983009808
    %v5584 = vunpack.c.0.s8 %v5583
    %v5585 = vlaneseq
    %v5586 = vshrl.u32 %v5585, 7
    %v5587 = vsub.s32 %v5584, %v5586
    %v5588 = vrot.slane %v5580, %v5587
    %v5590 = vunpack.c.l.s4 1983009808
    %v5591 = vunpack.c.0.s8 %v5590
    %v5592 = vlaneseq
    %v5593 = vshrl.u32 %v5592, 7
    %v5594 = vsub.s32 %v5591, %v5593
    %v5595 = vrot.slane %v5581, %v5594
    %v5596 = vcombine.low %v5588, %v5595
    %v5597 = vcombine.low %v2883, %v2887
    %v5598 = vcombine.low %v2891, %v2895
    %v5600 = vunpack.c.l.s4 1983009808
    %v5601 = vunpack.c.0.s8 %v5600
    %v5602 = vlaneseq
    %v5603 = vshrl.u32 %v5602, 7
    %v5604 = vsub.s32 %v5601, %v5603
    %v5605 = vrot.slane %v5597, %v5604
    %v5607 = vunpack.c.l.s4 1983009808
    %v5608 = vunpack.c.0.s8 %v5607
    %v5609 = vlaneseq
    %v5610 = vshrl.u32 %v5609, 7
    %v5611 = vsub.s32 %v5608, %v5610
    %v5612 = vrot.slane %v5598, %v5611
    %v5613 = vcombine.low %v5605, %v5612
    %v5614 = vcombine.low %v2899, %v2903
    %v5615 = vcombine.low %v2907, %v2911
    %v5617 = vunpack.c.l.s4 1983009808
    %v5618 = vunpack.c.0.s8 %v5617
    %v5619 = vlaneseq
    %v5620 = vshrl.u32 %v5619, 7
    %v5621 = vsub.s32 %v5618, %v5620
    %v5622 = vrot.slane %v5614, %v5621
    %v5624 = vunpack.c.l.s4 1983009808
    %v5625 = vunpack.c.0.s8 %v5624
    %v5626 = vlaneseq
    %v5627 = vshrl.u32 %v5626, 7
    %v5628 = vsub.s32 %v5625, %v5627
    %v5629 = vrot.slane %v5615, %v5628
    %v5630 = vcombine.low %v5622, %v5629
    %v5631 = vcombine.low %v2915, %v2919
    %v5632 = vcombine.low %v2923, %v2927
    %v5634 = vunpack.c.l.s4 1983009808
    %v5635 = vunpack.c.0.s8 %v5634
    %v5636 = vlaneseq
    %v5637 = vshrl.u32 %v5636, 7
    %v5638 = vsub.s32 %v5635, %v5637
    %v5639 = vrot.slane %v5631, %v5638
    %v5641 = vunpack.c.l.s4 1983009808
    %v5642 = vunpack.c.0.s8 %v5641
    %v5643 = vlaneseq
    %v5644 = vshrl.u32 %v5643, 7
    %v5645 = vsub.s32 %v5642, %v5644
    %v5646 = vrot.slane %v5632, %v5645
    %v5647 = vcombine.low %v5639, %v5646
    %v5808 = vmul.f32 %v127, %v2944
    %v5809 = vmul.f32 %v128, %v2961
    %v5810 = vmul.f32 %v129, %v2978
    %v5811 = vmul.f32 %v130, %v2995
    %v5812 = vmul.f32 %v131, %v3012
    %v5813 = vmul.f32 %v132, %v3029
    %v5814 = vmul.f32 %v133, %v3046
    %v5815 = vmul.f32 %v134, %v3063
    %v5816 = vmul.f32 %v135, %v3080
    %v5817 = vmul.f32 %v136, %v3097
    %v5818 = vmul.f32 %v137, %v3114
    %v5819 = vmul.f32 %v138, %v3131
    %v5820 = vmul.f32 %v139, %v3148
    %v5821 = vmul.f32 %v140, %v3165
    %v5822 = vmul.f32 %v141, %v3182
    %v5823 = vmul.f32 %v142, %v3199
    %v5824 = vmul.f32 %v143, %v3216
    %v5825 = vmul.f32 %v144, %v3233
    %v5826 = vmul.f32 %v145, %v3250
    %v5827 = vmul.f32 %v146, %v3267
    %v5828 = vmul.f32 %v147, %v3284
    %v5829 = vmul.f32 %v148, %v3301
    %v5830 = vmul.f32 %v149, %v3318
    %v5831 = vmul.f32 %v150, %v3335
    %v5832 = vmul.f32 %v151, %v3352
    %v5833 = vmul.f32 %v152, %v3369
    %v5834 = vmul.f32 %v153, %v3386
    %v5835 = vmul.f32 %v154, %v3403
    %v5836 = vmul.f32 %v155, %v3420
    %v5837 = vmul.f32 %v156, %v3437
    %v5838 = vmul.f32 %v157, %v3454
    %v5839 = vmul.f32 %v158, %v3471
    %v5840 = vmul.f32 %v159, %v3488
    %v5841 = vmul.f32 %v160, %v3505
    %v5842 = vmul.f32 %v161, %v3522
    %v5843 = vmul.f32 %v162, %v3539
    %v5844 = vmul.f32 %v163, %v3556
    %v5845 = vmul.f32 %v164, %v3573
    %v5846 = vmul.f32 %v165, %v3590
    %v5847 = vmul.f32 %v166, %v3607
    %v5848 = vmul.f32 %v167, %v3624
    %v5849 = vmul.f32 %v168, %v3641
    %v5850 = vmul.f32 %v169, %v3658
    %v5851 = vmul.f32 %v170, %v3675
    %v5852 = vmul.f32 %v171, %v3692
    %v5853 = vmul.f32 %v172, %v3709
    %v5854 = vmul.f32 %v173, %v3726
    %v5855 = vmul.f32 %v174, %v3743
    %v5856 = vmul.f32 %v175, %v3760
    %v5857 = vmul.f32 %v176, %v3777
    %v5858 = vmul.f32 %v177, %v3794
    %v5859 = vmul.f32 %v178, %v3811
    %v5860 = vmul.f32 %v179, %v3828
    %v5861 = vmul.f32 %v180, %v3845
    %v5862 = vmul.f32 %v181, %v3862
    %v5863 = vmul.f32 %v182, %v3879
    %v5864 = vmul.f32 %v183, %v3896
    %v5865 = vmul.f32 %v184, %v3913
    %v5866 = vmul.f32 %v185, %v3930
    %v5867 = vmul.f32 %v186, %v3947
    %v5868 = vmul.f32 %v187, %v3964
    %v5869 = vmul.f32 %v188, %v3981
    %v5870 = vmul.f32 %v189, %v3998
    %v5871 = vmul.f32 %v190, %v4015
    %v5872 = vmul.f32 %v191, %v4032
    %v5873 = vmul.f32 %v192, %v4049
    %v5874 = vmul.f32 %v193, %v4066
    %v5875 = vmul.f32 %v194, %v4083
    %v5876 = vmul.f32 %v195, %v4100
    %v5877 = vmul.f32 %v196, %v4117
    %v5878 = vmul.f32 %v197, %v4134
    %v5879 = vmul.f32 %v198, %v4151
    %v5880 = vmul.f32 %v199, %v4168
    %v5881 = vmul.f32 %v200, %v4185
    %v5882 = vmul.f32 %v201, %v4202
    %v5883 = vmul.f32 %v202, %v4219
    %v5884 = vmul.f32 %v203, %v4236
    %v5885 = vmul.f32 %v204, %v4253
    %v5886 = vmul.f32 %v205, %v4270
    %v5887 = vmul.f32 %v206, %v4287
    %v5888 = vmul.f32 %v207, %v4304
    %v5889 = vmul.f32 %v208, %v4321
    %v5890 = vmul.f32 %v209, %v4338
    %v5891 = vmul.f32 %v210, %v4355
    %v5892 = vmul.f32 %v211, %v4372
    %v5893 = vmul.f32 %v212, %v4389
    %v5894 = vmul.f32 %v213, %v4406
    %v5895 = vmul.f32 %v214, %v4423
    %v5896 = vmul.f32 %v215, %v4440
    %v5897 = vmul.f32 %v216, %v4457
    %v5898 = vmul.f32 %v217, %v4474
    %v5899 = vmul.f32 %v218, %v4491
    %v5900 = vmul.f32 %v219, %v4508
    %v5901 = vmul.f32 %v220, %v4525
    %v5902 = vmul.f32 %v221, %v4542
    %v5903 = vmul.f32 %v222, %v4559
    %v5904 = vmul.f32 %v223, %v4576
    %v5905 = vmul.f32 %v224, %v4593
    %v5906 = vmul.f32 %v225, %v4610
    %v5907 = vmul.f32 %v226, %v4627
    %v5908 = vmul.f32 %v227, %v4644
    %v5909 = vmul.f32 %v228, %v4661
    %v5910 = vmul.f32 %v229, %v4678
    %v5911 = vmul.f32 %v230, %v4695
    %v5912 = vmul.f32 %v231, %v4712
    %v5913 = vmul.f32 %v232, %v4729
    %v5914 = vmul.f32 %v233, %v4746
    %v5915 = vmul.f32 %v234, %v4763
    %v5916 = vmul.f32 %v235, %v4780
    %v5917 = vmul.f32 %v236, %v4797
    %v5918 = vmul.f32 %v237, %v4814
    %v5919 = vmul.f32 %v238, %v4831
    %v5920 = vmul.f32 %v239, %v4848
    %v5921 = vmul.f32 %v240, %v4865
    %v5922 = vmul.f32 %v241, %v4882
    %v5923 = vmul.f32 %v242, %v4899
    %v5924 = vmul.f32 %v243, %v4916
    %v5925 = vmul.f32 %v244, %v4933
    %v5926 = vmul.f32 %v245, %v4950
    %v5927 = vmul.f32 %v246, %v4967
    %v5928 = vmul.f32 %v247, %v4984
    %v5929 = vmul.f32 %v248, %v5001
    %v5930 = vmul.f32 %v249, %v5018
    %v5931 = vmul.f32 %v250, %v5035
    %v5932 = vmul.f32 %v251, %v5052
    %v5933 = vmul.f32 %v252, %v5069
    %v5934 = vmul.f32 %v253, %v5086
    %v5935 = vmul.f32 %v254, %v5103
    %v5936 = vmul.f32 %v255, %v5120
    %v5937 = vmul.f32 %v256, %v5137
    %v5938 = vmul.f32 %v257, %v5154
    %v5939 = vmul.f32 %v258, %v5171
    %v5940 = vmul.f32 %v259, %v5188
    %v5941 = vmul.f32 %v260, %v5205
    %v5942 = vmul.f32 %v261, %v5222
    %v5943 = vmul.f32 %v262, %v5239
    %v5944 = vmul.f32 %v263, %v5256
    %v5945 = vmul.f32 %v264, %v5273
    %v5946 = vmul.f32 %v265, %v5290
    %v5947 = vmul.f32 %v266, %v5307
    %v5948 = vmul.f32 %v267, %v5324
    %v5949 = vmul.f32 %v268, %v5341
    %v5950 = vmul.f32 %v269, %v5358
    %v5951 = vmul.f32 %v270, %v5375
    %v5952 = vmul.f32 %v271, %v5392
    %v5953 = vmul.f32 %v272, %v5409
    %v5954 = vmul.f32 %v273, %v5426
    %v5955 = vmul.f32 %v274, %v5443
    %v5956 = vmul.f32 %v275, %v5460
    %v5957 = vmul.f32 %v276, %v5477
    %v5958 = vmul.f32 %v277, %v5494
    %v5959 = vmul.f32 %v278, %v5511
    %v5960 = vmul.f32 %v279, %v5528
    %v5961 = vmul.f32 %v280, %v5545
    %v5962 = vmul.f32 %v281, %v5562
    %v5963 = vmul.f32 %v282, %v5579
    %v5964 = vmul.f32 %v283, %v5596
    %v5965 = vmul.f32 %v284, %v5613
    %v5966 = vmul.f32 %v285, %v5630
    %v5967 = vmul.f32 %v286, %v5647
    %v6128 = vcombine.high %v5808, %v5808
    %v6130 = vunpack.c.l.s4 1983009808
    %v6131 = vunpack.c.0.s8 %v6130
    %v6132 = vlaneseq
    %v6133 = vshrl.u32 %v6132, 7
    %v6134 = vsub.s32 %v6131, %v6133
    %v6135 = vrot.slane %v5808, %v6134
    %v6137 = vunpack.c.l.s4 1983009808
    %v6138 = vunpack.c.0.s8 %v6137
    %v6139 = vlaneseq
    %v6140 = vshrl.u32 %v6139, 7
    %v6141 = vsub.s32 %v6138, %v6140
    %v6142 = vrot.slane %v6128, %v6141
    %v6143 = vcombine.high %v6135, %v6135
    %v6144 = vcombine.high %v6142, %v6142
    %v6145 = vcombine.high %v5809, %v5809
    %v6147 = vunpack.c.l.s4 1983009808
    %v6148 = vunpack.c.0.s8 %v6147
    %v6149 = vlaneseq
    %v6150 = vshrl.u32 %v6149, 7
    %v6151 = vsub.s32 %v6148, %v6150
    %v6152 = vrot.slane %v5809, %v6151
    %v6154 = vunpack.c.l.s4 1983009808
    %v6155 = vunpack.c.0.s8 %v6154
    %v6156 = vlaneseq
    %v6157 = vshrl.u32 %v6156, 7
    %v6158 = vsub.s32 %v6155, %v6157
    %v6159 = vrot.slane %v6145, %v6158
    %v6160 = vcombine.high %v6152, %v6152
    %v6161 = vcombine.high %v6159, %v6159
    %v6162 = vcombine.high %v5810, %v5810
    %v6164 = vunpack.c.l.s4 1983009808
    %v6165 = vunpack.c.0.s8 %v6164
    %v6166 = vlaneseq
    %v6167 = vshrl.u32 %v6166, 7
    %v6168 = vsub.s32 %v6165, %v6167
    %v6169 = vrot.slane %v5810, %v6168
    %v6171 = vunpack.c.l.s4 1983009808
    %v6172 = vunpack.c.0.s8 %v6171
    %v6173 = vlaneseq
    %v6174 = vshrl.u32 %v6173, 7
    %v6175 = vsub.s32 %v6172, %v6174
    %v6176 = vrot.slane %v6162, %v6175
    %v6177 = vcombine.high %v6169, %v6169
    %v6178 = vcombine.high %v6176, %v6176
    %v6179 = vcombine.high %v5811, %v5811
    %v6181 = vunpack.c.l.s4 1983009808
    %v6182 = vunpack.c.0.s8 %v6181
    %v6183 = vlaneseq
    %v6184 = vshrl.u32 %v6183, 7
    %v6185 = vsub.s32 %v6182, %v6184
    %v6186 = vrot.slane %v5811, %v6185
    %v6188 = vunpack.c.l.s4 1983009808
    %v6189 = vunpack.c.0.s8 %v6188
    %v6190 = vlaneseq
    %v6191 = vshrl.u32 %v6190, 7
    %v6192 = vsub.s32 %v6189, %v6191
    %v6193 = vrot.slane %v6179, %v6192
    %v6194 = vcombine.high %v6186, %v6186
    %v6195 = vcombine.high %v6193, %v6193
    %v6196 = vcombine.high %v5812, %v5812
    %v6198 = vunpack.c.l.s4 1983009808
    %v6199 = vunpack.c.0.s8 %v6198
    %v6200 = vlaneseq
    %v6201 = vshrl.u32 %v6200, 7
    %v6202 = vsub.s32 %v6199, %v6201
    %v6203 = vrot.slane %v5812, %v6202
    %v6205 = vunpack.c.l.s4 1983009808
    %v6206 = vunpack.c.0.s8 %v6205
    %v6207 = vlaneseq
    %v6208 = vshrl.u32 %v6207, 7
    %v6209 = vsub.s32 %v6206, %v6208
    %v6210 = vrot.slane %v6196, %v6209
    %v6211 = vcombine.high %v6203, %v6203
    %v6212 = vcombine.high %v6210, %v6210
    %v6213 = vcombine.high %v5813, %v5813
    %v6215 = vunpack.c.l.s4 1983009808
    %v6216 = vunpack.c.0.s8 %v6215
    %v6217 = vlaneseq
    %v6218 = vshrl.u32 %v6217, 7
    %v6219 = vsub.s32 %v6216, %v6218
    %v6220 = vrot.slane %v5813, %v6219
    %v6222 = vunpack.c.l.s4 1983009808
    %v6223 = vunpack.c.0.s8 %v6222
    %v6224 = vlaneseq
    %v6225 = vshrl.u32 %v6224, 7
    %v6226 = vsub.s32 %v6223, %v6225
    %v6227 = vrot.slane %v6213, %v6226
    %v6228 = vcombine.high %v6220, %v6220
    %v6229 = vcombine.high %v6227, %v6227
    %v6230 = vcombine.high %v5814, %v5814
    %v6232 = vunpack.c.l.s4 1983009808
    %v6233 = vunpack.c.0.s8 %v6232
    %v6234 = vlaneseq
    %v6235 = vshrl.u32 %v6234, 7
    %v6236 = vsub.s32 %v6233, %v6235
    %v6237 = vrot.slane %v5814, %v6236
    %v6239 = vunpack.c.l.s4 1983009808
    %v6240 = vunpack.c.0.s8 %v6239
    %v6241 = vlaneseq
    %v6242 = vshrl.u32 %v6241, 7
    %v6243 = vsub.s32 %v6240, %v6242
    %v6244 = vrot.slane %v6230, %v6243
    %v6245 = vcombine.high %v6237, %v6237
    %v6246 = vcombine.high %v6244, %v6244
    %v6247 = vcombine.high %v5815, %v5815
    %v6249 = vunpack.c.l.s4 1983009808
    %v6250 = vunpack.c.0.s8 %v6249
    %v6251 = vlaneseq
    %v6252 = vshrl.u32 %v6251, 7
    %v6253 = vsub.s32 %v6250, %v6252
    %v6254 = vrot.slane %v5815, %v6253
    %v6256 = vunpack.c.l.s4 1983009808
    %v6257 = vunpack.c.0.s8 %v6256
    %v6258 = vlaneseq
    %v6259 = vshrl.u32 %v6258, 7
    %v6260 = vsub.s32 %v6257, %v6259
    %v6261 = vrot.slane %v6247, %v6260
    %v6262 = vcombine.high %v6254, %v6254
    %v6263 = vcombine.high %v6261, %v6261
    %v6264 = vcombine.high %v5816, %v5816
    %v6266 = vunpack.c.l.s4 1983009808
    %v6267 = vunpack.c.0.s8 %v6266
    %v6268 = vlaneseq
    %v6269 = vshrl.u32 %v6268, 7
    %v6270 = vsub.s32 %v6267, %v6269
    %v6271 = vrot.slane %v5816, %v6270
    %v6273 = vunpack.c.l.s4 1983009808
    %v6274 = vunpack.c.0.s8 %v6273
    %v6275 = vlaneseq
    %v6276 = vshrl.u32 %v6275, 7
    %v6277 = vsub.s32 %v6274, %v6276
    %v6278 = vrot.slane %v6264, %v6277
    %v6279 = vcombine.high %v6271, %v6271
    %v6280 = vcombine.high %v6278, %v6278
    %v6281 = vcombine.high %v5817, %v5817
    %v6283 = vunpack.c.l.s4 1983009808
    %v6284 = vunpack.c.0.s8 %v6283
    %v6285 = vlaneseq
    %v6286 = vshrl.u32 %v6285, 7
    %v6287 = vsub.s32 %v6284, %v6286
    %v6288 = vrot.slane %v5817, %v6287
    %v6290 = vunpack.c.l.s4 1983009808
    %v6291 = vunpack.c.0.s8 %v6290
    %v6292 = vlaneseq
    %v6293 = vshrl.u32 %v6292, 7
    %v6294 = vsub.s32 %v6291, %v6293
    %v6295 = vrot.slane %v6281, %v6294
    %v6296 = vcombine.high %v6288, %v6288
    %v6297 = vcombine.high %v6295, %v6295
    %v6298 = vcombine.high %v5818, %v5818
    %v6300 = vunpack.c.l.s4 1983009808
    %v6301 = vunpack.c.0.s8 %v6300
    %v6302 = vlaneseq
    %v6303 = vshrl.u32 %v6302, 7
    %v6304 = vsub.s32 %v6301, %v6303
    %v6305 = vrot.slane %v5818, %v6304
    %v6307 = vunpack.c.l.s4 1983009808
    %v6308 = vunpack.c.0.s8 %v6307
    %v6309 = vlaneseq
    %v6310 = vshrl.u32 %v6309, 7
    %v6311 = vsub.s32 %v6308, %v6310
    %v6312 = vrot.slane %v6298, %v6311
    %v6313 = vcombine.high %v6305, %v6305
    %v6314 = vcombine.high %v6312, %v6312
    %v6315 = vcombine.high %v5819, %v5819
    %v6317 = vunpack.c.l.s4 1983009808
    %v6318 = vunpack.c.0.s8 %v6317
    %v6319 = vlaneseq
    %v6320 = vshrl.u32 %v6319, 7
    %v6321 = vsub.s32 %v6318, %v6320
    %v6322 = vrot.slane %v5819, %v6321
    %v6324 = vunpack.c.l.s4 1983009808
    %v6325 = vunpack.c.0.s8 %v6324
    %v6326 = vlaneseq
    %v6327 = vshrl.u32 %v6326, 7
    %v6328 = vsub.s32 %v6325, %v6327
    %v6329 = vrot.slane %v6315, %v6328
    %v6330 = vcombine.high %v6322, %v6322
    %v6331 = vcombine.high %v6329, %v6329
    %v6332 = vcombine.high %v5820, %v5820
    %v6334 = vunpack.c.l.s4 1983009808
    %v6335 = vunpack.c.0.s8 %v6334
    %v6336 = vlaneseq
    %v6337 = vshrl.u32 %v6336, 7
    %v6338 = vsub.s32 %v6335, %v6337
    %v6339 = vrot.slane %v5820, %v6338
    %v6341 = vunpack.c.l.s4 1983009808
    %v6342 = vunpack.c.0.s8 %v6341
    %v6343 = vlaneseq
    %v6344 = vshrl.u32 %v6343, 7
    %v6345 = vsub.s32 %v6342, %v6344
    %v6346 = vrot.slane %v6332, %v6345
    %v6347 = vcombine.high %v6339, %v6339
    %v6348 = vcombine.high %v6346, %v6346
    %v6349 = vcombine.high %v5821, %v5821
    %v6351 = vunpack.c.l.s4 1983009808
    %v6352 = vunpack.c.0.s8 %v6351
    %v6353 = vlaneseq
    %v6354 = vshrl.u32 %v6353, 7
    %v6355 = vsub.s32 %v6352, %v6354
    %v6356 = vrot.slane %v5821, %v6355
    %v6358 = vunpack.c.l.s4 1983009808
    %v6359 = vunpack.c.0.s8 %v6358
    %v6360 = vlaneseq
    %v6361 = vshrl.u32 %v6360, 7
    %v6362 = vsub.s32 %v6359, %v6361
    %v6363 = vrot.slane %v6349, %v6362
    %v6364 = vcombine.high %v6356, %v6356
    %v6365 = vcombine.high %v6363, %v6363
    %v6366 = vcombine.high %v5822, %v5822
    %v6368 = vunpack.c.l.s4 1983009808
    %v6369 = vunpack.c.0.s8 %v6368
    %v6370 = vlaneseq
    %v6371 = vshrl.u32 %v6370, 7
    %v6372 = vsub.s32 %v6369, %v6371
    %v6373 = vrot.slane %v5822, %v6372
    %v6375 = vunpack.c.l.s4 1983009808
    %v6376 = vunpack.c.0.s8 %v6375
    %v6377 = vlaneseq
    %v6378 = vshrl.u32 %v6377, 7
    %v6379 = vsub.s32 %v6376, %v6378
    %v6380 = vrot.slane %v6366, %v6379
    %v6381 = vcombine.high %v6373, %v6373
    %v6382 = vcombine.high %v6380, %v6380
    %v6383 = vcombine.high %v5823, %v5823
    %v6385 = vunpack.c.l.s4 1983009808
    %v6386 = vunpack.c.0.s8 %v6385
    %v6387 = vlaneseq
    %v6388 = vshrl.u32 %v6387, 7
    %v6389 = vsub.s32 %v6386, %v6388
    %v6390 = vrot.slane %v5823, %v6389
    %v6392 = vunpack.c.l.s4 1983009808
    %v6393 = vunpack.c.0.s8 %v6392
    %v6394 = vlaneseq
    %v6395 = vshrl.u32 %v6394, 7
    %v6396 = vsub.s32 %v6393, %v6395
    %v6397 = vrot.slane %v6383, %v6396
    %v6398 = vcombine.high %v6390, %v6390
    %v6399 = vcombine.high %v6397, %v6397
    %v6400 = vcombine.high %v5824, %v5824
    %v6402 = vunpack.c.l.s4 1983009808
    %v6403 = vunpack.c.0.s8 %v6402
    %v6404 = vlaneseq
    %v6405 = vshrl.u32 %v6404, 7
    %v6406 = vsub.s32 %v6403, %v6405
    %v6407 = vrot.slane %v5824, %v6406
    %v6409 = vunpack.c.l.s4 1983009808
    %v6410 = vunpack.c.0.s8 %v6409
    %v6411 = vlaneseq
    %v6412 = vshrl.u32 %v6411, 7
    %v6413 = vsub.s32 %v6410, %v6412
    %v6414 = vrot.slane %v6400, %v6413
    %v6415 = vcombine.high %v6407, %v6407
    %v6416 = vcombine.high %v6414, %v6414
    %v6417 = vcombine.high %v5825, %v5825
    %v6419 = vunpack.c.l.s4 1983009808
    %v6420 = vunpack.c.0.s8 %v6419
    %v6421 = vlaneseq
    %v6422 = vshrl.u32 %v6421, 7
    %v6423 = vsub.s32 %v6420, %v6422
    %v6424 = vrot.slane %v5825, %v6423
    %v6426 = vunpack.c.l.s4 1983009808
    %v6427 = vunpack.c.0.s8 %v6426
    %v6428 = vlaneseq
    %v6429 = vshrl.u32 %v6428, 7
    %v6430 = vsub.s32 %v6427, %v6429
    %v6431 = vrot.slane %v6417, %v6430
    %v6432 = vcombine.high %v6424, %v6424
    %v6433 = vcombine.high %v6431, %v6431
    %v6434 = vcombine.high %v5826, %v5826
    %v6436 = vunpack.c.l.s4 1983009808
    %v6437 = vunpack.c.0.s8 %v6436
    %v6438 = vlaneseq
    %v6439 = vshrl.u32 %v6438, 7
    %v6440 = vsub.s32 %v6437, %v6439
    %v6441 = vrot.slane %v5826, %v6440
    %v6443 = vunpack.c.l.s4 1983009808
    %v6444 = vunpack.c.0.s8 %v6443
    %v6445 = vlaneseq
    %v6446 = vshrl.u32 %v6445, 7
    %v6447 = vsub.s32 %v6444, %v6446
    %v6448 = vrot.slane %v6434, %v6447
    %v6449 = vcombine.high %v6441, %v6441
    %v6450 = vcombine.high %v6448, %v6448
    %v6451 = vcombine.high %v5827, %v5827
    %v6453 = vunpack.c.l.s4 1983009808
    %v6454 = vunpack.c.0.s8 %v6453
    %v6455 = vlaneseq
    %v6456 = vshrl.u32 %v6455, 7
    %v6457 = vsub.s32 %v6454, %v6456
    %v6458 = vrot.slane %v5827, %v6457
    %v6460 = vunpack.c.l.s4 1983009808
    %v6461 = vunpack.c.0.s8 %v6460
    %v6462 = vlaneseq
    %v6463 = vshrl.u32 %v6462, 7
    %v6464 = vsub.s32 %v6461, %v6463
    %v6465 = vrot.slane %v6451, %v6464
    %v6466 = vcombine.high %v6458, %v6458
    %v6467 = vcombine.high %v6465, %v6465
    %v6468 = vcombine.high %v5828, %v5828
    %v6470 = vunpack.c.l.s4 1983009808
    %v6471 = vunpack.c.0.s8 %v6470
    %v6472 = vlaneseq
    %v6473 = vshrl.u32 %v6472, 7
    %v6474 = vsub.s32 %v6471, %v6473
    %v6475 = vrot.slane %v5828, %v6474
    %v6477 = vunpack.c.l.s4 1983009808
    %v6478 = vunpack.c.0.s8 %v6477
    %v6479 = vlaneseq
    %v6480 = vshrl.u32 %v6479, 7
    %v6481 = vsub.s32 %v6478, %v6480
    %v6482 = vrot.slane %v6468, %v6481
    %v6483 = vcombine.high %v6475, %v6475
    %v6484 = vcombine.high %v6482, %v6482
    %v6485 = vcombine.high %v5829, %v5829
    %v6487 = vunpack.c.l.s4 1983009808
    %v6488 = vunpack.c.0.s8 %v6487
    %v6489 = vlaneseq
    %v6490 = vshrl.u32 %v6489, 7
    %v6491 = vsub.s32 %v6488, %v6490
    %v6492 = vrot.slane %v5829, %v6491
    %v6494 = vunpack.c.l.s4 1983009808
    %v6495 = vunpack.c.0.s8 %v6494
    %v6496 = vlaneseq
    %v6497 = vshrl.u32 %v6496, 7
    %v6498 = vsub.s32 %v6495, %v6497
    %v6499 = vrot.slane %v6485, %v6498
    %v6500 = vcombine.high %v6492, %v6492
    %v6501 = vcombine.high %v6499, %v6499
    %v6502 = vcombine.high %v5830, %v5830
    %v6504 = vunpack.c.l.s4 1983009808
    %v6505 = vunpack.c.0.s8 %v6504
    %v6506 = vlaneseq
    %v6507 = vshrl.u32 %v6506, 7
    %v6508 = vsub.s32 %v6505, %v6507
    %v6509 = vrot.slane %v5830, %v6508
    %v6511 = vunpack.c.l.s4 1983009808
    %v6512 = vunpack.c.0.s8 %v6511
    %v6513 = vlaneseq
    %v6514 = vshrl.u32 %v6513, 7
    %v6515 = vsub.s32 %v6512, %v6514
    %v6516 = vrot.slane %v6502, %v6515
    %v6517 = vcombine.high %v6509, %v6509
    %v6518 = vcombine.high %v6516, %v6516
    %v6519 = vcombine.high %v5831, %v5831
    %v6521 = vunpack.c.l.s4 1983009808
    %v6522 = vunpack.c.0.s8 %v6521
    %v6523 = vlaneseq
    %v6524 = vshrl.u32 %v6523, 7
    %v6525 = vsub.s32 %v6522, %v6524
    %v6526 = vrot.slane %v5831, %v6525
    %v6528 = vunpack.c.l.s4 1983009808
    %v6529 = vunpack.c.0.s8 %v6528
    %v6530 = vlaneseq
    %v6531 = vshrl.u32 %v6530, 7
    %v6532 = vsub.s32 %v6529, %v6531
    %v6533 = vrot.slane %v6519, %v6532
    %v6534 = vcombine.high %v6526, %v6526
    %v6535 = vcombine.high %v6533, %v6533
    %v6536 = vcombine.high %v5832, %v5832
    %v6538 = vunpack.c.l.s4 1983009808
    %v6539 = vunpack.c.0.s8 %v6538
    %v6540 = vlaneseq
    %v6541 = vshrl.u32 %v6540, 7
    %v6542 = vsub.s32 %v6539, %v6541
    %v6543 = vrot.slane %v5832, %v6542
    %v6545 = vunpack.c.l.s4 1983009808
    %v6546 = vunpack.c.0.s8 %v6545
    %v6547 = vlaneseq
    %v6548 = vshrl.u32 %v6547, 7
    %v6549 = vsub.s32 %v6546, %v6548
    %v6550 = vrot.slane %v6536, %v6549
    %v6551 = vcombine.high %v6543, %v6543
    %v6552 = vcombine.high %v6550, %v6550
    %v6553 = vcombine.high %v5833, %v5833
    %v6555 = vunpack.c.l.s4 1983009808
    %v6556 = vunpack.c.0.s8 %v6555
    %v6557 = vlaneseq
    %v6558 = vshrl.u32 %v6557, 7
    %v6559 = vsub.s32 %v6556, %v6558
    %v6560 = vrot.slane %v5833, %v6559
    %v6562 = vunpack.c.l.s4 1983009808
    %v6563 = vunpack.c.0.s8 %v6562
    %v6564 = vlaneseq
    %v6565 = vshrl.u32 %v6564, 7
    %v6566 = vsub.s32 %v6563, %v6565
    %v6567 = vrot.slane %v6553, %v6566
    %v6568 = vcombine.high %v6560, %v6560
    %v6569 = vcombine.high %v6567, %v6567
    %v6570 = vcombine.high %v5834, %v5834
    %v6572 = vunpack.c.l.s4 1983009808
    %v6573 = vunpack.c.0.s8 %v6572
    %v6574 = vlaneseq
    %v6575 = vshrl.u32 %v6574, 7
    %v6576 = vsub.s32 %v6573, %v6575
    %v6577 = vrot.slane %v5834, %v6576
    %v6579 = vunpack.c.l.s4 1983009808
    %v6580 = vunpack.c.0.s8 %v6579
    %v6581 = vlaneseq
    %v6582 = vshrl.u32 %v6581, 7
    %v6583 = vsub.s32 %v6580, %v6582
    %v6584 = vrot.slane %v6570, %v6583
    %v6585 = vcombine.high %v6577, %v6577
    %v6586 = vcombine.high %v6584, %v6584
    %v6587 = vcombine.high %v5835, %v5835
    %v6589 = vunpack.c.l.s4 1983009808
    %v6590 = vunpack.c.0.s8 %v6589
    %v6591 = vlaneseq
    %v6592 = vshrl.u32 %v6591, 7
    %v6593 = vsub.s32 %v6590, %v6592
    %v6594 = vrot.slane %v5835, %v6593
    %v6596 = vunpack.c.l.s4 1983009808
    %v6597 = vunpack.c.0.s8 %v6596
    %v6598 = vlaneseq
    %v6599 = vshrl.u32 %v6598, 7
    %v6600 = vsub.s32 %v6597, %v6599
    %v6601 = vrot.slane %v6587, %v6600
    %v6602 = vcombine.high %v6594, %v6594
    %v6603 = vcombine.high %v6601, %v6601
    %v6604 = vcombine.high %v5836, %v5836
    %v6606 = vunpack.c.l.s4 1983009808
    %v6607 = vunpack.c.0.s8 %v6606
    %v6608 = vlaneseq
    %v6609 = vshrl.u32 %v6608, 7
    %v6610 = vsub.s32 %v6607, %v6609
    %v6611 = vrot.slane %v5836, %v6610
    %v6613 = vunpack.c.l.s4 1983009808
    %v6614 = vunpack.c.0.s8 %v6613
    %v6615 = vlaneseq
    %v6616 = vshrl.u32 %v6615, 7
    %v6617 = vsub.s32 %v6614, %v6616
    %v6618 = vrot.slane %v6604, %v6617
    %v6619 = vcombine.high %v6611, %v6611
    %v6620 = vcombine.high %v6618, %v6618
    %v6621 = vcombine.high %v5837, %v5837
    %v6623 = vunpack.c.l.s4 1983009808
    %v6624 = vunpack.c.0.s8 %v6623
    %v6625 = vlaneseq
    %v6626 = vshrl.u32 %v6625, 7
    %v6627 = vsub.s32 %v6624, %v6626
    %v6628 = vrot.slane %v5837, %v6627
    %v6630 = vunpack.c.l.s4 1983009808
    %v6631 = vunpack.c.0.s8 %v6630
    %v6632 = vlaneseq
    %v6633 = vshrl.u32 %v6632, 7
    %v6634 = vsub.s32 %v6631, %v6633
    %v6635 = vrot.slane %v6621, %v6634
    %v6636 = vcombine.high %v6628, %v6628
    %v6637 = vcombine.high %v6635, %v6635
    %v6638 = vcombine.high %v5838, %v5838
    %v6640 = vunpack.c.l.s4 1983009808
    %v6641 = vunpack.c.0.s8 %v6640
    %v6642 = vlaneseq
    %v6643 = vshrl.u32 %v6642, 7
    %v6644 = vsub.s32 %v6641, %v6643
    %v6645 = vrot.slane %v5838, %v6644
    %v6647 = vunpack.c.l.s4 1983009808
    %v6648 = vunpack.c.0.s8 %v6647
    %v6649 = vlaneseq
    %v6650 = vshrl.u32 %v6649, 7
    %v6651 = vsub.s32 %v6648, %v6650
    %v6652 = vrot.slane %v6638, %v6651
    %v6653 = vcombine.high %v6645, %v6645
    %v6654 = vcombine.high %v6652, %v6652
    %v6655 = vcombine.high %v5839, %v5839
    %v6657 = vunpack.c.l.s4 1983009808
    %v6658 = vunpack.c.0.s8 %v6657
    %v6659 = vlaneseq
    %v6660 = vshrl.u32 %v6659, 7
    %v6661 = vsub.s32 %v6658, %v6660
    %v6662 = vrot.slane %v5839, %v6661
    %v6664 = vunpack.c.l.s4 1983009808
    %v6665 = vunpack.c.0.s8 %v6664
    %v6666 = vlaneseq
    %v6667 = vshrl.u32 %v6666, 7
    %v6668 = vsub.s32 %v6665, %v6667
    %v6669 = vrot.slane %v6655, %v6668
    %v6670 = vcombine.high %v6662, %v6662
    %v6671 = vcombine.high %v6669, %v6669
    %v6672 = vcombine.high %v5840, %v5840
    %v6674 = vunpack.c.l.s4 1983009808
    %v6675 = vunpack.c.0.s8 %v6674
    %v6676 = vlaneseq
    %v6677 = vshrl.u32 %v6676, 7
    %v6678 = vsub.s32 %v6675, %v6677
    %v6679 = vrot.slane %v5840, %v6678
    %v6681 = vunpack.c.l.s4 1983009808
    %v6682 = vunpack.c.0.s8 %v6681
    %v6683 = vlaneseq
    %v6684 = vshrl.u32 %v6683, 7
    %v6685 = vsub.s32 %v6682, %v6684
    %v6686 = vrot.slane %v6672, %v6685
    %v6687 = vcombine.high %v6679, %v6679
    %v6688 = vcombine.high %v6686, %v6686
    %v6689 = vcombine.high %v5841, %v5841
    %v6691 = vunpack.c.l.s4 1983009808
    %v6692 = vunpack.c.0.s8 %v6691
    %v6693 = vlaneseq
    %v6694 = vshrl.u32 %v6693, 7
    %v6695 = vsub.s32 %v6692, %v6694
    %v6696 = vrot.slane %v5841, %v6695
    %v6698 = vunpack.c.l.s4 1983009808
    %v6699 = vunpack.c.0.s8 %v6698
    %v6700 = vlaneseq
    %v6701 = vshrl.u32 %v6700, 7
    %v6702 = vsub.s32 %v6699, %v6701
    %v6703 = vrot.slane %v6689, %v6702
    %v6704 = vcombine.high %v6696, %v6696
    %v6705 = vcombine.high %v6703, %v6703
    %v6706 = vcombine.high %v5842, %v5842
    %v6708 = vunpack.c.l.s4 1983009808
    %v6709 = vunpack.c.0.s8 %v6708
    %v6710 = vlaneseq
    %v6711 = vshrl.u32 %v6710, 7
    %v6712 = vsub.s32 %v6709, %v6711
    %v6713 = vrot.slane %v5842, %v6712
    %v6715 = vunpack.c.l.s4 1983009808
    %v6716 = vunpack.c.0.s8 %v6715
    %v6717 = vlaneseq
    %v6718 = vshrl.u32 %v6717, 7
    %v6719 = vsub.s32 %v6716, %v6718
    %v6720 = vrot.slane %v6706, %v6719
    %v6721 = vcombine.high %v6713, %v6713
    %v6722 = vcombine.high %v6720, %v6720
    %v6723 = vcombine.high %v5843, %v5843
    %v6725 = vunpack.c.l.s4 1983009808
    %v6726 = vunpack.c.0.s8 %v6725
    %v6727 = vlaneseq
    %v6728 = vshrl.u32 %v6727, 7
    %v6729 = vsub.s32 %v6726, %v6728
    %v6730 = vrot.slane %v5843, %v6729
    %v6732 = vunpack.c.l.s4 1983009808
    %v6733 = vunpack.c.0.s8 %v6732
    %v6734 = vlaneseq
    %v6735 = vshrl.u32 %v6734, 7
    %v6736 = vsub.s32 %v6733, %v6735
    %v6737 = vrot.slane %v6723, %v6736
    %v6738 = vcombine.high %v6730, %v6730
    %v6739 = vcombine.high %v6737, %v6737
    %v6740 = vcombine.high %v5844, %v5844
    %v6742 = vunpack.c.l.s4 1983009808
    %v6743 = vunpack.c.0.s8 %v6742
    %v6744 = vlaneseq
    %v6745 = vshrl.u32 %v6744, 7
    %v6746 = vsub.s32 %v6743, %v6745
    %v6747 = vrot.slane %v5844, %v6746
    %v6749 = vunpack.c.l.s4 1983009808
    %v6750 = vunpack.c.0.s8 %v6749
    %v6751 = vlaneseq
    %v6752 = vshrl.u32 %v6751, 7
    %v6753 = vsub.s32 %v6750, %v6752
    %v6754 = vrot.slane %v6740, %v6753
    %v6755 = vcombine.high %v6747, %v6747
    %v6756 = vcombine.high %v6754, %v6754
    %v6757 = vcombine.high %v5845, %v5845
    %v6759 = vunpack.c.l.s4 1983009808
    %v6760 = vunpack.c.0.s8 %v6759
    %v6761 = vlaneseq
    %v6762 = vshrl.u32 %v6761, 7
    %v6763 = vsub.s32 %v6760, %v6762
    %v6764 = vrot.slane %v5845, %v6763
    %v6766 = vunpack.c.l.s4 1983009808
    %v6767 = vunpack.c.0.s8 %v6766
    %v6768 = vlaneseq
    %v6769 = vshrl.u32 %v6768, 7
    %v6770 = vsub.s32 %v6767, %v6769
    %v6771 = vrot.slane %v6757, %v6770
    %v6772 = vcombine.high %v6764, %v6764
    %v6773 = vcombine.high %v6771, %v6771
    %v6774 = vcombine.high %v5846, %v5846
    %v6776 = vunpack.c.l.s4 1983009808
    %v6777 = vunpack.c.0.s8 %v6776
    %v6778 = vlaneseq
    %v6779 = vshrl.u32 %v6778, 7
    %v6780 = vsub.s32 %v6777, %v6779
    %v6781 = vrot.slane %v5846, %v6780
    %v6783 = vunpack.c.l.s4 1983009808
    %v6784 = vunpack.c.0.s8 %v6783
    %v6785 = vlaneseq
    %v6786 = vshrl.u32 %v6785, 7
    %v6787 = vsub.s32 %v6784, %v6786
    %v6788 = vrot.slane %v6774, %v6787
    %v6789 = vcombine.high %v6781, %v6781
    %v6790 = vcombine.high %v6788, %v6788
    %v6791 = vcombine.high %v5847, %v5847
    %v6793 = vunpack.c.l.s4 1983009808
    %v6794 = vunpack.c.0.s8 %v6793
    %v6795 = vlaneseq
    %v6796 = vshrl.u32 %v6795, 7
    %v6797 = vsub.s32 %v6794, %v6796
    %v6798 = vrot.slane %v5847, %v6797
    %v6800 = vunpack.c.l.s4 1983009808
    %v6801 = vunpack.c.0.s8 %v6800
    %v6802 = vlaneseq
    %v6803 = vshrl.u32 %v6802, 7
    %v6804 = vsub.s32 %v6801, %v6803
    %v6805 = vrot.slane %v6791, %v6804
    %v6806 = vcombine.high %v6798, %v6798
    %v6807 = vcombine.high %v6805, %v6805
    %v6808 = vcombine.high %v5848, %v5848
    %v6810 = vunpack.c.l.s4 1983009808
    %v6811 = vunpack.c.0.s8 %v6810
    %v6812 = vlaneseq
    %v6813 = vshrl.u32 %v6812, 7
    %v6814 = vsub.s32 %v6811, %v6813
    %v6815 = vrot.slane %v5848, %v6814
    %v6817 = vunpack.c.l.s4 1983009808
    %v6818 = vunpack.c.0.s8 %v6817
    %v6819 = vlaneseq
    %v6820 = vshrl.u32 %v6819, 7
    %v6821 = vsub.s32 %v6818, %v6820
    %v6822 = vrot.slane %v6808, %v6821
    %v6823 = vcombine.high %v6815, %v6815
    %v6824 = vcombine.high %v6822, %v6822
    %v6825 = vcombine.high %v5849, %v5849
    %v6827 = vunpack.c.l.s4 1983009808
    %v6828 = vunpack.c.0.s8 %v6827
    %v6829 = vlaneseq
    %v6830 = vshrl.u32 %v6829, 7
    %v6831 = vsub.s32 %v6828, %v6830
    %v6832 = vrot.slane %v5849, %v6831
    %v6834 = vunpack.c.l.s4 1983009808
    %v6835 = vunpack.c.0.s8 %v6834
    %v6836 = vlaneseq
    %v6837 = vshrl.u32 %v6836, 7
    %v6838 = vsub.s32 %v6835, %v6837
    %v6839 = vrot.slane %v6825, %v6838
    %v6840 = vcombine.high %v6832, %v6832
    %v6841 = vcombine.high %v6839, %v6839
    %v6842 = vcombine.high %v5850, %v5850
    %v6844 = vunpack.c.l.s4 1983009808
    %v6845 = vunpack.c.0.s8 %v6844
    %v6846 = vlaneseq
    %v6847 = vshrl.u32 %v6846, 7
    %v6848 = vsub.s32 %v6845, %v6847
    %v6849 = vrot.slane %v5850, %v6848
    %v6851 = vunpack.c.l.s4 1983009808
    %v6852 = vunpack.c.0.s8 %v6851
    %v6853 = vlaneseq
    %v6854 = vshrl.u32 %v6853, 7
    %v6855 = vsub.s32 %v6852, %v6854
    %v6856 = vrot.slane %v6842, %v6855
    %v6857 = vcombine.high %v6849, %v6849
    %v6858 = vcombine.high %v6856, %v6856
    %v6859 = vcombine.high %v5851, %v5851
    %v6861 = vunpack.c.l.s4 1983009808
    %v6862 = vunpack.c.0.s8 %v6861
    %v6863 = vlaneseq
    %v6864 = vshrl.u32 %v6863, 7
    %v6865 = vsub.s32 %v6862, %v6864
    %v6866 = vrot.slane %v5851, %v6865
    %v6868 = vunpack.c.l.s4 1983009808
    %v6869 = vunpack.c.0.s8 %v6868
    %v6870 = vlaneseq
    %v6871 = vshrl.u32 %v6870, 7
    %v6872 = vsub.s32 %v6869, %v6871
    %v6873 = vrot.slane %v6859, %v6872
    %v6874 = vcombine.high %v6866, %v6866
    %v6875 = vcombine.high %v6873, %v6873
    %v6876 = vcombine.high %v5852, %v5852
    %v6878 = vunpack.c.l.s4 1983009808
    %v6879 = vunpack.c.0.s8 %v6878
    %v6880 = vlaneseq
    %v6881 = vshrl.u32 %v6880, 7
    %v6882 = vsub.s32 %v6879, %v6881
    %v6883 = vrot.slane %v5852, %v6882
    %v6885 = vunpack.c.l.s4 1983009808
    %v6886 = vunpack.c.0.s8 %v6885
    %v6887 = vlaneseq
    %v6888 = vshrl.u32 %v6887, 7
    %v6889 = vsub.s32 %v6886, %v6888
    %v6890 = vrot.slane %v6876, %v6889
    %v6891 = vcombine.high %v6883, %v6883
    %v6892 = vcombine.high %v6890, %v6890
    %v6893 = vcombine.high %v5853, %v5853
    %v6895 = vunpack.c.l.s4 1983009808
    %v6896 = vunpack.c.0.s8 %v6895
    %v6897 = vlaneseq
    %v6898 = vshrl.u32 %v6897, 7
    %v6899 = vsub.s32 %v6896, %v6898
    %v6900 = vrot.slane %v5853, %v6899
    %v6902 = vunpack.c.l.s4 1983009808
    %v6903 = vunpack.c.0.s8 %v6902
    %v6904 = vlaneseq
    %v6905 = vshrl.u32 %v6904, 7
    %v6906 = vsub.s32 %v6903, %v6905
    %v6907 = vrot.slane %v6893, %v6906
    %v6908 = vcombine.high %v6900, %v6900
    %v6909 = vcombine.high %v6907, %v6907
    %v6910 = vcombine.high %v5854, %v5854
    %v6912 = vunpack.c.l.s4 1983009808
    %v6913 = vunpack.c.0.s8 %v6912
    %v6914 = vlaneseq
    %v6915 = vshrl.u32 %v6914, 7
    %v6916 = vsub.s32 %v6913, %v6915
    %v6917 = vrot.slane %v5854, %v6916
    %v6919 = vunpack.c.l.s4 1983009808
    %v6920 = vunpack.c.0.s8 %v6919
    %v6921 = vlaneseq
    %v6922 = vshrl.u32 %v6921, 7
    %v6923 = vsub.s32 %v6920, %v6922
    %v6924 = vrot.slane %v6910, %v6923
    %v6925 = vcombine.high %v6917, %v6917
    %v6926 = vcombine.high %v6924, %v6924
    %v6927 = vcombine.high %v5855, %v5855
    %v6929 = vunpack.c.l.s4 1983009808
    %v6930 = vunpack.c.0.s8 %v6929
    %v6931 = vlaneseq
    %v6932 = vshrl.u32 %v6931, 7
    %v6933 = vsub.s32 %v6930, %v6932
    %v6934 = vrot.slane %v5855, %v6933
    %v6936 = vunpack.c.l.s4 1983009808
    %v6937 = vunpack.c.0.s8 %v6936
    %v6938 = vlaneseq
    %v6939 = vshrl.u32 %v6938, 7
    %v6940 = vsub.s32 %v6937, %v6939
    %v6941 = vrot.slane %v6927, %v6940
    %v6942 = vcombine.high %v6934, %v6934
    %v6943 = vcombine.high %v6941, %v6941
    %v6944 = vcombine.high %v5856, %v5856
    %v6946 = vunpack.c.l.s4 1983009808
    %v6947 = vunpack.c.0.s8 %v6946
    %v6948 = vlaneseq
    %v6949 = vshrl.u32 %v6948, 7
    %v6950 = vsub.s32 %v6947, %v6949
    %v6951 = vrot.slane %v5856, %v6950
    %v6953 = vunpack.c.l.s4 1983009808
    %v6954 = vunpack.c.0.s8 %v6953
    %v6955 = vlaneseq
    %v6956 = vshrl.u32 %v6955, 7
    %v6957 = vsub.s32 %v6954, %v6956
    %v6958 = vrot.slane %v6944, %v6957
    %v6959 = vcombine.high %v6951, %v6951
    %v6960 = vcombine.high %v6958, %v6958
    %v6961 = vcombine.high %v5857, %v5857
    %v6963 = vunpack.c.l.s4 1983009808
    %v6964 = vunpack.c.0.s8 %v6963
    %v6965 = vlaneseq
    %v6966 = vshrl.u32 %v6965, 7
    %v6967 = vsub.s32 %v6964, %v6966
    %v6968 = vrot.slane %v5857, %v6967
    %v6970 = vunpack.c.l.s4 1983009808
    %v6971 = vunpack.c.0.s8 %v6970
    %v6972 = vlaneseq
    %v6973 = vshrl.u32 %v6972, 7
    %v6974 = vsub.s32 %v6971, %v6973
    %v6975 = vrot.slane %v6961, %v6974
    %v6976 = vcombine.high %v6968, %v6968
    %v6977 = vcombine.high %v6975, %v6975
    %v6978 = vcombine.high %v5858, %v5858
    %v6980 = vunpack.c.l.s4 1983009808
    %v6981 = vunpack.c.0.s8 %v6980
    %v6982 = vlaneseq
    %v6983 = vshrl.u32 %v6982, 7
    %v6984 = vsub.s32 %v6981, %v6983
    %v6985 = vrot.slane %v5858, %v6984
    %v6987 = vunpack.c.l.s4 1983009808
    %v6988 = vunpack.c.0.s8 %v6987
    %v6989 = vlaneseq
    %v6990 = vshrl.u32 %v6989, 7
    %v6991 = vsub.s32 %v6988, %v6990
    %v6992 = vrot.slane %v6978, %v6991
    %v6993 = vcombine.high %v6985, %v6985
    %v6994 = vcombine.high %v6992, %v6992
    %v6995 = vcombine.high %v5859, %v5859
    %v6997 = vunpack.c.l.s4 1983009808
    %v6998 = vunpack.c.0.s8 %v6997
    %v6999 = vlaneseq
    %v7000 = vshrl.u32 %v6999, 7
    %v7001 = vsub.s32 %v6998, %v7000
    %v7002 = vrot.slane %v5859, %v7001
    %v7004 = vunpack.c.l.s4 1983009808
    %v7005 = vunpack.c.0.s8 %v7004
    %v7006 = vlaneseq
    %v7007 = vshrl.u32 %v7006, 7
    %v7008 = vsub.s32 %v7005, %v7007
    %v7009 = vrot.slane %v6995, %v7008
    %v7010 = vcombine.high %v7002, %v7002
    %v7011 = vcombine.high %v7009, %v7009
    %v7012 = vcombine.high %v5860, %v5860
    %v7014 = vunpack.c.l.s4 1983009808
    %v7015 = vunpack.c.0.s8 %v7014
    %v7016 = vlaneseq
    %v7017 = vshrl.u32 %v7016, 7
    %v7018 = vsub.s32 %v7015, %v7017
    %v7019 = vrot.slane %v5860, %v7018
    %v7021 = vunpack.c.l.s4 1983009808
    %v7022 = vunpack.c.0.s8 %v7021
    %v7023 = vlaneseq
    %v7024 = vshrl.u32 %v7023, 7
    %v7025 = vsub.s32 %v7022, %v7024
    %v7026 = vrot.slane %v7012, %v7025
    %v7027 = vcombine.high %v7019, %v7019
    %v7028 = vcombine.high %v7026, %v7026
    %v7029 = vcombine.high %v5861, %v5861
    %v7031 = vunpack.c.l.s4 1983009808
    %v7032 = vunpack.c.0.s8 %v7031
    %v7033 = vlaneseq
    %v7034 = vshrl.u32 %v7033, 7
    %v7035 = vsub.s32 %v7032, %v7034
    %v7036 = vrot.slane %v5861, %v7035
    %v7038 = vunpack.c.l.s4 1983009808
    %v7039 = vunpack.c.0.s8 %v7038
    %v7040 = vlaneseq
    %v7041 = vshrl.u32 %v7040, 7
    %v7042 = vsub.s32 %v7039, %v7041
    %v7043 = vrot.slane %v7029, %v7042
    %v7044 = vcombine.high %v7036, %v7036
    %v7045 = vcombine.high %v7043, %v7043
    %v7046 = vcombine.high %v5862, %v5862
    %v7048 = vunpack.c.l.s4 1983009808
    %v7049 = vunpack.c.0.s8 %v7048
    %v7050 = vlaneseq
    %v7051 = vshrl.u32 %v7050, 7
    %v7052 = vsub.s32 %v7049, %v7051
    %v7053 = vrot.slane %v5862, %v7052
    %v7055 = vunpack.c.l.s4 1983009808
    %v7056 = vunpack.c.0.s8 %v7055
    %v7057 = vlaneseq
    %v7058 = vshrl.u32 %v7057, 7
    %v7059 = vsub.s32 %v7056, %v7058
    %v7060 = vrot.slane %v7046, %v7059
    %v7061 = vcombine.high %v7053, %v7053
    %v7062 = vcombine.high %v7060, %v7060
    %v7063 = vcombine.high %v5863, %v5863
    %v7065 = vunpack.c.l.s4 1983009808
    %v7066 = vunpack.c.0.s8 %v7065
    %v7067 = vlaneseq
    %v7068 = vshrl.u32 %v7067, 7
    %v7069 = vsub.s32 %v7066, %v7068
    %v7070 = vrot.slane %v5863, %v7069
    %v7072 = vunpack.c.l.s4 1983009808
    %v7073 = vunpack.c.0.s8 %v7072
    %v7074 = vlaneseq
    %v7075 = vshrl.u32 %v7074, 7
    %v7076 = vsub.s32 %v7073, %v7075
    %v7077 = vrot.slane %v7063, %v7076
    %v7078 = vcombine.high %v7070, %v7070
    %v7079 = vcombine.high %v7077, %v7077
    %v7080 = vcombine.high %v5864, %v5864
    %v7082 = vunpack.c.l.s4 1983009808
    %v7083 = vunpack.c.0.s8 %v7082
    %v7084 = vlaneseq
    %v7085 = vshrl.u32 %v7084, 7
    %v7086 = vsub.s32 %v7083, %v7085
    %v7087 = vrot.slane %v5864, %v7086
    %v7089 = vunpack.c.l.s4 1983009808
    %v7090 = vunpack.c.0.s8 %v7089
    %v7091 = vlaneseq
    %v7092 = vshrl.u32 %v7091, 7
    %v7093 = vsub.s32 %v7090, %v7092
    %v7094 = vrot.slane %v7080, %v7093
    %v7095 = vcombine.high %v7087, %v7087
    %v7096 = vcombine.high %v7094, %v7094
    %v7097 = vcombine.high %v5865, %v5865
    %v7099 = vunpack.c.l.s4 1983009808
    %v7100 = vunpack.c.0.s8 %v7099
    %v7101 = vlaneseq
    %v7102 = vshrl.u32 %v7101, 7
    %v7103 = vsub.s32 %v7100, %v7102
    %v7104 = vrot.slane %v5865, %v7103
    %v7106 = vunpack.c.l.s4 1983009808
    %v7107 = vunpack.c.0.s8 %v7106
    %v7108 = vlaneseq
    %v7109 = vshrl.u32 %v7108, 7
    %v7110 = vsub.s32 %v7107, %v7109
    %v7111 = vrot.slane %v7097, %v7110
    %v7112 = vcombine.high %v7104, %v7104
    %v7113 = vcombine.high %v7111, %v7111
    %v7114 = vcombine.high %v5866, %v5866
    %v7116 = vunpack.c.l.s4 1983009808
    %v7117 = vunpack.c.0.s8 %v7116
    %v7118 = vlaneseq
    %v7119 = vshrl.u32 %v7118, 7
    %v7120 = vsub.s32 %v7117, %v7119
    %v7121 = vrot.slane %v5866, %v7120
    %v7123 = vunpack.c.l.s4 1983009808
    %v7124 = vunpack.c.0.s8 %v7123
    %v7125 = vlaneseq
    %v7126 = vshrl.u32 %v7125, 7
    %v7127 = vsub.s32 %v7124, %v7126
    %v7128 = vrot.slane %v7114, %v7127
    %v7129 = vcombine.high %v7121, %v7121
    %v7130 = vcombine.high %v7128, %v7128
    %v7131 = vcombine.high %v5867, %v5867
    %v7133 = vunpack.c.l.s4 1983009808
    %v7134 = vunpack.c.0.s8 %v7133
    %v7135 = vlaneseq
    %v7136 = vshrl.u32 %v7135, 7
    %v7137 = vsub.s32 %v7134, %v7136
    %v7138 = vrot.slane %v5867, %v7137
    %v7140 = vunpack.c.l.s4 1983009808
    %v7141 = vunpack.c.0.s8 %v7140
    %v7142 = vlaneseq
    %v7143 = vshrl.u32 %v7142, 7
    %v7144 = vsub.s32 %v7141, %v7143
    %v7145 = vrot.slane %v7131, %v7144
    %v7146 = vcombine.high %v7138, %v7138
    %v7147 = vcombine.high %v7145, %v7145
    %v7148 = vcombine.high %v5868, %v5868
    %v7150 = vunpack.c.l.s4 1983009808
    %v7151 = vunpack.c.0.s8 %v7150
    %v7152 = vlaneseq
    %v7153 = vshrl.u32 %v7152, 7
    %v7154 = vsub.s32 %v7151, %v7153
    %v7155 = vrot.slane %v5868, %v7154
    %v7157 = vunpack.c.l.s4 1983009808
    %v7158 = vunpack.c.0.s8 %v7157
    %v7159 = vlaneseq
    %v7160 = vshrl.u32 %v7159, 7
    %v7161 = vsub.s32 %v7158, %v7160
    %v7162 = vrot.slane %v7148, %v7161
    %v7163 = vcombine.high %v7155, %v7155
    %v7164 = vcombine.high %v7162, %v7162
    %v7165 = vcombine.high %v5869, %v5869
    %v7167 = vunpack.c.l.s4 1983009808
    %v7168 = vunpack.c.0.s8 %v7167
    %v7169 = vlaneseq
    %v7170 = vshrl.u32 %v7169, 7
    %v7171 = vsub.s32 %v7168, %v7170
    %v7172 = vrot.slane %v5869, %v7171
    %v7174 = vunpack.c.l.s4 1983009808
    %v7175 = vunpack.c.0.s8 %v7174
    %v7176 = vlaneseq
    %v7177 = vshrl.u32 %v7176, 7
    %v7178 = vsub.s32 %v7175, %v7177
    %v7179 = vrot.slane %v7165, %v7178
    %v7180 = vcombine.high %v7172, %v7172
    %v7181 = vcombine.high %v7179, %v7179
    %v7182 = vcombine.high %v5870, %v5870
    %v7184 = vunpack.c.l.s4 1983009808
    %v7185 = vunpack.c.0.s8 %v7184
    %v7186 = vlaneseq
    %v7187 = vshrl.u32 %v7186, 7
    %v7188 = vsub.s32 %v7185, %v7187
    %v7189 = vrot.slane %v5870, %v7188
    %v7191 = vunpack.c.l.s4 1983009808
    %v7192 = vunpack.c.0.s8 %v7191
    %v7193 = vlaneseq
    %v7194 = vshrl.u32 %v7193, 7
    %v7195 = vsub.s32 %v7192, %v7194
    %v7196 = vrot.slane %v7182, %v7195
    %v7197 = vcombine.high %v7189, %v7189
    %v7198 = vcombine.high %v7196, %v7196
    %v7199 = vcombine.high %v5871, %v5871
    %v7201 = vunpack.c.l.s4 1983009808
    %v7202 = vunpack.c.0.s8 %v7201
    %v7203 = vlaneseq
    %v7204 = vshrl.u32 %v7203, 7
    %v7205 = vsub.s32 %v7202, %v7204
    %v7206 = vrot.slane %v5871, %v7205
    %v7208 = vunpack.c.l.s4 1983009808
    %v7209 = vunpack.c.0.s8 %v7208
    %v7210 = vlaneseq
    %v7211 = vshrl.u32 %v7210, 7
    %v7212 = vsub.s32 %v7209, %v7211
    %v7213 = vrot.slane %v7199, %v7212
    %v7214 = vcombine.high %v7206, %v7206
    %v7215 = vcombine.high %v7213, %v7213
    %v7216 = vcombine.high %v5872, %v5872
    %v7218 = vunpack.c.l.s4 1983009808
    %v7219 = vunpack.c.0.s8 %v7218
    %v7220 = vlaneseq
    %v7221 = vshrl.u32 %v7220, 7
    %v7222 = vsub.s32 %v7219, %v7221
    %v7223 = vrot.slane %v5872, %v7222
    %v7225 = vunpack.c.l.s4 1983009808
    %v7226 = vunpack.c.0.s8 %v7225
    %v7227 = vlaneseq
    %v7228 = vshrl.u32 %v7227, 7
    %v7229 = vsub.s32 %v7226, %v7228
    %v7230 = vrot.slane %v7216, %v7229
    %v7231 = vcombine.high %v7223, %v7223
    %v7232 = vcombine.high %v7230, %v7230
    %v7233 = vcombine.high %v5873, %v5873
    %v7235 = vunpack.c.l.s4 1983009808
    %v7236 = vunpack.c.0.s8 %v7235
    %v7237 = vlaneseq
    %v7238 = vshrl.u32 %v7237, 7
    %v7239 = vsub.s32 %v7236, %v7238
    %v7240 = vrot.slane %v5873, %v7239
    %v7242 = vunpack.c.l.s4 1983009808
    %v7243 = vunpack.c.0.s8 %v7242
    %v7244 = vlaneseq
    %v7245 = vshrl.u32 %v7244, 7
    %v7246 = vsub.s32 %v7243, %v7245
    %v7247 = vrot.slane %v7233, %v7246
    %v7248 = vcombine.high %v7240, %v7240
    %v7249 = vcombine.high %v7247, %v7247
    %v7250 = vcombine.high %v5874, %v5874
    %v7252 = vunpack.c.l.s4 1983009808
    %v7253 = vunpack.c.0.s8 %v7252
    %v7254 = vlaneseq
    %v7255 = vshrl.u32 %v7254, 7
    %v7256 = vsub.s32 %v7253, %v7255
    %v7257 = vrot.slane %v5874, %v7256
    %v7259 = vunpack.c.l.s4 1983009808
    %v7260 = vunpack.c.0.s8 %v7259
    %v7261 = vlaneseq
    %v7262 = vshrl.u32 %v7261, 7
    %v7263 = vsub.s32 %v7260, %v7262
    %v7264 = vrot.slane %v7250, %v7263
    %v7265 = vcombine.high %v7257, %v7257
    %v7266 = vcombine.high %v7264, %v7264
    %v7267 = vcombine.high %v5875, %v5875
    %v7269 = vunpack.c.l.s4 1983009808
    %v7270 = vunpack.c.0.s8 %v7269
    %v7271 = vlaneseq
    %v7272 = vshrl.u32 %v7271, 7
    %v7273 = vsub.s32 %v7270, %v7272
    %v7274 = vrot.slane %v5875, %v7273
    %v7276 = vunpack.c.l.s4 1983009808
    %v7277 = vunpack.c.0.s8 %v7276
    %v7278 = vlaneseq
    %v7279 = vshrl.u32 %v7278, 7
    %v7280 = vsub.s32 %v7277, %v7279
    %v7281 = vrot.slane %v7267, %v7280
    %v7282 = vcombine.high %v7274, %v7274
    %v7283 = vcombine.high %v7281, %v7281
    %v7284 = vcombine.high %v5876, %v5876
    %v7286 = vunpack.c.l.s4 1983009808
    %v7287 = vunpack.c.0.s8 %v7286
    %v7288 = vlaneseq
    %v7289 = vshrl.u32 %v7288, 7
    %v7290 = vsub.s32 %v7287, %v7289
    %v7291 = vrot.slane %v5876, %v7290
    %v7293 = vunpack.c.l.s4 1983009808
    %v7294 = vunpack.c.0.s8 %v7293
    %v7295 = vlaneseq
    %v7296 = vshrl.u32 %v7295, 7
    %v7297 = vsub.s32 %v7294, %v7296
    %v7298 = vrot.slane %v7284, %v7297
    %v7299 = vcombine.high %v7291, %v7291
    %v7300 = vcombine.high %v7298, %v7298
    %v7301 = vcombine.high %v5877, %v5877
    %v7303 = vunpack.c.l.s4 1983009808
    %v7304 = vunpack.c.0.s8 %v7303
    %v7305 = vlaneseq
    %v7306 = vshrl.u32 %v7305, 7
    %v7307 = vsub.s32 %v7304, %v7306
    %v7308 = vrot.slane %v5877, %v7307
    %v7310 = vunpack.c.l.s4 1983009808
    %v7311 = vunpack.c.0.s8 %v7310
    %v7312 = vlaneseq
    %v7313 = vshrl.u32 %v7312, 7
    %v7314 = vsub.s32 %v7311, %v7313
    %v7315 = vrot.slane %v7301, %v7314
    %v7316 = vcombine.high %v7308, %v7308
    %v7317 = vcombine.high %v7315, %v7315
    %v7318 = vcombine.high %v5878, %v5878
    %v7320 = vunpack.c.l.s4 1983009808
    %v7321 = vunpack.c.0.s8 %v7320
    %v7322 = vlaneseq
    %v7323 = vshrl.u32 %v7322, 7
    %v7324 = vsub.s32 %v7321, %v7323
    %v7325 = vrot.slane %v5878, %v7324
    %v7327 = vunpack.c.l.s4 1983009808
    %v7328 = vunpack.c.0.s8 %v7327
    %v7329 = vlaneseq
    %v7330 = vshrl.u32 %v7329, 7
    %v7331 = vsub.s32 %v7328, %v7330
    %v7332 = vrot.slane %v7318, %v7331
    %v7333 = vcombine.high %v7325, %v7325
    %v7334 = vcombine.high %v7332, %v7332
    %v7335 = vcombine.high %v5879, %v5879
    %v7337 = vunpack.c.l.s4 1983009808
    %v7338 = vunpack.c.0.s8 %v7337
    %v7339 = vlaneseq
    %v7340 = vshrl.u32 %v7339, 7
    %v7341 = vsub.s32 %v7338, %v7340
    %v7342 = vrot.slane %v5879, %v7341
    %v7344 = vunpack.c.l.s4 1983009808
    %v7345 = vunpack.c.0.s8 %v7344
    %v7346 = vlaneseq
    %v7347 = vshrl.u32 %v7346, 7
    %v7348 = vsub.s32 %v7345, %v7347
    %v7349 = vrot.slane %v7335, %v7348
    %v7350 = vcombine.high %v7342, %v7342
    %v7351 = vcombine.high %v7349, %v7349
    %v7352 = vcombine.high %v5880, %v5880
    %v7354 = vunpack.c.l.s4 1983009808
    %v7355 = vunpack.c.0.s8 %v7354
    %v7356 = vlaneseq
    %v7357 = vshrl.u32 %v7356, 7
    %v7358 = vsub.s32 %v7355, %v7357
    %v7359 = vrot.slane %v5880, %v7358
    %v7361 = vunpack.c.l.s4 1983009808
    %v7362 = vunpack.c.0.s8 %v7361
    %v7363 = vlaneseq
    %v7364 = vshrl.u32 %v7363, 7
    %v7365 = vsub.s32 %v7362, %v7364
    %v7366 = vrot.slane %v7352, %v7365
    %v7367 = vcombine.high %v7359, %v7359
    %v7368 = vcombine.high %v7366, %v7366
    %v7369 = vcombine.high %v5881, %v5881
    %v7371 = vunpack.c.l.s4 1983009808
    %v7372 = vunpack.c.0.s8 %v7371
    %v7373 = vlaneseq
    %v7374 = vshrl.u32 %v7373, 7
    %v7375 = vsub.s32 %v7372, %v7374
    %v7376 = vrot.slane %v5881, %v7375
    %v7378 = vunpack.c.l.s4 1983009808
    %v7379 = vunpack.c.0.s8 %v7378
    %v7380 = vlaneseq
    %v7381 = vshrl.u32 %v7380, 7
    %v7382 = vsub.s32 %v7379, %v7381
    %v7383 = vrot.slane %v7369, %v7382
    %v7384 = vcombine.high %v7376, %v7376
    %v7385 = vcombine.high %v7383, %v7383
    %v7386 = vcombine.high %v5882, %v5882
    %v7388 = vunpack.c.l.s4 1983009808
    %v7389 = vunpack.c.0.s8 %v7388
    %v7390 = vlaneseq
    %v7391 = vshrl.u32 %v7390, 7
    %v7392 = vsub.s32 %v7389, %v7391
    %v7393 = vrot.slane %v5882, %v7392
    %v7395 = vunpack.c.l.s4 1983009808
    %v7396 = vunpack.c.0.s8 %v7395
    %v7397 = vlaneseq
    %v7398 = vshrl.u32 %v7397, 7
    %v7399 = vsub.s32 %v7396, %v7398
    %v7400 = vrot.slane %v7386, %v7399
    %v7401 = vcombine.high %v7393, %v7393
    %v7402 = vcombine.high %v7400, %v7400
    %v7403 = vcombine.high %v5883, %v5883
    %v7405 = vunpack.c.l.s4 1983009808
    %v7406 = vunpack.c.0.s8 %v7405
    %v7407 = vlaneseq
    %v7408 = vshrl.u32 %v7407, 7
    %v7409 = vsub.s32 %v7406, %v7408
    %v7410 = vrot.slane %v5883, %v7409
    %v7412 = vunpack.c.l.s4 1983009808
    %v7413 = vunpack.c.0.s8 %v7412
    %v7414 = vlaneseq
    %v7415 = vshrl.u32 %v7414, 7
    %v7416 = vsub.s32 %v7413, %v7415
    %v7417 = vrot.slane %v7403, %v7416
    %v7418 = vcombine.high %v7410, %v7410
    %v7419 = vcombine.high %v7417, %v7417
    %v7420 = vcombine.high %v5884, %v5884
    %v7422 = vunpack.c.l.s4 1983009808
    %v7423 = vunpack.c.0.s8 %v7422
    %v7424 = vlaneseq
    %v7425 = vshrl.u32 %v7424, 7
    %v7426 = vsub.s32 %v7423, %v7425
    %v7427 = vrot.slane %v5884, %v7426
    %v7429 = vunpack.c.l.s4 1983009808
    %v7430 = vunpack.c.0.s8 %v7429
    %v7431 = vlaneseq
    %v7432 = vshrl.u32 %v7431, 7
    %v7433 = vsub.s32 %v7430, %v7432
    %v7434 = vrot.slane %v7420, %v7433
    %v7435 = vcombine.high %v7427, %v7427
    %v7436 = vcombine.high %v7434, %v7434
    %v7437 = vcombine.high %v5885, %v5885
    %v7439 = vunpack.c.l.s4 1983009808
    %v7440 = vunpack.c.0.s8 %v7439
    %v7441 = vlaneseq
    %v7442 = vshrl.u32 %v7441, 7
    %v7443 = vsub.s32 %v7440, %v7442
    %v7444 = vrot.slane %v5885, %v7443
    %v7446 = vunpack.c.l.s4 1983009808
    %v7447 = vunpack.c.0.s8 %v7446
    %v7448 = vlaneseq
    %v7449 = vshrl.u32 %v7448, 7
    %v7450 = vsub.s32 %v7447, %v7449
    %v7451 = vrot.slane %v7437, %v7450
    %v7452 = vcombine.high %v7444, %v7444
    %v7453 = vcombine.high %v7451, %v7451
    %v7454 = vcombine.high %v5886, %v5886
    %v7456 = vunpack.c.l.s4 1983009808
    %v7457 = vunpack.c.0.s8 %v7456
    %v7458 = vlaneseq
    %v7459 = vshrl.u32 %v7458, 7
    %v7460 = vsub.s32 %v7457, %v7459
    %v7461 = vrot.slane %v5886, %v7460
    %v7463 = vunpack.c.l.s4 1983009808
    %v7464 = vunpack.c.0.s8 %v7463
    %v7465 = vlaneseq
    %v7466 = vshrl.u32 %v7465, 7
    %v7467 = vsub.s32 %v7464, %v7466
    %v7468 = vrot.slane %v7454, %v7467
    %v7469 = vcombine.high %v7461, %v7461
    %v7470 = vcombine.high %v7468, %v7468
    %v7471 = vcombine.high %v5887, %v5887
    %v7473 = vunpack.c.l.s4 1983009808
    %v7474 = vunpack.c.0.s8 %v7473
    %v7475 = vlaneseq
    %v7476 = vshrl.u32 %v7475, 7
    %v7477 = vsub.s32 %v7474, %v7476
    %v7478 = vrot.slane %v5887, %v7477
    %v7480 = vunpack.c.l.s4 1983009808
    %v7481 = vunpack.c.0.s8 %v7480
    %v7482 = vlaneseq
    %v7483 = vshrl.u32 %v7482, 7
    %v7484 = vsub.s32 %v7481, %v7483
    %v7485 = vrot.slane %v7471, %v7484
    %v7486 = vcombine.high %v7478, %v7478
    %v7487 = vcombine.high %v7485, %v7485
    %v7488 = vcombine.high %v5888, %v5888
    %v7490 = vunpack.c.l.s4 1983009808
    %v7491 = vunpack.c.0.s8 %v7490
    %v7492 = vlaneseq
    %v7493 = vshrl.u32 %v7492, 7
    %v7494 = vsub.s32 %v7491, %v7493
    %v7495 = vrot.slane %v5888, %v7494
    %v7497 = vunpack.c.l.s4 1983009808
    %v7498 = vunpack.c.0.s8 %v7497
    %v7499 = vlaneseq
    %v7500 = vshrl.u32 %v7499, 7
    %v7501 = vsub.s32 %v7498, %v7500
    %v7502 = vrot.slane %v7488, %v7501
    %v7503 = vcombine.high %v7495, %v7495
    %v7504 = vcombine.high %v7502, %v7502
    %v7505 = vcombine.high %v5889, %v5889
    %v7507 = vunpack.c.l.s4 1983009808
    %v7508 = vunpack.c.0.s8 %v7507
    %v7509 = vlaneseq
    %v7510 = vshrl.u32 %v7509, 7
    %v7511 = vsub.s32 %v7508, %v7510
    %v7512 = vrot.slane %v5889, %v7511
    %v7514 = vunpack.c.l.s4 1983009808
    %v7515 = vunpack.c.0.s8 %v7514
    %v7516 = vlaneseq
    %v7517 = vshrl.u32 %v7516, 7
    %v7518 = vsub.s32 %v7515, %v7517
    %v7519 = vrot.slane %v7505, %v7518
    %v7520 = vcombine.high %v7512, %v7512
    %v7521 = vcombine.high %v7519, %v7519
    %v7522 = vcombine.high %v5890, %v5890
    %v7524 = vunpack.c.l.s4 1983009808
    %v7525 = vunpack.c.0.s8 %v7524
    %v7526 = vlaneseq
    %v7527 = vshrl.u32 %v7526, 7
    %v7528 = vsub.s32 %v7525, %v7527
    %v7529 = vrot.slane %v5890, %v7528
    %v7531 = vunpack.c.l.s4 1983009808
    %v7532 = vunpack.c.0.s8 %v7531
    %v7533 = vlaneseq
    %v7534 = vshrl.u32 %v7533, 7
    %v7535 = vsub.s32 %v7532, %v7534
    %v7536 = vrot.slane %v7522, %v7535
    %v7537 = vcombine.high %v7529, %v7529
    %v7538 = vcombine.high %v7536, %v7536
    %v7539 = vcombine.high %v5891, %v5891
    %v7541 = vunpack.c.l.s4 1983009808
    %v7542 = vunpack.c.0.s8 %v7541
    %v7543 = vlaneseq
    %v7544 = vshrl.u32 %v7543, 7
    %v7545 = vsub.s32 %v7542, %v7544
    %v7546 = vrot.slane %v5891, %v7545
    %v7548 = vunpack.c.l.s4 1983009808
    %v7549 = vunpack.c.0.s8 %v7548
    %v7550 = vlaneseq
    %v7551 = vshrl.u32 %v7550, 7
    %v7552 = vsub.s32 %v7549, %v7551
    %v7553 = vrot.slane %v7539, %v7552
    %v7554 = vcombine.high %v7546, %v7546
    %v7555 = vcombine.high %v7553, %v7553
    %v7556 = vcombine.high %v5892, %v5892
    %v7558 = vunpack.c.l.s4 1983009808
    %v7559 = vunpack.c.0.s8 %v7558
    %v7560 = vlaneseq
    %v7561 = vshrl.u32 %v7560, 7
    %v7562 = vsub.s32 %v7559, %v7561
    %v7563 = vrot.slane %v5892, %v7562
    %v7565 = vunpack.c.l.s4 1983009808
    %v7566 = vunpack.c.0.s8 %v7565
    %v7567 = vlaneseq
    %v7568 = vshrl.u32 %v7567, 7
    %v7569 = vsub.s32 %v7566, %v7568
    %v7570 = vrot.slane %v7556, %v7569
    %v7571 = vcombine.high %v7563, %v7563
    %v7572 = vcombine.high %v7570, %v7570
    %v7573 = vcombine.high %v5893, %v5893
    %v7575 = vunpack.c.l.s4 1983009808
    %v7576 = vunpack.c.0.s8 %v7575
    %v7577 = vlaneseq
    %v7578 = vshrl.u32 %v7577, 7
    %v7579 = vsub.s32 %v7576, %v7578
    %v7580 = vrot.slane %v5893, %v7579
    %v7582 = vunpack.c.l.s4 1983009808
    %v7583 = vunpack.c.0.s8 %v7582
    %v7584 = vlaneseq
    %v7585 = vshrl.u32 %v7584, 7
    %v7586 = vsub.s32 %v7583, %v7585
    %v7587 = vrot.slane %v7573, %v7586
    %v7588 = vcombine.high %v7580, %v7580
    %v7589 = vcombine.high %v7587, %v7587
    %v7590 = vcombine.high %v5894, %v5894
    %v7592 = vunpack.c.l.s4 1983009808
    %v7593 = vunpack.c.0.s8 %v7592
    %v7594 = vlaneseq
    %v7595 = vshrl.u32 %v7594, 7
    %v7596 = vsub.s32 %v7593, %v7595
    %v7597 = vrot.slane %v5894, %v7596
    %v7599 = vunpack.c.l.s4 1983009808
    %v7600 = vunpack.c.0.s8 %v7599
    %v7601 = vlaneseq
    %v7602 = vshrl.u32 %v7601, 7
    %v7603 = vsub.s32 %v7600, %v7602
    %v7604 = vrot.slane %v7590, %v7603
    %v7605 = vcombine.high %v7597, %v7597
    %v7606 = vcombine.high %v7604, %v7604
    %v7607 = vcombine.high %v5895, %v5895
    %v7609 = vunpack.c.l.s4 1983009808
    %v7610 = vunpack.c.0.s8 %v7609
    %v7611 = vlaneseq
    %v7612 = vshrl.u32 %v7611, 7
    %v7613 = vsub.s32 %v7610, %v7612
    %v7614 = vrot.slane %v5895, %v7613
    %v7616 = vunpack.c.l.s4 1983009808
    %v7617 = vunpack.c.0.s8 %v7616
    %v7618 = vlaneseq
    %v7619 = vshrl.u32 %v7618, 7
    %v7620 = vsub.s32 %v7617, %v7619
    %v7621 = vrot.slane %v7607, %v7620
    %v7622 = vcombine.high %v7614, %v7614
    %v7623 = vcombine.high %v7621, %v7621
    %v7624 = vcombine.high %v5896, %v5896
    %v7626 = vunpack.c.l.s4 1983009808
    %v7627 = vunpack.c.0.s8 %v7626
    %v7628 = vlaneseq
    %v7629 = vshrl.u32 %v7628, 7
    %v7630 = vsub.s32 %v7627, %v7629
    %v7631 = vrot.slane %v5896, %v7630
    %v7633 = vunpack.c.l.s4 1983009808
    %v7634 = vunpack.c.0.s8 %v7633
    %v7635 = vlaneseq
    %v7636 = vshrl.u32 %v7635, 7
    %v7637 = vsub.s32 %v7634, %v7636
    %v7638 = vrot.slane %v7624, %v7637
    %v7639 = vcombine.high %v7631, %v7631
    %v7640 = vcombine.high %v7638, %v7638
    %v7641 = vcombine.high %v5897, %v5897
    %v7643 = vunpack.c.l.s4 1983009808
    %v7644 = vunpack.c.0.s8 %v7643
    %v7645 = vlaneseq
    %v7646 = vshrl.u32 %v7645, 7
    %v7647 = vsub.s32 %v7644, %v7646
    %v7648 = vrot.slane %v5897, %v7647
    %v7650 = vunpack.c.l.s4 1983009808
    %v7651 = vunpack.c.0.s8 %v7650
    %v7652 = vlaneseq
    %v7653 = vshrl.u32 %v7652, 7
    %v7654 = vsub.s32 %v7651, %v7653
    %v7655 = vrot.slane %v7641, %v7654
    %v7656 = vcombine.high %v7648, %v7648
    %v7657 = vcombine.high %v7655, %v7655
    %v7658 = vcombine.high %v5898, %v5898
    %v7660 = vunpack.c.l.s4 1983009808
    %v7661 = vunpack.c.0.s8 %v7660
    %v7662 = vlaneseq
    %v7663 = vshrl.u32 %v7662, 7
    %v7664 = vsub.s32 %v7661, %v7663
    %v7665 = vrot.slane %v5898, %v7664
    %v7667 = vunpack.c.l.s4 1983009808
    %v7668 = vunpack.c.0.s8 %v7667
    %v7669 = vlaneseq
    %v7670 = vshrl.u32 %v7669, 7
    %v7671 = vsub.s32 %v7668, %v7670
    %v7672 = vrot.slane %v7658, %v7671
    %v7673 = vcombine.high %v7665, %v7665
    %v7674 = vcombine.high %v7672, %v7672
    %v7675 = vcombine.high %v5899, %v5899
    %v7677 = vunpack.c.l.s4 1983009808
    %v7678 = vunpack.c.0.s8 %v7677
    %v7679 = vlaneseq
    %v7680 = vshrl.u32 %v7679, 7
    %v7681 = vsub.s32 %v7678, %v7680
    %v7682 = vrot.slane %v5899, %v7681
    %v7684 = vunpack.c.l.s4 1983009808
    %v7685 = vunpack.c.0.s8 %v7684
    %v7686 = vlaneseq
    %v7687 = vshrl.u32 %v7686, 7
    %v7688 = vsub.s32 %v7685, %v7687
    %v7689 = vrot.slane %v7675, %v7688
    %v7690 = vcombine.high %v7682, %v7682
    %v7691 = vcombine.high %v7689, %v7689
    %v7692 = vcombine.high %v5900, %v5900
    %v7694 = vunpack.c.l.s4 1983009808
    %v7695 = vunpack.c.0.s8 %v7694
    %v7696 = vlaneseq
    %v7697 = vshrl.u32 %v7696, 7
    %v7698 = vsub.s32 %v7695, %v7697
    %v7699 = vrot.slane %v5900, %v7698
    %v7701 = vunpack.c.l.s4 1983009808
    %v7702 = vunpack.c.0.s8 %v7701
    %v7703 = vlaneseq
    %v7704 = vshrl.u32 %v7703, 7
    %v7705 = vsub.s32 %v7702, %v7704
    %v7706 = vrot.slane %v7692, %v7705
    %v7707 = vcombine.high %v7699, %v7699
    %v7708 = vcombine.high %v7706, %v7706
    %v7709 = vcombine.high %v5901, %v5901
    %v7711 = vunpack.c.l.s4 1983009808
    %v7712 = vunpack.c.0.s8 %v7711
    %v7713 = vlaneseq
    %v7714 = vshrl.u32 %v7713, 7
    %v7715 = vsub.s32 %v7712, %v7714
    %v7716 = vrot.slane %v5901, %v7715
    %v7718 = vunpack.c.l.s4 1983009808
    %v7719 = vunpack.c.0.s8 %v7718
    %v7720 = vlaneseq
    %v7721 = vshrl.u32 %v7720, 7
    %v7722 = vsub.s32 %v7719, %v7721
    %v7723 = vrot.slane %v7709, %v7722
    %v7724 = vcombine.high %v7716, %v7716
    %v7725 = vcombine.high %v7723, %v7723
    %v7726 = vcombine.high %v5902, %v5902
    %v7728 = vunpack.c.l.s4 1983009808
    %v7729 = vunpack.c.0.s8 %v7728
    %v7730 = vlaneseq
    %v7731 = vshrl.u32 %v7730, 7
    %v7732 = vsub.s32 %v7729, %v7731
    %v7733 = vrot.slane %v5902, %v7732
    %v7735 = vunpack.c.l.s4 1983009808
    %v7736 = vunpack.c.0.s8 %v7735
    %v7737 = vlaneseq
    %v7738 = vshrl.u32 %v7737, 7
    %v7739 = vsub.s32 %v7736, %v7738
    %v7740 = vrot.slane %v7726, %v7739
    %v7741 = vcombine.high %v7733, %v7733
    %v7742 = vcombine.high %v7740, %v7740
    %v7743 = vcombine.high %v5903, %v5903
    %v7745 = vunpack.c.l.s4 1983009808
    %v7746 = vunpack.c.0.s8 %v7745
    %v7747 = vlaneseq
    %v7748 = vshrl.u32 %v7747, 7
    %v7749 = vsub.s32 %v7746, %v7748
    %v7750 = vrot.slane %v5903, %v7749
    %v7752 = vunpack.c.l.s4 1983009808
    %v7753 = vunpack.c.0.s8 %v7752
    %v7754 = vlaneseq
    %v7755 = vshrl.u32 %v7754, 7
    %v7756 = vsub.s32 %v7753, %v7755
    %v7757 = vrot.slane %v7743, %v7756
    %v7758 = vcombine.high %v7750, %v7750
    %v7759 = vcombine.high %v7757, %v7757
    %v7760 = vcombine.high %v5904, %v5904
    %v7762 = vunpack.c.l.s4 1983009808
    %v7763 = vunpack.c.0.s8 %v7762
    %v7764 = vlaneseq
    %v7765 = vshrl.u32 %v7764, 7
    %v7766 = vsub.s32 %v7763, %v7765
    %v7767 = vrot.slane %v5904, %v7766
    %v7769 = vunpack.c.l.s4 1983009808
    %v7770 = vunpack.c.0.s8 %v7769
    %v7771 = vlaneseq
    %v7772 = vshrl.u32 %v7771, 7
    %v7773 = vsub.s32 %v7770, %v7772
    %v7774 = vrot.slane %v7760, %v7773
    %v7775 = vcombine.high %v7767, %v7767
    %v7776 = vcombine.high %v7774, %v7774
    %v7777 = vcombine.high %v5905, %v5905
    %v7779 = vunpack.c.l.s4 1983009808
    %v7780 = vunpack.c.0.s8 %v7779
    %v7781 = vlaneseq
    %v7782 = vshrl.u32 %v7781, 7
    %v7783 = vsub.s32 %v7780, %v7782
    %v7784 = vrot.slane %v5905, %v7783
    %v7786 = vunpack.c.l.s4 1983009808
    %v7787 = vunpack.c.0.s8 %v7786
    %v7788 = vlaneseq
    %v7789 = vshrl.u32 %v7788, 7
    %v7790 = vsub.s32 %v7787, %v7789
    %v7791 = vrot.slane %v7777, %v7790
    %v7792 = vcombine.high %v7784, %v7784
    %v7793 = vcombine.high %v7791, %v7791
    %v7794 = vcombine.high %v5906, %v5906
    %v7796 = vunpack.c.l.s4 1983009808
    %v7797 = vunpack.c.0.s8 %v7796
    %v7798 = vlaneseq
    %v7799 = vshrl.u32 %v7798, 7
    %v7800 = vsub.s32 %v7797, %v7799
    %v7801 = vrot.slane %v5906, %v7800
    %v7803 = vunpack.c.l.s4 1983009808
    %v7804 = vunpack.c.0.s8 %v7803
    %v7805 = vlaneseq
    %v7806 = vshrl.u32 %v7805, 7
    %v7807 = vsub.s32 %v7804, %v7806
    %v7808 = vrot.slane %v7794, %v7807
    %v7809 = vcombine.high %v7801, %v7801
    %v7810 = vcombine.high %v7808, %v7808
    %v7811 = vcombine.high %v5907, %v5907
    %v7813 = vunpack.c.l.s4 1983009808
    %v7814 = vunpack.c.0.s8 %v7813
    %v7815 = vlaneseq
    %v7816 = vshrl.u32 %v7815, 7
    %v7817 = vsub.s32 %v7814, %v7816
    %v7818 = vrot.slane %v5907, %v7817
    %v7820 = vunpack.c.l.s4 1983009808
    %v7821 = vunpack.c.0.s8 %v7820
    %v7822 = vlaneseq
    %v7823 = vshrl.u32 %v7822, 7
    %v7824 = vsub.s32 %v7821, %v7823
    %v7825 = vrot.slane %v7811, %v7824
    %v7826 = vcombine.high %v7818, %v7818
    %v7827 = vcombine.high %v7825, %v7825
    %v7828 = vcombine.high %v5908, %v5908
    %v7830 = vunpack.c.l.s4 1983009808
    %v7831 = vunpack.c.0.s8 %v7830
    %v7832 = vlaneseq
    %v7833 = vshrl.u32 %v7832, 7
    %v7834 = vsub.s32 %v7831, %v7833
    %v7835 = vrot.slane %v5908, %v7834
    %v7837 = vunpack.c.l.s4 1983009808
    %v7838 = vunpack.c.0.s8 %v7837
    %v7839 = vlaneseq
    %v7840 = vshrl.u32 %v7839, 7
    %v7841 = vsub.s32 %v7838, %v7840
    %v7842 = vrot.slane %v7828, %v7841
    %v7843 = vcombine.high %v7835, %v7835
    %v7844 = vcombine.high %v7842, %v7842
    %v7845 = vcombine.high %v5909, %v5909
    %v7847 = vunpack.c.l.s4 1983009808
    %v7848 = vunpack.c.0.s8 %v7847
    %v7849 = vlaneseq
    %v7850 = vshrl.u32 %v7849, 7
    %v7851 = vsub.s32 %v7848, %v7850
    %v7852 = vrot.slane %v5909, %v7851
    %v7854 = vunpack.c.l.s4 1983009808
    %v7855 = vunpack.c.0.s8 %v7854
    %v7856 = vlaneseq
    %v7857 = vshrl.u32 %v7856, 7
    %v7858 = vsub.s32 %v7855, %v7857
    %v7859 = vrot.slane %v7845, %v7858
    %v7860 = vcombine.high %v7852, %v7852
    %v7861 = vcombine.high %v7859, %v7859
    %v7862 = vcombine.high %v5910, %v5910
    %v7864 = vunpack.c.l.s4 1983009808
    %v7865 = vunpack.c.0.s8 %v7864
    %v7866 = vlaneseq
    %v7867 = vshrl.u32 %v7866, 7
    %v7868 = vsub.s32 %v7865, %v7867
    %v7869 = vrot.slane %v5910, %v7868
    %v7871 = vunpack.c.l.s4 1983009808
    %v7872 = vunpack.c.0.s8 %v7871
    %v7873 = vlaneseq
    %v7874 = vshrl.u32 %v7873, 7
    %v7875 = vsub.s32 %v7872, %v7874
    %v7876 = vrot.slane %v7862, %v7875
    %v7877 = vcombine.high %v7869, %v7869
    %v7878 = vcombine.high %v7876, %v7876
    %v7879 = vcombine.high %v5911, %v5911
    %v7881 = vunpack.c.l.s4 1983009808
    %v7882 = vunpack.c.0.s8 %v7881
    %v7883 = vlaneseq
    %v7884 = vshrl.u32 %v7883, 7
    %v7885 = vsub.s32 %v7882, %v7884
    %v7886 = vrot.slane %v5911, %v7885
    %v7888 = vunpack.c.l.s4 1983009808
    %v7889 = vunpack.c.0.s8 %v7888
    %v7890 = vlaneseq
    %v7891 = vshrl.u32 %v7890, 7
    %v7892 = vsub.s32 %v7889, %v7891
    %v7893 = vrot.slane %v7879, %v7892
    %v7894 = vcombine.high %v7886, %v7886
    %v7895 = vcombine.high %v7893, %v7893
    %v7896 = vcombine.high %v5912, %v5912
    %v7898 = vunpack.c.l.s4 1983009808
    %v7899 = vunpack.c.0.s8 %v7898
    %v7900 = vlaneseq
    %v7901 = vshrl.u32 %v7900, 7
    %v7902 = vsub.s32 %v7899, %v7901
    %v7903 = vrot.slane %v5912, %v7902
    %v7905 = vunpack.c.l.s4 1983009808
    %v7906 = vunpack.c.0.s8 %v7905
    %v7907 = vlaneseq
    %v7908 = vshrl.u32 %v7907, 7
    %v7909 = vsub.s32 %v7906, %v7908
    %v7910 = vrot.slane %v7896, %v7909
    %v7911 = vcombine.high %v7903, %v7903
    %v7912 = vcombine.high %v7910, %v7910
    %v7913 = vcombine.high %v5913, %v5913
    %v7915 = vunpack.c.l.s4 1983009808
    %v7916 = vunpack.c.0.s8 %v7915
    %v7917 = vlaneseq
    %v7918 = vshrl.u32 %v7917, 7
    %v7919 = vsub.s32 %v7916, %v7918
    %v7920 = vrot.slane %v5913, %v7919
    %v7922 = vunpack.c.l.s4 1983009808
    %v7923 = vunpack.c.0.s8 %v7922
    %v7924 = vlaneseq
    %v7925 = vshrl.u32 %v7924, 7
    %v7926 = vsub.s32 %v7923, %v7925
    %v7927 = vrot.slane %v7913, %v7926
    %v7928 = vcombine.high %v7920, %v7920
    %v7929 = vcombine.high %v7927, %v7927
    %v7930 = vcombine.high %v5914, %v5914
    %v7932 = vunpack.c.l.s4 1983009808
    %v7933 = vunpack.c.0.s8 %v7932
    %v7934 = vlaneseq
    %v7935 = vshrl.u32 %v7934, 7
    %v7936 = vsub.s32 %v7933, %v7935
    %v7937 = vrot.slane %v5914, %v7936
    %v7939 = vunpack.c.l.s4 1983009808
    %v7940 = vunpack.c.0.s8 %v7939
    %v7941 = vlaneseq
    %v7942 = vshrl.u32 %v7941, 7
    %v7943 = vsub.s32 %v7940, %v7942
    %v7944 = vrot.slane %v7930, %v7943
    %v7945 = vcombine.high %v7937, %v7937
    %v7946 = vcombine.high %v7944, %v7944
    %v7947 = vcombine.high %v5915, %v5915
    %v7949 = vunpack.c.l.s4 1983009808
    %v7950 = vunpack.c.0.s8 %v7949
    %v7951 = vlaneseq
    %v7952 = vshrl.u32 %v7951, 7
    %v7953 = vsub.s32 %v7950, %v7952
    %v7954 = vrot.slane %v5915, %v7953
    %v7956 = vunpack.c.l.s4 1983009808
    %v7957 = vunpack.c.0.s8 %v7956
    %v7958 = vlaneseq
    %v7959 = vshrl.u32 %v7958, 7
    %v7960 = vsub.s32 %v7957, %v7959
    %v7961 = vrot.slane %v7947, %v7960
    %v7962 = vcombine.high %v7954, %v7954
    %v7963 = vcombine.high %v7961, %v7961
    %v7964 = vcombine.high %v5916, %v5916
    %v7966 = vunpack.c.l.s4 1983009808
    %v7967 = vunpack.c.0.s8 %v7966
    %v7968 = vlaneseq
    %v7969 = vshrl.u32 %v7968, 7
    %v7970 = vsub.s32 %v7967, %v7969
    %v7971 = vrot.slane %v5916, %v7970
    %v7973 = vunpack.c.l.s4 1983009808
    %v7974 = vunpack.c.0.s8 %v7973
    %v7975 = vlaneseq
    %v7976 = vshrl.u32 %v7975, 7
    %v7977 = vsub.s32 %v7974, %v7976
    %v7978 = vrot.slane %v7964, %v7977
    %v7979 = vcombine.high %v7971, %v7971
    %v7980 = vcombine.high %v7978, %v7978
    %v7981 = vcombine.high %v5917, %v5917
    %v7983 = vunpack.c.l.s4 1983009808
    %v7984 = vunpack.c.0.s8 %v7983
    %v7985 = vlaneseq
    %v7986 = vshrl.u32 %v7985, 7
    %v7987 = vsub.s32 %v7984, %v7986
    %v7988 = vrot.slane %v5917, %v7987
    %v7990 = vunpack.c.l.s4 1983009808
    %v7991 = vunpack.c.0.s8 %v7990
    %v7992 = vlaneseq
    %v7993 = vshrl.u32 %v7992, 7
    %v7994 = vsub.s32 %v7991, %v7993
    %v7995 = vrot.slane %v7981, %v7994
    %v7996 = vcombine.high %v7988, %v7988
    %v7997 = vcombine.high %v7995, %v7995
    %v7998 = vcombine.high %v5918, %v5918
    %v8000 = vunpack.c.l.s4 1983009808
    %v8001 = vunpack.c.0.s8 %v8000
    %v8002 = vlaneseq
    %v8003 = vshrl.u32 %v8002, 7
    %v8004 = vsub.s32 %v8001, %v8003
    %v8005 = vrot.slane %v5918, %v8004
    %v8007 = vunpack.c.l.s4 1983009808
    %v8008 = vunpack.c.0.s8 %v8007
    %v8009 = vlaneseq
    %v8010 = vshrl.u32 %v8009, 7
    %v8011 = vsub.s32 %v8008, %v8010
    %v8012 = vrot.slane %v7998, %v8011
    %v8013 = vcombine.high %v8005, %v8005
    %v8014 = vcombine.high %v8012, %v8012
    %v8015 = vcombine.high %v5919, %v5919
    %v8017 = vunpack.c.l.s4 1983009808
    %v8018 = vunpack.c.0.s8 %v8017
    %v8019 = vlaneseq
    %v8020 = vshrl.u32 %v8019, 7
    %v8021 = vsub.s32 %v8018, %v8020
    %v8022 = vrot.slane %v5919, %v8021
    %v8024 = vunpack.c.l.s4 1983009808
    %v8025 = vunpack.c.0.s8 %v8024
    %v8026 = vlaneseq
    %v8027 = vshrl.u32 %v8026, 7
    %v8028 = vsub.s32 %v8025, %v8027
    %v8029 = vrot.slane %v8015, %v8028
    %v8030 = vcombine.high %v8022, %v8022
    %v8031 = vcombine.high %v8029, %v8029
    %v8032 = vcombine.high %v5920, %v5920
    %v8034 = vunpack.c.l.s4 1983009808
    %v8035 = vunpack.c.0.s8 %v8034
    %v8036 = vlaneseq
    %v8037 = vshrl.u32 %v8036, 7
    %v8038 = vsub.s32 %v8035, %v8037
    %v8039 = vrot.slane %v5920, %v8038
    %v8041 = vunpack.c.l.s4 1983009808
    %v8042 = vunpack.c.0.s8 %v8041
    %v8043 = vlaneseq
    %v8044 = vshrl.u32 %v8043, 7
    %v8045 = vsub.s32 %v8042, %v8044
    %v8046 = vrot.slane %v8032, %v8045
    %v8047 = vcombine.high %v8039, %v8039
    %v8048 = vcombine.high %v8046, %v8046
    %v8049 = vcombine.high %v5921, %v5921
    %v8051 = vunpack.c.l.s4 1983009808
    %v8052 = vunpack.c.0.s8 %v8051
    %v8053 = vlaneseq
    %v8054 = vshrl.u32 %v8053, 7
    %v8055 = vsub.s32 %v8052, %v8054
    %v8056 = vrot.slane %v5921, %v8055
    %v8058 = vunpack.c.l.s4 1983009808
    %v8059 = vunpack.c.0.s8 %v8058
    %v8060 = vlaneseq
    %v8061 = vshrl.u32 %v8060, 7
    %v8062 = vsub.s32 %v8059, %v8061
    %v8063 = vrot.slane %v8049, %v8062
    %v8064 = vcombine.high %v8056, %v8056
    %v8065 = vcombine.high %v8063, %v8063
    %v8066 = vcombine.high %v5922, %v5922
    %v8068 = vunpack.c.l.s4 1983009808
    %v8069 = vunpack.c.0.s8 %v8068
    %v8070 = vlaneseq
    %v8071 = vshrl.u32 %v8070, 7
    %v8072 = vsub.s32 %v8069, %v8071
    %v8073 = vrot.slane %v5922, %v8072
    %v8075 = vunpack.c.l.s4 1983009808
    %v8076 = vunpack.c.0.s8 %v8075
    %v8077 = vlaneseq
    %v8078 = vshrl.u32 %v8077, 7
    %v8079 = vsub.s32 %v8076, %v8078
    %v8080 = vrot.slane %v8066, %v8079
    %v8081 = vcombine.high %v8073, %v8073
    %v8082 = vcombine.high %v8080, %v8080
    %v8083 = vcombine.high %v5923, %v5923
    %v8085 = vunpack.c.l.s4 1983009808
    %v8086 = vunpack.c.0.s8 %v8085
    %v8087 = vlaneseq
    %v8088 = vshrl.u32 %v8087, 7
    %v8089 = vsub.s32 %v8086, %v8088
    %v8090 = vrot.slane %v5923, %v8089
    %v8092 = vunpack.c.l.s4 1983009808
    %v8093 = vunpack.c.0.s8 %v8092
    %v8094 = vlaneseq
    %v8095 = vshrl.u32 %v8094, 7
    %v8096 = vsub.s32 %v8093, %v8095
    %v8097 = vrot.slane %v8083, %v8096
    %v8098 = vcombine.high %v8090, %v8090
    %v8099 = vcombine.high %v8097, %v8097
    %v8100 = vcombine.high %v5924, %v5924
    %v8102 = vunpack.c.l.s4 1983009808
    %v8103 = vunpack.c.0.s8 %v8102
    %v8104 = vlaneseq
    %v8105 = vshrl.u32 %v8104, 7
    %v8106 = vsub.s32 %v8103, %v8105
    %v8107 = vrot.slane %v5924, %v8106
    %v8109 = vunpack.c.l.s4 1983009808
    %v8110 = vunpack.c.0.s8 %v8109
    %v8111 = vlaneseq
    %v8112 = vshrl.u32 %v8111, 7
    %v8113 = vsub.s32 %v8110, %v8112
    %v8114 = vrot.slane %v8100, %v8113
    %v8115 = vcombine.high %v8107, %v8107
    %v8116 = vcombine.high %v8114, %v8114
    %v8117 = vcombine.high %v5925, %v5925
    %v8119 = vunpack.c.l.s4 1983009808
    %v8120 = vunpack.c.0.s8 %v8119
    %v8121 = vlaneseq
    %v8122 = vshrl.u32 %v8121, 7
    %v8123 = vsub.s32 %v8120, %v8122
    %v8124 = vrot.slane %v5925, %v8123
    %v8126 = vunpack.c.l.s4 1983009808
    %v8127 = vunpack.c.0.s8 %v8126
    %v8128 = vlaneseq
    %v8129 = vshrl.u32 %v8128, 7
    %v8130 = vsub.s32 %v8127, %v8129
    %v8131 = vrot.slane %v8117, %v8130
    %v8132 = vcombine.high %v8124, %v8124
    %v8133 = vcombine.high %v8131, %v8131
    %v8134 = vcombine.high %v5926, %v5926
    %v8136 = vunpack.c.l.s4 1983009808
    %v8137 = vunpack.c.0.s8 %v8136
    %v8138 = vlaneseq
    %v8139 = vshrl.u32 %v8138, 7
    %v8140 = vsub.s32 %v8137, %v8139
    %v8141 = vrot.slane %v5926, %v8140
    %v8143 = vunpack.c.l.s4 1983009808
    %v8144 = vunpack.c.0.s8 %v8143
    %v8145 = vlaneseq
    %v8146 = vshrl.u32 %v8145, 7
    %v8147 = vsub.s32 %v8144, %v8146
    %v8148 = vrot.slane %v8134, %v8147
    %v8149 = vcombine.high %v8141, %v8141
    %v8150 = vcombine.high %v8148, %v8148
    %v8151 = vcombine.high %v5927, %v5927
    %v8153 = vunpack.c.l.s4 1983009808
    %v8154 = vunpack.c.0.s8 %v8153
    %v8155 = vlaneseq
    %v8156 = vshrl.u32 %v8155, 7
    %v8157 = vsub.s32 %v8154, %v8156
    %v8158 = vrot.slane %v5927, %v8157
    %v8160 = vunpack.c.l.s4 1983009808
    %v8161 = vunpack.c.0.s8 %v8160
    %v8162 = vlaneseq
    %v8163 = vshrl.u32 %v8162, 7
    %v8164 = vsub.s32 %v8161, %v8163
    %v8165 = vrot.slane %v8151, %v8164
    %v8166 = vcombine.high %v8158, %v8158
    %v8167 = vcombine.high %v8165, %v8165
    %v8168 = vcombine.high %v5928, %v5928
    %v8170 = vunpack.c.l.s4 1983009808
    %v8171 = vunpack.c.0.s8 %v8170
    %v8172 = vlaneseq
    %v8173 = vshrl.u32 %v8172, 7
    %v8174 = vsub.s32 %v8171, %v8173
    %v8175 = vrot.slane %v5928, %v8174
    %v8177 = vunpack.c.l.s4 1983009808
    %v8178 = vunpack.c.0.s8 %v8177
    %v8179 = vlaneseq
    %v8180 = vshrl.u32 %v8179, 7
    %v8181 = vsub.s32 %v8178, %v8180
    %v8182 = vrot.slane %v8168, %v8181
    %v8183 = vcombine.high %v8175, %v8175
    %v8184 = vcombine.high %v8182, %v8182
    %v8185 = vcombine.high %v5929, %v5929
    %v8187 = vunpack.c.l.s4 1983009808
    %v8188 = vunpack.c.0.s8 %v8187
    %v8189 = vlaneseq
    %v8190 = vshrl.u32 %v8189, 7
    %v8191 = vsub.s32 %v8188, %v8190
    %v8192 = vrot.slane %v5929, %v8191
    %v8194 = vunpack.c.l.s4 1983009808
    %v8195 = vunpack.c.0.s8 %v8194
    %v8196 = vlaneseq
    %v8197 = vshrl.u32 %v8196, 7
    %v8198 = vsub.s32 %v8195, %v8197
    %v8199 = vrot.slane %v8185, %v8198
    %v8200 = vcombine.high %v8192, %v8192
    %v8201 = vcombine.high %v8199, %v8199
    %v8202 = vcombine.high %v5930, %v5930
    %v8204 = vunpack.c.l.s4 1983009808
    %v8205 = vunpack.c.0.s8 %v8204
    %v8206 = vlaneseq
    %v8207 = vshrl.u32 %v8206, 7
    %v8208 = vsub.s32 %v8205, %v8207
    %v8209 = vrot.slane %v5930, %v8208
    %v8211 = vunpack.c.l.s4 1983009808
    %v8212 = vunpack.c.0.s8 %v8211
    %v8213 = vlaneseq
    %v8214 = vshrl.u32 %v8213, 7
    %v8215 = vsub.s32 %v8212, %v8214
    %v8216 = vrot.slane %v8202, %v8215
    %v8217 = vcombine.high %v8209, %v8209
    %v8218 = vcombine.high %v8216, %v8216
    %v8219 = vcombine.high %v5931, %v5931
    %v8221 = vunpack.c.l.s4 1983009808
    %v8222 = vunpack.c.0.s8 %v8221
    %v8223 = vlaneseq
    %v8224 = vshrl.u32 %v8223, 7
    %v8225 = vsub.s32 %v8222, %v8224
    %v8226 = vrot.slane %v5931, %v8225
    %v8228 = vunpack.c.l.s4 1983009808
    %v8229 = vunpack.c.0.s8 %v8228
    %v8230 = vlaneseq
    %v8231 = vshrl.u32 %v8230, 7
    %v8232 = vsub.s32 %v8229, %v8231
    %v8233 = vrot.slane %v8219, %v8232
    %v8234 = vcombine.high %v8226, %v8226
    %v8235 = vcombine.high %v8233, %v8233
    %v8236 = vcombine.high %v5932, %v5932
    %v8238 = vunpack.c.l.s4 1983009808
    %v8239 = vunpack.c.0.s8 %v8238
    %v8240 = vlaneseq
    %v8241 = vshrl.u32 %v8240, 7
    %v8242 = vsub.s32 %v8239, %v8241
    %v8243 = vrot.slane %v5932, %v8242
    %v8245 = vunpack.c.l.s4 1983009808
    %v8246 = vunpack.c.0.s8 %v8245
    %v8247 = vlaneseq
    %v8248 = vshrl.u32 %v8247, 7
    %v8249 = vsub.s32 %v8246, %v8248
    %v8250 = vrot.slane %v8236, %v8249
    %v8251 = vcombine.high %v8243, %v8243
    %v8252 = vcombine.high %v8250, %v8250
    %v8253 = vcombine.high %v5933, %v5933
    %v8255 = vunpack.c.l.s4 1983009808
    %v8256 = vunpack.c.0.s8 %v8255
    %v8257 = vlaneseq
    %v8258 = vshrl.u32 %v8257, 7
    %v8259 = vsub.s32 %v8256, %v8258
    %v8260 = vrot.slane %v5933, %v8259
    %v8262 = vunpack.c.l.s4 1983009808
    %v8263 = vunpack.c.0.s8 %v8262
    %v8264 = vlaneseq
    %v8265 = vshrl.u32 %v8264, 7
    %v8266 = vsub.s32 %v8263, %v8265
    %v8267 = vrot.slane %v8253, %v8266
    %v8268 = vcombine.high %v8260, %v8260
    %v8269 = vcombine.high %v8267, %v8267
    %v8270 = vcombine.high %v5934, %v5934
    %v8272 = vunpack.c.l.s4 1983009808
    %v8273 = vunpack.c.0.s8 %v8272
    %v8274 = vlaneseq
    %v8275 = vshrl.u32 %v8274, 7
    %v8276 = vsub.s32 %v8273, %v8275
    %v8277 = vrot.slane %v5934, %v8276
    %v8279 = vunpack.c.l.s4 1983009808
    %v8280 = vunpack.c.0.s8 %v8279
    %v8281 = vlaneseq
    %v8282 = vshrl.u32 %v8281, 7
    %v8283 = vsub.s32 %v8280, %v8282
    %v8284 = vrot.slane %v8270, %v8283
    %v8285 = vcombine.high %v8277, %v8277
    %v8286 = vcombine.high %v8284, %v8284
    %v8287 = vcombine.high %v5935, %v5935
    %v8289 = vunpack.c.l.s4 1983009808
    %v8290 = vunpack.c.0.s8 %v8289
    %v8291 = vlaneseq
    %v8292 = vshrl.u32 %v8291, 7
    %v8293 = vsub.s32 %v8290, %v8292
    %v8294 = vrot.slane %v5935, %v8293
    %v8296 = vunpack.c.l.s4 1983009808
    %v8297 = vunpack.c.0.s8 %v8296
    %v8298 = vlaneseq
    %v8299 = vshrl.u32 %v8298, 7
    %v8300 = vsub.s32 %v8297, %v8299
    %v8301 = vrot.slane %v8287, %v8300
    %v8302 = vcombine.high %v8294, %v8294
    %v8303 = vcombine.high %v8301, %v8301
    %v8304 = vcombine.high %v5936, %v5936
    %v8306 = vunpack.c.l.s4 1983009808
    %v8307 = vunpack.c.0.s8 %v8306
    %v8308 = vlaneseq
    %v8309 = vshrl.u32 %v8308, 7
    %v8310 = vsub.s32 %v8307, %v8309
    %v8311 = vrot.slane %v5936, %v8310
    %v8313 = vunpack.c.l.s4 1983009808
    %v8314 = vunpack.c.0.s8 %v8313
    %v8315 = vlaneseq
    %v8316 = vshrl.u32 %v8315, 7
    %v8317 = vsub.s32 %v8314, %v8316
    %v8318 = vrot.slane %v8304, %v8317
    %v8319 = vcombine.high %v8311, %v8311
    %v8320 = vcombine.high %v8318, %v8318
    %v8321 = vcombine.high %v5937, %v5937
    %v8323 = vunpack.c.l.s4 1983009808
    %v8324 = vunpack.c.0.s8 %v8323
    %v8325 = vlaneseq
    %v8326 = vshrl.u32 %v8325, 7
    %v8327 = vsub.s32 %v8324, %v8326
    %v8328 = vrot.slane %v5937, %v8327
    %v8330 = vunpack.c.l.s4 1983009808
    %v8331 = vunpack.c.0.s8 %v8330
    %v8332 = vlaneseq
    %v8333 = vshrl.u32 %v8332, 7
    %v8334 = vsub.s32 %v8331, %v8333
    %v8335 = vrot.slane %v8321, %v8334
    %v8336 = vcombine.high %v8328, %v8328
    %v8337 = vcombine.high %v8335, %v8335
    %v8338 = vcombine.high %v5938, %v5938
    %v8340 = vunpack.c.l.s4 1983009808
    %v8341 = vunpack.c.0.s8 %v8340
    %v8342 = vlaneseq
    %v8343 = vshrl.u32 %v8342, 7
    %v8344 = vsub.s32 %v8341, %v8343
    %v8345 = vrot.slane %v5938, %v8344
    %v8347 = vunpack.c.l.s4 1983009808
    %v8348 = vunpack.c.0.s8 %v8347
    %v8349 = vlaneseq
    %v8350 = vshrl.u32 %v8349, 7
    %v8351 = vsub.s32 %v8348, %v8350
    %v8352 = vrot.slane %v8338, %v8351
    %v8353 = vcombine.high %v8345, %v8345
    %v8354 = vcombine.high %v8352, %v8352
    %v8355 = vcombine.high %v5939, %v5939
    %v8357 = vunpack.c.l.s4 1983009808
    %v8358 = vunpack.c.0.s8 %v8357
    %v8359 = vlaneseq
    %v8360 = vshrl.u32 %v8359, 7
    %v8361 = vsub.s32 %v8358, %v8360
    %v8362 = vrot.slane %v5939, %v8361
    %v8364 = vunpack.c.l.s4 1983009808
    %v8365 = vunpack.c.0.s8 %v8364
    %v8366 = vlaneseq
    %v8367 = vshrl.u32 %v8366, 7
    %v8368 = vsub.s32 %v8365, %v8367
    %v8369 = vrot.slane %v8355, %v8368
    %v8370 = vcombine.high %v8362, %v8362
    %v8371 = vcombine.high %v8369, %v8369
    %v8372 = vcombine.high %v5940, %v5940
    %v8374 = vunpack.c.l.s4 1983009808
    %v8375 = vunpack.c.0.s8 %v8374
    %v8376 = vlaneseq
    %v8377 = vshrl.u32 %v8376, 7
    %v8378 = vsub.s32 %v8375, %v8377
    %v8379 = vrot.slane %v5940, %v8378
    %v8381 = vunpack.c.l.s4 1983009808
    %v8382 = vunpack.c.0.s8 %v8381
    %v8383 = vlaneseq
    %v8384 = vshrl.u32 %v8383, 7
    %v8385 = vsub.s32 %v8382, %v8384
    %v8386 = vrot.slane %v8372, %v8385
    %v8387 = vcombine.high %v8379, %v8379
    %v8388 = vcombine.high %v8386, %v8386
    %v8389 = vcombine.high %v5941, %v5941
    %v8391 = vunpack.c.l.s4 1983009808
    %v8392 = vunpack.c.0.s8 %v8391
    %v8393 = vlaneseq
    %v8394 = vshrl.u32 %v8393, 7
    %v8395 = vsub.s32 %v8392, %v8394
    %v8396 = vrot.slane %v5941, %v8395
    %v8398 = vunpack.c.l.s4 1983009808
    %v8399 = vunpack.c.0.s8 %v8398
    %v8400 = vlaneseq
    %v8401 = vshrl.u32 %v8400, 7
    %v8402 = vsub.s32 %v8399, %v8401
    %v8403 = vrot.slane %v8389, %v8402
    %v8404 = vcombine.high %v8396, %v8396
    %v8405 = vcombine.high %v8403, %v8403
    %v8406 = vcombine.high %v5942, %v5942
    %v8408 = vunpack.c.l.s4 1983009808
    %v8409 = vunpack.c.0.s8 %v8408
    %v8410 = vlaneseq
    %v8411 = vshrl.u32 %v8410, 7
    %v8412 = vsub.s32 %v8409, %v8411
    %v8413 = vrot.slane %v5942, %v8412
    %v8415 = vunpack.c.l.s4 1983009808
    %v8416 = vunpack.c.0.s8 %v8415
    %v8417 = vlaneseq
    %v8418 = vshrl.u32 %v8417, 7
    %v8419 = vsub.s32 %v8416, %v8418
    %v8420 = vrot.slane %v8406, %v8419
    %v8421 = vcombine.high %v8413, %v8413
    %v8422 = vcombine.high %v8420, %v8420
    %v8423 = vcombine.high %v5943, %v5943
    %v8425 = vunpack.c.l.s4 1983009808
    %v8426 = vunpack.c.0.s8 %v8425
    %v8427 = vlaneseq
    %v8428 = vshrl.u32 %v8427, 7
    %v8429 = vsub.s32 %v8426, %v8428
    %v8430 = vrot.slane %v5943, %v8429
    %v8432 = vunpack.c.l.s4 1983009808
    %v8433 = vunpack.c.0.s8 %v8432
    %v8434 = vlaneseq
    %v8435 = vshrl.u32 %v8434, 7
    %v8436 = vsub.s32 %v8433, %v8435
    %v8437 = vrot.slane %v8423, %v8436
    %v8438 = vcombine.high %v8430, %v8430
    %v8439 = vcombine.high %v8437, %v8437
    %v8440 = vcombine.high %v5944, %v5944
    %v8442 = vunpack.c.l.s4 1983009808
    %v8443 = vunpack.c.0.s8 %v8442
    %v8444 = vlaneseq
    %v8445 = vshrl.u32 %v8444, 7
    %v8446 = vsub.s32 %v8443, %v8445
    %v8447 = vrot.slane %v5944, %v8446
    %v8449 = vunpack.c.l.s4 1983009808
    %v8450 = vunpack.c.0.s8 %v8449
    %v8451 = vlaneseq
    %v8452 = vshrl.u32 %v8451, 7
    %v8453 = vsub.s32 %v8450, %v8452
    %v8454 = vrot.slane %v8440, %v8453
    %v8455 = vcombine.high %v8447, %v8447
    %v8456 = vcombine.high %v8454, %v8454
    %v8457 = vcombine.high %v5945, %v5945
    %v8459 = vunpack.c.l.s4 1983009808
    %v8460 = vunpack.c.0.s8 %v8459
    %v8461 = vlaneseq
    %v8462 = vshrl.u32 %v8461, 7
    %v8463 = vsub.s32 %v8460, %v8462
    %v8464 = vrot.slane %v5945, %v8463
    %v8466 = vunpack.c.l.s4 1983009808
    %v8467 = vunpack.c.0.s8 %v8466
    %v8468 = vlaneseq
    %v8469 = vshrl.u32 %v8468, 7
    %v8470 = vsub.s32 %v8467, %v8469
    %v8471 = vrot.slane %v8457, %v8470
    %v8472 = vcombine.high %v8464, %v8464
    %v8473 = vcombine.high %v8471, %v8471
    %v8474 = vcombine.high %v5946, %v5946
    %v8476 = vunpack.c.l.s4 1983009808
    %v8477 = vunpack.c.0.s8 %v8476
    %v8478 = vlaneseq
    %v8479 = vshrl.u32 %v8478, 7
    %v8480 = vsub.s32 %v8477, %v8479
    %v8481 = vrot.slane %v5946, %v8480
    %v8483 = vunpack.c.l.s4 1983009808
    %v8484 = vunpack.c.0.s8 %v8483
    %v8485 = vlaneseq
    %v8486 = vshrl.u32 %v8485, 7
    %v8487 = vsub.s32 %v8484, %v8486
    %v8488 = vrot.slane %v8474, %v8487
    %v8489 = vcombine.high %v8481, %v8481
    %v8490 = vcombine.high %v8488, %v8488
    %v8491 = vcombine.high %v5947, %v5947
    %v8493 = vunpack.c.l.s4 1983009808
    %v8494 = vunpack.c.0.s8 %v8493
    %v8495 = vlaneseq
    %v8496 = vshrl.u32 %v8495, 7
    %v8497 = vsub.s32 %v8494, %v8496
    %v8498 = vrot.slane %v5947, %v8497
    %v8500 = vunpack.c.l.s4 1983009808
    %v8501 = vunpack.c.0.s8 %v8500
    %v8502 = vlaneseq
    %v8503 = vshrl.u32 %v8502, 7
    %v8504 = vsub.s32 %v8501, %v8503
    %v8505 = vrot.slane %v8491, %v8504
    %v8506 = vcombine.high %v8498, %v8498
    %v8507 = vcombine.high %v8505, %v8505
    %v8508 = vcombine.high %v5948, %v5948
    %v8510 = vunpack.c.l.s4 1983009808
    %v8511 = vunpack.c.0.s8 %v8510
    %v8512 = vlaneseq
    %v8513 = vshrl.u32 %v8512, 7
    %v8514 = vsub.s32 %v8511, %v8513
    %v8515 = vrot.slane %v5948, %v8514
    %v8517 = vunpack.c.l.s4 1983009808
    %v8518 = vunpack.c.0.s8 %v8517
    %v8519 = vlaneseq
    %v8520 = vshrl.u32 %v8519, 7
    %v8521 = vsub.s32 %v8518, %v8520
    %v8522 = vrot.slane %v8508, %v8521
    %v8523 = vcombine.high %v8515, %v8515
    %v8524 = vcombine.high %v8522, %v8522
    %v8525 = vcombine.high %v5949, %v5949
    %v8527 = vunpack.c.l.s4 1983009808
    %v8528 = vunpack.c.0.s8 %v8527
    %v8529 = vlaneseq
    %v8530 = vshrl.u32 %v8529, 7
    %v8531 = vsub.s32 %v8528, %v8530
    %v8532 = vrot.slane %v5949, %v8531
    %v8534 = vunpack.c.l.s4 1983009808
    %v8535 = vunpack.c.0.s8 %v8534
    %v8536 = vlaneseq
    %v8537 = vshrl.u32 %v8536, 7
    %v8538 = vsub.s32 %v8535, %v8537
    %v8539 = vrot.slane %v8525, %v8538
    %v8540 = vcombine.high %v8532, %v8532
    %v8541 = vcombine.high %v8539, %v8539
    %v8542 = vcombine.high %v5950, %v5950
    %v8544 = vunpack.c.l.s4 1983009808
    %v8545 = vunpack.c.0.s8 %v8544
    %v8546 = vlaneseq
    %v8547 = vshrl.u32 %v8546, 7
    %v8548 = vsub.s32 %v8545, %v8547
    %v8549 = vrot.slane %v5950, %v8548
    %v8551 = vunpack.c.l.s4 1983009808
    %v8552 = vunpack.c.0.s8 %v8551
    %v8553 = vlaneseq
    %v8554 = vshrl.u32 %v8553, 7
    %v8555 = vsub.s32 %v8552, %v8554
    %v8556 = vrot.slane %v8542, %v8555
    %v8557 = vcombine.high %v8549, %v8549
    %v8558 = vcombine.high %v8556, %v8556
    %v8559 = vcombine.high %v5951, %v5951
    %v8561 = vunpack.c.l.s4 1983009808
    %v8562 = vunpack.c.0.s8 %v8561
    %v8563 = vlaneseq
    %v8564 = vshrl.u32 %v8563, 7
    %v8565 = vsub.s32 %v8562, %v8564
    %v8566 = vrot.slane %v5951, %v8565
    %v8568 = vunpack.c.l.s4 1983009808
    %v8569 = vunpack.c.0.s8 %v8568
    %v8570 = vlaneseq
    %v8571 = vshrl.u32 %v8570, 7
    %v8572 = vsub.s32 %v8569, %v8571
    %v8573 = vrot.slane %v8559, %v8572
    %v8574 = vcombine.high %v8566, %v8566
    %v8575 = vcombine.high %v8573, %v8573
    %v8576 = vcombine.high %v5952, %v5952
    %v8578 = vunpack.c.l.s4 1983009808
    %v8579 = vunpack.c.0.s8 %v8578
    %v8580 = vlaneseq
    %v8581 = vshrl.u32 %v8580, 7
    %v8582 = vsub.s32 %v8579, %v8581
    %v8583 = vrot.slane %v5952, %v8582
    %v8585 = vunpack.c.l.s4 1983009808
    %v8586 = vunpack.c.0.s8 %v8585
    %v8587 = vlaneseq
    %v8588 = vshrl.u32 %v8587, 7
    %v8589 = vsub.s32 %v8586, %v8588
    %v8590 = vrot.slane %v8576, %v8589
    %v8591 = vcombine.high %v8583, %v8583
    %v8592 = vcombine.high %v8590, %v8590
    %v8593 = vcombine.high %v5953, %v5953
    %v8595 = vunpack.c.l.s4 1983009808
    %v8596 = vunpack.c.0.s8 %v8595
    %v8597 = vlaneseq
    %v8598 = vshrl.u32 %v8597, 7
    %v8599 = vsub.s32 %v8596, %v8598
    %v8600 = vrot.slane %v5953, %v8599
    %v8602 = vunpack.c.l.s4 1983009808
    %v8603 = vunpack.c.0.s8 %v8602
    %v8604 = vlaneseq
    %v8605 = vshrl.u32 %v8604, 7
    %v8606 = vsub.s32 %v8603, %v8605
    %v8607 = vrot.slane %v8593, %v8606
    %v8608 = vcombine.high %v8600, %v8600
    %v8609 = vcombine.high %v8607, %v8607
    %v8610 = vcombine.high %v5954, %v5954
    %v8612 = vunpack.c.l.s4 1983009808
    %v8613 = vunpack.c.0.s8 %v8612
    %v8614 = vlaneseq
    %v8615 = vshrl.u32 %v8614, 7
    %v8616 = vsub.s32 %v8613, %v8615
    %v8617 = vrot.slane %v5954, %v8616
    %v8619 = vunpack.c.l.s4 1983009808
    %v8620 = vunpack.c.0.s8 %v8619
    %v8621 = vlaneseq
    %v8622 = vshrl.u32 %v8621, 7
    %v8623 = vsub.s32 %v8620, %v8622
    %v8624 = vrot.slane %v8610, %v8623
    %v8625 = vcombine.high %v8617, %v8617
    %v8626 = vcombine.high %v8624, %v8624
    %v8627 = vcombine.high %v5955, %v5955
    %v8629 = vunpack.c.l.s4 1983009808
    %v8630 = vunpack.c.0.s8 %v8629
    %v8631 = vlaneseq
    %v8632 = vshrl.u32 %v8631, 7
    %v8633 = vsub.s32 %v8630, %v8632
    %v8634 = vrot.slane %v5955, %v8633
    %v8636 = vunpack.c.l.s4 1983009808
    %v8637 = vunpack.c.0.s8 %v8636
    %v8638 = vlaneseq
    %v8639 = vshrl.u32 %v8638, 7
    %v8640 = vsub.s32 %v8637, %v8639
    %v8641 = vrot.slane %v8627, %v8640
    %v8642 = vcombine.high %v8634, %v8634
    %v8643 = vcombine.high %v8641, %v8641
    %v8644 = vcombine.high %v5956, %v5956
    %v8646 = vunpack.c.l.s4 1983009808
    %v8647 = vunpack.c.0.s8 %v8646
    %v8648 = vlaneseq
    %v8649 = vshrl.u32 %v8648, 7
    %v8650 = vsub.s32 %v8647, %v8649
    %v8651 = vrot.slane %v5956, %v8650
    %v8653 = vunpack.c.l.s4 1983009808
    %v8654 = vunpack.c.0.s8 %v8653
    %v8655 = vlaneseq
    %v8656 = vshrl.u32 %v8655, 7
    %v8657 = vsub.s32 %v8654, %v8656
    %v8658 = vrot.slane %v8644, %v8657
    %v8659 = vcombine.high %v8651, %v8651
    %v8660 = vcombine.high %v8658, %v8658
    %v8661 = vcombine.high %v5957, %v5957
    %v8663 = vunpack.c.l.s4 1983009808
    %v8664 = vunpack.c.0.s8 %v8663
    %v8665 = vlaneseq
    %v8666 = vshrl.u32 %v8665, 7
    %v8667 = vsub.s32 %v8664, %v8666
    %v8668 = vrot.slane %v5957, %v8667
    %v8670 = vunpack.c.l.s4 1983009808
    %v8671 = vunpack.c.0.s8 %v8670
    %v8672 = vlaneseq
    %v8673 = vshrl.u32 %v8672, 7
    %v8674 = vsub.s32 %v8671, %v8673
    %v8675 = vrot.slane %v8661, %v8674
    %v8676 = vcombine.high %v8668, %v8668
    %v8677 = vcombine.high %v8675, %v8675
    %v8678 = vcombine.high %v5958, %v5958
    %v8680 = vunpack.c.l.s4 1983009808
    %v8681 = vunpack.c.0.s8 %v8680
    %v8682 = vlaneseq
    %v8683 = vshrl.u32 %v8682, 7
    %v8684 = vsub.s32 %v8681, %v8683
    %v8685 = vrot.slane %v5958, %v8684
    %v8687 = vunpack.c.l.s4 1983009808
    %v8688 = vunpack.c.0.s8 %v8687
    %v8689 = vlaneseq
    %v8690 = vshrl.u32 %v8689, 7
    %v8691 = vsub.s32 %v8688, %v8690
    %v8692 = vrot.slane %v8678, %v8691
    %v8693 = vcombine.high %v8685, %v8685
    %v8694 = vcombine.high %v8692, %v8692
    %v8695 = vcombine.high %v5959, %v5959
    %v8697 = vunpack.c.l.s4 1983009808
    %v8698 = vunpack.c.0.s8 %v8697
    %v8699 = vlaneseq
    %v8700 = vshrl.u32 %v8699, 7
    %v8701 = vsub.s32 %v8698, %v8700
    %v8702 = vrot.slane %v5959, %v8701
    %v8704 = vunpack.c.l.s4 1983009808
    %v8705 = vunpack.c.0.s8 %v8704
    %v8706 = vlaneseq
    %v8707 = vshrl.u32 %v8706, 7
    %v8708 = vsub.s32 %v8705, %v8707
    %v8709 = vrot.slane %v8695, %v8708
    %v8710 = vcombine.high %v8702, %v8702
    %v8711 = vcombine.high %v8709, %v8709
    %v8712 = vcombine.high %v5960, %v5960
    %v8714 = vunpack.c.l.s4 1983009808
    %v8715 = vunpack.c.0.s8 %v8714
    %v8716 = vlaneseq
    %v8717 = vshrl.u32 %v8716, 7
    %v8718 = vsub.s32 %v8715, %v8717
    %v8719 = vrot.slane %v5960, %v8718
    %v8721 = vunpack.c.l.s4 1983009808
    %v8722 = vunpack.c.0.s8 %v8721
    %v8723 = vlaneseq
    %v8724 = vshrl.u32 %v8723, 7
    %v8725 = vsub.s32 %v8722, %v8724
    %v8726 = vrot.slane %v8712, %v8725
    %v8727 = vcombine.high %v8719, %v8719
    %v8728 = vcombine.high %v8726, %v8726
    %v8729 = vcombine.high %v5961, %v5961
    %v8731 = vunpack.c.l.s4 1983009808
    %v8732 = vunpack.c.0.s8 %v8731
    %v8733 = vlaneseq
    %v8734 = vshrl.u32 %v8733, 7
    %v8735 = vsub.s32 %v8732, %v8734
    %v8736 = vrot.slane %v5961, %v8735
    %v8738 = vunpack.c.l.s4 1983009808
    %v8739 = vunpack.c.0.s8 %v8738
    %v8740 = vlaneseq
    %v8741 = vshrl.u32 %v8740, 7
    %v8742 = vsub.s32 %v8739, %v8741
    %v8743 = vrot.slane %v8729, %v8742
    %v8744 = vcombine.high %v8736, %v8736
    %v8745 = vcombine.high %v8743, %v8743
    %v8746 = vcombine.high %v5962, %v5962
    %v8748 = vunpack.c.l.s4 1983009808
    %v8749 = vunpack.c.0.s8 %v8748
    %v8750 = vlaneseq
    %v8751 = vshrl.u32 %v8750, 7
    %v8752 = vsub.s32 %v8749, %v8751
    %v8753 = vrot.slane %v5962, %v8752
    %v8755 = vunpack.c.l.s4 1983009808
    %v8756 = vunpack.c.0.s8 %v8755
    %v8757 = vlaneseq
    %v8758 = vshrl.u32 %v8757, 7
    %v8759 = vsub.s32 %v8756, %v8758
    %v8760 = vrot.slane %v8746, %v8759
    %v8761 = vcombine.high %v8753, %v8753
    %v8762 = vcombine.high %v8760, %v8760
    %v8763 = vcombine.high %v5963, %v5963
    %v8765 = vunpack.c.l.s4 1983009808
    %v8766 = vunpack.c.0.s8 %v8765
    %v8767 = vlaneseq
    %v8768 = vshrl.u32 %v8767, 7
    %v8769 = vsub.s32 %v8766, %v8768
    %v8770 = vrot.slane %v5963, %v8769
    %v8772 = vunpack.c.l.s4 1983009808
    %v8773 = vunpack.c.0.s8 %v8772
    %v8774 = vlaneseq
    %v8775 = vshrl.u32 %v8774, 7
    %v8776 = vsub.s32 %v8773, %v8775
    %v8777 = vrot.slane %v8763, %v8776
    %v8778 = vcombine.high %v8770, %v8770
    %v8779 = vcombine.high %v8777, %v8777
    %v8780 = vcombine.high %v5964, %v5964
    %v8782 = vunpack.c.l.s4 1983009808
    %v8783 = vunpack.c.0.s8 %v8782
    %v8784 = vlaneseq
    %v8785 = vshrl.u32 %v8784, 7
    %v8786 = vsub.s32 %v8783, %v8785
    %v8787 = vrot.slane %v5964, %v8786
    %v8789 = vunpack.c.l.s4 1983009808
    %v8790 = vunpack.c.0.s8 %v8789
    %v8791 = vlaneseq
    %v8792 = vshrl.u32 %v8791, 7
    %v8793 = vsub.s32 %v8790, %v8792
    %v8794 = vrot.slane %v8780, %v8793
    %v8795 = vcombine.high %v8787, %v8787
    %v8796 = vcombine.high %v8794, %v8794
    %v8797 = vcombine.high %v5965, %v5965
    %v8799 = vunpack.c.l.s4 1983009808
    %v8800 = vunpack.c.0.s8 %v8799
    %v8801 = vlaneseq
    %v8802 = vshrl.u32 %v8801, 7
    %v8803 = vsub.s32 %v8800, %v8802
    %v8804 = vrot.slane %v5965, %v8803
    %v8806 = vunpack.c.l.s4 1983009808
    %v8807 = vunpack.c.0.s8 %v8806
    %v8808 = vlaneseq
    %v8809 = vshrl.u32 %v8808, 7
    %v8810 = vsub.s32 %v8807, %v8809
    %v8811 = vrot.slane %v8797, %v8810
    %v8812 = vcombine.high %v8804, %v8804
    %v8813 = vcombine.high %v8811, %v8811
    %v8814 = vcombine.high %v5966, %v5966
    %v8816 = vunpack.c.l.s4 1983009808
    %v8817 = vunpack.c.0.s8 %v8816
    %v8818 = vlaneseq
    %v8819 = vshrl.u32 %v8818, 7
    %v8820 = vsub.s32 %v8817, %v8819
    %v8821 = vrot.slane %v5966, %v8820
    %v8823 = vunpack.c.l.s4 1983009808
    %v8824 = vunpack.c.0.s8 %v8823
    %v8825 = vlaneseq
    %v8826 = vshrl.u32 %v8825, 7
    %v8827 = vsub.s32 %v8824, %v8826
    %v8828 = vrot.slane %v8814, %v8827
    %v8829 = vcombine.high %v8821, %v8821
    %v8830 = vcombine.high %v8828, %v8828
    %v8831 = vcombine.high %v5967, %v5967
    %v8833 = vunpack.c.l.s4 1983009808
    %v8834 = vunpack.c.0.s8 %v8833
    %v8835 = vlaneseq
    %v8836 = vshrl.u32 %v8835, 7
    %v8837 = vsub.s32 %v8834, %v8836
    %v8838 = vrot.slane %v5967, %v8837
    %v8840 = vunpack.c.l.s4 1983009808
    %v8841 = vunpack.c.0.s8 %v8840
    %v8842 = vlaneseq
    %v8843 = vshrl.u32 %v8842, 7
    %v8844 = vsub.s32 %v8841, %v8843
    %v8845 = vrot.slane %v8831, %v8844
    %v8846 = vcombine.high %v8838, %v8838
    %v8847 = vcombine.high %v8845, %v8845
    %vm9488 = vcmask 1041408
    %v9489 = vsel %vm9488, %v6135, 0.0
    %v9490 = vsel %vm9488, %v6143, 0.0
    %v9491 = vadd.f32 %v9489, %v9490
    %v9492 = vsel %vm9488, %v6142, 0.0
    %v9493 = vadd.f32 %v9491, %v9492
    %v9494 = vsel %vm9488, %v6144, 0.0
    %v9495 = vadd.f32 %v9493, %v9494
    %v9496 = vsel %vm9488, %v6152, 0.0
    %v9497 = vadd.f32 %v9495, %v9496
    %v9498 = vsel %vm9488, %v6160, 0.0
    %v9499 = vadd.f32 %v9497, %v9498
    %v9500 = vsel %vm9488, %v6159, 0.0
    %v9501 = vadd.f32 %v9499, %v9500
    %v9502 = vsel %vm9488, %v6161, 0.0
    %v9503 = vadd.f32 %v9501, %v9502
    %v9504 = vsel %vm9488, %v6169, 0.0
    %v9505 = vadd.f32 %v9503, %v9504
    %v9506 = vsel %vm9488, %v6177, 0.0
    %v9507 = vadd.f32 %v9505, %v9506
    %v9508 = vsel %vm9488, %v6176, 0.0
    %v9509 = vadd.f32 %v9507, %v9508
    %v9510 = vsel %vm9488, %v6178, 0.0
    %v9511 = vadd.f32 %v9509, %v9510
    %v9512 = vsel %vm9488, %v6186, 0.0
    %v9513 = vadd.f32 %v9511, %v9512
    %v9514 = vsel %vm9488, %v6194, 0.0
    %v9515 = vadd.f32 %v9513, %v9514
    %v9516 = vsel %vm9488, %v6193, 0.0
    %v9517 = vadd.f32 %v9515, %v9516
    %v9518 = vsel %vm9488, %v6195, 0.0
    %v9519 = vadd.f32 %v9517, %v9518
    %v9520 = vsel %vm9488, %v6203, 0.0
    %v9521 = vadd.f32 %v9519, %v9520
    %v9522 = vsel %vm9488, %v6211, 0.0
    %v9523 = vadd.f32 %v9521, %v9522
    %v9524 = vsel %vm9488, %v6210, 0.0
    %v9525 = vadd.f32 %v9523, %v9524
    %v9526 = vsel %vm9488, %v6212, 0.0
    %v9527 = vadd.f32 %v9525, %v9526
    %v9528 = vsel %vm9488, %v6220, 0.0
    %v9529 = vadd.f32 %v9527, %v9528
    %v9530 = vsel %vm9488, %v6228, 0.0
    %v9531 = vadd.f32 %v9529, %v9530
    %v9532 = vsel %vm9488, %v6227, 0.0
    %v9533 = vadd.f32 %v9531, %v9532
    %v9534 = vsel %vm9488, %v6229, 0.0
    %v9535 = vadd.f32 %v9533, %v9534
    %v9536 = vsel %vm9488, %v6237, 0.0
    %v9537 = vadd.f32 %v9535, %v9536
    %v9538 = vsel %vm9488, %v6245, 0.0
    %v9539 = vadd.f32 %v9537, %v9538
    %v9540 = vsel %vm9488, %v6244, 0.0
    %v9541 = vadd.f32 %v9539, %v9540
    %v9542 = vsel %vm9488, %v6246, 0.0
    %v9543 = vadd.f32 %v9541, %v9542
    %v9544 = vsel %vm9488, %v6254, 0.0
    %v9545 = vadd.f32 %v9543, %v9544
    %v9546 = vsel %vm9488, %v6262, 0.0
    %v9547 = vadd.f32 %v9545, %v9546
    %v9548 = vsel %vm9488, %v6261, 0.0
    %v9549 = vadd.f32 %v9547, %v9548
    %v9550 = vsel %vm9488, %v6263, 0.0
    %v9551 = vadd.f32 %v9549, %v9550
    %v9552 = vsel %vm9488, %v6271, 0.0
    %v9553 = vadd.f32 %v9551, %v9552
    %v9554 = vsel %vm9488, %v6279, 0.0
    %v9555 = vadd.f32 %v9553, %v9554
    %v9556 = vsel %vm9488, %v6278, 0.0
    %v9557 = vadd.f32 %v9555, %v9556
    %v9558 = vsel %vm9488, %v6280, 0.0
    %v9559 = vadd.f32 %v9557, %v9558
    %v9560 = vsel %vm9488, %v6288, 0.0
    %v9561 = vadd.f32 %v9559, %v9560
    %v9562 = vsel %vm9488, %v6296, 0.0
    %v9563 = vadd.f32 %v9561, %v9562
    %v9564 = vsel %vm9488, %v6295, 0.0
    %v9565 = vadd.f32 %v9563, %v9564
    %v9566 = vsel %vm9488, %v6297, 0.0
    %v9567 = vadd.f32 %v9565, %v9566
    %v9568 = vsel %vm9488, %v6305, 0.0
    %v9569 = vadd.f32 %v9567, %v9568
    %v9570 = vsel %vm9488, %v6313, 0.0
    %v9571 = vadd.f32 %v9569, %v9570
    %v9572 = vsel %vm9488, %v6312, 0.0
    %v9573 = vadd.f32 %v9571, %v9572
    %v9574 = vsel %vm9488, %v6314, 0.0
    %v9575 = vadd.f32 %v9573, %v9574
    %v9576 = vsel %vm9488, %v6322, 0.0
    %v9577 = vadd.f32 %v9575, %v9576
    %v9578 = vsel %vm9488, %v6330, 0.0
    %v9579 = vadd.f32 %v9577, %v9578
    %v9580 = vsel %vm9488, %v6329, 0.0
    %v9581 = vadd.f32 %v9579, %v9580
    %v9582 = vsel %vm9488, %v6331, 0.0
    %v9583 = vadd.f32 %v9581, %v9582
    %v9584 = vsel %vm9488, %v6339, 0.0
    %v9585 = vadd.f32 %v9583, %v9584
    %v9586 = vsel %vm9488, %v6347, 0.0
    %v9587 = vadd.f32 %v9585, %v9586
    %v9588 = vsel %vm9488, %v6346, 0.0
    %v9589 = vadd.f32 %v9587, %v9588
    %v9590 = vsel %vm9488, %v6348, 0.0
    %v9591 = vadd.f32 %v9589, %v9590
    %v9592 = vsel %vm9488, %v6356, 0.0
    %v9593 = vadd.f32 %v9591, %v9592
    %v9594 = vsel %vm9488, %v6364, 0.0
    %v9595 = vadd.f32 %v9593, %v9594
    %v9596 = vsel %vm9488, %v6363, 0.0
    %v9597 = vadd.f32 %v9595, %v9596
    %v9598 = vsel %vm9488, %v6365, 0.0
    %v9599 = vadd.f32 %v9597, %v9598
    %v9600 = vsel %vm9488, %v6373, 0.0
    %v9601 = vadd.f32 %v9599, %v9600
    %v9602 = vsel %vm9488, %v6381, 0.0
    %v9603 = vadd.f32 %v9601, %v9602
    %v9604 = vsel %vm9488, %v6380, 0.0
    %v9605 = vadd.f32 %v9603, %v9604
    %v9606 = vsel %vm9488, %v6382, 0.0
    %v9607 = vadd.f32 %v9605, %v9606
    %v9608 = vsel %vm9488, %v6390, 0.0
    %v9609 = vadd.f32 %v9607, %v9608
    %v9610 = vsel %vm9488, %v6398, 0.0
    %v9611 = vadd.f32 %v9609, %v9610
    %v9612 = vsel %vm9488, %v6397, 0.0
    %v9613 = vadd.f32 %v9611, %v9612
    %v9614 = vsel %vm9488, %v6399, 0.0
    %v9615 = vadd.f32 %v9613, %v9614
    %v9616 = vsel %vm9488, %v6407, 0.0
    %v9617 = vadd.f32 %v9615, %v9616
    %v9618 = vsel %vm9488, %v6415, 0.0
    %v9619 = vadd.f32 %v9617, %v9618
    %v9620 = vsel %vm9488, %v6414, 0.0
    %v9621 = vadd.f32 %v9619, %v9620
    %v9622 = vsel %vm9488, %v6416, 0.0
    %v9623 = vadd.f32 %v9621, %v9622
    %v9624 = vsel %vm9488, %v6424, 0.0
    %v9625 = vadd.f32 %v9623, %v9624
    %v9626 = vsel %vm9488, %v6432, 0.0
    %v9627 = vadd.f32 %v9625, %v9626
    %v9628 = vsel %vm9488, %v6431, 0.0
    %v9629 = vadd.f32 %v9627, %v9628
    %v9630 = vsel %vm9488, %v6433, 0.0
    %v9631 = vadd.f32 %v9629, %v9630
    %v9632 = vsel %vm9488, %v6441, 0.0
    %v9633 = vadd.f32 %v9631, %v9632
    %v9634 = vsel %vm9488, %v6449, 0.0
    %v9635 = vadd.f32 %v9633, %v9634
    %v9636 = vsel %vm9488, %v6448, 0.0
    %v9637 = vadd.f32 %v9635, %v9636
    %v9638 = vsel %vm9488, %v6450, 0.0
    %v9639 = vadd.f32 %v9637, %v9638
    %v9640 = vsel %vm9488, %v6458, 0.0
    %v9641 = vadd.f32 %v9639, %v9640
    %v9642 = vsel %vm9488, %v6466, 0.0
    %v9643 = vadd.f32 %v9641, %v9642
    %v9644 = vsel %vm9488, %v6465, 0.0
    %v9645 = vadd.f32 %v9643, %v9644
    %v9646 = vsel %vm9488, %v6467, 0.0
    %v9647 = vadd.f32 %v9645, %v9646
    %v9648 = vsel %vm9488, %v6475, 0.0
    %v9649 = vadd.f32 %v9647, %v9648
    %v9650 = vsel %vm9488, %v6483, 0.0
    %v9651 = vadd.f32 %v9649, %v9650
    %v9652 = vsel %vm9488, %v6482, 0.0
    %v9653 = vadd.f32 %v9651, %v9652
    %v9654 = vsel %vm9488, %v6484, 0.0
    %v9655 = vadd.f32 %v9653, %v9654
    %v9656 = vsel %vm9488, %v6492, 0.0
    %v9657 = vadd.f32 %v9655, %v9656
    %v9658 = vsel %vm9488, %v6500, 0.0
    %v9659 = vadd.f32 %v9657, %v9658
    %v9660 = vsel %vm9488, %v6499, 0.0
    %v9661 = vadd.f32 %v9659, %v9660
    %v9662 = vsel %vm9488, %v6501, 0.0
    %v9663 = vadd.f32 %v9661, %v9662
    %v9664 = vsel %vm9488, %v6509, 0.0
    %v9665 = vadd.f32 %v9663, %v9664
    %v9666 = vsel %vm9488, %v6517, 0.0
    %v9667 = vadd.f32 %v9665, %v9666
    %v9668 = vsel %vm9488, %v6516, 0.0
    %v9669 = vadd.f32 %v9667, %v9668
    %v9670 = vsel %vm9488, %v6518, 0.0
    %v9671 = vadd.f32 %v9669, %v9670
    %v9672 = vsel %vm9488, %v6526, 0.0
    %v9673 = vadd.f32 %v9671, %v9672
    %v9674 = vsel %vm9488, %v6534, 0.0
    %v9675 = vadd.f32 %v9673, %v9674
    %v9676 = vsel %vm9488, %v6533, 0.0
    %v9677 = vadd.f32 %v9675, %v9676
    %v9678 = vsel %vm9488, %v6535, 0.0
    %v9679 = vadd.f32 %v9677, %v9678
    %v9680 = vsel %vm9488, %v6543, 0.0
    %v9681 = vadd.f32 %v9679, %v9680
    %v9682 = vsel %vm9488, %v6551, 0.0
    %v9683 = vadd.f32 %v9681, %v9682
    %v9684 = vsel %vm9488, %v6550, 0.0
    %v9685 = vadd.f32 %v9683, %v9684
    %v9686 = vsel %vm9488, %v6552, 0.0
    %v9687 = vadd.f32 %v9685, %v9686
    %v9688 = vsel %vm9488, %v6560, 0.0
    %v9689 = vadd.f32 %v9687, %v9688
    %v9690 = vsel %vm9488, %v6568, 0.0
    %v9691 = vadd.f32 %v9689, %v9690
    %v9692 = vsel %vm9488, %v6567, 0.0
    %v9693 = vadd.f32 %v9691, %v9692
    %v9694 = vsel %vm9488, %v6569, 0.0
    %v9695 = vadd.f32 %v9693, %v9694
    %v9696 = vsel %vm9488, %v6577, 0.0
    %v9697 = vadd.f32 %v9695, %v9696
    %v9698 = vsel %vm9488, %v6585, 0.0
    %v9699 = vadd.f32 %v9697, %v9698
    %v9700 = vsel %vm9488, %v6584, 0.0
    %v9701 = vadd.f32 %v9699, %v9700
    %v9702 = vsel %vm9488, %v6586, 0.0
    %v9703 = vadd.f32 %v9701, %v9702
    %v9704 = vsel %vm9488, %v6594, 0.0
    %v9705 = vadd.f32 %v9703, %v9704
    %v9706 = vsel %vm9488, %v6602, 0.0
    %v9707 = vadd.f32 %v9705, %v9706
    %v9708 = vsel %vm9488, %v6601, 0.0
    %v9709 = vadd.f32 %v9707, %v9708
    %v9710 = vsel %vm9488, %v6603, 0.0
    %v9711 = vadd.f32 %v9709, %v9710
    %v9712 = vsel %vm9488, %v6611, 0.0
    %v9713 = vadd.f32 %v9711, %v9712
    %v9714 = vsel %vm9488, %v6619, 0.0
    %v9715 = vadd.f32 %v9713, %v9714
    %v9716 = vsel %vm9488, %v6618, 0.0
    %v9717 = vadd.f32 %v9715, %v9716
    %v9718 = vsel %vm9488, %v6620, 0.0
    %v9719 = vadd.f32 %v9717, %v9718
    %v9720 = vsel %vm9488, %v6628, 0.0
    %v9721 = vadd.f32 %v9719, %v9720
    %v9722 = vsel %vm9488, %v6636, 0.0
    %v9723 = vadd.f32 %v9721, %v9722
    %v9724 = vsel %vm9488, %v6635, 0.0
    %v9725 = vadd.f32 %v9723, %v9724
    %v9726 = vsel %vm9488, %v6637, 0.0
    %v9727 = vadd.f32 %v9725, %v9726
    %v9728 = vsel %vm9488, %v6645, 0.0
    %v9729 = vadd.f32 %v9727, %v9728
    %v9730 = vsel %vm9488, %v6653, 0.0
    %v9731 = vadd.f32 %v9729, %v9730
    %v9732 = vsel %vm9488, %v6652, 0.0
    %v9733 = vadd.f32 %v9731, %v9732
    %v9734 = vsel %vm9488, %v6654, 0.0
    %v9735 = vadd.f32 %v9733, %v9734
    %v9736 = vsel %vm9488, %v6662, 0.0
    %v9737 = vadd.f32 %v9735, %v9736
    %v9738 = vsel %vm9488, %v6670, 0.0
    %v9739 = vadd.f32 %v9737, %v9738
    %v9740 = vsel %vm9488, %v6669, 0.0
    %v9741 = vadd.f32 %v9739, %v9740
    %v9742 = vsel %vm9488, %v6671, 0.0
    %v9743 = vadd.f32 %v9741, %v9742
    %v9744 = vsel %vm9488, %v6679, 0.0
    %v9745 = vadd.f32 %v9743, %v9744
    %v9746 = vsel %vm9488, %v6687, 0.0
    %v9747 = vadd.f32 %v9745, %v9746
    %v9748 = vsel %vm9488, %v6686, 0.0
    %v9749 = vadd.f32 %v9747, %v9748
    %v9750 = vsel %vm9488, %v6688, 0.0
    %v9751 = vadd.f32 %v9749, %v9750
    %v9752 = vsel %vm9488, %v6696, 0.0
    %v9753 = vadd.f32 %v9751, %v9752
    %v9754 = vsel %vm9488, %v6704, 0.0
    %v9755 = vadd.f32 %v9753, %v9754
    %v9756 = vsel %vm9488, %v6703, 0.0
    %v9757 = vadd.f32 %v9755, %v9756
    %v9758 = vsel %vm9488, %v6705, 0.0
    %v9759 = vadd.f32 %v9757, %v9758
    %v9760 = vsel %vm9488, %v6713, 0.0
    %v9761 = vadd.f32 %v9759, %v9760
    %v9762 = vsel %vm9488, %v6721, 0.0
    %v9763 = vadd.f32 %v9761, %v9762
    %v9764 = vsel %vm9488, %v6720, 0.0
    %v9765 = vadd.f32 %v9763, %v9764
    %v9766 = vsel %vm9488, %v6722, 0.0
    %v9767 = vadd.f32 %v9765, %v9766
    %v9768 = vsel %vm9488, %v6730, 0.0
    %v9769 = vadd.f32 %v9767, %v9768
    %v9770 = vsel %vm9488, %v6738, 0.0
    %v9771 = vadd.f32 %v9769, %v9770
    %v9772 = vsel %vm9488, %v6737, 0.0
    %v9773 = vadd.f32 %v9771, %v9772
    %v9774 = vsel %vm9488, %v6739, 0.0
    %v9775 = vadd.f32 %v9773, %v9774
    %v9776 = vsel %vm9488, %v6747, 0.0
    %v9777 = vadd.f32 %v9775, %v9776
    %v9778 = vsel %vm9488, %v6755, 0.0
    %v9779 = vadd.f32 %v9777, %v9778
    %v9780 = vsel %vm9488, %v6754, 0.0
    %v9781 = vadd.f32 %v9779, %v9780
    %v9782 = vsel %vm9488, %v6756, 0.0
    %v9783 = vadd.f32 %v9781, %v9782
    %v9784 = vsel %vm9488, %v6764, 0.0
    %v9785 = vadd.f32 %v9783, %v9784
    %v9786 = vsel %vm9488, %v6772, 0.0
    %v9787 = vadd.f32 %v9785, %v9786
    %v9788 = vsel %vm9488, %v6771, 0.0
    %v9789 = vadd.f32 %v9787, %v9788
    %v9790 = vsel %vm9488, %v6773, 0.0
    %v9791 = vadd.f32 %v9789, %v9790
    %v9792 = vsel %vm9488, %v6781, 0.0
    %v9793 = vadd.f32 %v9791, %v9792
    %v9794 = vsel %vm9488, %v6789, 0.0
    %v9795 = vadd.f32 %v9793, %v9794
    %v9796 = vsel %vm9488, %v6788, 0.0
    %v9797 = vadd.f32 %v9795, %v9796
    %v9798 = vsel %vm9488, %v6790, 0.0
    %v9799 = vadd.f32 %v9797, %v9798
    %v9800 = vsel %vm9488, %v6798, 0.0
    %v9801 = vadd.f32 %v9799, %v9800
    %v9802 = vsel %vm9488, %v6806, 0.0
    %v9803 = vadd.f32 %v9801, %v9802
    %v9804 = vsel %vm9488, %v6805, 0.0
    %v9805 = vadd.f32 %v9803, %v9804
    %v9806 = vsel %vm9488, %v6807, 0.0
    %v9807 = vadd.f32 %v9805, %v9806
    %v9808 = vsel %vm9488, %v6815, 0.0
    %v9809 = vadd.f32 %v9807, %v9808
    %v9810 = vsel %vm9488, %v6823, 0.0
    %v9811 = vadd.f32 %v9809, %v9810
    %v9812 = vsel %vm9488, %v6822, 0.0
    %v9813 = vadd.f32 %v9811, %v9812
    %v9814 = vsel %vm9488, %v6824, 0.0
    %v9815 = vadd.f32 %v9813, %v9814
    %v9816 = vsel %vm9488, %v6832, 0.0
    %v9817 = vadd.f32 %v9815, %v9816
    %v9818 = vsel %vm9488, %v6840, 0.0
    %v9819 = vadd.f32 %v9817, %v9818
    %v9820 = vsel %vm9488, %v6839, 0.0
    %v9821 = vadd.f32 %v9819, %v9820
    %v9822 = vsel %vm9488, %v6841, 0.0
    %v9823 = vadd.f32 %v9821, %v9822
    %v9824 = vsel %vm9488, %v6849, 0.0
    %v9825 = vadd.f32 %v9823, %v9824
    %v9826 = vsel %vm9488, %v6857, 0.0
    %v9827 = vadd.f32 %v9825, %v9826
    %v9828 = vsel %vm9488, %v6856, 0.0
    %v9829 = vadd.f32 %v9827, %v9828
    %v9830 = vsel %vm9488, %v6858, 0.0
    %v9831 = vadd.f32 %v9829, %v9830
    %v9832 = vsel %vm9488, %v6866, 0.0
    %v9833 = vadd.f32 %v9831, %v9832
    %v9834 = vsel %vm9488, %v6874, 0.0
    %v9835 = vadd.f32 %v9833, %v9834
    %v9836 = vsel %vm9488, %v6873, 0.0
    %v9837 = vadd.f32 %v9835, %v9836
    %v9838 = vsel %vm9488, %v6875, 0.0
    %v9839 = vadd.f32 %v9837, %v9838
    %v9840 = vsel %vm9488, %v6883, 0.0
    %v9841 = vadd.f32 %v9839, %v9840
    %v9842 = vsel %vm9488, %v6891, 0.0
    %v9843 = vadd.f32 %v9841, %v9842
    %v9844 = vsel %vm9488, %v6890, 0.0
    %v9845 = vadd.f32 %v9843, %v9844
    %v9846 = vsel %vm9488, %v6892, 0.0
    %v9847 = vadd.f32 %v9845, %v9846
    %v9848 = vsel %vm9488, %v6900, 0.0
    %v9849 = vadd.f32 %v9847, %v9848
    %v9850 = vsel %vm9488, %v6908, 0.0
    %v9851 = vadd.f32 %v9849, %v9850
    %v9852 = vsel %vm9488, %v6907, 0.0
    %v9853 = vadd.f32 %v9851, %v9852
    %v9854 = vsel %vm9488, %v6909, 0.0
    %v9855 = vadd.f32 %v9853, %v9854
    %v9856 = vsel %vm9488, %v6917, 0.0
    %v9857 = vadd.f32 %v9855, %v9856
    %v9858 = vsel %vm9488, %v6925, 0.0
    %v9859 = vadd.f32 %v9857, %v9858
    %v9860 = vsel %vm9488, %v6924, 0.0
    %v9861 = vadd.f32 %v9859, %v9860
    %v9862 = vsel %vm9488, %v6926, 0.0
    %v9863 = vadd.f32 %v9861, %v9862
    %v9864 = vsel %vm9488, %v6934, 0.0
    %v9865 = vadd.f32 %v9863, %v9864
    %v9866 = vsel %vm9488, %v6942, 0.0
    %v9867 = vadd.f32 %v9865, %v9866
    %v9868 = vsel %vm9488, %v6941, 0.0
    %v9869 = vadd.f32 %v9867, %v9868
    %v9870 = vsel %vm9488, %v6943, 0.0
    %v9871 = vadd.f32 %v9869, %v9870
    %v9872 = vsel %vm9488, %v6951, 0.0
    %v9873 = vadd.f32 %v9871, %v9872
    %v9874 = vsel %vm9488, %v6959, 0.0
    %v9875 = vadd.f32 %v9873, %v9874
    %v9876 = vsel %vm9488, %v6958, 0.0
    %v9877 = vadd.f32 %v9875, %v9876
    %v9878 = vsel %vm9488, %v6960, 0.0
    %v9879 = vadd.f32 %v9877, %v9878
    %v9880 = vsel %vm9488, %v6968, 0.0
    %v9881 = vadd.f32 %v9879, %v9880
    %v9882 = vsel %vm9488, %v6976, 0.0
    %v9883 = vadd.f32 %v9881, %v9882
    %v9884 = vsel %vm9488, %v6975, 0.0
    %v9885 = vadd.f32 %v9883, %v9884
    %v9886 = vsel %vm9488, %v6977, 0.0
    %v9887 = vadd.f32 %v9885, %v9886
    %v9888 = vsel %vm9488, %v6985, 0.0
    %v9889 = vadd.f32 %v9887, %v9888
    %v9890 = vsel %vm9488, %v6993, 0.0
    %v9891 = vadd.f32 %v9889, %v9890
    %v9892 = vsel %vm9488, %v6992, 0.0
    %v9893 = vadd.f32 %v9891, %v9892
    %v9894 = vsel %vm9488, %v6994, 0.0
    %v9895 = vadd.f32 %v9893, %v9894
    %v9896 = vsel %vm9488, %v7002, 0.0
    %v9897 = vadd.f32 %v9895, %v9896
    %v9898 = vsel %vm9488, %v7010, 0.0
    %v9899 = vadd.f32 %v9897, %v9898
    %v9900 = vsel %vm9488, %v7009, 0.0
    %v9901 = vadd.f32 %v9899, %v9900
    %v9902 = vsel %vm9488, %v7011, 0.0
    %v9903 = vadd.f32 %v9901, %v9902
    %v9904 = vsel %vm9488, %v7019, 0.0
    %v9905 = vadd.f32 %v9903, %v9904
    %v9906 = vsel %vm9488, %v7027, 0.0
    %v9907 = vadd.f32 %v9905, %v9906
    %v9908 = vsel %vm9488, %v7026, 0.0
    %v9909 = vadd.f32 %v9907, %v9908
    %v9910 = vsel %vm9488, %v7028, 0.0
    %v9911 = vadd.f32 %v9909, %v9910
    %v9912 = vsel %vm9488, %v7036, 0.0
    %v9913 = vadd.f32 %v9911, %v9912
    %v9914 = vsel %vm9488, %v7044, 0.0
    %v9915 = vadd.f32 %v9913, %v9914
    %v9916 = vsel %vm9488, %v7043, 0.0
    %v9917 = vadd.f32 %v9915, %v9916
    %v9918 = vsel %vm9488, %v7045, 0.0
    %v9919 = vadd.f32 %v9917, %v9918
    %v9920 = vsel %vm9488, %v7053, 0.0
    %v9921 = vadd.f32 %v9919, %v9920
    %v9922 = vsel %vm9488, %v7061, 0.0
    %v9923 = vadd.f32 %v9921, %v9922
    %v9924 = vsel %vm9488, %v7060, 0.0
    %v9925 = vadd.f32 %v9923, %v9924
    %v9926 = vsel %vm9488, %v7062, 0.0
    %v9927 = vadd.f32 %v9925, %v9926
    %v9928 = vsel %vm9488, %v7070, 0.0
    %v9929 = vadd.f32 %v9927, %v9928
    %v9930 = vsel %vm9488, %v7078, 0.0
    %v9931 = vadd.f32 %v9929, %v9930
    %v9932 = vsel %vm9488, %v7077, 0.0
    %v9933 = vadd.f32 %v9931, %v9932
    %v9934 = vsel %vm9488, %v7079, 0.0
    %v9935 = vadd.f32 %v9933, %v9934
    %v9936 = vsel %vm9488, %v7087, 0.0
    %v9937 = vadd.f32 %v9935, %v9936
    %v9938 = vsel %vm9488, %v7095, 0.0
    %v9939 = vadd.f32 %v9937, %v9938
    %v9940 = vsel %vm9488, %v7094, 0.0
    %v9941 = vadd.f32 %v9939, %v9940
    %v9942 = vsel %vm9488, %v7096, 0.0
    %v9943 = vadd.f32 %v9941, %v9942
    %v9944 = vsel %vm9488, %v7104, 0.0
    %v9945 = vadd.f32 %v9943, %v9944
    %v9946 = vsel %vm9488, %v7112, 0.0
    %v9947 = vadd.f32 %v9945, %v9946
    %v9948 = vsel %vm9488, %v7111, 0.0
    %v9949 = vadd.f32 %v9947, %v9948
    %v9950 = vsel %vm9488, %v7113, 0.0
    %v9951 = vadd.f32 %v9949, %v9950
    %v9952 = vsel %vm9488, %v7121, 0.0
    %v9953 = vadd.f32 %v9951, %v9952
    %v9954 = vsel %vm9488, %v7129, 0.0
    %v9955 = vadd.f32 %v9953, %v9954
    %v9956 = vsel %vm9488, %v7128, 0.0
    %v9957 = vadd.f32 %v9955, %v9956
    %v9958 = vsel %vm9488, %v7130, 0.0
    %v9959 = vadd.f32 %v9957, %v9958
    %v9960 = vsel %vm9488, %v7138, 0.0
    %v9961 = vadd.f32 %v9959, %v9960
    %v9962 = vsel %vm9488, %v7146, 0.0
    %v9963 = vadd.f32 %v9961, %v9962
    %v9964 = vsel %vm9488, %v7145, 0.0
    %v9965 = vadd.f32 %v9963, %v9964
    %v9966 = vsel %vm9488, %v7147, 0.0
    %v9967 = vadd.f32 %v9965, %v9966
    %v9968 = vsel %vm9488, %v7155, 0.0
    %v9969 = vadd.f32 %v9967, %v9968
    %v9970 = vsel %vm9488, %v7163, 0.0
    %v9971 = vadd.f32 %v9969, %v9970
    %v9972 = vsel %vm9488, %v7162, 0.0
    %v9973 = vadd.f32 %v9971, %v9972
    %v9974 = vsel %vm9488, %v7164, 0.0
    %v9975 = vadd.f32 %v9973, %v9974
    %v9976 = vsel %vm9488, %v7172, 0.0
    %v9977 = vadd.f32 %v9975, %v9976
    %v9978 = vsel %vm9488, %v7180, 0.0
    %v9979 = vadd.f32 %v9977, %v9978
    %v9980 = vsel %vm9488, %v7179, 0.0
    %v9981 = vadd.f32 %v9979, %v9980
    %v9982 = vsel %vm9488, %v7181, 0.0
    %v9983 = vadd.f32 %v9981, %v9982
    %v9984 = vsel %vm9488, %v7189, 0.0
    %v9985 = vadd.f32 %v9983, %v9984
    %v9986 = vsel %vm9488, %v7197, 0.0
    %v9987 = vadd.f32 %v9985, %v9986
    %v9988 = vsel %vm9488, %v7196, 0.0
    %v9989 = vadd.f32 %v9987, %v9988
    %v9990 = vsel %vm9488, %v7198, 0.0
    %v9991 = vadd.f32 %v9989, %v9990
    %v9992 = vsel %vm9488, %v7206, 0.0
    %v9993 = vadd.f32 %v9991, %v9992
    %v9994 = vsel %vm9488, %v7214, 0.0
    %v9995 = vadd.f32 %v9993, %v9994
    %v9996 = vsel %vm9488, %v7213, 0.0
    %v9997 = vadd.f32 %v9995, %v9996
    %v9998 = vsel %vm9488, %v7215, 0.0
    %v9999 = vadd.f32 %v9997, %v9998
    %v10000 = vsel %vm9488, %v7223, 0.0
    %v10001 = vadd.f32 %v9999, %v10000
    %v10002 = vsel %vm9488, %v7231, 0.0
    %v10003 = vadd.f32 %v10001, %v10002
    %v10004 = vsel %vm9488, %v7230, 0.0
    %v10005 = vadd.f32 %v10003, %v10004
    %v10006 = vsel %vm9488, %v7232, 0.0
    %v10007 = vadd.f32 %v10005, %v10006
    %v10008 = vsel %vm9488, %v7240, 0.0
    %v10009 = vadd.f32 %v10007, %v10008
    %v10010 = vsel %vm9488, %v7248, 0.0
    %v10011 = vadd.f32 %v10009, %v10010
    %v10012 = vsel %vm9488, %v7247, 0.0
    %v10013 = vadd.f32 %v10011, %v10012
    %v10014 = vsel %vm9488, %v7249, 0.0
    %v10015 = vadd.f32 %v10013, %v10014
    %v10016 = vsel %vm9488, %v7257, 0.0
    %v10017 = vadd.f32 %v10015, %v10016
    %v10018 = vsel %vm9488, %v7265, 0.0
    %v10019 = vadd.f32 %v10017, %v10018
    %v10020 = vsel %vm9488, %v7264, 0.0
    %v10021 = vadd.f32 %v10019, %v10020
    %v10022 = vsel %vm9488, %v7266, 0.0
    %v10023 = vadd.f32 %v10021, %v10022
    %v10024 = vsel %vm9488, %v7274, 0.0
    %v10025 = vadd.f32 %v10023, %v10024
    %v10026 = vsel %vm9488, %v7282, 0.0
    %v10027 = vadd.f32 %v10025, %v10026
    %v10028 = vsel %vm9488, %v7281, 0.0
    %v10029 = vadd.f32 %v10027, %v10028
    %v10030 = vsel %vm9488, %v7283, 0.0
    %v10031 = vadd.f32 %v10029, %v10030
    %v10032 = vsel %vm9488, %v7291, 0.0
    %v10033 = vadd.f32 %v10031, %v10032
    %v10034 = vsel %vm9488, %v7299, 0.0
    %v10035 = vadd.f32 %v10033, %v10034
    %v10036 = vsel %vm9488, %v7298, 0.0
    %v10037 = vadd.f32 %v10035, %v10036
    %v10038 = vsel %vm9488, %v7300, 0.0
    %v10039 = vadd.f32 %v10037, %v10038
    %v10040 = vsel %vm9488, %v7308, 0.0
    %v10041 = vadd.f32 %v10039, %v10040
    %v10042 = vsel %vm9488, %v7316, 0.0
    %v10043 = vadd.f32 %v10041, %v10042
    %v10044 = vsel %vm9488, %v7315, 0.0
    %v10045 = vadd.f32 %v10043, %v10044
    %v10046 = vsel %vm9488, %v7317, 0.0
    %v10047 = vadd.f32 %v10045, %v10046
    %v10048 = vsel %vm9488, %v7325, 0.0
    %v10049 = vadd.f32 %v10047, %v10048
    %v10050 = vsel %vm9488, %v7333, 0.0
    %v10051 = vadd.f32 %v10049, %v10050
    %v10052 = vsel %vm9488, %v7332, 0.0
    %v10053 = vadd.f32 %v10051, %v10052
    %v10054 = vsel %vm9488, %v7334, 0.0
    %v10055 = vadd.f32 %v10053, %v10054
    %v10056 = vsel %vm9488, %v7342, 0.0
    %v10057 = vadd.f32 %v10055, %v10056
    %v10058 = vsel %vm9488, %v7350, 0.0
    %v10059 = vadd.f32 %v10057, %v10058
    %v10060 = vsel %vm9488, %v7349, 0.0
    %v10061 = vadd.f32 %v10059, %v10060
    %v10062 = vsel %vm9488, %v7351, 0.0
    %v10063 = vadd.f32 %v10061, %v10062
    %v10064 = vsel %vm9488, %v7359, 0.0
    %v10065 = vadd.f32 %v10063, %v10064
    %v10066 = vsel %vm9488, %v7367, 0.0
    %v10067 = vadd.f32 %v10065, %v10066
    %v10068 = vsel %vm9488, %v7366, 0.0
    %v10069 = vadd.f32 %v10067, %v10068
    %v10070 = vsel %vm9488, %v7368, 0.0
    %v10071 = vadd.f32 %v10069, %v10070
    %v10072 = vsel %vm9488, %v7376, 0.0
    %v10073 = vadd.f32 %v10071, %v10072
    %v10074 = vsel %vm9488, %v7384, 0.0
    %v10075 = vadd.f32 %v10073, %v10074
    %v10076 = vsel %vm9488, %v7383, 0.0
    %v10077 = vadd.f32 %v10075, %v10076
    %v10078 = vsel %vm9488, %v7385, 0.0
    %v10079 = vadd.f32 %v10077, %v10078
    %v10080 = vsel %vm9488, %v7393, 0.0
    %v10081 = vadd.f32 %v10079, %v10080
    %v10082 = vsel %vm9488, %v7401, 0.0
    %v10083 = vadd.f32 %v10081, %v10082
    %v10084 = vsel %vm9488, %v7400, 0.0
    %v10085 = vadd.f32 %v10083, %v10084
    %v10086 = vsel %vm9488, %v7402, 0.0
    %v10087 = vadd.f32 %v10085, %v10086
    %v10088 = vsel %vm9488, %v7410, 0.0
    %v10089 = vadd.f32 %v10087, %v10088
    %v10090 = vsel %vm9488, %v7418, 0.0
    %v10091 = vadd.f32 %v10089, %v10090
    %v10092 = vsel %vm9488, %v7417, 0.0
    %v10093 = vadd.f32 %v10091, %v10092
    %v10094 = vsel %vm9488, %v7419, 0.0
    %v10095 = vadd.f32 %v10093, %v10094
    %v10096 = vsel %vm9488, %v7427, 0.0
    %v10097 = vadd.f32 %v10095, %v10096
    %v10098 = vsel %vm9488, %v7435, 0.0
    %v10099 = vadd.f32 %v10097, %v10098
    %v10100 = vsel %vm9488, %v7434, 0.0
    %v10101 = vadd.f32 %v10099, %v10100
    %v10102 = vsel %vm9488, %v7436, 0.0
    %v10103 = vadd.f32 %v10101, %v10102
    %v10104 = vsel %vm9488, %v7444, 0.0
    %v10105 = vadd.f32 %v10103, %v10104
    %v10106 = vsel %vm9488, %v7452, 0.0
    %v10107 = vadd.f32 %v10105, %v10106
    %v10108 = vsel %vm9488, %v7451, 0.0
    %v10109 = vadd.f32 %v10107, %v10108
    %v10110 = vsel %vm9488, %v7453, 0.0
    %v10111 = vadd.f32 %v10109, %v10110
    %v10112 = vsel %vm9488, %v7461, 0.0
    %v10113 = vadd.f32 %v10111, %v10112
    %v10114 = vsel %vm9488, %v7469, 0.0
    %v10115 = vadd.f32 %v10113, %v10114
    %v10116 = vsel %vm9488, %v7468, 0.0
    %v10117 = vadd.f32 %v10115, %v10116
    %v10118 = vsel %vm9488, %v7470, 0.0
    %v10119 = vadd.f32 %v10117, %v10118
    %v10120 = vsel %vm9488, %v7478, 0.0
    %v10121 = vadd.f32 %v10119, %v10120
    %v10122 = vsel %vm9488, %v7486, 0.0
    %v10123 = vadd.f32 %v10121, %v10122
    %v10124 = vsel %vm9488, %v7485, 0.0
    %v10125 = vadd.f32 %v10123, %v10124
    %v10126 = vsel %vm9488, %v7487, 0.0
    %v10127 = vadd.f32 %v10125, %v10126
    %v10128 = vsel %vm9488, %v7495, 0.0
    %v10129 = vadd.f32 %v10127, %v10128
    %v10130 = vsel %vm9488, %v7503, 0.0
    %v10131 = vadd.f32 %v10129, %v10130
    %v10132 = vsel %vm9488, %v7502, 0.0
    %v10133 = vadd.f32 %v10131, %v10132
    %v10134 = vsel %vm9488, %v7504, 0.0
    %v10135 = vadd.f32 %v10133, %v10134
    %v10136 = vsel %vm9488, %v7512, 0.0
    %v10137 = vadd.f32 %v10135, %v10136
    %v10138 = vsel %vm9488, %v7520, 0.0
    %v10139 = vadd.f32 %v10137, %v10138
    %v10140 = vsel %vm9488, %v7519, 0.0
    %v10141 = vadd.f32 %v10139, %v10140
    %v10142 = vsel %vm9488, %v7521, 0.0
    %v10143 = vadd.f32 %v10141, %v10142
    %v10144 = vsel %vm9488, %v7529, 0.0
    %v10145 = vadd.f32 %v10143, %v10144
    %v10146 = vsel %vm9488, %v7537, 0.0
    %v10147 = vadd.f32 %v10145, %v10146
    %v10148 = vsel %vm9488, %v7536, 0.0
    %v10149 = vadd.f32 %v10147, %v10148
    %v10150 = vsel %vm9488, %v7538, 0.0
    %v10151 = vadd.f32 %v10149, %v10150
    %v10152 = vsel %vm9488, %v7546, 0.0
    %v10153 = vadd.f32 %v10151, %v10152
    %v10154 = vsel %vm9488, %v7554, 0.0
    %v10155 = vadd.f32 %v10153, %v10154
    %v10156 = vsel %vm9488, %v7553, 0.0
    %v10157 = vadd.f32 %v10155, %v10156
    %v10158 = vsel %vm9488, %v7555, 0.0
    %v10159 = vadd.f32 %v10157, %v10158
    %v10160 = vsel %vm9488, %v7563, 0.0
    %v10161 = vadd.f32 %v10159, %v10160
    %v10162 = vsel %vm9488, %v7571, 0.0
    %v10163 = vadd.f32 %v10161, %v10162
    %v10164 = vsel %vm9488, %v7570, 0.0
    %v10165 = vadd.f32 %v10163, %v10164
    %v10166 = vsel %vm9488, %v7572, 0.0
    %v10167 = vadd.f32 %v10165, %v10166
    %v10168 = vsel %vm9488, %v7580, 0.0
    %v10169 = vadd.f32 %v10167, %v10168
    %v10170 = vsel %vm9488, %v7588, 0.0
    %v10171 = vadd.f32 %v10169, %v10170
    %v10172 = vsel %vm9488, %v7587, 0.0
    %v10173 = vadd.f32 %v10171, %v10172
    %v10174 = vsel %vm9488, %v7589, 0.0
    %v10175 = vadd.f32 %v10173, %v10174
    %v10176 = vsel %vm9488, %v7597, 0.0
    %v10177 = vadd.f32 %v10175, %v10176
    %v10178 = vsel %vm9488, %v7605, 0.0
    %v10179 = vadd.f32 %v10177, %v10178
    %v10180 = vsel %vm9488, %v7604, 0.0
    %v10181 = vadd.f32 %v10179, %v10180
    %v10182 = vsel %vm9488, %v7606, 0.0
    %v10183 = vadd.f32 %v10181, %v10182
    %v10184 = vsel %vm9488, %v7614, 0.0
    %v10185 = vadd.f32 %v10183, %v10184
    %v10186 = vsel %vm9488, %v7622, 0.0
    %v10187 = vadd.f32 %v10185, %v10186
    %v10188 = vsel %vm9488, %v7621, 0.0
    %v10189 = vadd.f32 %v10187, %v10188
    %v10190 = vsel %vm9488, %v7623, 0.0
    %v10191 = vadd.f32 %v10189, %v10190
    %v10192 = vsel %vm9488, %v7631, 0.0
    %v10193 = vadd.f32 %v10191, %v10192
    %v10194 = vsel %vm9488, %v7639, 0.0
    %v10195 = vadd.f32 %v10193, %v10194
    %v10196 = vsel %vm9488, %v7638, 0.0
    %v10197 = vadd.f32 %v10195, %v10196
    %v10198 = vsel %vm9488, %v7640, 0.0
    %v10199 = vadd.f32 %v10197, %v10198
    %v10200 = vsel %vm9488, %v7648, 0.0
    %v10201 = vadd.f32 %v10199, %v10200
    %v10202 = vsel %vm9488, %v7656, 0.0
    %v10203 = vadd.f32 %v10201, %v10202
    %v10204 = vsel %vm9488, %v7655, 0.0
    %v10205 = vadd.f32 %v10203, %v10204
    %v10206 = vsel %vm9488, %v7657, 0.0
    %v10207 = vadd.f32 %v10205, %v10206
    %v10208 = vsel %vm9488, %v7665, 0.0
    %v10209 = vadd.f32 %v10207, %v10208
    %v10210 = vsel %vm9488, %v7673, 0.0
    %v10211 = vadd.f32 %v10209, %v10210
    %v10212 = vsel %vm9488, %v7672, 0.0
    %v10213 = vadd.f32 %v10211, %v10212
    %v10214 = vsel %vm9488, %v7674, 0.0
    %v10215 = vadd.f32 %v10213, %v10214
    %v10216 = vsel %vm9488, %v7682, 0.0
    %v10217 = vadd.f32 %v10215, %v10216
    %v10218 = vsel %vm9488, %v7690, 0.0
    %v10219 = vadd.f32 %v10217, %v10218
    %v10220 = vsel %vm9488, %v7689, 0.0
    %v10221 = vadd.f32 %v10219, %v10220
    %v10222 = vsel %vm9488, %v7691, 0.0
    %v10223 = vadd.f32 %v10221, %v10222
    %v10224 = vsel %vm9488, %v7699, 0.0
    %v10225 = vadd.f32 %v10223, %v10224
    %v10226 = vsel %vm9488, %v7707, 0.0
    %v10227 = vadd.f32 %v10225, %v10226
    %v10228 = vsel %vm9488, %v7706, 0.0
    %v10229 = vadd.f32 %v10227, %v10228
    %v10230 = vsel %vm9488, %v7708, 0.0
    %v10231 = vadd.f32 %v10229, %v10230
    %v10232 = vsel %vm9488, %v7716, 0.0
    %v10233 = vadd.f32 %v10231, %v10232
    %v10234 = vsel %vm9488, %v7724, 0.0
    %v10235 = vadd.f32 %v10233, %v10234
    %v10236 = vsel %vm9488, %v7723, 0.0
    %v10237 = vadd.f32 %v10235, %v10236
    %v10238 = vsel %vm9488, %v7725, 0.0
    %v10239 = vadd.f32 %v10237, %v10238
    %v10240 = vsel %vm9488, %v7733, 0.0
    %v10241 = vadd.f32 %v10239, %v10240
    %v10242 = vsel %vm9488, %v7741, 0.0
    %v10243 = vadd.f32 %v10241, %v10242
    %v10244 = vsel %vm9488, %v7740, 0.0
    %v10245 = vadd.f32 %v10243, %v10244
    %v10246 = vsel %vm9488, %v7742, 0.0
    %v10247 = vadd.f32 %v10245, %v10246
    %v10248 = vsel %vm9488, %v7750, 0.0
    %v10249 = vadd.f32 %v10247, %v10248
    %v10250 = vsel %vm9488, %v7758, 0.0
    %v10251 = vadd.f32 %v10249, %v10250
    %v10252 = vsel %vm9488, %v7757, 0.0
    %v10253 = vadd.f32 %v10251, %v10252
    %v10254 = vsel %vm9488, %v7759, 0.0
    %v10255 = vadd.f32 %v10253, %v10254
    %v10256 = vsel %vm9488, %v7767, 0.0
    %v10257 = vadd.f32 %v10255, %v10256
    %v10258 = vsel %vm9488, %v7775, 0.0
    %v10259 = vadd.f32 %v10257, %v10258
    %v10260 = vsel %vm9488, %v7774, 0.0
    %v10261 = vadd.f32 %v10259, %v10260
    %v10262 = vsel %vm9488, %v7776, 0.0
    %v10263 = vadd.f32 %v10261, %v10262
    %v10264 = vsel %vm9488, %v7784, 0.0
    %v10265 = vadd.f32 %v10263, %v10264
    %v10266 = vsel %vm9488, %v7792, 0.0
    %v10267 = vadd.f32 %v10265, %v10266
    %v10268 = vsel %vm9488, %v7791, 0.0
    %v10269 = vadd.f32 %v10267, %v10268
    %v10270 = vsel %vm9488, %v7793, 0.0
    %v10271 = vadd.f32 %v10269, %v10270
    %v10272 = vsel %vm9488, %v7801, 0.0
    %v10273 = vadd.f32 %v10271, %v10272
    %v10274 = vsel %vm9488, %v7809, 0.0
    %v10275 = vadd.f32 %v10273, %v10274
    %v10276 = vsel %vm9488, %v7808, 0.0
    %v10277 = vadd.f32 %v10275, %v10276
    %v10278 = vsel %vm9488, %v7810, 0.0
    %v10279 = vadd.f32 %v10277, %v10278
    %v10280 = vsel %vm9488, %v7818, 0.0
    %v10281 = vadd.f32 %v10279, %v10280
    %v10282 = vsel %vm9488, %v7826, 0.0
    %v10283 = vadd.f32 %v10281, %v10282
    %v10284 = vsel %vm9488, %v7825, 0.0
    %v10285 = vadd.f32 %v10283, %v10284
    %v10286 = vsel %vm9488, %v7827, 0.0
    %v10287 = vadd.f32 %v10285, %v10286
    %v10288 = vsel %vm9488, %v7835, 0.0
    %v10289 = vadd.f32 %v10287, %v10288
    %v10290 = vsel %vm9488, %v7843, 0.0
    %v10291 = vadd.f32 %v10289, %v10290
    %v10292 = vsel %vm9488, %v7842, 0.0
    %v10293 = vadd.f32 %v10291, %v10292
    %v10294 = vsel %vm9488, %v7844, 0.0
    %v10295 = vadd.f32 %v10293, %v10294
    %v10296 = vsel %vm9488, %v7852, 0.0
    %v10297 = vadd.f32 %v10295, %v10296
    %v10298 = vsel %vm9488, %v7860, 0.0
    %v10299 = vadd.f32 %v10297, %v10298
    %v10300 = vsel %vm9488, %v7859, 0.0
    %v10301 = vadd.f32 %v10299, %v10300
    %v10302 = vsel %vm9488, %v7861, 0.0
    %v10303 = vadd.f32 %v10301, %v10302
    %v10304 = vsel %vm9488, %v7869, 0.0
    %v10305 = vadd.f32 %v10303, %v10304
    %v10306 = vsel %vm9488, %v7877, 0.0
    %v10307 = vadd.f32 %v10305, %v10306
    %v10308 = vsel %vm9488, %v7876, 0.0
    %v10309 = vadd.f32 %v10307, %v10308
    %v10310 = vsel %vm9488, %v7878, 0.0
    %v10311 = vadd.f32 %v10309, %v10310
    %v10312 = vsel %vm9488, %v7886, 0.0
    %v10313 = vadd.f32 %v10311, %v10312
    %v10314 = vsel %vm9488, %v7894, 0.0
    %v10315 = vadd.f32 %v10313, %v10314
    %v10316 = vsel %vm9488, %v7893, 0.0
    %v10317 = vadd.f32 %v10315, %v10316
    %v10318 = vsel %vm9488, %v7895, 0.0
    %v10319 = vadd.f32 %v10317, %v10318
    %v10320 = vsel %vm9488, %v7903, 0.0
    %v10321 = vadd.f32 %v10319, %v10320
    %v10322 = vsel %vm9488, %v7911, 0.0
    %v10323 = vadd.f32 %v10321, %v10322
    %v10324 = vsel %vm9488, %v7910, 0.0
    %v10325 = vadd.f32 %v10323, %v10324
    %v10326 = vsel %vm9488, %v7912, 0.0
    %v10327 = vadd.f32 %v10325, %v10326
    %v10328 = vsel %vm9488, %v7920, 0.0
    %v10329 = vadd.f32 %v10327, %v10328
    %v10330 = vsel %vm9488, %v7928, 0.0
    %v10331 = vadd.f32 %v10329, %v10330
    %v10332 = vsel %vm9488, %v7927, 0.0
    %v10333 = vadd.f32 %v10331, %v10332
    %v10334 = vsel %vm9488, %v7929, 0.0
    %v10335 = vadd.f32 %v10333, %v10334
    %v10336 = vsel %vm9488, %v7937, 0.0
    %v10337 = vadd.f32 %v10335, %v10336
    %v10338 = vsel %vm9488, %v7945, 0.0
    %v10339 = vadd.f32 %v10337, %v10338
    %v10340 = vsel %vm9488, %v7944, 0.0
    %v10341 = vadd.f32 %v10339, %v10340
    %v10342 = vsel %vm9488, %v7946, 0.0
    %v10343 = vadd.f32 %v10341, %v10342
    %v10344 = vsel %vm9488, %v7954, 0.0
    %v10345 = vadd.f32 %v10343, %v10344
    %v10346 = vsel %vm9488, %v7962, 0.0
    %v10347 = vadd.f32 %v10345, %v10346
    %v10348 = vsel %vm9488, %v7961, 0.0
    %v10349 = vadd.f32 %v10347, %v10348
    %v10350 = vsel %vm9488, %v7963, 0.0
    %v10351 = vadd.f32 %v10349, %v10350
    %v10352 = vsel %vm9488, %v7971, 0.0
    %v10353 = vadd.f32 %v10351, %v10352
    %v10354 = vsel %vm9488, %v7979, 0.0
    %v10355 = vadd.f32 %v10353, %v10354
    %v10356 = vsel %vm9488, %v7978, 0.0
    %v10357 = vadd.f32 %v10355, %v10356
    %v10358 = vsel %vm9488, %v7980, 0.0
    %v10359 = vadd.f32 %v10357, %v10358
    %v10360 = vsel %vm9488, %v7988, 0.0
    %v10361 = vadd.f32 %v10359, %v10360
    %v10362 = vsel %vm9488, %v7996, 0.0
    %v10363 = vadd.f32 %v10361, %v10362
    %v10364 = vsel %vm9488, %v7995, 0.0
    %v10365 = vadd.f32 %v10363, %v10364
    %v10366 = vsel %vm9488, %v7997, 0.0
    %v10367 = vadd.f32 %v10365, %v10366
    %v10368 = vsel %vm9488, %v8005, 0.0
    %v10369 = vadd.f32 %v10367, %v10368
    %v10370 = vsel %vm9488, %v8013, 0.0
    %v10371 = vadd.f32 %v10369, %v10370
    %v10372 = vsel %vm9488, %v8012, 0.0
    %v10373 = vadd.f32 %v10371, %v10372
    %v10374 = vsel %vm9488, %v8014, 0.0
    %v10375 = vadd.f32 %v10373, %v10374
    %v10376 = vsel %vm9488, %v8022, 0.0
    %v10377 = vadd.f32 %v10375, %v10376
    %v10378 = vsel %vm9488, %v8030, 0.0
    %v10379 = vadd.f32 %v10377, %v10378
    %v10380 = vsel %vm9488, %v8029, 0.0
    %v10381 = vadd.f32 %v10379, %v10380
    %v10382 = vsel %vm9488, %v8031, 0.0
    %v10383 = vadd.f32 %v10381, %v10382
    %v10384 = vsel %vm9488, %v8039, 0.0
    %v10385 = vadd.f32 %v10383, %v10384
    %v10386 = vsel %vm9488, %v8047, 0.0
    %v10387 = vadd.f32 %v10385, %v10386
    %v10388 = vsel %vm9488, %v8046, 0.0
    %v10389 = vadd.f32 %v10387, %v10388
    %v10390 = vsel %vm9488, %v8048, 0.0
    %v10391 = vadd.f32 %v10389, %v10390
    %v10392 = vsel %vm9488, %v8056, 0.0
    %v10393 = vadd.f32 %v10391, %v10392
    %v10394 = vsel %vm9488, %v8064, 0.0
    %v10395 = vadd.f32 %v10393, %v10394
    %v10396 = vsel %vm9488, %v8063, 0.0
    %v10397 = vadd.f32 %v10395, %v10396
    %v10398 = vsel %vm9488, %v8065, 0.0
    %v10399 = vadd.f32 %v10397, %v10398
    %v10400 = vsel %vm9488, %v8073, 0.0
    %v10401 = vadd.f32 %v10399, %v10400
    %v10402 = vsel %vm9488, %v8081, 0.0
    %v10403 = vadd.f32 %v10401, %v10402
    %v10404 = vsel %vm9488, %v8080, 0.0
    %v10405 = vadd.f32 %v10403, %v10404
    %v10406 = vsel %vm9488, %v8082, 0.0
    %v10407 = vadd.f32 %v10405, %v10406
    %v10408 = vsel %vm9488, %v8090, 0.0
    %v10409 = vadd.f32 %v10407, %v10408
    %v10410 = vsel %vm9488, %v8098, 0.0
    %v10411 = vadd.f32 %v10409, %v10410
    %v10412 = vsel %vm9488, %v8097, 0.0
    %v10413 = vadd.f32 %v10411, %v10412
    %v10414 = vsel %vm9488, %v8099, 0.0
    %v10415 = vadd.f32 %v10413, %v10414
    %v10416 = vsel %vm9488, %v8107, 0.0
    %v10417 = vadd.f32 %v10415, %v10416
    %v10418 = vsel %vm9488, %v8115, 0.0
    %v10419 = vadd.f32 %v10417, %v10418
    %v10420 = vsel %vm9488, %v8114, 0.0
    %v10421 = vadd.f32 %v10419, %v10420
    %v10422 = vsel %vm9488, %v8116, 0.0
    %v10423 = vadd.f32 %v10421, %v10422
    %v10424 = vsel %vm9488, %v8124, 0.0
    %v10425 = vadd.f32 %v10423, %v10424
    %v10426 = vsel %vm9488, %v8132, 0.0
    %v10427 = vadd.f32 %v10425, %v10426
    %v10428 = vsel %vm9488, %v8131, 0.0
    %v10429 = vadd.f32 %v10427, %v10428
    %v10430 = vsel %vm9488, %v8133, 0.0
    %v10431 = vadd.f32 %v10429, %v10430
    %v10432 = vsel %vm9488, %v8141, 0.0
    %v10433 = vadd.f32 %v10431, %v10432
    %v10434 = vsel %vm9488, %v8149, 0.0
    %v10435 = vadd.f32 %v10433, %v10434
    %v10436 = vsel %vm9488, %v8148, 0.0
    %v10437 = vadd.f32 %v10435, %v10436
    %v10438 = vsel %vm9488, %v8150, 0.0
    %v10439 = vadd.f32 %v10437, %v10438
    %v10440 = vsel %vm9488, %v8158, 0.0
    %v10441 = vadd.f32 %v10439, %v10440
    %v10442 = vsel %vm9488, %v8166, 0.0
    %v10443 = vadd.f32 %v10441, %v10442
    %v10444 = vsel %vm9488, %v8165, 0.0
    %v10445 = vadd.f32 %v10443, %v10444
    %v10446 = vsel %vm9488, %v8167, 0.0
    %v10447 = vadd.f32 %v10445, %v10446
    %v10448 = vsel %vm9488, %v8175, 0.0
    %v10449 = vadd.f32 %v10447, %v10448
    %v10450 = vsel %vm9488, %v8183, 0.0
    %v10451 = vadd.f32 %v10449, %v10450
    %v10452 = vsel %vm9488, %v8182, 0.0
    %v10453 = vadd.f32 %v10451, %v10452
    %v10454 = vsel %vm9488, %v8184, 0.0
    %v10455 = vadd.f32 %v10453, %v10454
    %v10456 = vsel %vm9488, %v8192, 0.0
    %v10457 = vadd.f32 %v10455, %v10456
    %v10458 = vsel %vm9488, %v8200, 0.0
    %v10459 = vadd.f32 %v10457, %v10458
    %v10460 = vsel %vm9488, %v8199, 0.0
    %v10461 = vadd.f32 %v10459, %v10460
    %v10462 = vsel %vm9488, %v8201, 0.0
    %v10463 = vadd.f32 %v10461, %v10462
    %v10464 = vsel %vm9488, %v8209, 0.0
    %v10465 = vadd.f32 %v10463, %v10464
    %v10466 = vsel %vm9488, %v8217, 0.0
    %v10467 = vadd.f32 %v10465, %v10466
    %v10468 = vsel %vm9488, %v8216, 0.0
    %v10469 = vadd.f32 %v10467, %v10468
    %v10470 = vsel %vm9488, %v8218, 0.0
    %v10471 = vadd.f32 %v10469, %v10470
    %v10472 = vsel %vm9488, %v8226, 0.0
    %v10473 = vadd.f32 %v10471, %v10472
    %v10474 = vsel %vm9488, %v8234, 0.0
    %v10475 = vadd.f32 %v10473, %v10474
    %v10476 = vsel %vm9488, %v8233, 0.0
    %v10477 = vadd.f32 %v10475, %v10476
    %v10478 = vsel %vm9488, %v8235, 0.0
    %v10479 = vadd.f32 %v10477, %v10478
    %v10480 = vsel %vm9488, %v8243, 0.0
    %v10481 = vadd.f32 %v10479, %v10480
    %v10482 = vsel %vm9488, %v8251, 0.0
    %v10483 = vadd.f32 %v10481, %v10482
    %v10484 = vsel %vm9488, %v8250, 0.0
    %v10485 = vadd.f32 %v10483, %v10484
    %v10486 = vsel %vm9488, %v8252, 0.0
    %v10487 = vadd.f32 %v10485, %v10486
    %v10488 = vsel %vm9488, %v8260, 0.0
    %v10489 = vadd.f32 %v10487, %v10488
    %v10490 = vsel %vm9488, %v8268, 0.0
    %v10491 = vadd.f32 %v10489, %v10490
    %v10492 = vsel %vm9488, %v8267, 0.0
    %v10493 = vadd.f32 %v10491, %v10492
    %v10494 = vsel %vm9488, %v8269, 0.0
    %v10495 = vadd.f32 %v10493, %v10494
    %v10496 = vsel %vm9488, %v8277, 0.0
    %v10497 = vadd.f32 %v10495, %v10496
    %v10498 = vsel %vm9488, %v8285, 0.0
    %v10499 = vadd.f32 %v10497, %v10498
    %v10500 = vsel %vm9488, %v8284, 0.0
    %v10501 = vadd.f32 %v10499, %v10500
    %v10502 = vsel %vm9488, %v8286, 0.0
    %v10503 = vadd.f32 %v10501, %v10502
    %v10504 = vsel %vm9488, %v8294, 0.0
    %v10505 = vadd.f32 %v10503, %v10504
    %v10506 = vsel %vm9488, %v8302, 0.0
    %v10507 = vadd.f32 %v10505, %v10506
    %v10508 = vsel %vm9488, %v8301, 0.0
    %v10509 = vadd.f32 %v10507, %v10508
    %v10510 = vsel %vm9488, %v8303, 0.0
    %v10511 = vadd.f32 %v10509, %v10510
    %v10512 = vsel %vm9488, %v8311, 0.0
    %v10513 = vadd.f32 %v10511, %v10512
    %v10514 = vsel %vm9488, %v8319, 0.0
    %v10515 = vadd.f32 %v10513, %v10514
    %v10516 = vsel %vm9488, %v8318, 0.0
    %v10517 = vadd.f32 %v10515, %v10516
    %v10518 = vsel %vm9488, %v8320, 0.0
    %v10519 = vadd.f32 %v10517, %v10518
    %v10520 = vsel %vm9488, %v8328, 0.0
    %v10521 = vadd.f32 %v10519, %v10520
    %v10522 = vsel %vm9488, %v8336, 0.0
    %v10523 = vadd.f32 %v10521, %v10522
    %v10524 = vsel %vm9488, %v8335, 0.0
    %v10525 = vadd.f32 %v10523, %v10524
    %v10526 = vsel %vm9488, %v8337, 0.0
    %v10527 = vadd.f32 %v10525, %v10526
    %v10528 = vsel %vm9488, %v8345, 0.0
    %v10529 = vadd.f32 %v10527, %v10528
    %v10530 = vsel %vm9488, %v8353, 0.0
    %v10531 = vadd.f32 %v10529, %v10530
    %v10532 = vsel %vm9488, %v8352, 0.0
    %v10533 = vadd.f32 %v10531, %v10532
    %v10534 = vsel %vm9488, %v8354, 0.0
    %v10535 = vadd.f32 %v10533, %v10534
    %v10536 = vsel %vm9488, %v8362, 0.0
    %v10537 = vadd.f32 %v10535, %v10536
    %v10538 = vsel %vm9488, %v8370, 0.0
    %v10539 = vadd.f32 %v10537, %v10538
    %v10540 = vsel %vm9488, %v8369, 0.0
    %v10541 = vadd.f32 %v10539, %v10540
    %v10542 = vsel %vm9488, %v8371, 0.0
    %v10543 = vadd.f32 %v10541, %v10542
    %v10544 = vsel %vm9488, %v8379, 0.0
    %v10545 = vadd.f32 %v10543, %v10544
    %v10546 = vsel %vm9488, %v8387, 0.0
    %v10547 = vadd.f32 %v10545, %v10546
    %v10548 = vsel %vm9488, %v8386, 0.0
    %v10549 = vadd.f32 %v10547, %v10548
    %v10550 = vsel %vm9488, %v8388, 0.0
    %v10551 = vadd.f32 %v10549, %v10550
    %v10552 = vsel %vm9488, %v8396, 0.0
    %v10553 = vadd.f32 %v10551, %v10552
    %v10554 = vsel %vm9488, %v8404, 0.0
    %v10555 = vadd.f32 %v10553, %v10554
    %v10556 = vsel %vm9488, %v8403, 0.0
    %v10557 = vadd.f32 %v10555, %v10556
    %v10558 = vsel %vm9488, %v8405, 0.0
    %v10559 = vadd.f32 %v10557, %v10558
    %v10560 = vsel %vm9488, %v8413, 0.0
    %v10561 = vadd.f32 %v10559, %v10560
    %v10562 = vsel %vm9488, %v8421, 0.0
    %v10563 = vadd.f32 %v10561, %v10562
    %v10564 = vsel %vm9488, %v8420, 0.0
    %v10565 = vadd.f32 %v10563, %v10564
    %v10566 = vsel %vm9488, %v8422, 0.0
    %v10567 = vadd.f32 %v10565, %v10566
    %v10568 = vsel %vm9488, %v8430, 0.0
    %v10569 = vadd.f32 %v10567, %v10568
    %v10570 = vsel %vm9488, %v8438, 0.0
    %v10571 = vadd.f32 %v10569, %v10570
    %v10572 = vsel %vm9488, %v8437, 0.0
    %v10573 = vadd.f32 %v10571, %v10572
    %v10574 = vsel %vm9488, %v8439, 0.0
    %v10575 = vadd.f32 %v10573, %v10574
    %v10576 = vsel %vm9488, %v8447, 0.0
    %v10577 = vadd.f32 %v10575, %v10576
    %v10578 = vsel %vm9488, %v8455, 0.0
    %v10579 = vadd.f32 %v10577, %v10578
    %v10580 = vsel %vm9488, %v8454, 0.0
    %v10581 = vadd.f32 %v10579, %v10580
    %v10582 = vsel %vm9488, %v8456, 0.0
    %v10583 = vadd.f32 %v10581, %v10582
    %v10584 = vsel %vm9488, %v8464, 0.0
    %v10585 = vadd.f32 %v10583, %v10584
    %v10586 = vsel %vm9488, %v8472, 0.0
    %v10587 = vadd.f32 %v10585, %v10586
    %v10588 = vsel %vm9488, %v8471, 0.0
    %v10589 = vadd.f32 %v10587, %v10588
    %v10590 = vsel %vm9488, %v8473, 0.0
    %v10591 = vadd.f32 %v10589, %v10590
    %v10592 = vsel %vm9488, %v8481, 0.0
    %v10593 = vadd.f32 %v10591, %v10592
    %v10594 = vsel %vm9488, %v8489, 0.0
    %v10595 = vadd.f32 %v10593, %v10594
    %v10596 = vsel %vm9488, %v8488, 0.0
    %v10597 = vadd.f32 %v10595, %v10596
    %v10598 = vsel %vm9488, %v8490, 0.0
    %v10599 = vadd.f32 %v10597, %v10598
    %v10600 = vsel %vm9488, %v8498, 0.0
    %v10601 = vadd.f32 %v10599, %v10600
    %v10602 = vsel %vm9488, %v8506, 0.0
    %v10603 = vadd.f32 %v10601, %v10602
    %v10604 = vsel %vm9488, %v8505, 0.0
    %v10605 = vadd.f32 %v10603, %v10604
    %v10606 = vsel %vm9488, %v8507, 0.0
    %v10607 = vadd.f32 %v10605, %v10606
    %v10608 = vsel %vm9488, %v8515, 0.0
    %v10609 = vadd.f32 %v10607, %v10608
    %v10610 = vsel %vm9488, %v8523, 0.0
    %v10611 = vadd.f32 %v10609, %v10610
    %v10612 = vsel %vm9488, %v8522, 0.0
    %v10613 = vadd.f32 %v10611, %v10612
    %v10614 = vsel %vm9488, %v8524, 0.0
    %v10615 = vadd.f32 %v10613, %v10614
    %v10616 = vsel %vm9488, %v8532, 0.0
    %v10617 = vadd.f32 %v10615, %v10616
    %v10618 = vsel %vm9488, %v8540, 0.0
    %v10619 = vadd.f32 %v10617, %v10618
    %v10620 = vsel %vm9488, %v8539, 0.0
    %v10621 = vadd.f32 %v10619, %v10620
    %v10622 = vsel %vm9488, %v8541, 0.0
    %v10623 = vadd.f32 %v10621, %v10622
    %v10624 = vsel %vm9488, %v8549, 0.0
    %v10625 = vadd.f32 %v10623, %v10624
    %v10626 = vsel %vm9488, %v8557, 0.0
    %v10627 = vadd.f32 %v10625, %v10626
    %v10628 = vsel %vm9488, %v8556, 0.0
    %v10629 = vadd.f32 %v10627, %v10628
    %v10630 = vsel %vm9488, %v8558, 0.0
    %v10631 = vadd.f32 %v10629, %v10630
    %v10632 = vsel %vm9488, %v8566, 0.0
    %v10633 = vadd.f32 %v10631, %v10632
    %v10634 = vsel %vm9488, %v8574, 0.0
    %v10635 = vadd.f32 %v10633, %v10634
    %v10636 = vsel %vm9488, %v8573, 0.0
    %v10637 = vadd.f32 %v10635, %v10636
    %v10638 = vsel %vm9488, %v8575, 0.0
    %v10639 = vadd.f32 %v10637, %v10638
    %v10640 = vsel %vm9488, %v8583, 0.0
    %v10641 = vadd.f32 %v10639, %v10640
    %v10642 = vsel %vm9488, %v8591, 0.0
    %v10643 = vadd.f32 %v10641, %v10642
    %v10644 = vsel %vm9488, %v8590, 0.0
    %v10645 = vadd.f32 %v10643, %v10644
    %v10646 = vsel %vm9488, %v8592, 0.0
    %v10647 = vadd.f32 %v10645, %v10646
    %v10648 = vsel %vm9488, %v8600, 0.0
    %v10649 = vadd.f32 %v10647, %v10648
    %v10650 = vsel %vm9488, %v8608, 0.0
    %v10651 = vadd.f32 %v10649, %v10650
    %v10652 = vsel %vm9488, %v8607, 0.0
    %v10653 = vadd.f32 %v10651, %v10652
    %v10654 = vsel %vm9488, %v8609, 0.0
    %v10655 = vadd.f32 %v10653, %v10654
    %v10656 = vsel %vm9488, %v8617, 0.0
    %v10657 = vadd.f32 %v10655, %v10656
    %v10658 = vsel %vm9488, %v8625, 0.0
    %v10659 = vadd.f32 %v10657, %v10658
    %v10660 = vsel %vm9488, %v8624, 0.0
    %v10661 = vadd.f32 %v10659, %v10660
    %v10662 = vsel %vm9488, %v8626, 0.0
    %v10663 = vadd.f32 %v10661, %v10662
    %v10664 = vsel %vm9488, %v8634, 0.0
    %v10665 = vadd.f32 %v10663, %v10664
    %v10666 = vsel %vm9488, %v8642, 0.0
    %v10667 = vadd.f32 %v10665, %v10666
    %v10668 = vsel %vm9488, %v8641, 0.0
    %v10669 = vadd.f32 %v10667, %v10668
    %v10670 = vsel %vm9488, %v8643, 0.0
    %v10671 = vadd.f32 %v10669, %v10670
    %v10672 = vsel %vm9488, %v8651, 0.0
    %v10673 = vadd.f32 %v10671, %v10672
    %v10674 = vsel %vm9488, %v8659, 0.0
    %v10675 = vadd.f32 %v10673, %v10674
    %v10676 = vsel %vm9488, %v8658, 0.0
    %v10677 = vadd.f32 %v10675, %v10676
    %v10678 = vsel %vm9488, %v8660, 0.0
    %v10679 = vadd.f32 %v10677, %v10678
    %v10680 = vsel %vm9488, %v8668, 0.0
    %v10681 = vadd.f32 %v10679, %v10680
    %v10682 = vsel %vm9488, %v8676, 0.0
    %v10683 = vadd.f32 %v10681, %v10682
    %v10684 = vsel %vm9488, %v8675, 0.0
    %v10685 = vadd.f32 %v10683, %v10684
    %v10686 = vsel %vm9488, %v8677, 0.0
    %v10687 = vadd.f32 %v10685, %v10686
    %v10688 = vsel %vm9488, %v8685, 0.0
    %v10689 = vadd.f32 %v10687, %v10688
    %v10690 = vsel %vm9488, %v8693, 0.0
    %v10691 = vadd.f32 %v10689, %v10690
    %v10692 = vsel %vm9488, %v8692, 0.0
    %v10693 = vadd.f32 %v10691, %v10692
    %v10694 = vsel %vm9488, %v8694, 0.0
    %v10695 = vadd.f32 %v10693, %v10694
    %v10696 = vsel %vm9488, %v8702, 0.0
    %v10697 = vadd.f32 %v10695, %v10696
    %v10698 = vsel %vm9488, %v8710, 0.0
    %v10699 = vadd.f32 %v10697, %v10698
    %v10700 = vsel %vm9488, %v8709, 0.0
    %v10701 = vadd.f32 %v10699, %v10700
    %v10702 = vsel %vm9488, %v8711, 0.0
    %v10703 = vadd.f32 %v10701, %v10702
    %v10704 = vsel %vm9488, %v8719, 0.0
    %v10705 = vadd.f32 %v10703, %v10704
    %v10706 = vsel %vm9488, %v8727, 0.0
    %v10707 = vadd.f32 %v10705, %v10706
    %v10708 = vsel %vm9488, %v8726, 0.0
    %v10709 = vadd.f32 %v10707, %v10708
    %v10710 = vsel %vm9488, %v8728, 0.0
    %v10711 = vadd.f32 %v10709, %v10710
    %v10712 = vsel %vm9488, %v8736, 0.0
    %v10713 = vadd.f32 %v10711, %v10712
    %v10714 = vsel %vm9488, %v8744, 0.0
    %v10715 = vadd.f32 %v10713, %v10714
    %v10716 = vsel %vm9488, %v8743, 0.0
    %v10717 = vadd.f32 %v10715, %v10716
    %v10718 = vsel %vm9488, %v8745, 0.0
    %v10719 = vadd.f32 %v10717, %v10718
    %v10720 = vsel %vm9488, %v8753, 0.0
    %v10721 = vadd.f32 %v10719, %v10720
    %v10722 = vsel %vm9488, %v8761, 0.0
    %v10723 = vadd.f32 %v10721, %v10722
    %v10724 = vsel %vm9488, %v8760, 0.0
    %v10725 = vadd.f32 %v10723, %v10724
    %v10726 = vsel %vm9488, %v8762, 0.0
    %v10727 = vadd.f32 %v10725, %v10726
    %v10728 = vsel %vm9488, %v8770, 0.0
    %v10729 = vadd.f32 %v10727, %v10728
    %v10730 = vsel %vm9488, %v8778, 0.0
    %v10731 = vadd.f32 %v10729, %v10730
    %v10732 = vsel %vm9488, %v8777, 0.0
    %v10733 = vadd.f32 %v10731, %v10732
    %v10734 = vsel %vm9488, %v8779, 0.0
    %v10735 = vadd.f32 %v10733, %v10734
    %v10736 = vsel %vm9488, %v8787, 0.0
    %v10737 = vadd.f32 %v10735, %v10736
    %v10738 = vsel %vm9488, %v8795, 0.0
    %v10739 = vadd.f32 %v10737, %v10738
    %v10740 = vsel %vm9488, %v8794, 0.0
    %v10741 = vadd.f32 %v10739, %v10740
    %v10742 = vsel %vm9488, %v8796, 0.0
    %v10743 = vadd.f32 %v10741, %v10742
    %v10744 = vsel %vm9488, %v8804, 0.0
    %v10745 = vadd.f32 %v10743, %v10744
    %v10746 = vsel %vm9488, %v8812, 0.0
    %v10747 = vadd.f32 %v10745, %v10746
    %v10748 = vsel %vm9488, %v8811, 0.0
    %v10749 = vadd.f32 %v10747, %v10748
    %v10750 = vsel %vm9488, %v8813, 0.0
    %v10751 = vadd.f32 %v10749, %v10750
    %v10752 = vsel %vm9488, %v8821, 0.0
    %v10753 = vadd.f32 %v10751, %v10752
    %v10754 = vsel %vm9488, %v8829, 0.0
    %v10755 = vadd.f32 %v10753, %v10754
    %v10756 = vsel %vm9488, %v8828, 0.0
    %v10757 = vadd.f32 %v10755, %v10756
    %v10758 = vsel %vm9488, %v8830, 0.0
    %v10759 = vadd.f32 %v10757, %v10758
    %v10760 = vsel %vm9488, %v8838, 0.0
    %v10761 = vadd.f32 %v10759, %v10760
    %v10762 = vsel %vm9488, %v8846, 0.0
    %v10763 = vadd.f32 %v10761, %v10762
    %v10764 = vsel %vm9488, %v8845, 0.0
    %v10765 = vadd.f32 %v10763, %v10764
    %v10766 = vsel %vm9488, %v8847, 0.0
    %v10767 = vadd.f32 %v10765, %v10766
    %10768 = vadd.xlane.f32.xlu0 %v10767
    %v10769 = vpop.xlane.xlu0 %10768
    %v10770 = vadd.f32 %v287, %v10769
    %vm10771 = vcmask 1024
    %10772 = vst.msk [vmem:[#allocation2] sm:$0x3] %vm10771, %v10770
    // Predicated region
    $region26: #{tpu_custom_call.1} parent=1 // pred_check
      %p10773 = pneg %p39
    $region27: #{tpu_custom_call.1} parent=1 // pred_check_branch
      %10775 = sbr.rel (%p10773) target = $region29
    $region28: #{tpu_custom_call.1} parent=1 // pred_region
      %v10776 = vld [vmem:[#allocation2] sm:$0x3]
      %s10777 = sld [smem:[#allocation3]]
      %v10778 = vstv %s10777
      %v10779 = vadd.f32 %v10776, %v10778
      %v10780 = vxor.u32 %v10779, 2147483648
      %v10781 = vmul.f32 %v10780, 1.442695
      %v10782 = vpow.pop %v10781
      %v10783 = vadd.f32 %v10782, 1.0
      %v10784 = vrcp.pop %v10783
      %v10785 = vmul.f32 1.0, %v10784
      %10786 = vst.msk [vmem:[%s3] sm:$0x3] %vm10771, %v10785
    $region29: #{tpu_custom_call.1} parent=1 // pred_fallthru
      _
    // Predicated region
    $region30: #{tpu_custom_call.1} parent=1 // pred_check
      _
    $region31: #{tpu_custom_call.1} parent=1 // pred_check_branch
      %10788 = sbr.rel (0) target = $region33
    $region32: #{tpu_custom_call.1} parent=1 // pred_region
      _
    $region33: #{tpu_custom_call.1} parent=1 // pred_fallthru
      _
    // Predicated region
    $region34: #{tpu_custom_call.1} parent=1 // pred_check
      _
    $region35: #{tpu_custom_call.1} parent=1 // pred_check_branch
      %10790 = sbr.rel (0) target = $region37
    $region36: #{tpu_custom_call.1} parent=1 // pred_region
      _
    $region37: #{tpu_custom_call.1} parent=1 // pred_fallthru
      _
    %10791 = vsyncpa [#allocation5], 1
    %10792 = vsyncpa [#allocation7], 1

</llo_original>
